<compile_context>
chip_gen: v7x
topology: tpu7x:2x2x1
jax: 0.10.0
libtpu: 0.0.40
codegen_flags: <defaults>
</compile_context>

<pallas_src>
import numpy as np
import jax
import jax.numpy as jnp
from jax.experimental import pallas as pl
from jax.experimental.pallas import tpu as pltpu

# ---------------- SMPL constants ----------------
NUM_VERTS = 6890
NUM_JOINTS = 24
NUM_BETAS = 10
NUM_POSE_FEATS = (NUM_JOINTS - 1) * 9          # 207
K_TOTAL = 1 + NUM_BETAS + NUM_POSE_FEATS       # 218 = [1 | beta | lrotmin]

VP = 6912                                      # padded vertex count (54 * 128)
TILE_V = 3456                                  # 27 * 128 -> 2 lane tiles per forward

# SMPL kinematic tree parents for joints 1..23 (standard SMPL kintree).
PARENT = np.array([0, 0, 0, 1, 2, 3, 4, 5, 6, 7, 8, 9, 9, 9,
                   12, 13, 14, 16, 17, 18, 19, 20, 21], dtype=np.int32)


def _compute_levels(parent):
    depth = np.zeros(NUM_JOINTS, np.int32)
    for j in range(1, NUM_JOINTS):
        depth[j] = depth[parent[j - 1]] + 1
    return [np.where(depth == d)[0] for d in range(1, int(depth.max()) + 1)]


LEVELS = _compute_levels(PARENT)               # 8 levels of independent joints


# ---------------- Fused blend-shapes + skinning Pallas kernel ----------------
def _fused_kernel(coef_ref, m_ref, wt_ref, g_ref, out_ref):
    # coef_ref : (3, B, 218) f32  — scale-folded [1 | beta | lrotmin] per coordinate
    # m_ref    : (3, 218, TILE_V) int8 — quantized coordinate-major blend dirs
    # wt_ref   : (24, TILE_V) bf16 — skinning weights, transposed (lane-dense)
    # g_ref    : (12*B, 24) f32   — blended-transform rows, row index = c*B + b
    # out_ref  : (3, B, TILE_V) f32 — skinned vertices, coordinate-major
    B = out_ref.shape[1]
    coef = coef_ref[...].astype(jnp.bfloat16)                                # (3, B, 218)
    # v_posed, one bf16 MXU matmul per coordinate (int8 tile dequantizes via folded scales).
    vx = jnp.dot(coef[0], m_ref[0].astype(jnp.bfloat16),
                 preferred_element_type=jnp.float32)                         # (B, TILE_V)
    vy = jnp.dot(coef[1], m_ref[1].astype(jnp.bfloat16),
                 preferred_element_type=jnp.float32)
    vz = jnp.dot(coef[2], m_ref[2].astype(jnp.bfloat16),
                 preferred_element_type=jnp.float32)
    # One batched skinning matmul: (12B, 24) @ (24, TILE_V); wt streams through the MXU once.
    T = jnp.dot(g_ref[...], wt_ref[...].astype(jnp.float32),
                preferred_element_type=jnp.float32)                          # (12B, TILE_V)
    # Affine apply on dense (B, TILE_V) slabs; three direct row stores (no sublane concat).
    out_ref[0] = (T[0 * B:1 * B] * vx + T[1 * B:2 * B] * vy
                  + T[2 * B:3 * B] * vz + T[3 * B:4 * B])
    out_ref[1] = (T[4 * B:5 * B] * vx + T[5 * B:6 * B] * vy
                  + T[6 * B:7 * B] * vz + T[7 * B:8 * B])
    out_ref[2] = (T[8 * B:9 * B] * vx + T[9 * B:10 * B] * vy
                  + T[10 * B:11 * B] * vz + T[11 * B:12 * B])


def fused_blend_skin(coefs, Mq, Wt, Gflat):
    B = coefs.shape[1]
    nt = VP // TILE_V                                                        # 2 grid steps
    return pl.pallas_call(
        _fused_kernel,
        out_shape=jax.ShapeDtypeStruct((3, B, VP), jnp.float32),
        grid_spec=pltpu.PrefetchScalarGridSpec(
            num_scalar_prefetch=0,
            grid=(nt,),
            in_specs=[
                pl.BlockSpec((3, B, K_TOTAL), lambda t: (0, 0, 0)),
                pl.BlockSpec((3, K_TOTAL, TILE_V), lambda t: (0, 0, t)),
                pl.BlockSpec((NUM_JOINTS, TILE_V), lambda t: (0, t)),
                pl.BlockSpec((12 * B, NUM_JOINTS), lambda t: (0, 0)),
            ],
            out_specs=pl.BlockSpec((3, B, TILE_V), lambda t: (0, 0, t))),
        compiler_params=pltpu.CompilerParams(
            dimension_semantics=("parallel",),
            vmem_limit_bytes=32 * 1024 * 1024),
    )(coefs, Mq, Wt, Gflat)


# ---------------- Plain-JAX glue (tiny sequential / elementwise pieces) ----------------
def rodrigues(r):
    # r: (N, 3) axis-angle -> (N, 3, 3) rotation matrices (same eps as pymaf rodrigues).
    theta = jnp.sqrt(jnp.sum(r * r, axis=1) + 1e-8)
    n = r / theta[:, None]
    nx, ny, nz = n[:, 0], n[:, 1], n[:, 2]
    z = jnp.zeros_like(nx)
    K = jnp.stack([z, -nz, ny, nz, z, -nx, -ny, nx, z], axis=1).reshape(-1, 3, 3)
    s = jnp.sin(theta)[:, None, None]
    c = jnp.cos(theta)[:, None, None]
    return jnp.eye(3, dtype=r.dtype)[None] + s * K + (1.0 - c) * jnp.matmul(K, K)


def rigid_transforms(R, J):
    """Levelized kinematic chain.  Returns (12*B, 24): blended-transform rows
    [R | t - R@J] flattened per coordinate, with row index = c*B + b so the skin
    kernel can do one (12B,24) @ (24,TILE_V) matmul and slice (B,TILE_V) slabs."""
    B = R.shape[0]
    J_rel = J.at[:, 1:, :].set(J[:, 1:, :] - J[:, PARENT, :])
    G_local = jnp.concatenate([R, J_rel[..., None]], axis=-1)               # (B,24,3,4)
    pad_row = jnp.broadcast_to(
        jnp.array([0.0, 0.0, 0.0, 1.0], R.dtype).reshape(1, 1, 1, 4),
        (B, NUM_JOINTS, 1, 4))
    G_local = jnp.concatenate([G_local, pad_row], axis=2)                   # (B,24,4,4)

    G_world = [None] * NUM_JOINTS
    G_world[0] = G_local[:, 0]
    for level in LEVELS:                                                    # 8 dependent steps
        parents = [int(PARENT[j - 1]) for j in level]
        Gp = jnp.stack([G_world[p] for p in parents], axis=1)               # (B,n,4,4)
        Gw = jnp.matmul(Gp, G_local[:, np.asarray(level)])                  # (B,n,4,4)
        for i, j in enumerate(level):
            G_world[int(j)] = Gw[:, i]
    G = jnp.stack(G_world, axis=1)                                          # (B,24,4,4)

    Rw = G[..., :3, :3]
    tw = G[..., :3, 3]
    t_corr = tw - jnp.einsum('bjmn,bjn->bjm', Rw, J)                        # rest-pose subtraction
    A = jnp.concatenate([Rw, t_corr[..., None]], axis=-1)                   # (B,24,3,4)
    # (B,24,12) -> (12,B,24) -> (12B,24); row = c*B + b.
    return A.reshape(B, NUM_JOINTS, 12).transpose(2, 0, 1).reshape(12 * B, NUM_JOINTS)


# ---------------- Parameter synthesis (deterministic, replaces pickle load) ----------------
def make_params(key):
    ks = jax.random.split(key, 5)
    v_template = 0.3 * jax.random.normal(ks[0], (NUM_VERTS, 3), jnp.float32)
    shapedirs = 0.01 * jax.random.normal(ks[1], (NUM_VERTS, 3, NUM_BETAS), jnp.float32)
    posedirs = 0.01 * jax.random.normal(ks[2], (NUM_VERTS, 3, NUM_POSE_FEATS), jnp.float32)
    jr = jax.random.uniform(ks[3], (NUM_JOINTS, NUM_VERTS), jnp.float32)
    J_regressor = jr / jnp.sum(jr, axis=1, keepdims=True)
    w = jax.random.uniform(ks[4], (NUM_VERTS, NUM_JOINTS), jnp.float32)
    weights = w / jnp.sum(w, axis=1, keepdims=True)
    return dict(v_template=v_template, shapedirs=shapedirs, posedirs=posedirs,
                J_regressor=J_regressor, weights=weights)


# ---------------- Full forward using the fused Pallas kernel ----------------
def make_smpl_forward(params):
    v_template = params['v_template']                     # (V, 3)
    shapedirs = params['shapedirs']                       # (V, 3, 10)
    posedirs = params['posedirs']                         # (V, 3, 207)
    J_reg = params['J_regressor']                         # (24, V)
    weights = params['weights']                           # (V, 24)

    # Coordinate-major, lane-dense blend matrix M[c, k, v].
    M = jnp.zeros((3, K_TOTAL, VP), jnp.float32)
    M = M.at[:, 0, :NUM_VERTS].set(v_template.T)
    M = M.at[:, 1:1 + NUM_BETAS, :NUM_VERTS].set(shapedirs.transpose(1, 2, 0))
    M = M.at[:, 1 + NUM_BETAS:, :NUM_VERTS].set(posedirs.transpose(1, 2, 0))

    # Symmetric int8 quantization with one scale per (coord, k) row; scales are folded
    # exactly into the per-batch coefficient vector, so only rounding error is added.
    scales = jnp.maximum(jnp.max(jnp.abs(M), axis=2), 1e-8) / 127.0          # (3, 218)
    Mq = jnp.clip(jnp.round(M / scales[:, :, None]), -127.0, 127.0).astype(jnp.int8)

    # Transposed skinning weights (lane-dense over vertices), bf16 (values in [0,1]).
    Wt = jnp.zeros((NUM_JOINTS, VP), jnp.bfloat16)
    Wt = Wt.at[:, :NUM_VERTS].set(weights.T.astype(jnp.bfloat16))

    # J is linear in beta: precompute the linear map (removes the joint-regression kernel
    # and the v_shaped HBM round trip entirely).  Kept in f32 for accuracy.
    J_template = J_reg @ v_template                                          # (24, 3)
    J_dirs = jnp.einsum('jv,vck->jck', J_reg, shapedirs)                     # (24, 3, 10)

    @jax.jit
    def forward(pose, beta):
        B = pose.shape[0]
        R = rodrigues(pose.reshape(-1, 3)).reshape(B, NUM_JOINTS, 3, 3)
        lrotmin = (R[:, 1:] - jnp.eye(3, dtype=R.dtype)).reshape(B, NUM_POSE_FEATS)
        coef = jnp.concatenate(
            [jnp.ones((B, 1), beta.dtype), beta, lrotmin], axis=1)           # (B, 218)
        coefs = scales[:, None, :] * coef[None, :, :]                        # (3, B, 218)

        J = J_template[None] + jnp.einsum('bk,jck->bjc', beta, J_dirs)       # (B, 24, 3)
        Gflat = rigid_transforms(R, J)                                       # (12B, 24)

        out = fused_blend_skin(coefs, Mq, Wt, Gflat)                         # (3, B, VP)
        # TODO(synk): downstream consumers that accept coordinate-major (3, B, V) could
        # skip this transpose; kept to match the torch forward's (B, 6890, 3) output.
        return out[:, :, :NUM_VERTS].transpose(1, 2, 0)                      # (B, 6890, 3)

    return forward


# ---------------- Pure-JAX reference mirroring the torch forward ----------------
def kinematic_chain_ref(R, J):
    B = R.shape[0]
    J_rel = J.at[:, 1:, :].set(J[:, 1:, :] - J[:, PARENT, :])
    G_ = jnp.concatenate([R, J_rel[:, :, :, None]], axis=-1)
    pad_row = jnp.broadcast_to(
        jnp.array([0.0, 0.0, 0.0, 1.0], R.dtype).reshape(1, 1, 1, 4),
        (B, NUM_JOINTS, 1, 4))
    G_ = jnp.concatenate([G_, pad_row], axis=2)
    Gs = [G_[:, 0]]
    for i in range(1, NUM_JOINTS):
        Gs.append(jnp.matmul(Gs[int(PARENT[i - 1])], G_[:, i]))
    G = jnp.stack(Gs, axis=1)
    rest = jnp.concatenate([J, jnp.zeros((B, NUM_JOINTS, 1), R.dtype)],
                           axis=2).reshape(B, NUM_JOINTS, 4, 1)
    rest = jnp.concatenate([jnp.zeros((B, NUM_JOINTS, 4, 3), R.dtype), rest], axis=-1)
    return G - jnp.matmul(G, rest)


def smpl_forward_ref(pose, beta, p):
    B = pose.shape[0]
    v_template = p['v_template'][None]
    shapedirs = p['shapedirs'].reshape(-1, NUM_BETAS)[None]
    v_shaped = jnp.matmul(shapedirs, beta[:, :, None]).reshape(-1, NUM_VERTS, 3) + v_template
    J = jnp.einsum('jv,bvk->bjk', p['J_regressor'], v_shaped)
    R = rodrigues(pose.reshape(-1, 3)).reshape(B, NUM_JOINTS, 3, 3)
    lrotmin = (R[:, 1:] - jnp.eye(3)).reshape(B, -1)
    posedirs = p['posedirs'].reshape(-1, NUM_POSE_FEATS)[None]
    v_posed = v_shaped + jnp.matmul(posedirs, lrotmin[:, :, None]).reshape(-1, NUM_VERTS, 3)
    G = kinematic_chain_ref(R, J)
    T = jnp.einsum('vj,bjmn->bvmn', p['weights'], G)
    rest_shape_h = jnp.concatenate(
        [v_posed, jnp.ones((B, NUM_VERTS, 1), v_posed.dtype)], axis=-1)
    return jnp.matmul(T, rest_shape_h[..., None])[:, :, :3, 0]


if __name__ == "__main__":
    key = jax.random.PRNGKey(0)
    kp, kpose, kbeta = jax.random.split(key, 3)
    params = make_params(kp)

    B = 2
    pose = 0.3 * jax.random.normal(kpose, (B, NUM_JOINTS * 3), jnp.float32)   # (B, 72)
    beta = jax.random.normal(kbeta, (B, NUM_BETAS), jnp.float32)              # (B, 10)

    forward = make_smpl_forward(params)
    v = jax.block_until_ready(forward(pose, beta))

    v_ref = jax.block_until_ready(smpl_forward_ref(pose, beta, params))
    assert v.shape == (B, NUM_VERTS, 3)
    assert bool(jnp.all(jnp.isfinite(v)))
    err = float(jnp.max(jnp.abs(v - v_ref)))
    assert err < 5e-2, f"max abs err {err}"

    print("KERNEL_OK")
</pallas_src>

<mosaic_0001>
module attributes {stable_mosaic.version = 11 : i64} {
  func.func @_fused_kernel(%arg0: i32, %arg1: memref<3x2x218xf32, #tpu.memory_space<vmem>>, %arg2: memref<3x218x3456xi8, #tpu.memory_space<vmem>>, %arg3: memref<24x3456xbf16, #tpu.memory_space<vmem>>, %arg4: memref<24x24xf32, #tpu.memory_space<vmem>>, %arg5: memref<3x2x3456xf32, #tpu.memory_space<vmem>>) attributes {dimension_semantics = [#tpu.dimension_semantics<parallel>], iteration_bounds = array<i64: 2>, scalar_prefetch = 0 : i64, scratch_operands = 0 : i64, tpu.core_type = #tpu.core_type<tc>, window_params = [{pipeline_mode = #tpu.pipeline_mode<synchronous>, transform_indices = @transform_0, window_bounds = array<i64: 3, 2, 218>}, {transform_indices = @transform_1, window_bounds = array<i64: 3, 218, 3456>}, {transform_indices = @transform_2, window_bounds = array<i64: 24, 3456>}, {pipeline_mode = #tpu.pipeline_mode<synchronous>, transform_indices = @transform_3, window_bounds = array<i64: 24, 24>}, {transform_indices = @transform_4, window_bounds = array<i64: 3, 2, 3456>}]} {
    %c0 = arith.constant 0 : index
    %c0_0 = arith.constant 0 : index
    %c0_1 = arith.constant 0 : index
    %0 = vector.load %arg1[%c0, %c0_0, %c0_1] : memref<3x2x218xf32, #tpu.memory_space<vmem>>, vector<3x2x218xf32>
    %1 = arith.truncf %0 : vector<3x2x218xf32> to vector<3x2x218xbf16>
    %2 = vector.extract_strided_slice %1 {offsets = [0, 0, 0], sizes = [1, 2, 218], strides = [1, 1, 1]} : vector<3x2x218xbf16> to vector<1x2x218xbf16>
    %3 = vector.shape_cast %2 : vector<1x2x218xbf16> to vector<2x218xbf16>
    %c0_2 = arith.constant 0 : index
    %c0_3 = arith.constant 0 : index
    %c0_4 = arith.constant 0 : index
    %4 = vector.load %arg2[%c0_2, %c0_3, %c0_4] : memref<3x218x3456xi8, #tpu.memory_space<vmem>>, vector<1x218x3456xi8>
    %5 = vector.shape_cast %4 : vector<1x218x3456xi8> to vector<218x3456xi8>
    %6 = arith.sitofp %5 : vector<218x3456xi8> to vector<218x3456xbf16>
    %cst = arith.constant dense<0.000000e+00> : vector<2x3456xf32>
    %7 = tpu.matmul %3, %6, %cst {dimension_numbers = #tpu.dot_dimension_numbers<[1], [0], [0], [1], [0, 0, 1, 1], [], []>} : vector<2x218xbf16>, vector<218x3456xbf16>, vector<2x3456xf32> -> vector<2x3456xf32>
    %8 = vector.extract_strided_slice %1 {offsets = [1, 0, 0], sizes = [1, 2, 218], strides = [1, 1, 1]} : vector<3x2x218xbf16> to vector<1x2x218xbf16>
    %9 = vector.shape_cast %8 : vector<1x2x218xbf16> to vector<2x218xbf16>
    %c1 = arith.constant 1 : index
    %c0_5 = arith.constant 0 : index
    %c0_6 = arith.constant 0 : index
    %10 = vector.load %arg2[%c1, %c0_5, %c0_6] : memref<3x218x3456xi8, #tpu.memory_space<vmem>>, vector<1x218x3456xi8>
    %11 = vector.shape_cast %10 : vector<1x218x3456xi8> to vector<218x3456xi8>
    %12 = arith.sitofp %11 : vector<218x3456xi8> to vector<218x3456xbf16>
    %cst_7 = arith.constant dense<0.000000e+00> : vector<2x3456xf32>
    %13 = tpu.matmul %9, %12, %cst_7 {dimension_numbers = #tpu.dot_dimension_numbers<[1], [0], [0], [1], [0, 0, 1, 1], [], []>} : vector<2x218xbf16>, vector<218x3456xbf16>, vector<2x3456xf32> -> vector<2x3456xf32>
    %14 = vector.extract_strided_slice %1 {offsets = [2, 0, 0], sizes = [1, 2, 218], strides = [1, 1, 1]} : vector<3x2x218xbf16> to vector<1x2x218xbf16>
    %15 = vector.shape_cast %14 : vector<1x2x218xbf16> to vector<2x218xbf16>
    %c2 = arith.constant 2 : index
    %c0_8 = arith.constant 0 : index
    %c0_9 = arith.constant 0 : index
    %16 = vector.load %arg2[%c2, %c0_8, %c0_9] : memref<3x218x3456xi8, #tpu.memory_space<vmem>>, vector<1x218x3456xi8>
    %17 = vector.shape_cast %16 : vector<1x218x3456xi8> to vector<218x3456xi8>
    %18 = arith.sitofp %17 : vector<218x3456xi8> to vector<218x3456xbf16>
    %cst_10 = arith.constant dense<0.000000e+00> : vector<2x3456xf32>
    %19 = tpu.matmul %15, %18, %cst_10 {dimension_numbers = #tpu.dot_dimension_numbers<[1], [0], [0], [1], [0, 0, 1, 1], [], []>} : vector<2x218xbf16>, vector<218x3456xbf16>, vector<2x3456xf32> -> vector<2x3456xf32>
    %c0_11 = arith.constant 0 : index
    %c0_12 = arith.constant 0 : index
    %20 = vector.load %arg4[%c0_11, %c0_12] : memref<24x24xf32, #tpu.memory_space<vmem>>, vector<24x24xf32>
    %c0_13 = arith.constant 0 : index
    %c0_14 = arith.constant 0 : index
    %21 = vector.load %arg3[%c0_13, %c0_14] : memref<24x3456xbf16, #tpu.memory_space<vmem>>, vector<24x3456xbf16>
    %22 = arith.extf %21 : vector<24x3456xbf16> to vector<24x3456xf32>
    %cst_15 = arith.constant dense<0.000000e+00> : vector<24x3456xf32>
    %23 = tpu.matmul %20, %22, %cst_15 {dimension_numbers = #tpu.dot_dimension_numbers<[1], [0], [0], [1], [0, 0, 1, 1], [], []>} : vector<24x24xf32>, vector<24x3456xf32>, vector<24x3456xf32> -> vector<24x3456xf32>
    %24 = vector.extract_strided_slice %23 {offsets = [0, 0], sizes = [2, 3456], strides = [1, 1]} : vector<24x3456xf32> to vector<2x3456xf32>
    %25 = arith.mulf %24, %7 : vector<2x3456xf32>
    %26 = vector.extract_strided_slice %23 {offsets = [2, 0], sizes = [2, 3456], strides = [1, 1]} : vector<24x3456xf32> to vector<2x3456xf32>
    %27 = arith.mulf %26, %13 : vector<2x3456xf32>
    %28 = arith.addf %25, %27 : vector<2x3456xf32>
    %29 = vector.extract_strided_slice %23 {offsets = [4, 0], sizes = [2, 3456], strides = [1, 1]} : vector<24x3456xf32> to vector<2x3456xf32>
    %30 = arith.mulf %29, %19 : vector<2x3456xf32>
    %31 = arith.addf %28, %30 : vector<2x3456xf32>
    %32 = vector.extract_strided_slice %23 {offsets = [6, 0], sizes = [2, 3456], strides = [1, 1]} : vector<24x3456xf32> to vector<2x3456xf32>
    %33 = arith.addf %31, %32 : vector<2x3456xf32>
    %c0_16 = arith.constant 0 : index
    %c0_17 = arith.constant 0 : index
    %c0_18 = arith.constant 0 : index
    %34 = vector.load %arg5[%c0_16, %c0_17, %c0_18] : memref<3x2x3456xf32, #tpu.memory_space<vmem>>, vector<1x2x3456xf32>
    %35 = vector.shape_cast %34 : vector<1x2x3456xf32> to vector<2x3456xf32>
    %36 = vector.shape_cast %33 : vector<2x3456xf32> to vector<1x2x3456xf32>
    tpu.vector_store %arg5[%c0_16, %c0_17, %c0_18], %36 {strides = array<i32>} : memref<3x2x3456xf32, #tpu.memory_space<vmem>>, vector<1x2x3456xf32>,
    %37 = vector.extract_strided_slice %23 {offsets = [8, 0], sizes = [2, 3456], strides = [1, 1]} : vector<24x3456xf32> to vector<2x3456xf32>
    %38 = arith.mulf %37, %7 : vector<2x3456xf32>
    %39 = vector.extract_strided_slice %23 {offsets = [10, 0], sizes = [2, 3456], strides = [1, 1]} : vector<24x3456xf32> to vector<2x3456xf32>
    %40 = arith.mulf %39, %13 : vector<2x3456xf32>
    %41 = arith.addf %38, %40 : vector<2x3456xf32>
    %42 = vector.extract_strided_slice %23 {offsets = [12, 0], sizes = [2, 3456], strides = [1, 1]} : vector<24x3456xf32> to vector<2x3456xf32>
    %43 = arith.mulf %42, %19 : vector<2x3456xf32>
    %44 = arith.addf %41, %43 : vector<2x3456xf32>
    %45 = vector.extract_strided_slice %23 {offsets = [14, 0], sizes = [2, 3456], strides = [1, 1]} : vector<24x3456xf32> to vector<2x3456xf32>
    %46 = arith.addf %44, %45 : vector<2x3456xf32>
    %c1_19 = arith.constant 1 : index
    %c0_20 = arith.constant 0 : index
    %c0_21 = arith.constant 0 : index
    %47 = vector.load %arg5[%c1_19, %c0_20, %c0_21] : memref<3x2x3456xf32, #tpu.memory_space<vmem>>, vector<1x2x3456xf32>
    %48 = vector.shape_cast %47 : vector<1x2x3456xf32> to vector<2x3456xf32>
    %49 = vector.shape_cast %46 : vector<2x3456xf32> to vector<1x2x3456xf32>
    tpu.vector_store %arg5[%c1_19, %c0_20, %c0_21], %49 {strides = array<i32>} : memref<3x2x3456xf32, #tpu.memory_space<vmem>>, vector<1x2x3456xf32>,
    %50 = vector.extract_strided_slice %23 {offsets = [16, 0], sizes = [2, 3456], strides = [1, 1]} : vector<24x3456xf32> to vector<2x3456xf32>
    %51 = arith.mulf %50, %7 : vector<2x3456xf32>
    %52 = vector.extract_strided_slice %23 {offsets = [18, 0], sizes = [2, 3456], strides = [1, 1]} : vector<24x3456xf32> to vector<2x3456xf32>
    %53 = arith.mulf %52, %13 : vector<2x3456xf32>
    %54 = arith.addf %51, %53 : vector<2x3456xf32>
    %55 = vector.extract_strided_slice %23 {offsets = [20, 0], sizes = [2, 3456], strides = [1, 1]} : vector<24x3456xf32> to vector<2x3456xf32>
    %56 = arith.mulf %55, %19 : vector<2x3456xf32>
    %57 = arith.addf %54, %56 : vector<2x3456xf32>
    %58 = vector.extract_strided_slice %23 {offsets = [22, 0], sizes = [2, 3456], strides = [1, 1]} : vector<24x3456xf32> to vector<2x3456xf32>
    %59 = arith.addf %57, %58 : vector<2x3456xf32>
    %c2_22 = arith.constant 2 : index
    %c0_23 = arith.constant 0 : index
    %c0_24 = arith.constant 0 : index
    %60 = vector.load %arg5[%c2_22, %c0_23, %c0_24] : memref<3x2x3456xf32, #tpu.memory_space<vmem>>, vector<1x2x3456xf32>
    %61 = vector.shape_cast %60 : vector<1x2x3456xf32> to vector<2x3456xf32>
    %62 = vector.shape_cast %59 : vector<2x3456xf32> to vector<1x2x3456xf32>
    tpu.vector_store %arg5[%c2_22, %c0_23, %c0_24], %62 {strides = array<i32>} : memref<3x2x3456xf32, #tpu.memory_space<vmem>>, vector<1x2x3456xf32>,
    return
  }
  func.func @transform_0(%arg0: i32) -> (i32, i32, i32) {
    %c0_i32 = arith.constant 0 : i32
    %c0_i32_0 = arith.constant 0 : i32
    %c0_i32_1 = arith.constant 0 : i32
    %c0_i32_2 = arith.constant 0 : i32
    return %c0_i32, %c0_i32_0, %c0_i32_1 : i32, i32, i32
  }
  func.func @transform_1(%arg0: i32) -> (i32, i32, i32) {
    %c0_i32 = arith.constant 0 : i32
    %c0_i32_0 = arith.constant 0 : i32
    %c0_i32_1 = arith.constant 0 : i32
    return %c0_i32, %c0_i32_0, %arg0 : i32, i32, i32
  }
  func.func @transform_2(%arg0: i32) -> (i32, i32) {
    %c0_i32 = arith.constant 0 : i32
    %c0_i32_0 = arith.constant 0 : i32
    return %c0_i32, %arg0 : i32, i32
  }
  func.func @transform_3(%arg0: i32) -> (i32, i32) {
    %c0_i32 = arith.constant 0 : i32
    %c0_i32_0 = arith.constant 0 : i32
    %c0_i32_1 = arith.constant 0 : i32
    return %c0_i32, %c0_i32_0 : i32, i32
  }
  func.func @transform_4(%arg0: i32) -> (i32, i32, i32) {
    %c0_i32 = arith.constant 0 : i32
    %c0_i32_0 = arith.constant 0 : i32
    %c0_i32_1 = arith.constant 0 : i32
    return %c0_i32, %c0_i32_0, %arg0 : i32, i32, i32
  }
}

</mosaic_0001>

<llo_original>
// kernel: forward.1
$region0: #{forward.1}
  #allocation0 [shape = 'u32[]', space=smem, size = 0x4, offset = 0x4, fixed_abs, tag = 'smem constant byte address 0x4 - core index']
  #allocation1 [shape = 'u32[144,128]{1,0:T(1,128)}', space=vmem, size = 0x12000, scoped, tag = 'internal scratch']
  %s0 = inlined_call_operand.vmem [shape: f32[3,2,218], index: 0, kind: input, shape index: {}]
  %s1 = inlined_call_operand.hbm [shape: s8[3,218,6912], index: 1, kind: input, shape index: {}]
  %s2 = inlined_call_operand.hbm [shape: bf16[24,6912], index: 2, kind: input, shape index: {}]
  %s3 = inlined_call_operand.vmem [shape: f32[24,24], index: 3, kind: input, shape index: {}]
  %s4 = inlined_call_operand.vmem [shape: f32[3,2,6912], index: 4, kind: output, shape index: {}]
  %s5 = sld [smem:[#allocation0]]
  $region79: #{forward.1} parent=0
    _
  %s7 = ssub.s32 1, %s5
  %s8 = scalar_select 0, %s7, %s5
  $region1: #{forward.1} parent=0
    #allocation2 [shape = 'u8[4644864]{0}', space=vmem, size = 0x46e000, scoped, tag = 'input window, operand 1']
    #allocation3 [shape = 's32[2]{0}', space=sflag, size = 0x8, scoped, tag = 'scoped memory for forward.1']
    #allocation4 [shape = 'u8[331776]{0}', space=vmem, size = 0x51000, scoped, tag = 'input window, operand 2']
    #allocation5 [shape = 's32[2]{0}', space=sflag, size = 0x8, scoped, tag = 'scoped memory for forward.1']
    #allocation6 [shape = 'u8[165888]{0}', space=vmem, size = 0x28800, scoped, tag = 'output window, operand 0']
    %9 = vsyncpa [#allocation3], 0
    %s10 = scalar_lea.sflag [#allocation3], 1
    %11 = vsyncpa %s10, 0
    %12 = vsyncpa [#allocation5], 0
    %s13 = scalar_lea.sflag [#allocation5], 1
    %14 = vsyncpa %s13, 0
    loop: start=0, step=1, limit=4
    $region2: #{forward.1} parent=1 // loop_pre_header
      _
    $region3: #{forward.1} parent=1 // loop_header
      %s16 = sphi 0, %s20
      %p17 = scmp.ge.s32.totalorder %s16, 4
      %s24 = sphi 0, %s24
      %s26 = sphi 0, %s24
      %s27 = sphi 0, %s26
      %s41 = sphi 0, %s27
      %s47 = sphi 0, %s49
      %s50 = sphi 0, %s47
      %s51 = sphi 0, %s50
      %s67 = sphi 0, %s51
      %s73 = sphi 0, %s75
      %s76 = sphi 0, %s73
      %s77 = sphi 0, %s76
      %s93 = sphi 0, %s77
      %s97 = sphi 0, %s97
      %s99 = sphi 0, %s97
      %s100 = sphi 0, %s99
      %s114 = sphi 0, %s100
      %s120 = sphi 0, %s122
      %s123 = sphi 0, %s120
      %s124 = sphi 0, %s123
      %s140 = sphi 0, %s124
    $region4: #{forward.1} parent=1 // loop_header_branch
      %19 = sbr.rel (%p17) target = $region8
    $region5: #{forward.1} parent=1 // loop_body
      %s21 = ssub.s32 %s16, 1
      %s22 = ssub.s32 %s16, 2
      %s23 = sadd.s32 %s16, 1
      %s25 = sadd.s32 %s24, 1
      %p28 = scmp.eq.s32.totalorder %s16, 1
      %p29 = scmp.ne.s32.totalorder %s24, %s26
      %p30 = scmp.eq.s32.totalorder %s16, 0
      %p31 = por %p29, %p30
      %p32 = scmp.ne.s32.totalorder %s24, %s26
      %p33 = scmp.eq.s32.totalorder %s21, 1
      %p34 = por %p32, %p33
      %p35 = scmp.ne.s32.totalorder %s26, %s27
      %p36 = scmp.eq.s32.totalorder %s21, 0
      %p37 = por %p35, %p36
      %p38 = scmp.ne.s32.totalorder %s26, %s27
      %p39 = scmp.eq.s32.totalorder %s22, 1
      %p40 = por %p38, %p39
      %p42 = scmp.ne.s32.totalorder %s27, %s41
      %p43 = scmp.eq.s32.totalorder %s22, 0
      %p44 = por %p42, %p43
      %s45 = ssub.s32 %s16, %s23
      %p46 = scmp.eq.s32.totalorder %s45, 0
      %s48 = sadd.s32 %s47, 1
      %s49 = scalar_select %p46, %s47, %s48
      %p52 = pneg %p46
      %p53 = scmp.eq.s32.totalorder %s16, 1
      %p54 = por %p52, %p53
      %p55 = scmp.ne.s32.totalorder %s47, %s50
      %p56 = scmp.eq.s32.totalorder %s16, 0
      %p57 = por %p55, %p56
      %p58 = scmp.ne.s32.totalorder %s47, %s50
      %p59 = scmp.eq.s32.totalorder %s21, 1
      %p60 = por %p58, %p59
      %p61 = scmp.ne.s32.totalorder %s50, %s51
      %p62 = scmp.eq.s32.totalorder %s21, 0
      %p63 = por %p61, %p62
      %p64 = scmp.ne.s32.totalorder %s50, %s51
      %p65 = scmp.eq.s32.totalorder %s22, 1
      %p66 = por %p64, %p65
      %p68 = scmp.ne.s32.totalorder %s51, %s67
      %p69 = scmp.eq.s32.totalorder %s22, 0
      %p70 = por %p68, %p69
      %s71 = ssub.s32 %s16, %s23
      %p72 = scmp.eq.s32.totalorder %s71, 0
      %s74 = sadd.s32 %s73, 1
      %s75 = scalar_select %p72, %s73, %s74
      %p78 = pneg %p72
      %p79 = scmp.eq.s32.totalorder %s16, 1
      %p80 = por %p78, %p79
      %p81 = scmp.ne.s32.totalorder %s73, %s76
      %p82 = scmp.eq.s32.totalorder %s16, 0
      %p83 = por %p81, %p82
      %p84 = scmp.ne.s32.totalorder %s73, %s76
      %p85 = scmp.eq.s32.totalorder %s21, 1
      %p86 = por %p84, %p85
      %p87 = scmp.ne.s32.totalorder %s76, %s77
      %p88 = scmp.eq.s32.totalorder %s21, 0
      %p89 = por %p87, %p88
      %p90 = scmp.ne.s32.totalorder %s76, %s77
      %p91 = scmp.eq.s32.totalorder %s22, 1
      %p92 = por %p90, %p91
      %p94 = scmp.ne.s32.totalorder %s77, %s93
      %p95 = scmp.eq.s32.totalorder %s22, 0
      %p96 = por %p94, %p95
      %s98 = sadd.s32 %s97, 1
      %p101 = scmp.eq.s32.totalorder %s16, 1
      %p102 = scmp.ne.s32.totalorder %s97, %s99
      %p103 = scmp.eq.s32.totalorder %s16, 0
      %p104 = por %p102, %p103
      %p105 = scmp.ne.s32.totalorder %s97, %s99
      %p106 = scmp.eq.s32.totalorder %s21, 1
      %p107 = por %p105, %p106
      %p108 = scmp.ne.s32.totalorder %s99, %s100
      %p109 = scmp.eq.s32.totalorder %s21, 0
      %p110 = por %p108, %p109
      %p111 = scmp.ne.s32.totalorder %s99, %s100
      %p112 = scmp.eq.s32.totalorder %s22, 1
      %p113 = por %p111, %p112
      %p115 = scmp.ne.s32.totalorder %s100, %s114
      %p116 = scmp.eq.s32.totalorder %s22, 0
      %p117 = por %p115, %p116
      %s118 = ssub.s32 %s16, %s23
      %p119 = scmp.eq.s32.totalorder %s118, 0
      %s121 = sadd.s32 %s120, 1
      %s122 = scalar_select %p119, %s120, %s121
      %p125 = pneg %p119
      %p126 = scmp.eq.s32.totalorder %s16, 1
      %p127 = por %p125, %p126
      %p128 = scmp.ne.s32.totalorder %s120, %s123
      %p129 = scmp.eq.s32.totalorder %s16, 0
      %p130 = por %p128, %p129
      %p131 = scmp.ne.s32.totalorder %s120, %s123
      %p132 = scmp.eq.s32.totalorder %s21, 1
      %p133 = por %p131, %p132
      %p134 = scmp.ne.s32.totalorder %s123, %s124
      %p135 = scmp.eq.s32.totalorder %s21, 0
      %p136 = por %p134, %p135
      %p137 = scmp.ne.s32.totalorder %s123, %s124
      %p138 = scmp.eq.s32.totalorder %s22, 1
      %p139 = por %p137, %p138
      %p141 = scmp.ne.s32.totalorder %s124, %s140
      %p142 = scmp.eq.s32.totalorder %s22, 0
      %p143 = por %p141, %p142
      %p144 = scmp.le.s32.totalorder 1, %s16
      %p145 = scmp.lt.s32.totalorder %s16, 3
      %p146 = pnand %p144, %p145
      %p147 = pneg %p146
      // Predicated region
      $region9: #{forward.1} parent=5 // pred_check
        _
      $region10: #{forward.1} parent=5 // pred_check_branch
        %149 = sbr.rel (%p146) target = $region12
      $region11: #{forward.1} parent=5 // pred_region
        %s150 = ssub.s32 %s16, 1
        // Predicated region
        $region13: #{forward.1} parent=11 // pred_check
          %p151 = pneg %p37
        $region14: #{forward.1} parent=11 // pred_check_branch
          %153 = sbr.rel (%p151) target = $region16
        $region15: #{forward.1} parent=11 // pred_region
          _
        $region16: #{forward.1} parent=11 // pred_fallthru
          _
        // Predicated region
        $region17: #{forward.1} parent=11 // pred_check
          %p154 = pneg %p110
        $region18: #{forward.1} parent=11 // pred_check_branch
          %156 = sbr.rel (%p154) target = $region20
        $region19: #{forward.1} parent=11 // pred_region
          _
        $region20: #{forward.1} parent=11 // pred_fallthru
          _
      $region12: #{forward.1} parent=5 // pred_fallthru
        _
      %p157 = scmp.lt.s32.totalorder %s16, 2
      // Predicated region
      $region21: #{forward.1} parent=5 // pred_check
        %p158 = pneg %p157
      $region22: #{forward.1} parent=5 // pred_check_branch
        %160 = sbr.rel (%p158) target = $region24
      $region23: #{forward.1} parent=5 // pred_region
        // Predicated region
        $region25: #{forward.1} parent=23 // pred_check
          %p161 = pneg %p57
        $region26: #{forward.1} parent=23 // pred_check_branch
          %163 = sbr.rel (%p161) target = $region28
        $region27: #{forward.1} parent=23 // pred_region
          %s164 = sand.u32 %s47, 1
          %s165 = scalar_lea.sflag [#allocation3], %s164
          %s166 = sand.u32 %s47, 1
          %s167 = smul.addr %s166, 4536
          %s168 = scalar_lea.vmem [#allocation2], %s167
          %s169 = smul.u32 27, %s16
          %s171 = ssub.s32 72576, 72576
          %172 = vsyncadd %s165, %s171
          %s173 = smul.addr %s169, 32
          %s174 = scalar_lea.hbm %s1, %s173
          %s175 = sshll.u32 %s168, 4
          %s176 = int_to_ptr.vmem [resolvable:$true] %s175
          %181 = dma.hbm_to_vmem [thread:$0]  %s174, 72576, %s176, %s165, 1728, 864, 54
        $region28: #{forward.1} parent=23 // pred_fallthru
          _
        // Predicated region
        $region29: #{forward.1} parent=23 // pred_check
          %p182 = pneg %p83
        $region30: #{forward.1} parent=23 // pred_check_branch
          %184 = sbr.rel (%p182) target = $region32
        $region31: #{forward.1} parent=23 // pred_region
          %s185 = sand.u32 %s73, 1
          %s186 = scalar_lea.sflag [#allocation5], %s185
          %s187 = sand.u32 %s73, 1
          %s188 = smul.addr %s187, 324
          %s189 = scalar_lea.vmem [#allocation4], %s188
          %s190 = smul.u32 27, %s16
          %s192 = ssub.s32 5184, 5184
          %193 = vsyncadd %s186, %s192
          %s194 = smul.addr %s190, 64
          %s195 = scalar_lea.hbm %s2, %s194
          %s196 = sshll.u32 %s189, 4
          %s197 = int_to_ptr.vmem [resolvable:$true] %s196
          %202 = dma.hbm_to_vmem [thread:$0]  %s195, 5184, %s197, %s186, 3456, 1728, 108
        $region32: #{forward.1} parent=23 // pred_fallthru
          _
      $region24: #{forward.1} parent=5 // pred_fallthru
        _
      %p203 = scmp.le.s32.totalorder 1, %s16
      %p204 = scmp.lt.s32.totalorder %s16, 3
      %p205 = pnand %p203, %p204
      %p206 = pneg %p205
      // Predicated region
      $region33: #{forward.1} parent=5 // pred_check
        _
      $region34: #{forward.1} parent=5 // pred_check_branch
        %208 = sbr.rel (%p205) target = $region36
      $region35: #{forward.1} parent=5 // pred_region
        %s209 = ssub.s32 %s16, 1
        %s210 = sand.u32 %s50, 1
        %s211 = scalar_lea.sflag [#allocation3], %s210
        %s212 = sand.u32 %s50, 1
        %s213 = smul.addr %s212, 4536
        %s214 = scalar_lea.vmem [#allocation2], %s213
        // Predicated region
        $region37: #{forward.1} parent=35 // pred_check
          %p215 = pneg %p63
        $region38: #{forward.1} parent=35 // pred_check_branch
          %217 = sbr.rel (%p215) target = $region40
        $region39: #{forward.1} parent=35 // pred_region
          %218 = dma.done %s211, 72576
        $region40: #{forward.1} parent=35 // pred_fallthru
          _
        %s219 = sand.u32 %s76, 1
        %s220 = scalar_lea.sflag [#allocation5], %s219
        %s221 = sand.u32 %s76, 1
        %s222 = smul.addr %s221, 324
        %s223 = scalar_lea.vmem [#allocation4], %s222
        // Predicated region
        $region41: #{forward.1} parent=35 // pred_check
          %p224 = pneg %p89
        $region42: #{forward.1} parent=35 // pred_check_branch
          %226 = sbr.rel (%p224) target = $region44
        $region43: #{forward.1} parent=35 // pred_region
          %227 = dma.done %s220, 5184
        $region44: #{forward.1} parent=35 // pred_fallthru
          _
        %p228 = pneg %p37
        %p229 = pneg %p34
        %s230 = sand.u32 %s50, 1
        %s231 = scalar_lea.sflag [#allocation3], %s230
        %s232 = sand.u32 %s50, 1
        %s233 = smul.addr %s232, 4536
        %s234 = scalar_lea.vmem [#allocation2], %s233
        %p235 = pneg %p63
        %p236 = pneg %p60
        %s237 = sand.u32 %s76, 1
        %s238 = scalar_lea.sflag [#allocation5], %s237
        %s239 = sand.u32 %s76, 1
        %s240 = smul.addr %s239, 324
        %s241 = scalar_lea.vmem [#allocation4], %s240
        %p242 = pneg %p89
        %p243 = pneg %p86
        %p244 = pneg %p110
        %p245 = pneg %p107
        %p246 = pneg %p136
        %p247 = pneg %p133
        %s248 = sand.u32 %s123, 1
        %s249 = sand.u32 %s123, 1
        %s250 = smul.addr %s249, 162
        %s251 = scalar_lea.vmem [#allocation6], %s250
        %s252 = smul.u32 27, %s21
        %s253 = smul.u32 27, %s21
        %s254 = smul.u32 27, %s21
        %v256 = vld [vmem:[%s0] sm:$0xf]
        %v257 = vld [vmem:[%s0 + $0x4] sm:$0xf]
        %v258 = vld [vmem:[%s0 + $0x8] sm:$0xf]
        %v263 = vunpack.c.l.s4 1983009808
        %v264 = vunpack.c.0.s8 %v263
        %v265 = vlaneseq
        %v266 = vshrl.u32 %v265, 7
        %v267 = vsub.s32 %v264, %v266
        %v268 = vrot.slane %v256, %v267
        %v269 = vcombine.high %v268, %v268
        %v271 = vunpack.c.l.s4 1983009808
        %v272 = vunpack.c.0.s8 %v271
        %v273 = vlaneseq
        %v274 = vshrl.u32 %v273, 7
        %v275 = vsub.s32 %v272, %v274
        %v276 = vrot.slane %v257, %v275
        %v277 = vcombine.high %v276, %v276
        %v279 = vunpack.c.l.s4 1983009808
        %v280 = vunpack.c.0.s8 %v279
        %v281 = vlaneseq
        %v282 = vshrl.u32 %v281, 7
        %v283 = vsub.s32 %v280, %v282
        %v284 = vrot.slane %v258, %v283
        %v285 = vcombine.high %v284, %v284
        %v292 = vpack.c.bf16 %v268, %v268
        %v293 = vpack.c.bf16 %v269, %v269
        %v294 = vpack.c.bf16 %v276, %v276
        %v295 = vpack.c.bf16 %v277, %v277
        %v296 = vpack.c.bf16 %v284, %v284
        %v297 = vpack.c.bf16 %v285, %v285
        %v298 = vld [vmem:[%s214] sm:$0xff]
        %v299 = vld [vmem:[%s214 + $0x8] sm:$0xff]
        %v300 = vld [vmem:[%s214 + $0x10] sm:$0xff]
        %v301 = vld [vmem:[%s214 + $0x18] sm:$0xff]
        %v302 = vld [vmem:[%s214 + $0x20] sm:$0xff]
        %v303 = vld [vmem:[%s214 + $0x28] sm:$0xff]
        %v304 = vld [vmem:[%s214 + $0x30] sm:$0x3f]
        %v305 = vld [vmem:[%s214 + $0x36] sm:$0xff]
        %v306 = vld [vmem:[%s214 + $0x3e] sm:$0xff]
        %v307 = vld [vmem:[%s214 + $0x46] sm:$0xff]
        %v308 = vld [vmem:[%s214 + $0x4e] sm:$0xff]
        %v309 = vld [vmem:[%s214 + $0x56] sm:$0xff]
        %v310 = vld [vmem:[%s214 + $0x5e] sm:$0xff]
        %v311 = vld [vmem:[%s214 + $0x66] sm:$0x3f]
        %v312 = vld [vmem:[%s214 + $0x6c] sm:$0xff]
        %v313 = vld [vmem:[%s214 + $0x74] sm:$0xff]
        %v314 = vld [vmem:[%s214 + $0x7c] sm:$0xff]
        %v315 = vld [vmem:[%s214 + $0x84] sm:$0xff]
        %v316 = vld [vmem:[%s214 + $0x8c] sm:$0xff]
        %v317 = vld [vmem:[%s214 + $0x94] sm:$0xff]
        %v318 = vld [vmem:[%s214 + $0x9c] sm:$0x3f]
        %v319 = vld [vmem:[%s214 + $0xa2] sm:$0xff]
        %v320 = vld [vmem:[%s214 + $0xaa] sm:$0xff]
        %v321 = vld [vmem:[%s214 + $0xb2] sm:$0xff]
        %v322 = vld [vmem:[%s214 + $0xba] sm:$0xff]
        %v323 = vld [vmem:[%s214 + $0xc2] sm:$0xff]
        %v324 = vld [vmem:[%s214 + $0xca] sm:$0xff]
        %v325 = vld [vmem:[%s214 + $0xd2] sm:$0x3f]
        %v326 = vld [vmem:[%s214 + $0xd8] sm:$0xff]
        %v327 = vld [vmem:[%s214 + $0xe0] sm:$0xff]
        %v328 = vld [vmem:[%s214 + $0xe8] sm:$0xff]
        %v329 = vld [vmem:[%s214 + $0xf0] sm:$0xff]
        %v330 = vld [vmem:[%s214 + $0xf8] sm:$0xff]
        %v331 = vld [vmem:[%s214 + $0x100] sm:$0xff]
        %v332 = vld [vmem:[%s214 + $0x108] sm:$0x3f]
        %v333 = vld [vmem:[%s214 + $0x10e] sm:$0xff]
        %v334 = vld [vmem:[%s214 + $0x116] sm:$0xff]
        %v335 = vld [vmem:[%s214 + $0x11e] sm:$0xff]
        %v336 = vld [vmem:[%s214 + $0x126] sm:$0xff]
        %v337 = vld [vmem:[%s214 + $0x12e] sm:$0xff]
        %v338 = vld [vmem:[%s214 + $0x136] sm:$0xff]
        %v339 = vld [vmem:[%s214 + $0x13e] sm:$0x3f]
        %v340 = vld [vmem:[%s214 + $0x144] sm:$0xff]
        %v341 = vld [vmem:[%s214 + $0x14c] sm:$0xff]
        %v342 = vld [vmem:[%s214 + $0x154] sm:$0xff]
        %v343 = vld [vmem:[%s214 + $0x15c] sm:$0xff]
        %v344 = vld [vmem:[%s214 + $0x164] sm:$0xff]
        %v345 = vld [vmem:[%s214 + $0x16c] sm:$0xff]
        %v346 = vld [vmem:[%s214 + $0x174] sm:$0x3f]
        %v347 = vld [vmem:[%s214 + $0x17a] sm:$0xff]
        %v348 = vld [vmem:[%s214 + $0x182] sm:$0xff]
        %v349 = vld [vmem:[%s214 + $0x18a] sm:$0xff]
        %v350 = vld [vmem:[%s214 + $0x192] sm:$0xff]
        %v351 = vld [vmem:[%s214 + $0x19a] sm:$0xff]
        %v352 = vld [vmem:[%s214 + $0x1a2] sm:$0xff]
        %v353 = vld [vmem:[%s214 + $0x1aa] sm:$0x3f]
        %v354 = vld [vmem:[%s214 + $0x1b0] sm:$0xff]
        %v355 = vld [vmem:[%s214 + $0x1b8] sm:$0xff]
        %v356 = vld [vmem:[%s214 + $0x1c0] sm:$0xff]
        %v357 = vld [vmem:[%s214 + $0x1c8] sm:$0xff]
        %v358 = vld [vmem:[%s214 + $0x1d0] sm:$0xff]
        %v359 = vld [vmem:[%s214 + $0x1d8] sm:$0xff]
        %v360 = vld [vmem:[%s214 + $0x1e0] sm:$0x3f]
        %v361 = vld [vmem:[%s214 + $0x1e6] sm:$0xff]
        %v362 = vld [vmem:[%s214 + $0x1ee] sm:$0xff]
        %v363 = vld [vmem:[%s214 + $0x1f6] sm:$0xff]
        %v364 = vld [vmem:[%s214 + $0x1fe] sm:$0xff]
        %v365 = vld [vmem:[%s214 + $0x206] sm:$0xff]
        %v366 = vld [vmem:[%s214 + $0x20e] sm:$0xff]
        %v367 = vld [vmem:[%s214 + $0x216] sm:$0x3f]
        %v368 = vld [vmem:[%s214 + $0x21c] sm:$0xff]
        %v369 = vld [vmem:[%s214 + $0x224] sm:$0xff]
        %v370 = vld [vmem:[%s214 + $0x22c] sm:$0xff]
        %v371 = vld [vmem:[%s214 + $0x234] sm:$0xff]
        %v372 = vld [vmem:[%s214 + $0x23c] sm:$0xff]
        %v373 = vld [vmem:[%s214 + $0x244] sm:$0xff]
        %v374 = vld [vmem:[%s214 + $0x24c] sm:$0x3f]
        %v375 = vld [vmem:[%s214 + $0x252] sm:$0xff]
        %v376 = vld [vmem:[%s214 + $0x25a] sm:$0xff]
        %v377 = vld [vmem:[%s214 + $0x262] sm:$0xff]
        %v378 = vld [vmem:[%s214 + $0x26a] sm:$0xff]
        %v379 = vld [vmem:[%s214 + $0x272] sm:$0xff]
        %v380 = vld [vmem:[%s214 + $0x27a] sm:$0xff]
        %v381 = vld [vmem:[%s214 + $0x282] sm:$0x3f]
        %v382 = vld [vmem:[%s214 + $0x288] sm:$0xff]
        %v383 = vld [vmem:[%s214 + $0x290] sm:$0xff]
        %v384 = vld [vmem:[%s214 + $0x298] sm:$0xff]
        %v385 = vld [vmem:[%s214 + $0x2a0] sm:$0xff]
        %v386 = vld [vmem:[%s214 + $0x2a8] sm:$0xff]
        %v387 = vld [vmem:[%s214 + $0x2b0] sm:$0xff]
        %v388 = vld [vmem:[%s214 + $0x2b8] sm:$0x3f]
        %v389 = vld [vmem:[%s214 + $0x2be] sm:$0xff]
        %v390 = vld [vmem:[%s214 + $0x2c6] sm:$0xff]
        %v391 = vld [vmem:[%s214 + $0x2ce] sm:$0xff]
        %v392 = vld [vmem:[%s214 + $0x2d6] sm:$0xff]
        %v393 = vld [vmem:[%s214 + $0x2de] sm:$0xff]
        %v394 = vld [vmem:[%s214 + $0x2e6] sm:$0xff]
        %v395 = vld [vmem:[%s214 + $0x2ee] sm:$0x3f]
        %v396 = vld [vmem:[%s214 + $0x2f4] sm:$0xff]
        %v397 = vld [vmem:[%s214 + $0x2fc] sm:$0xff]
        %v398 = vld [vmem:[%s214 + $0x304] sm:$0xff]
        %v399 = vld [vmem:[%s214 + $0x30c] sm:$0xff]
        %v400 = vld [vmem:[%s214 + $0x314] sm:$0xff]
        %v401 = vld [vmem:[%s214 + $0x31c] sm:$0xff]
        %v402 = vld [vmem:[%s214 + $0x324] sm:$0x3f]
        %v403 = vld [vmem:[%s214 + $0x32a] sm:$0xff]
        %v404 = vld [vmem:[%s214 + $0x332] sm:$0xff]
        %v405 = vld [vmem:[%s214 + $0x33a] sm:$0xff]
        %v406 = vld [vmem:[%s214 + $0x342] sm:$0xff]
        %v407 = vld [vmem:[%s214 + $0x34a] sm:$0xff]
        %v408 = vld [vmem:[%s214 + $0x352] sm:$0xff]
        %v409 = vld [vmem:[%s214 + $0x35a] sm:$0x3f]
        %v410 = vld [vmem:[%s214 + $0x360] sm:$0xff]
        %v411 = vld [vmem:[%s214 + $0x368] sm:$0xff]
        %v412 = vld [vmem:[%s214 + $0x370] sm:$0xff]
        %v413 = vld [vmem:[%s214 + $0x378] sm:$0xff]
        %v414 = vld [vmem:[%s214 + $0x380] sm:$0xff]
        %v415 = vld [vmem:[%s214 + $0x388] sm:$0xff]
        %v416 = vld [vmem:[%s214 + $0x390] sm:$0x3f]
        %v417 = vld [vmem:[%s214 + $0x396] sm:$0xff]
        %v418 = vld [vmem:[%s214 + $0x39e] sm:$0xff]
        %v419 = vld [vmem:[%s214 + $0x3a6] sm:$0xff]
        %v420 = vld [vmem:[%s214 + $0x3ae] sm:$0xff]
        %v421 = vld [vmem:[%s214 + $0x3b6] sm:$0xff]
        %v422 = vld [vmem:[%s214 + $0x3be] sm:$0xff]
        %v423 = vld [vmem:[%s214 + $0x3c6] sm:$0x3f]
        %v424 = vld [vmem:[%s214 + $0x3cc] sm:$0xff]
        %v425 = vld [vmem:[%s214 + $0x3d4] sm:$0xff]
        %v426 = vld [vmem:[%s214 + $0x3dc] sm:$0xff]
        %v427 = vld [vmem:[%s214 + $0x3e4] sm:$0xff]
        %v428 = vld [vmem:[%s214 + $0x3ec] sm:$0xff]
        %v429 = vld [vmem:[%s214 + $0x3f4] sm:$0xff]
        %v430 = vld [vmem:[%s214 + $0x3fc] sm:$0x3f]
        %v431 = vld [vmem:[%s214 + $0x402] sm:$0xff]
        %v432 = vld [vmem:[%s214 + $0x40a] sm:$0xff]
        %v433 = vld [vmem:[%s214 + $0x412] sm:$0xff]
        %v434 = vld [vmem:[%s214 + $0x41a] sm:$0xff]
        %v435 = vld [vmem:[%s214 + $0x422] sm:$0xff]
        %v436 = vld [vmem:[%s214 + $0x42a] sm:$0xff]
        %v437 = vld [vmem:[%s214 + $0x432] sm:$0x3f]
        %v438 = vld [vmem:[%s214 + $0x438] sm:$0xff]
        %v439 = vld [vmem:[%s214 + $0x440] sm:$0xff]
        %v440 = vld [vmem:[%s214 + $0x448] sm:$0xff]
        %v441 = vld [vmem:[%s214 + $0x450] sm:$0xff]
        %v442 = vld [vmem:[%s214 + $0x458] sm:$0xff]
        %v443 = vld [vmem:[%s214 + $0x460] sm:$0xff]
        %v444 = vld [vmem:[%s214 + $0x468] sm:$0x3f]
        %v445 = vld [vmem:[%s214 + $0x46e] sm:$0xff]
        %v446 = vld [vmem:[%s214 + $0x476] sm:$0xff]
        %v447 = vld [vmem:[%s214 + $0x47e] sm:$0xff]
        %v448 = vld [vmem:[%s214 + $0x486] sm:$0xff]
        %v449 = vld [vmem:[%s214 + $0x48e] sm:$0xff]
        %v450 = vld [vmem:[%s214 + $0x496] sm:$0xff]
        %v451 = vld [vmem:[%s214 + $0x49e] sm:$0x3f]
        %v452 = vld [vmem:[%s214 + $0x4a4] sm:$0xff]
        %v453 = vld [vmem:[%s214 + $0x4ac] sm:$0xff]
        %v454 = vld [vmem:[%s214 + $0x4b4] sm:$0xff]
        %v455 = vld [vmem:[%s214 + $0x4bc] sm:$0xff]
        %v456 = vld [vmem:[%s214 + $0x4c4] sm:$0xff]
        %v457 = vld [vmem:[%s214 + $0x4cc] sm:$0xff]
        %v458 = vld [vmem:[%s214 + $0x4d4] sm:$0x3f]
        %v459 = vld [vmem:[%s214 + $0x4da] sm:$0xff]
        %v460 = vld [vmem:[%s214 + $0x4e2] sm:$0xff]
        %v461 = vld [vmem:[%s214 + $0x4ea] sm:$0xff]
        %v462 = vld [vmem:[%s214 + $0x4f2] sm:$0xff]
        %v463 = vld [vmem:[%s214 + $0x4fa] sm:$0xff]
        %v464 = vld [vmem:[%s214 + $0x502] sm:$0xff]
        %v465 = vld [vmem:[%s214 + $0x50a] sm:$0x3f]
        %v466 = vld [vmem:[%s214 + $0x510] sm:$0xff]
        %v467 = vld [vmem:[%s214 + $0x518] sm:$0xff]
        %v468 = vld [vmem:[%s214 + $0x520] sm:$0xff]
        %v469 = vld [vmem:[%s214 + $0x528] sm:$0xff]
        %v470 = vld [vmem:[%s214 + $0x530] sm:$0xff]
        %v471 = vld [vmem:[%s214 + $0x538] sm:$0xff]
        %v472 = vld [vmem:[%s214 + $0x540] sm:$0x3f]
        %v473 = vld [vmem:[%s214 + $0x546] sm:$0xff]
        %v474 = vld [vmem:[%s214 + $0x54e] sm:$0xff]
        %v475 = vld [vmem:[%s214 + $0x556] sm:$0xff]
        %v476 = vld [vmem:[%s214 + $0x55e] sm:$0xff]
        %v477 = vld [vmem:[%s214 + $0x566] sm:$0xff]
        %v478 = vld [vmem:[%s214 + $0x56e] sm:$0xff]
        %v479 = vld [vmem:[%s214 + $0x576] sm:$0x3f]
        %v480 = vld [vmem:[%s214 + $0x57c] sm:$0xff]
        %v481 = vld [vmem:[%s214 + $0x584] sm:$0xff]
        %v482 = vld [vmem:[%s214 + $0x58c] sm:$0xff]
        %v483 = vld [vmem:[%s214 + $0x594] sm:$0xff]
        %v484 = vld [vmem:[%s214 + $0x59c] sm:$0xff]
        %v485 = vld [vmem:[%s214 + $0x5a4] sm:$0xff]
        %v486 = vld [vmem:[%s214 + $0x5ac] sm:$0x3f]
        %v487 = vld [vmem:[%s214 + $0x5b2] sm:$0x55]
        %v488 = vld [vmem:[%s214 + $0x5ba] sm:$0x55]
        %v489 = vld [vmem:[%s214 + $0x5c2] sm:$0x55]
        %v490 = vld [vmem:[%s214 + $0x5ca] sm:$0x55]
        %v491 = vld [vmem:[%s214 + $0x5d2] sm:$0x55]
        %v492 = vld [vmem:[%s214 + $0x5da] sm:$0x55]
        %v493 = vld [vmem:[%s214 + $0x5e2] sm:$0x15]
        %v494 = vunpack.c.l.s8.bf16 %v298
        %v495 = vunpack.c.h.s8.bf16 %v298
        %v496 = vunpack.c.l.s8.bf16 %v299
        %v497 = vunpack.c.h.s8.bf16 %v299
        %v498 = vunpack.c.l.s8.bf16 %v300
        %v499 = vunpack.c.h.s8.bf16 %v300
        %v500 = vunpack.c.l.s8.bf16 %v301
        %v501 = vunpack.c.h.s8.bf16 %v301
        %v502 = vunpack.c.l.s8.bf16 %v302
        %v503 = vunpack.c.h.s8.bf16 %v302
        %v504 = vunpack.c.l.s8.bf16 %v303
        %v505 = vunpack.c.h.s8.bf16 %v303
        %v506 = vunpack.c.l.s8.bf16 %v304
        %v507 = vunpack.c.h.s8.bf16 %v304
        %v508 = vunpack.c.l.s8.bf16 %v305
        %v509 = vunpack.c.h.s8.bf16 %v305
        %v510 = vunpack.c.l.s8.bf16 %v306
        %v511 = vunpack.c.h.s8.bf16 %v306
        %v512 = vunpack.c.l.s8.bf16 %v307
        %v513 = vunpack.c.h.s8.bf16 %v307
        %v514 = vunpack.c.l.s8.bf16 %v308
        %v515 = vunpack.c.h.s8.bf16 %v308
        %v516 = vunpack.c.l.s8.bf16 %v309
        %v517 = vunpack.c.h.s8.bf16 %v309
        %v518 = vunpack.c.l.s8.bf16 %v310
        %v519 = vunpack.c.h.s8.bf16 %v310
        %v520 = vunpack.c.l.s8.bf16 %v311
        %v521 = vunpack.c.h.s8.bf16 %v311
        %v522 = vunpack.c.l.s8.bf16 %v312
        %v523 = vunpack.c.h.s8.bf16 %v312
        %v524 = vunpack.c.l.s8.bf16 %v313
        %v525 = vunpack.c.h.s8.bf16 %v313
        %v526 = vunpack.c.l.s8.bf16 %v314
        %v527 = vunpack.c.h.s8.bf16 %v314
        %v528 = vunpack.c.l.s8.bf16 %v315
        %v529 = vunpack.c.h.s8.bf16 %v315
        %v530 = vunpack.c.l.s8.bf16 %v316
        %v531 = vunpack.c.h.s8.bf16 %v316
        %v532 = vunpack.c.l.s8.bf16 %v317
        %v533 = vunpack.c.h.s8.bf16 %v317
        %v534 = vunpack.c.l.s8.bf16 %v318
        %v535 = vunpack.c.h.s8.bf16 %v318
        %v536 = vunpack.c.l.s8.bf16 %v319
        %v537 = vunpack.c.h.s8.bf16 %v319
        %v538 = vunpack.c.l.s8.bf16 %v320
        %v539 = vunpack.c.h.s8.bf16 %v320
        %v540 = vunpack.c.l.s8.bf16 %v321
        %v541 = vunpack.c.h.s8.bf16 %v321
        %v542 = vunpack.c.l.s8.bf16 %v322
        %v543 = vunpack.c.h.s8.bf16 %v322
        %v544 = vunpack.c.l.s8.bf16 %v323
        %v545 = vunpack.c.h.s8.bf16 %v323
        %v546 = vunpack.c.l.s8.bf16 %v324
        %v547 = vunpack.c.h.s8.bf16 %v324
        %v548 = vunpack.c.l.s8.bf16 %v325
        %v549 = vunpack.c.h.s8.bf16 %v325
        %v550 = vunpack.c.l.s8.bf16 %v326
        %v551 = vunpack.c.h.s8.bf16 %v326
        %v552 = vunpack.c.l.s8.bf16 %v327
        %v553 = vunpack.c.h.s8.bf16 %v327
        %v554 = vunpack.c.l.s8.bf16 %v328
        %v555 = vunpack.c.h.s8.bf16 %v328
        %v556 = vunpack.c.l.s8.bf16 %v329
        %v557 = vunpack.c.h.s8.bf16 %v329
        %v558 = vunpack.c.l.s8.bf16 %v330
        %v559 = vunpack.c.h.s8.bf16 %v330
        %v560 = vunpack.c.l.s8.bf16 %v331
        %v561 = vunpack.c.h.s8.bf16 %v331
        %v562 = vunpack.c.l.s8.bf16 %v332
        %v563 = vunpack.c.h.s8.bf16 %v332
        %v564 = vunpack.c.l.s8.bf16 %v333
        %v565 = vunpack.c.h.s8.bf16 %v333
        %v566 = vunpack.c.l.s8.bf16 %v334
        %v567 = vunpack.c.h.s8.bf16 %v334
        %v568 = vunpack.c.l.s8.bf16 %v335
        %v569 = vunpack.c.h.s8.bf16 %v335
        %v570 = vunpack.c.l.s8.bf16 %v336
        %v571 = vunpack.c.h.s8.bf16 %v336
        %v572 = vunpack.c.l.s8.bf16 %v337
        %v573 = vunpack.c.h.s8.bf16 %v337
        %v574 = vunpack.c.l.s8.bf16 %v338
        %v575 = vunpack.c.h.s8.bf16 %v338
        %v576 = vunpack.c.l.s8.bf16 %v339
        %v577 = vunpack.c.h.s8.bf16 %v339
        %v578 = vunpack.c.l.s8.bf16 %v340
        %v579 = vunpack.c.h.s8.bf16 %v340
        %v580 = vunpack.c.l.s8.bf16 %v341
        %v581 = vunpack.c.h.s8.bf16 %v341
        %v582 = vunpack.c.l.s8.bf16 %v342
        %v583 = vunpack.c.h.s8.bf16 %v342
        %v584 = vunpack.c.l.s8.bf16 %v343
        %v585 = vunpack.c.h.s8.bf16 %v343
        %v586 = vunpack.c.l.s8.bf16 %v344
        %v587 = vunpack.c.h.s8.bf16 %v344
        %v588 = vunpack.c.l.s8.bf16 %v345
        %v589 = vunpack.c.h.s8.bf16 %v345
        %v590 = vunpack.c.l.s8.bf16 %v346
        %v591 = vunpack.c.h.s8.bf16 %v346
        %v592 = vunpack.c.l.s8.bf16 %v347
        %v593 = vunpack.c.h.s8.bf16 %v347
        %v594 = vunpack.c.l.s8.bf16 %v348
        %v595 = vunpack.c.h.s8.bf16 %v348
        %v596 = vunpack.c.l.s8.bf16 %v349
        %v597 = vunpack.c.h.s8.bf16 %v349
        %v598 = vunpack.c.l.s8.bf16 %v350
        %v599 = vunpack.c.h.s8.bf16 %v350
        %v600 = vunpack.c.l.s8.bf16 %v351
        %v601 = vunpack.c.h.s8.bf16 %v351
        %v602 = vunpack.c.l.s8.bf16 %v352
        %v603 = vunpack.c.h.s8.bf16 %v352
        %v604 = vunpack.c.l.s8.bf16 %v353
        %v605 = vunpack.c.h.s8.bf16 %v353
        %v606 = vunpack.c.l.s8.bf16 %v354
        %v607 = vunpack.c.h.s8.bf16 %v354
        %v608 = vunpack.c.l.s8.bf16 %v355
        %v609 = vunpack.c.h.s8.bf16 %v355
        %v610 = vunpack.c.l.s8.bf16 %v356
        %v611 = vunpack.c.h.s8.bf16 %v356
        %v612 = vunpack.c.l.s8.bf16 %v357
        %v613 = vunpack.c.h.s8.bf16 %v357
        %v614 = vunpack.c.l.s8.bf16 %v358
        %v615 = vunpack.c.h.s8.bf16 %v358
        %v616 = vunpack.c.l.s8.bf16 %v359
        %v617 = vunpack.c.h.s8.bf16 %v359
        %v618 = vunpack.c.l.s8.bf16 %v360
        %v619 = vunpack.c.h.s8.bf16 %v360
        %v620 = vunpack.c.l.s8.bf16 %v361
        %v621 = vunpack.c.h.s8.bf16 %v361
        %v622 = vunpack.c.l.s8.bf16 %v362
        %v623 = vunpack.c.h.s8.bf16 %v362
        %v624 = vunpack.c.l.s8.bf16 %v363
        %v625 = vunpack.c.h.s8.bf16 %v363
        %v626 = vunpack.c.l.s8.bf16 %v364
        %v627 = vunpack.c.h.s8.bf16 %v364
        %v628 = vunpack.c.l.s8.bf16 %v365
        %v629 = vunpack.c.h.s8.bf16 %v365
        %v630 = vunpack.c.l.s8.bf16 %v366
        %v631 = vunpack.c.h.s8.bf16 %v366
        %v632 = vunpack.c.l.s8.bf16 %v367
        %v633 = vunpack.c.h.s8.bf16 %v367
        %v634 = vunpack.c.l.s8.bf16 %v368
        %v635 = vunpack.c.h.s8.bf16 %v368
        %v636 = vunpack.c.l.s8.bf16 %v369
        %v637 = vunpack.c.h.s8.bf16 %v369
        %v638 = vunpack.c.l.s8.bf16 %v370
        %v639 = vunpack.c.h.s8.bf16 %v370
        %v640 = vunpack.c.l.s8.bf16 %v371
        %v641 = vunpack.c.h.s8.bf16 %v371
        %v642 = vunpack.c.l.s8.bf16 %v372
        %v643 = vunpack.c.h.s8.bf16 %v372
        %v644 = vunpack.c.l.s8.bf16 %v373
        %v645 = vunpack.c.h.s8.bf16 %v373
        %v646 = vunpack.c.l.s8.bf16 %v374
        %v647 = vunpack.c.h.s8.bf16 %v374
        %v648 = vunpack.c.l.s8.bf16 %v375
        %v649 = vunpack.c.h.s8.bf16 %v375
        %v650 = vunpack.c.l.s8.bf16 %v376
        %v651 = vunpack.c.h.s8.bf16 %v376
        %v652 = vunpack.c.l.s8.bf16 %v377
        %v653 = vunpack.c.h.s8.bf16 %v377
        %v654 = vunpack.c.l.s8.bf16 %v378
        %v655 = vunpack.c.h.s8.bf16 %v378
        %v656 = vunpack.c.l.s8.bf16 %v379
        %v657 = vunpack.c.h.s8.bf16 %v379
        %v658 = vunpack.c.l.s8.bf16 %v380
        %v659 = vunpack.c.h.s8.bf16 %v380
        %v660 = vunpack.c.l.s8.bf16 %v381
        %v661 = vunpack.c.h.s8.bf16 %v381
        %v662 = vunpack.c.l.s8.bf16 %v382
        %v663 = vunpack.c.h.s8.bf16 %v382
        %v664 = vunpack.c.l.s8.bf16 %v383
        %v665 = vunpack.c.h.s8.bf16 %v383
        %v666 = vunpack.c.l.s8.bf16 %v384
        %v667 = vunpack.c.h.s8.bf16 %v384
        %v668 = vunpack.c.l.s8.bf16 %v385
        %v669 = vunpack.c.h.s8.bf16 %v385
        %v670 = vunpack.c.l.s8.bf16 %v386
        %v671 = vunpack.c.h.s8.bf16 %v386
        %v672 = vunpack.c.l.s8.bf16 %v387
        %v673 = vunpack.c.h.s8.bf16 %v387
        %v674 = vunpack.c.l.s8.bf16 %v388
        %v675 = vunpack.c.h.s8.bf16 %v388
        %v676 = vunpack.c.l.s8.bf16 %v389
        %v677 = vunpack.c.h.s8.bf16 %v389
        %v678 = vunpack.c.l.s8.bf16 %v390
        %v679 = vunpack.c.h.s8.bf16 %v390
        %v680 = vunpack.c.l.s8.bf16 %v391
        %v681 = vunpack.c.h.s8.bf16 %v391
        %v682 = vunpack.c.l.s8.bf16 %v392
        %v683 = vunpack.c.h.s8.bf16 %v392
        %v684 = vunpack.c.l.s8.bf16 %v393
        %v685 = vunpack.c.h.s8.bf16 %v393
        %v686 = vunpack.c.l.s8.bf16 %v394
        %v687 = vunpack.c.h.s8.bf16 %v394
        %v688 = vunpack.c.l.s8.bf16 %v395
        %v689 = vunpack.c.h.s8.bf16 %v395
        %v690 = vunpack.c.l.s8.bf16 %v396
        %v691 = vunpack.c.h.s8.bf16 %v396
        %v692 = vunpack.c.l.s8.bf16 %v397
        %v693 = vunpack.c.h.s8.bf16 %v397
        %v694 = vunpack.c.l.s8.bf16 %v398
        %v695 = vunpack.c.h.s8.bf16 %v398
        %v696 = vunpack.c.l.s8.bf16 %v399
        %v697 = vunpack.c.h.s8.bf16 %v399
        %v698 = vunpack.c.l.s8.bf16 %v400
        %v699 = vunpack.c.h.s8.bf16 %v400
        %v700 = vunpack.c.l.s8.bf16 %v401
        %v701 = vunpack.c.h.s8.bf16 %v401
        %v702 = vunpack.c.l.s8.bf16 %v402
        %v703 = vunpack.c.h.s8.bf16 %v402
        %v704 = vunpack.c.l.s8.bf16 %v403
        %v705 = vunpack.c.h.s8.bf16 %v403
        %v706 = vunpack.c.l.s8.bf16 %v404
        %v707 = vunpack.c.h.s8.bf16 %v404
        %v708 = vunpack.c.l.s8.bf16 %v405
        %v709 = vunpack.c.h.s8.bf16 %v405
        %v710 = vunpack.c.l.s8.bf16 %v406
        %v711 = vunpack.c.h.s8.bf16 %v406
        %v712 = vunpack.c.l.s8.bf16 %v407
        %v713 = vunpack.c.h.s8.bf16 %v407
        %v714 = vunpack.c.l.s8.bf16 %v408
        %v715 = vunpack.c.h.s8.bf16 %v408
        %v716 = vunpack.c.l.s8.bf16 %v409
        %v717 = vunpack.c.h.s8.bf16 %v409
        %v718 = vunpack.c.l.s8.bf16 %v410
        %v719 = vunpack.c.h.s8.bf16 %v410
        %v720 = vunpack.c.l.s8.bf16 %v411
        %v721 = vunpack.c.h.s8.bf16 %v411
        %v722 = vunpack.c.l.s8.bf16 %v412
        %v723 = vunpack.c.h.s8.bf16 %v412
        %v724 = vunpack.c.l.s8.bf16 %v413
        %v725 = vunpack.c.h.s8.bf16 %v413
        %v726 = vunpack.c.l.s8.bf16 %v414
        %v727 = vunpack.c.h.s8.bf16 %v414
        %v728 = vunpack.c.l.s8.bf16 %v415
        %v729 = vunpack.c.h.s8.bf16 %v415
        %v730 = vunpack.c.l.s8.bf16 %v416
        %v731 = vunpack.c.h.s8.bf16 %v416
        %v732 = vunpack.c.l.s8.bf16 %v417
        %v733 = vunpack.c.h.s8.bf16 %v417
        %v734 = vunpack.c.l.s8.bf16 %v418
        %v735 = vunpack.c.h.s8.bf16 %v418
        %v736 = vunpack.c.l.s8.bf16 %v419
        %v737 = vunpack.c.h.s8.bf16 %v419
        %v738 = vunpack.c.l.s8.bf16 %v420
        %v739 = vunpack.c.h.s8.bf16 %v420
        %v740 = vunpack.c.l.s8.bf16 %v421
        %v741 = vunpack.c.h.s8.bf16 %v421
        %v742 = vunpack.c.l.s8.bf16 %v422
        %v743 = vunpack.c.h.s8.bf16 %v422
        %v744 = vunpack.c.l.s8.bf16 %v423
        %v745 = vunpack.c.h.s8.bf16 %v423
        %v746 = vunpack.c.l.s8.bf16 %v424
        %v747 = vunpack.c.h.s8.bf16 %v424
        %v748 = vunpack.c.l.s8.bf16 %v425
        %v749 = vunpack.c.h.s8.bf16 %v425
        %v750 = vunpack.c.l.s8.bf16 %v426
        %v751 = vunpack.c.h.s8.bf16 %v426
        %v752 = vunpack.c.l.s8.bf16 %v427
        %v753 = vunpack.c.h.s8.bf16 %v427
        %v754 = vunpack.c.l.s8.bf16 %v428
        %v755 = vunpack.c.h.s8.bf16 %v428
        %v756 = vunpack.c.l.s8.bf16 %v429
        %v757 = vunpack.c.h.s8.bf16 %v429
        %v758 = vunpack.c.l.s8.bf16 %v430
        %v759 = vunpack.c.h.s8.bf16 %v430
        %v760 = vunpack.c.l.s8.bf16 %v431
        %v761 = vunpack.c.h.s8.bf16 %v431
        %v762 = vunpack.c.l.s8.bf16 %v432
        %v763 = vunpack.c.h.s8.bf16 %v432
        %v764 = vunpack.c.l.s8.bf16 %v433
        %v765 = vunpack.c.h.s8.bf16 %v433
        %v766 = vunpack.c.l.s8.bf16 %v434
        %v767 = vunpack.c.h.s8.bf16 %v434
        %v768 = vunpack.c.l.s8.bf16 %v435
        %v769 = vunpack.c.h.s8.bf16 %v435
        %v770 = vunpack.c.l.s8.bf16 %v436
        %v771 = vunpack.c.h.s8.bf16 %v436
        %v772 = vunpack.c.l.s8.bf16 %v437
        %v773 = vunpack.c.h.s8.bf16 %v437
        %v774 = vunpack.c.l.s8.bf16 %v438
        %v775 = vunpack.c.h.s8.bf16 %v438
        %v776 = vunpack.c.l.s8.bf16 %v439
        %v777 = vunpack.c.h.s8.bf16 %v439
        %v778 = vunpack.c.l.s8.bf16 %v440
        %v779 = vunpack.c.h.s8.bf16 %v440
        %v780 = vunpack.c.l.s8.bf16 %v441
        %v781 = vunpack.c.h.s8.bf16 %v441
        %v782 = vunpack.c.l.s8.bf16 %v442
        %v783 = vunpack.c.h.s8.bf16 %v442
        %v784 = vunpack.c.l.s8.bf16 %v443
        %v785 = vunpack.c.h.s8.bf16 %v443
        %v786 = vunpack.c.l.s8.bf16 %v444
        %v787 = vunpack.c.h.s8.bf16 %v444
        %v788 = vunpack.c.l.s8.bf16 %v445
        %v789 = vunpack.c.h.s8.bf16 %v445
        %v790 = vunpack.c.l.s8.bf16 %v446
        %v791 = vunpack.c.h.s8.bf16 %v446
        %v792 = vunpack.c.l.s8.bf16 %v447
        %v793 = vunpack.c.h.s8.bf16 %v447
        %v794 = vunpack.c.l.s8.bf16 %v448
        %v795 = vunpack.c.h.s8.bf16 %v448
        %v796 = vunpack.c.l.s8.bf16 %v449
        %v797 = vunpack.c.h.s8.bf16 %v449
        %v798 = vunpack.c.l.s8.bf16 %v450
        %v799 = vunpack.c.h.s8.bf16 %v450
        %v800 = vunpack.c.l.s8.bf16 %v451
        %v801 = vunpack.c.h.s8.bf16 %v451
        %v802 = vunpack.c.l.s8.bf16 %v452
        %v803 = vunpack.c.h.s8.bf16 %v452
        %v804 = vunpack.c.l.s8.bf16 %v453
        %v805 = vunpack.c.h.s8.bf16 %v453
        %v806 = vunpack.c.l.s8.bf16 %v454
        %v807 = vunpack.c.h.s8.bf16 %v454
        %v808 = vunpack.c.l.s8.bf16 %v455
        %v809 = vunpack.c.h.s8.bf16 %v455
        %v810 = vunpack.c.l.s8.bf16 %v456
        %v811 = vunpack.c.h.s8.bf16 %v456
        %v812 = vunpack.c.l.s8.bf16 %v457
        %v813 = vunpack.c.h.s8.bf16 %v457
        %v814 = vunpack.c.l.s8.bf16 %v458
        %v815 = vunpack.c.h.s8.bf16 %v458
        %v816 = vunpack.c.l.s8.bf16 %v459
        %v817 = vunpack.c.h.s8.bf16 %v459
        %v818 = vunpack.c.l.s8.bf16 %v460
        %v819 = vunpack.c.h.s8.bf16 %v460
        %v820 = vunpack.c.l.s8.bf16 %v461
        %v821 = vunpack.c.h.s8.bf16 %v461
        %v822 = vunpack.c.l.s8.bf16 %v462
        %v823 = vunpack.c.h.s8.bf16 %v462
        %v824 = vunpack.c.l.s8.bf16 %v463
        %v825 = vunpack.c.h.s8.bf16 %v463
        %v826 = vunpack.c.l.s8.bf16 %v464
        %v827 = vunpack.c.h.s8.bf16 %v464
        %v828 = vunpack.c.l.s8.bf16 %v465
        %v829 = vunpack.c.h.s8.bf16 %v465
        %v830 = vunpack.c.l.s8.bf16 %v466
        %v831 = vunpack.c.h.s8.bf16 %v466
        %v832 = vunpack.c.l.s8.bf16 %v467
        %v833 = vunpack.c.h.s8.bf16 %v467
        %v834 = vunpack.c.l.s8.bf16 %v468
        %v835 = vunpack.c.h.s8.bf16 %v468
        %v836 = vunpack.c.l.s8.bf16 %v469
        %v837 = vunpack.c.h.s8.bf16 %v469
        %v838 = vunpack.c.l.s8.bf16 %v470
        %v839 = vunpack.c.h.s8.bf16 %v470
        %v840 = vunpack.c.l.s8.bf16 %v471
        %v841 = vunpack.c.h.s8.bf16 %v471
        %v842 = vunpack.c.l.s8.bf16 %v472
        %v843 = vunpack.c.h.s8.bf16 %v472
        %v844 = vunpack.c.l.s8.bf16 %v473
        %v845 = vunpack.c.h.s8.bf16 %v473
        %v846 = vunpack.c.l.s8.bf16 %v474
        %v847 = vunpack.c.h.s8.bf16 %v474
        %v848 = vunpack.c.l.s8.bf16 %v475
        %v849 = vunpack.c.h.s8.bf16 %v475
        %v850 = vunpack.c.l.s8.bf16 %v476
        %v851 = vunpack.c.h.s8.bf16 %v476
        %v852 = vunpack.c.l.s8.bf16 %v477
        %v853 = vunpack.c.h.s8.bf16 %v477
        %v854 = vunpack.c.l.s8.bf16 %v478
        %v855 = vunpack.c.h.s8.bf16 %v478
        %v856 = vunpack.c.l.s8.bf16 %v479
        %v857 = vunpack.c.h.s8.bf16 %v479
        %v858 = vunpack.c.l.s8.bf16 %v480
        %v859 = vunpack.c.h.s8.bf16 %v480
        %v860 = vunpack.c.l.s8.bf16 %v481
        %v861 = vunpack.c.h.s8.bf16 %v481
        %v862 = vunpack.c.l.s8.bf16 %v482
        %v863 = vunpack.c.h.s8.bf16 %v482
        %v864 = vunpack.c.l.s8.bf16 %v483
        %v865 = vunpack.c.h.s8.bf16 %v483
        %v866 = vunpack.c.l.s8.bf16 %v484
        %v867 = vunpack.c.h.s8.bf16 %v484
        %v868 = vunpack.c.l.s8.bf16 %v485
        %v869 = vunpack.c.h.s8.bf16 %v485
        %v870 = vunpack.c.l.s8.bf16 %v486
        %v871 = vunpack.c.h.s8.bf16 %v486
        %v872 = vunpack.c.l.s8.bf16 %v487
        %v873 = vunpack.c.h.s8.bf16 %v487
        %v874 = vunpack.c.l.s8.bf16 %v488
        %v875 = vunpack.c.h.s8.bf16 %v488
        %v876 = vunpack.c.l.s8.bf16 %v489
        %v877 = vunpack.c.h.s8.bf16 %v489
        %v878 = vunpack.c.l.s8.bf16 %v490
        %v879 = vunpack.c.h.s8.bf16 %v490
        %v880 = vunpack.c.l.s8.bf16 %v491
        %v881 = vunpack.c.h.s8.bf16 %v491
        %v882 = vunpack.c.l.s8.bf16 %v492
        %v883 = vunpack.c.h.s8.bf16 %v492
        %v884 = vunpack.c.l.s8.bf16 %v493
        %v885 = vunpack.c.h.s8.bf16 %v493
        %v1278 = vunpack.c.l.b16 %v494
        %v1279 = vunpack.c.h.b16 %v494
        %v1280 = vunpack.c.l.b16 %v495
        %v1281 = vunpack.c.h.b16 %v495
        %v1282 = vunpack.c.l.b16 %v496
        %v1283 = vunpack.c.h.b16 %v496
        %v1284 = vunpack.c.l.b16 %v497
        %v1285 = vunpack.c.h.b16 %v497
        %v1286 = vunpack.c.l.b16 %v498
        %v1287 = vunpack.c.h.b16 %v498
        %v1288 = vunpack.c.l.b16 %v499
        %v1289 = vunpack.c.h.b16 %v499
        %v1290 = vunpack.c.l.b16 %v500
        %v1291 = vunpack.c.h.b16 %v500
        %v1292 = vunpack.c.l.b16 %v501
        %v1293 = vunpack.c.h.b16 %v501
        %v1294 = vunpack.c.l.b16 %v502
        %v1295 = vunpack.c.h.b16 %v502
        %v1296 = vunpack.c.l.b16 %v503
        %v1297 = vunpack.c.h.b16 %v503
        %v1298 = vunpack.c.l.b16 %v504
        %v1299 = vunpack.c.h.b16 %v504
        %v1300 = vunpack.c.l.b16 %v505
        %v1301 = vunpack.c.h.b16 %v505
        %v1302 = vunpack.c.l.b16 %v506
        %v1303 = vunpack.c.h.b16 %v506
        %v1304 = vunpack.c.l.b16 %v507
        %v1305 = vunpack.c.l.b16 %v508
        %v1306 = vunpack.c.h.b16 %v508
        %v1307 = vunpack.c.l.b16 %v509
        %v1308 = vunpack.c.h.b16 %v509
        %v1309 = vunpack.c.l.b16 %v510
        %v1310 = vunpack.c.h.b16 %v510
        %v1311 = vunpack.c.l.b16 %v511
        %v1312 = vunpack.c.h.b16 %v511
        %v1313 = vunpack.c.l.b16 %v512
        %v1314 = vunpack.c.h.b16 %v512
        %v1315 = vunpack.c.l.b16 %v513
        %v1316 = vunpack.c.h.b16 %v513
        %v1317 = vunpack.c.l.b16 %v514
        %v1318 = vunpack.c.h.b16 %v514
        %v1319 = vunpack.c.l.b16 %v515
        %v1320 = vunpack.c.h.b16 %v515
        %v1321 = vunpack.c.l.b16 %v516
        %v1322 = vunpack.c.h.b16 %v516
        %v1323 = vunpack.c.l.b16 %v517
        %v1324 = vunpack.c.h.b16 %v517
        %v1325 = vunpack.c.l.b16 %v518
        %v1326 = vunpack.c.h.b16 %v518
        %v1327 = vunpack.c.l.b16 %v519
        %v1328 = vunpack.c.h.b16 %v519
        %v1329 = vunpack.c.l.b16 %v520
        %v1330 = vunpack.c.h.b16 %v520
        %v1331 = vunpack.c.l.b16 %v521
        %v1332 = vunpack.c.l.b16 %v522
        %v1333 = vunpack.c.h.b16 %v522
        %v1334 = vunpack.c.l.b16 %v523
        %v1335 = vunpack.c.h.b16 %v523
        %v1336 = vunpack.c.l.b16 %v524
        %v1337 = vunpack.c.h.b16 %v524
        %v1338 = vunpack.c.l.b16 %v525
        %v1339 = vunpack.c.h.b16 %v525
        %v1340 = vunpack.c.l.b16 %v526
        %v1341 = vunpack.c.h.b16 %v526
        %v1342 = vunpack.c.l.b16 %v527
        %v1343 = vunpack.c.h.b16 %v527
        %v1344 = vunpack.c.l.b16 %v528
        %v1345 = vunpack.c.h.b16 %v528
        %v1346 = vunpack.c.l.b16 %v529
        %v1347 = vunpack.c.h.b16 %v529
        %v1348 = vunpack.c.l.b16 %v530
        %v1349 = vunpack.c.h.b16 %v530
        %v1350 = vunpack.c.l.b16 %v531
        %v1351 = vunpack.c.h.b16 %v531
        %v1352 = vunpack.c.l.b16 %v532
        %v1353 = vunpack.c.h.b16 %v532
        %v1354 = vunpack.c.l.b16 %v533
        %v1355 = vunpack.c.h.b16 %v533
        %v1356 = vunpack.c.l.b16 %v534
        %v1357 = vunpack.c.h.b16 %v534
        %v1358 = vunpack.c.l.b16 %v535
        %v1359 = vunpack.c.l.b16 %v536
        %v1360 = vunpack.c.h.b16 %v536
        %v1361 = vunpack.c.l.b16 %v537
        %v1362 = vunpack.c.h.b16 %v537
        %v1363 = vunpack.c.l.b16 %v538
        %v1364 = vunpack.c.h.b16 %v538
        %v1365 = vunpack.c.l.b16 %v539
        %v1366 = vunpack.c.h.b16 %v539
        %v1367 = vunpack.c.l.b16 %v540
        %v1368 = vunpack.c.h.b16 %v540
        %v1369 = vunpack.c.l.b16 %v541
        %v1370 = vunpack.c.h.b16 %v541
        %v1371 = vunpack.c.l.b16 %v542
        %v1372 = vunpack.c.h.b16 %v542
        %v1373 = vunpack.c.l.b16 %v543
        %v1374 = vunpack.c.h.b16 %v543
        %v1375 = vunpack.c.l.b16 %v544
        %v1376 = vunpack.c.h.b16 %v544
        %v1377 = vunpack.c.l.b16 %v545
        %v1378 = vunpack.c.h.b16 %v545
        %v1379 = vunpack.c.l.b16 %v546
        %v1380 = vunpack.c.h.b16 %v546
        %v1381 = vunpack.c.l.b16 %v547
        %v1382 = vunpack.c.h.b16 %v547
        %v1383 = vunpack.c.l.b16 %v548
        %v1384 = vunpack.c.h.b16 %v548
        %v1385 = vunpack.c.l.b16 %v549
        %v1386 = vunpack.c.l.b16 %v550
        %v1387 = vunpack.c.h.b16 %v550
        %v1388 = vunpack.c.l.b16 %v551
        %v1389 = vunpack.c.h.b16 %v551
        %v1390 = vunpack.c.l.b16 %v552
        %v1391 = vunpack.c.h.b16 %v552
        %v1392 = vunpack.c.l.b16 %v553
        %v1393 = vunpack.c.h.b16 %v553
        %v1394 = vunpack.c.l.b16 %v554
        %v1395 = vunpack.c.h.b16 %v554
        %v1396 = vunpack.c.l.b16 %v555
        %v1397 = vunpack.c.h.b16 %v555
        %v1398 = vunpack.c.l.b16 %v556
        %v1399 = vunpack.c.h.b16 %v556
        %v1400 = vunpack.c.l.b16 %v557
        %v1401 = vunpack.c.h.b16 %v557
        %v1402 = vunpack.c.l.b16 %v558
        %v1403 = vunpack.c.h.b16 %v558
        %v1404 = vunpack.c.l.b16 %v559
        %v1405 = vunpack.c.h.b16 %v559
        %v1406 = vunpack.c.l.b16 %v560
        %v1407 = vunpack.c.h.b16 %v560
        %v1408 = vunpack.c.l.b16 %v561
        %v1409 = vunpack.c.h.b16 %v561
        %v1410 = vunpack.c.l.b16 %v562
        %v1411 = vunpack.c.h.b16 %v562
        %v1412 = vunpack.c.l.b16 %v563
        %v1413 = vunpack.c.l.b16 %v564
        %v1414 = vunpack.c.h.b16 %v564
        %v1415 = vunpack.c.l.b16 %v565
        %v1416 = vunpack.c.h.b16 %v565
        %v1417 = vunpack.c.l.b16 %v566
        %v1418 = vunpack.c.h.b16 %v566
        %v1419 = vunpack.c.l.b16 %v567
        %v1420 = vunpack.c.h.b16 %v567
        %v1421 = vunpack.c.l.b16 %v568
        %v1422 = vunpack.c.h.b16 %v568
        %v1423 = vunpack.c.l.b16 %v569
        %v1424 = vunpack.c.h.b16 %v569
        %v1425 = vunpack.c.l.b16 %v570
        %v1426 = vunpack.c.h.b16 %v570
        %v1427 = vunpack.c.l.b16 %v571
        %v1428 = vunpack.c.h.b16 %v571
        %v1429 = vunpack.c.l.b16 %v572
        %v1430 = vunpack.c.h.b16 %v572
        %v1431 = vunpack.c.l.b16 %v573
        %v1432 = vunpack.c.h.b16 %v573
        %v1433 = vunpack.c.l.b16 %v574
        %v1434 = vunpack.c.h.b16 %v574
        %v1435 = vunpack.c.l.b16 %v575
        %v1436 = vunpack.c.h.b16 %v575
        %v1437 = vunpack.c.l.b16 %v576
        %v1438 = vunpack.c.h.b16 %v576
        %v1439 = vunpack.c.l.b16 %v577
        %v1440 = vunpack.c.l.b16 %v578
        %v1441 = vunpack.c.h.b16 %v578
        %v1442 = vunpack.c.l.b16 %v579
        %v1443 = vunpack.c.h.b16 %v579
        %v1444 = vunpack.c.l.b16 %v580
        %v1445 = vunpack.c.h.b16 %v580
        %v1446 = vunpack.c.l.b16 %v581
        %v1447 = vunpack.c.h.b16 %v581
        %v1448 = vunpack.c.l.b16 %v582
        %v1449 = vunpack.c.h.b16 %v582
        %v1450 = vunpack.c.l.b16 %v583
        %v1451 = vunpack.c.h.b16 %v583
        %v1452 = vunpack.c.l.b16 %v584
        %v1453 = vunpack.c.h.b16 %v584
        %v1454 = vunpack.c.l.b16 %v585
        %v1455 = vunpack.c.h.b16 %v585
        %v1456 = vunpack.c.l.b16 %v586
        %v1457 = vunpack.c.h.b16 %v586
        %v1458 = vunpack.c.l.b16 %v587
        %v1459 = vunpack.c.h.b16 %v587
        %v1460 = vunpack.c.l.b16 %v588
        %v1461 = vunpack.c.h.b16 %v588
        %v1462 = vunpack.c.l.b16 %v589
        %v1463 = vunpack.c.h.b16 %v589
        %v1464 = vunpack.c.l.b16 %v590
        %v1465 = vunpack.c.h.b16 %v590
        %v1466 = vunpack.c.l.b16 %v591
        %v1467 = vunpack.c.l.b16 %v592
        %v1468 = vunpack.c.h.b16 %v592
        %v1469 = vunpack.c.l.b16 %v593
        %v1470 = vunpack.c.h.b16 %v593
        %v1471 = vunpack.c.l.b16 %v594
        %v1472 = vunpack.c.h.b16 %v594
        %v1473 = vunpack.c.l.b16 %v595
        %v1474 = vunpack.c.h.b16 %v595
        %v1475 = vunpack.c.l.b16 %v596
        %v1476 = vunpack.c.h.b16 %v596
        %v1477 = vunpack.c.l.b16 %v597
        %v1478 = vunpack.c.h.b16 %v597
        %v1479 = vunpack.c.l.b16 %v598
        %v1480 = vunpack.c.h.b16 %v598
        %v1481 = vunpack.c.l.b16 %v599
        %v1482 = vunpack.c.h.b16 %v599
        %v1483 = vunpack.c.l.b16 %v600
        %v1484 = vunpack.c.h.b16 %v600
        %v1485 = vunpack.c.l.b16 %v601
        %v1486 = vunpack.c.h.b16 %v601
        %v1487 = vunpack.c.l.b16 %v602
        %v1488 = vunpack.c.h.b16 %v602
        %v1489 = vunpack.c.l.b16 %v603
        %v1490 = vunpack.c.h.b16 %v603
        %v1491 = vunpack.c.l.b16 %v604
        %v1492 = vunpack.c.h.b16 %v604
        %v1493 = vunpack.c.l.b16 %v605
        %v1494 = vunpack.c.l.b16 %v606
        %v1495 = vunpack.c.h.b16 %v606
        %v1496 = vunpack.c.l.b16 %v607
        %v1497 = vunpack.c.h.b16 %v607
        %v1498 = vunpack.c.l.b16 %v608
        %v1499 = vunpack.c.h.b16 %v608
        %v1500 = vunpack.c.l.b16 %v609
        %v1501 = vunpack.c.h.b16 %v609
        %v1502 = vunpack.c.l.b16 %v610
        %v1503 = vunpack.c.h.b16 %v610
        %v1504 = vunpack.c.l.b16 %v611
        %v1505 = vunpack.c.h.b16 %v611
        %v1506 = vunpack.c.l.b16 %v612
        %v1507 = vunpack.c.h.b16 %v612
        %v1508 = vunpack.c.l.b16 %v613
        %v1509 = vunpack.c.h.b16 %v613
        %v1510 = vunpack.c.l.b16 %v614
        %v1511 = vunpack.c.h.b16 %v614
        %v1512 = vunpack.c.l.b16 %v615
        %v1513 = vunpack.c.h.b16 %v615
        %v1514 = vunpack.c.l.b16 %v616
        %v1515 = vunpack.c.h.b16 %v616
        %v1516 = vunpack.c.l.b16 %v617
        %v1517 = vunpack.c.h.b16 %v617
        %v1518 = vunpack.c.l.b16 %v618
        %v1519 = vunpack.c.h.b16 %v618
        %v1520 = vunpack.c.l.b16 %v619
        %v1521 = vunpack.c.l.b16 %v620
        %v1522 = vunpack.c.h.b16 %v620
        %v1523 = vunpack.c.l.b16 %v621
        %v1524 = vunpack.c.h.b16 %v621
        %v1525 = vunpack.c.l.b16 %v622
        %v1526 = vunpack.c.h.b16 %v622
        %v1527 = vunpack.c.l.b16 %v623
        %v1528 = vunpack.c.h.b16 %v623
        %v1529 = vunpack.c.l.b16 %v624
        %v1530 = vunpack.c.h.b16 %v624
        %v1531 = vunpack.c.l.b16 %v625
        %v1532 = vunpack.c.h.b16 %v625
        %v1533 = vunpack.c.l.b16 %v626
        %v1534 = vunpack.c.h.b16 %v626
        %v1535 = vunpack.c.l.b16 %v627
        %v1536 = vunpack.c.h.b16 %v627
        %v1537 = vunpack.c.l.b16 %v628
        %v1538 = vunpack.c.h.b16 %v628
        %v1539 = vunpack.c.l.b16 %v629
        %v1540 = vunpack.c.h.b16 %v629
        %v1541 = vunpack.c.l.b16 %v630
        %v1542 = vunpack.c.h.b16 %v630
        %v1543 = vunpack.c.l.b16 %v631
        %v1544 = vunpack.c.h.b16 %v631
        %v1545 = vunpack.c.l.b16 %v632
        %v1546 = vunpack.c.h.b16 %v632
        %v1547 = vunpack.c.l.b16 %v633
        %v1548 = vunpack.c.l.b16 %v634
        %v1549 = vunpack.c.h.b16 %v634
        %v1550 = vunpack.c.l.b16 %v635
        %v1551 = vunpack.c.h.b16 %v635
        %v1552 = vunpack.c.l.b16 %v636
        %v1553 = vunpack.c.h.b16 %v636
        %v1554 = vunpack.c.l.b16 %v637
        %v1555 = vunpack.c.h.b16 %v637
        %v1556 = vunpack.c.l.b16 %v638
        %v1557 = vunpack.c.h.b16 %v638
        %v1558 = vunpack.c.l.b16 %v639
        %v1559 = vunpack.c.h.b16 %v639
        %v1560 = vunpack.c.l.b16 %v640
        %v1561 = vunpack.c.h.b16 %v640
        %v1562 = vunpack.c.l.b16 %v641
        %v1563 = vunpack.c.h.b16 %v641
        %v1564 = vunpack.c.l.b16 %v642
        %v1565 = vunpack.c.h.b16 %v642
        %v1566 = vunpack.c.l.b16 %v643
        %v1567 = vunpack.c.h.b16 %v643
        %v1568 = vunpack.c.l.b16 %v644
        %v1569 = vunpack.c.h.b16 %v644
        %v1570 = vunpack.c.l.b16 %v645
        %v1571 = vunpack.c.h.b16 %v645
        %v1572 = vunpack.c.l.b16 %v646
        %v1573 = vunpack.c.h.b16 %v646
        %v1574 = vunpack.c.l.b16 %v647
        %v1575 = vunpack.c.l.b16 %v648
        %v1576 = vunpack.c.h.b16 %v648
        %v1577 = vunpack.c.l.b16 %v649
        %v1578 = vunpack.c.h.b16 %v649
        %v1579 = vunpack.c.l.b16 %v650
        %v1580 = vunpack.c.h.b16 %v650
        %v1581 = vunpack.c.l.b16 %v651
        %v1582 = vunpack.c.h.b16 %v651
        %v1583 = vunpack.c.l.b16 %v652
        %v1584 = vunpack.c.h.b16 %v652
        %v1585 = vunpack.c.l.b16 %v653
        %v1586 = vunpack.c.h.b16 %v653
        %v1587 = vunpack.c.l.b16 %v654
        %v1588 = vunpack.c.h.b16 %v654
        %v1589 = vunpack.c.l.b16 %v655
        %v1590 = vunpack.c.h.b16 %v655
        %v1591 = vunpack.c.l.b16 %v656
        %v1592 = vunpack.c.h.b16 %v656
        %v1593 = vunpack.c.l.b16 %v657
        %v1594 = vunpack.c.h.b16 %v657
        %v1595 = vunpack.c.l.b16 %v658
        %v1596 = vunpack.c.h.b16 %v658
        %v1597 = vunpack.c.l.b16 %v659
        %v1598 = vunpack.c.h.b16 %v659
        %v1599 = vunpack.c.l.b16 %v660
        %v1600 = vunpack.c.h.b16 %v660
        %v1601 = vunpack.c.l.b16 %v661
        %v1602 = vunpack.c.l.b16 %v662
        %v1603 = vunpack.c.h.b16 %v662
        %v1604 = vunpack.c.l.b16 %v663
        %v1605 = vunpack.c.h.b16 %v663
        %v1606 = vunpack.c.l.b16 %v664
        %v1607 = vunpack.c.h.b16 %v664
        %v1608 = vunpack.c.l.b16 %v665
        %v1609 = vunpack.c.h.b16 %v665
        %v1610 = vunpack.c.l.b16 %v666
        %v1611 = vunpack.c.h.b16 %v666
        %v1612 = vunpack.c.l.b16 %v667
        %v1613 = vunpack.c.h.b16 %v667
        %v1614 = vunpack.c.l.b16 %v668
        %v1615 = vunpack.c.h.b16 %v668
        %v1616 = vunpack.c.l.b16 %v669
        %v1617 = vunpack.c.h.b16 %v669
        %v1618 = vunpack.c.l.b16 %v670
        %v1619 = vunpack.c.h.b16 %v670
        %v1620 = vunpack.c.l.b16 %v671
        %v1621 = vunpack.c.h.b16 %v671
        %v1622 = vunpack.c.l.b16 %v672
        %v1623 = vunpack.c.h.b16 %v672
        %v1624 = vunpack.c.l.b16 %v673
        %v1625 = vunpack.c.h.b16 %v673
        %v1626 = vunpack.c.l.b16 %v674
        %v1627 = vunpack.c.h.b16 %v674
        %v1628 = vunpack.c.l.b16 %v675
        %v1629 = vunpack.c.l.b16 %v676
        %v1630 = vunpack.c.h.b16 %v676
        %v1631 = vunpack.c.l.b16 %v677
        %v1632 = vunpack.c.h.b16 %v677
        %v1633 = vunpack.c.l.b16 %v678
        %v1634 = vunpack.c.h.b16 %v678
        %v1635 = vunpack.c.l.b16 %v679
        %v1636 = vunpack.c.h.b16 %v679
        %v1637 = vunpack.c.l.b16 %v680
        %v1638 = vunpack.c.h.b16 %v680
        %v1639 = vunpack.c.l.b16 %v681
        %v1640 = vunpack.c.h.b16 %v681
        %v1641 = vunpack.c.l.b16 %v682
        %v1642 = vunpack.c.h.b16 %v682
        %v1643 = vunpack.c.l.b16 %v683
        %v1644 = vunpack.c.h.b16 %v683
        %v1645 = vunpack.c.l.b16 %v684
        %v1646 = vunpack.c.h.b16 %v684
        %v1647 = vunpack.c.l.b16 %v685
        %v1648 = vunpack.c.h.b16 %v685
        %v1649 = vunpack.c.l.b16 %v686
        %v1650 = vunpack.c.h.b16 %v686
        %v1651 = vunpack.c.l.b16 %v687
        %v1652 = vunpack.c.h.b16 %v687
        %v1653 = vunpack.c.l.b16 %v688
        %v1654 = vunpack.c.h.b16 %v688
        %v1655 = vunpack.c.l.b16 %v689
        %v1656 = vunpack.c.l.b16 %v690
        %v1657 = vunpack.c.h.b16 %v690
        %v1658 = vunpack.c.l.b16 %v691
        %v1659 = vunpack.c.h.b16 %v691
        %v1660 = vunpack.c.l.b16 %v692
        %v1661 = vunpack.c.h.b16 %v692
        %v1662 = vunpack.c.l.b16 %v693
        %v1663 = vunpack.c.h.b16 %v693
        %v1664 = vunpack.c.l.b16 %v694
        %v1665 = vunpack.c.h.b16 %v694
        %v1666 = vunpack.c.l.b16 %v695
        %v1667 = vunpack.c.h.b16 %v695
        %v1668 = vunpack.c.l.b16 %v696
        %v1669 = vunpack.c.h.b16 %v696
        %v1670 = vunpack.c.l.b16 %v697
        %v1671 = vunpack.c.h.b16 %v697
        %v1672 = vunpack.c.l.b16 %v698
        %v1673 = vunpack.c.h.b16 %v698
        %v1674 = vunpack.c.l.b16 %v699
        %v1675 = vunpack.c.h.b16 %v699
        %v1676 = vunpack.c.l.b16 %v700
        %v1677 = vunpack.c.h.b16 %v700
        %v1678 = vunpack.c.l.b16 %v701
        %v1679 = vunpack.c.h.b16 %v701
        %v1680 = vunpack.c.l.b16 %v702
        %v1681 = vunpack.c.h.b16 %v702
        %v1682 = vunpack.c.l.b16 %v703
        %v1683 = vunpack.c.l.b16 %v704
        %v1684 = vunpack.c.h.b16 %v704
        %v1685 = vunpack.c.l.b16 %v705
        %v1686 = vunpack.c.h.b16 %v705
        %v1687 = vunpack.c.l.b16 %v706
        %v1688 = vunpack.c.h.b16 %v706
        %v1689 = vunpack.c.l.b16 %v707
        %v1690 = vunpack.c.h.b16 %v707
        %v1691 = vunpack.c.l.b16 %v708
        %v1692 = vunpack.c.h.b16 %v708
        %v1693 = vunpack.c.l.b16 %v709
        %v1694 = vunpack.c.h.b16 %v709
        %v1695 = vunpack.c.l.b16 %v710
        %v1696 = vunpack.c.h.b16 %v710
        %v1697 = vunpack.c.l.b16 %v711
        %v1698 = vunpack.c.h.b16 %v711
        %v1699 = vunpack.c.l.b16 %v712
        %v1700 = vunpack.c.h.b16 %v712
        %v1701 = vunpack.c.l.b16 %v713
        %v1702 = vunpack.c.h.b16 %v713
        %v1703 = vunpack.c.l.b16 %v714
        %v1704 = vunpack.c.h.b16 %v714
        %v1705 = vunpack.c.l.b16 %v715
        %v1706 = vunpack.c.h.b16 %v715
        %v1707 = vunpack.c.l.b16 %v716
        %v1708 = vunpack.c.h.b16 %v716
        %v1709 = vunpack.c.l.b16 %v717
        %v1710 = vunpack.c.l.b16 %v718
        %v1711 = vunpack.c.h.b16 %v718
        %v1712 = vunpack.c.l.b16 %v719
        %v1713 = vunpack.c.h.b16 %v719
        %v1714 = vunpack.c.l.b16 %v720
        %v1715 = vunpack.c.h.b16 %v720
        %v1716 = vunpack.c.l.b16 %v721
        %v1717 = vunpack.c.h.b16 %v721
        %v1718 = vunpack.c.l.b16 %v722
        %v1719 = vunpack.c.h.b16 %v722
        %v1720 = vunpack.c.l.b16 %v723
        %v1721 = vunpack.c.h.b16 %v723
        %v1722 = vunpack.c.l.b16 %v724
        %v1723 = vunpack.c.h.b16 %v724
        %v1724 = vunpack.c.l.b16 %v725
        %v1725 = vunpack.c.h.b16 %v725
        %v1726 = vunpack.c.l.b16 %v726
        %v1727 = vunpack.c.h.b16 %v726
        %v1728 = vunpack.c.l.b16 %v727
        %v1729 = vunpack.c.h.b16 %v727
        %v1730 = vunpack.c.l.b16 %v728
        %v1731 = vunpack.c.h.b16 %v728
        %v1732 = vunpack.c.l.b16 %v729
        %v1733 = vunpack.c.h.b16 %v729
        %v1734 = vunpack.c.l.b16 %v730
        %v1735 = vunpack.c.h.b16 %v730
        %v1736 = vunpack.c.l.b16 %v731
        %v1737 = vunpack.c.l.b16 %v732
        %v1738 = vunpack.c.h.b16 %v732
        %v1739 = vunpack.c.l.b16 %v733
        %v1740 = vunpack.c.h.b16 %v733
        %v1741 = vunpack.c.l.b16 %v734
        %v1742 = vunpack.c.h.b16 %v734
        %v1743 = vunpack.c.l.b16 %v735
        %v1744 = vunpack.c.h.b16 %v735
        %v1745 = vunpack.c.l.b16 %v736
        %v1746 = vunpack.c.h.b16 %v736
        %v1747 = vunpack.c.l.b16 %v737
        %v1748 = vunpack.c.h.b16 %v737
        %v1749 = vunpack.c.l.b16 %v738
        %v1750 = vunpack.c.h.b16 %v738
        %v1751 = vunpack.c.l.b16 %v739
        %v1752 = vunpack.c.h.b16 %v739
        %v1753 = vunpack.c.l.b16 %v740
        %v1754 = vunpack.c.h.b16 %v740
        %v1755 = vunpack.c.l.b16 %v741
        %v1756 = vunpack.c.h.b16 %v741
        %v1757 = vunpack.c.l.b16 %v742
        %v1758 = vunpack.c.h.b16 %v742
        %v1759 = vunpack.c.l.b16 %v743
        %v1760 = vunpack.c.h.b16 %v743
        %v1761 = vunpack.c.l.b16 %v744
        %v1762 = vunpack.c.h.b16 %v744
        %v1763 = vunpack.c.l.b16 %v745
        %v1764 = vunpack.c.l.b16 %v746
        %v1765 = vunpack.c.h.b16 %v746
        %v1766 = vunpack.c.l.b16 %v747
        %v1767 = vunpack.c.h.b16 %v747
        %v1768 = vunpack.c.l.b16 %v748
        %v1769 = vunpack.c.h.b16 %v748
        %v1770 = vunpack.c.l.b16 %v749
        %v1771 = vunpack.c.h.b16 %v749
        %v1772 = vunpack.c.l.b16 %v750
        %v1773 = vunpack.c.h.b16 %v750
        %v1774 = vunpack.c.l.b16 %v751
        %v1775 = vunpack.c.h.b16 %v751
        %v1776 = vunpack.c.l.b16 %v752
        %v1777 = vunpack.c.h.b16 %v752
        %v1778 = vunpack.c.l.b16 %v753
        %v1779 = vunpack.c.h.b16 %v753
        %v1780 = vunpack.c.l.b16 %v754
        %v1781 = vunpack.c.h.b16 %v754
        %v1782 = vunpack.c.l.b16 %v755
        %v1783 = vunpack.c.h.b16 %v755
        %v1784 = vunpack.c.l.b16 %v756
        %v1785 = vunpack.c.h.b16 %v756
        %v1786 = vunpack.c.l.b16 %v757
        %v1787 = vunpack.c.h.b16 %v757
        %v1788 = vunpack.c.l.b16 %v758
        %v1789 = vunpack.c.h.b16 %v758
        %v1790 = vunpack.c.l.b16 %v759
        %v1791 = vunpack.c.l.b16 %v760
        %v1792 = vunpack.c.h.b16 %v760
        %v1793 = vunpack.c.l.b16 %v761
        %v1794 = vunpack.c.h.b16 %v761
        %v1795 = vunpack.c.l.b16 %v762
        %v1796 = vunpack.c.h.b16 %v762
        %v1797 = vunpack.c.l.b16 %v763
        %v1798 = vunpack.c.h.b16 %v763
        %v1799 = vunpack.c.l.b16 %v764
        %v1800 = vunpack.c.h.b16 %v764
        %v1801 = vunpack.c.l.b16 %v765
        %v1802 = vunpack.c.h.b16 %v765
        %v1803 = vunpack.c.l.b16 %v766
        %v1804 = vunpack.c.h.b16 %v766
        %v1805 = vunpack.c.l.b16 %v767
        %v1806 = vunpack.c.h.b16 %v767
        %v1807 = vunpack.c.l.b16 %v768
        %v1808 = vunpack.c.h.b16 %v768
        %v1809 = vunpack.c.l.b16 %v769
        %v1810 = vunpack.c.h.b16 %v769
        %v1811 = vunpack.c.l.b16 %v770
        %v1812 = vunpack.c.h.b16 %v770
        %v1813 = vunpack.c.l.b16 %v771
        %v1814 = vunpack.c.h.b16 %v771
        %v1815 = vunpack.c.l.b16 %v772
        %v1816 = vunpack.c.h.b16 %v772
        %v1817 = vunpack.c.l.b16 %v773
        %v1818 = vunpack.c.l.b16 %v774
        %v1819 = vunpack.c.h.b16 %v774
        %v1820 = vunpack.c.l.b16 %v775
        %v1821 = vunpack.c.h.b16 %v775
        %v1822 = vunpack.c.l.b16 %v776
        %v1823 = vunpack.c.h.b16 %v776
        %v1824 = vunpack.c.l.b16 %v777
        %v1825 = vunpack.c.h.b16 %v777
        %v1826 = vunpack.c.l.b16 %v778
        %v1827 = vunpack.c.h.b16 %v778
        %v1828 = vunpack.c.l.b16 %v779
        %v1829 = vunpack.c.h.b16 %v779
        %v1830 = vunpack.c.l.b16 %v780
        %v1831 = vunpack.c.h.b16 %v780
        %v1832 = vunpack.c.l.b16 %v781
        %v1833 = vunpack.c.h.b16 %v781
        %v1834 = vunpack.c.l.b16 %v782
        %v1835 = vunpack.c.h.b16 %v782
        %v1836 = vunpack.c.l.b16 %v783
        %v1837 = vunpack.c.h.b16 %v783
        %v1838 = vunpack.c.l.b16 %v784
        %v1839 = vunpack.c.h.b16 %v784
        %v1840 = vunpack.c.l.b16 %v785
        %v1841 = vunpack.c.h.b16 %v785
        %v1842 = vunpack.c.l.b16 %v786
        %v1843 = vunpack.c.h.b16 %v786
        %v1844 = vunpack.c.l.b16 %v787
        %v1845 = vunpack.c.l.b16 %v788
        %v1846 = vunpack.c.h.b16 %v788
        %v1847 = vunpack.c.l.b16 %v789
        %v1848 = vunpack.c.h.b16 %v789
        %v1849 = vunpack.c.l.b16 %v790
        %v1850 = vunpack.c.h.b16 %v790
        %v1851 = vunpack.c.l.b16 %v791
        %v1852 = vunpack.c.h.b16 %v791
        %v1853 = vunpack.c.l.b16 %v792
        %v1854 = vunpack.c.h.b16 %v792
        %v1855 = vunpack.c.l.b16 %v793
        %v1856 = vunpack.c.h.b16 %v793
        %v1857 = vunpack.c.l.b16 %v794
        %v1858 = vunpack.c.h.b16 %v794
        %v1859 = vunpack.c.l.b16 %v795
        %v1860 = vunpack.c.h.b16 %v795
        %v1861 = vunpack.c.l.b16 %v796
        %v1862 = vunpack.c.h.b16 %v796
        %v1863 = vunpack.c.l.b16 %v797
        %v1864 = vunpack.c.h.b16 %v797
        %v1865 = vunpack.c.l.b16 %v798
        %v1866 = vunpack.c.h.b16 %v798
        %v1867 = vunpack.c.l.b16 %v799
        %v1868 = vunpack.c.h.b16 %v799
        %v1869 = vunpack.c.l.b16 %v800
        %v1870 = vunpack.c.h.b16 %v800
        %v1871 = vunpack.c.l.b16 %v801
        %v1872 = vunpack.c.l.b16 %v802
        %v1873 = vunpack.c.h.b16 %v802
        %v1874 = vunpack.c.l.b16 %v803
        %v1875 = vunpack.c.h.b16 %v803
        %v1876 = vunpack.c.l.b16 %v804
        %v1877 = vunpack.c.h.b16 %v804
        %v1878 = vunpack.c.l.b16 %v805
        %v1879 = vunpack.c.h.b16 %v805
        %v1880 = vunpack.c.l.b16 %v806
        %v1881 = vunpack.c.h.b16 %v806
        %v1882 = vunpack.c.l.b16 %v807
        %v1883 = vunpack.c.h.b16 %v807
        %v1884 = vunpack.c.l.b16 %v808
        %v1885 = vunpack.c.h.b16 %v808
        %v1886 = vunpack.c.l.b16 %v809
        %v1887 = vunpack.c.h.b16 %v809
        %v1888 = vunpack.c.l.b16 %v810
        %v1889 = vunpack.c.h.b16 %v810
        %v1890 = vunpack.c.l.b16 %v811
        %v1891 = vunpack.c.h.b16 %v811
        %v1892 = vunpack.c.l.b16 %v812
        %v1893 = vunpack.c.h.b16 %v812
        %v1894 = vunpack.c.l.b16 %v813
        %v1895 = vunpack.c.h.b16 %v813
        %v1896 = vunpack.c.l.b16 %v814
        %v1897 = vunpack.c.h.b16 %v814
        %v1898 = vunpack.c.l.b16 %v815
        %v1899 = vunpack.c.l.b16 %v816
        %v1900 = vunpack.c.h.b16 %v816
        %v1901 = vunpack.c.l.b16 %v817
        %v1902 = vunpack.c.h.b16 %v817
        %v1903 = vunpack.c.l.b16 %v818
        %v1904 = vunpack.c.h.b16 %v818
        %v1905 = vunpack.c.l.b16 %v819
        %v1906 = vunpack.c.h.b16 %v819
        %v1907 = vunpack.c.l.b16 %v820
        %v1908 = vunpack.c.h.b16 %v820
        %v1909 = vunpack.c.l.b16 %v821
        %v1910 = vunpack.c.h.b16 %v821
        %v1911 = vunpack.c.l.b16 %v822
        %v1912 = vunpack.c.h.b16 %v822
        %v1913 = vunpack.c.l.b16 %v823
        %v1914 = vunpack.c.h.b16 %v823
        %v1915 = vunpack.c.l.b16 %v824
        %v1916 = vunpack.c.h.b16 %v824
        %v1917 = vunpack.c.l.b16 %v825
        %v1918 = vunpack.c.h.b16 %v825
        %v1919 = vunpack.c.l.b16 %v826
        %v1920 = vunpack.c.h.b16 %v826
        %v1921 = vunpack.c.l.b16 %v827
        %v1922 = vunpack.c.h.b16 %v827
        %v1923 = vunpack.c.l.b16 %v828
        %v1924 = vunpack.c.h.b16 %v828
        %v1925 = vunpack.c.l.b16 %v829
        %v1926 = vunpack.c.l.b16 %v830
        %v1927 = vunpack.c.h.b16 %v830
        %v1928 = vunpack.c.l.b16 %v831
        %v1929 = vunpack.c.h.b16 %v831
        %v1930 = vunpack.c.l.b16 %v832
        %v1931 = vunpack.c.h.b16 %v832
        %v1932 = vunpack.c.l.b16 %v833
        %v1933 = vunpack.c.h.b16 %v833
        %v1934 = vunpack.c.l.b16 %v834
        %v1935 = vunpack.c.h.b16 %v834
        %v1936 = vunpack.c.l.b16 %v835
        %v1937 = vunpack.c.h.b16 %v835
        %v1938 = vunpack.c.l.b16 %v836
        %v1939 = vunpack.c.h.b16 %v836
        %v1940 = vunpack.c.l.b16 %v837
        %v1941 = vunpack.c.h.b16 %v837
        %v1942 = vunpack.c.l.b16 %v838
        %v1943 = vunpack.c.h.b16 %v838
        %v1944 = vunpack.c.l.b16 %v839
        %v1945 = vunpack.c.h.b16 %v839
        %v1946 = vunpack.c.l.b16 %v840
        %v1947 = vunpack.c.h.b16 %v840
        %v1948 = vunpack.c.l.b16 %v841
        %v1949 = vunpack.c.h.b16 %v841
        %v1950 = vunpack.c.l.b16 %v842
        %v1951 = vunpack.c.h.b16 %v842
        %v1952 = vunpack.c.l.b16 %v843
        %v1953 = vunpack.c.l.b16 %v844
        %v1954 = vunpack.c.h.b16 %v844
        %v1955 = vunpack.c.l.b16 %v845
        %v1956 = vunpack.c.h.b16 %v845
        %v1957 = vunpack.c.l.b16 %v846
        %v1958 = vunpack.c.h.b16 %v846
        %v1959 = vunpack.c.l.b16 %v847
        %v1960 = vunpack.c.h.b16 %v847
        %v1961 = vunpack.c.l.b16 %v848
        %v1962 = vunpack.c.h.b16 %v848
        %v1963 = vunpack.c.l.b16 %v849
        %v1964 = vunpack.c.h.b16 %v849
        %v1965 = vunpack.c.l.b16 %v850
        %v1966 = vunpack.c.h.b16 %v850
        %v1967 = vunpack.c.l.b16 %v851
        %v1968 = vunpack.c.h.b16 %v851
        %v1969 = vunpack.c.l.b16 %v852
        %v1970 = vunpack.c.h.b16 %v852
        %v1971 = vunpack.c.l.b16 %v853
        %v1972 = vunpack.c.h.b16 %v853
        %v1973 = vunpack.c.l.b16 %v854
        %v1974 = vunpack.c.h.b16 %v854
        %v1975 = vunpack.c.l.b16 %v855
        %v1976 = vunpack.c.h.b16 %v855
        %v1977 = vunpack.c.l.b16 %v856
        %v1978 = vunpack.c.h.b16 %v856
        %v1979 = vunpack.c.l.b16 %v857
        %v1980 = vunpack.c.l.b16 %v858
        %v1981 = vunpack.c.h.b16 %v858
        %v1982 = vunpack.c.l.b16 %v859
        %v1983 = vunpack.c.h.b16 %v859
        %v1984 = vunpack.c.l.b16 %v860
        %v1985 = vunpack.c.h.b16 %v860
        %v1986 = vunpack.c.l.b16 %v861
        %v1987 = vunpack.c.h.b16 %v861
        %v1988 = vunpack.c.l.b16 %v862
        %v1989 = vunpack.c.h.b16 %v862
        %v1990 = vunpack.c.l.b16 %v863
        %v1991 = vunpack.c.h.b16 %v863
        %v1992 = vunpack.c.l.b16 %v864
        %v1993 = vunpack.c.h.b16 %v864
        %v1994 = vunpack.c.l.b16 %v865
        %v1995 = vunpack.c.h.b16 %v865
        %v1996 = vunpack.c.l.b16 %v866
        %v1997 = vunpack.c.h.b16 %v866
        %v1998 = vunpack.c.l.b16 %v867
        %v1999 = vunpack.c.h.b16 %v867
        %v2000 = vunpack.c.l.b16 %v868
        %v2001 = vunpack.c.h.b16 %v868
        %v2002 = vunpack.c.l.b16 %v869
        %v2003 = vunpack.c.h.b16 %v869
        %v2004 = vunpack.c.l.b16 %v870
        %v2005 = vunpack.c.h.b16 %v870
        %v2006 = vunpack.c.l.b16 %v871
        %v2007 = vunpack.c.l.b16 %v872
        %v2008 = vunpack.c.h.b16 %v872
        %v2009 = vunpack.c.l.b16 %v873
        %v2010 = vunpack.c.h.b16 %v873
        %v2011 = vunpack.c.l.b16 %v874
        %v2012 = vunpack.c.h.b16 %v874
        %v2013 = vunpack.c.l.b16 %v875
        %v2014 = vunpack.c.h.b16 %v875
        %v2015 = vunpack.c.l.b16 %v876
        %v2016 = vunpack.c.h.b16 %v876
        %v2017 = vunpack.c.l.b16 %v877
        %v2018 = vunpack.c.h.b16 %v877
        %v2019 = vunpack.c.l.b16 %v878
        %v2020 = vunpack.c.h.b16 %v878
        %v2021 = vunpack.c.l.b16 %v879
        %v2022 = vunpack.c.h.b16 %v879
        %v2023 = vunpack.c.l.b16 %v880
        %v2024 = vunpack.c.h.b16 %v880
        %v2025 = vunpack.c.l.b16 %v881
        %v2026 = vunpack.c.h.b16 %v881
        %v2027 = vunpack.c.l.b16 %v882
        %v2028 = vunpack.c.h.b16 %v882
        %v2029 = vunpack.c.l.b16 %v883
        %v2030 = vunpack.c.h.b16 %v883
        %v2031 = vunpack.c.l.b16 %v884
        %v2032 = vunpack.c.h.b16 %v884
        %v2033 = vunpack.c.l.b16 %v885
        %v2034 = vpack.c.b16 %v1305, %v1278
        %v2035 = vpack.c.b16 %v1306, %v1279
        %v2036 = vpack.c.b16 %v1307, %v1280
        %v2037 = vpack.c.b16 %v1308, %v1281
        %v2038 = vpack.c.b16 %v1309, %v1282
        %v2039 = vpack.c.b16 %v1310, %v1283
        %v2040 = vpack.c.b16 %v1311, %v1284
        %v2041 = vpack.c.b16 %v1312, %v1285
        %v2042 = vpack.c.b16 %v1313, %v1286
        %v2043 = vpack.c.b16 %v1314, %v1287
        %v2044 = vpack.c.b16 %v1315, %v1288
        %v2045 = vpack.c.b16 %v1316, %v1289
        %v2046 = vpack.c.b16 %v1317, %v1290
        %v2047 = vpack.c.b16 %v1318, %v1291
        %v2048 = vpack.c.b16 %v1319, %v1292
        %v2049 = vpack.c.b16 %v1320, %v1293
        %v2050 = vpack.c.b16 %v1321, %v1294
        %v2051 = vpack.c.b16 %v1322, %v1295
        %v2052 = vpack.c.b16 %v1323, %v1296
        %v2053 = vpack.c.b16 %v1324, %v1297
        %v2054 = vpack.c.b16 %v1325, %v1298
        %v2055 = vpack.c.b16 %v1326, %v1299
        %v2056 = vpack.c.b16 %v1327, %v1300
        %v2057 = vpack.c.b16 %v1328, %v1301
        %v2058 = vpack.c.b16 %v1329, %v1302
        %v2059 = vpack.c.b16 %v1330, %v1303
        %v2060 = vpack.c.b16 %v1331, %v1304
        %v2061 = vpack.c.b16 %v1359, %v1332
        %v2062 = vpack.c.b16 %v1360, %v1333
        %v2063 = vpack.c.b16 %v1361, %v1334
        %v2064 = vpack.c.b16 %v1362, %v1335
        %v2065 = vpack.c.b16 %v1363, %v1336
        %v2066 = vpack.c.b16 %v1364, %v1337
        %v2067 = vpack.c.b16 %v1365, %v1338
        %v2068 = vpack.c.b16 %v1366, %v1339
        %v2069 = vpack.c.b16 %v1367, %v1340
        %v2070 = vpack.c.b16 %v1368, %v1341
        %v2071 = vpack.c.b16 %v1369, %v1342
        %v2072 = vpack.c.b16 %v1370, %v1343
        %v2073 = vpack.c.b16 %v1371, %v1344
        %v2074 = vpack.c.b16 %v1372, %v1345
        %v2075 = vpack.c.b16 %v1373, %v1346
        %v2076 = vpack.c.b16 %v1374, %v1347
        %v2077 = vpack.c.b16 %v1375, %v1348
        %v2078 = vpack.c.b16 %v1376, %v1349
        %v2079 = vpack.c.b16 %v1377, %v1350
        %v2080 = vpack.c.b16 %v1378, %v1351
        %v2081 = vpack.c.b16 %v1379, %v1352
        %v2082 = vpack.c.b16 %v1380, %v1353
        %v2083 = vpack.c.b16 %v1381, %v1354
        %v2084 = vpack.c.b16 %v1382, %v1355
        %v2085 = vpack.c.b16 %v1383, %v1356
        %v2086 = vpack.c.b16 %v1384, %v1357
        %v2087 = vpack.c.b16 %v1385, %v1358
        %v2088 = vpack.c.b16 %v1413, %v1386
        %v2089 = vpack.c.b16 %v1414, %v1387
        %v2090 = vpack.c.b16 %v1415, %v1388
        %v2091 = vpack.c.b16 %v1416, %v1389
        %v2092 = vpack.c.b16 %v1417, %v1390
        %v2093 = vpack.c.b16 %v1418, %v1391
        %v2094 = vpack.c.b16 %v1419, %v1392
        %v2095 = vpack.c.b16 %v1420, %v1393
        %v2096 = vpack.c.b16 %v1421, %v1394
        %v2097 = vpack.c.b16 %v1422, %v1395
        %v2098 = vpack.c.b16 %v1423, %v1396
        %v2099 = vpack.c.b16 %v1424, %v1397
        %v2100 = vpack.c.b16 %v1425, %v1398
        %v2101 = vpack.c.b16 %v1426, %v1399
        %v2102 = vpack.c.b16 %v1427, %v1400
        %v2103 = vpack.c.b16 %v1428, %v1401
        %v2104 = vpack.c.b16 %v1429, %v1402
        %v2105 = vpack.c.b16 %v1430, %v1403
        %v2106 = vpack.c.b16 %v1431, %v1404
        %v2107 = vpack.c.b16 %v1432, %v1405
        %v2108 = vpack.c.b16 %v1433, %v1406
        %v2109 = vpack.c.b16 %v1434, %v1407
        %v2110 = vpack.c.b16 %v1435, %v1408
        %v2111 = vpack.c.b16 %v1436, %v1409
        %v2112 = vpack.c.b16 %v1437, %v1410
        %v2113 = vpack.c.b16 %v1438, %v1411
        %v2114 = vpack.c.b16 %v1439, %v1412
        %v2115 = vpack.c.b16 %v1467, %v1440
        %v2116 = vpack.c.b16 %v1468, %v1441
        %v2117 = vpack.c.b16 %v1469, %v1442
        %v2118 = vpack.c.b16 %v1470, %v1443
        %v2119 = vpack.c.b16 %v1471, %v1444
        %v2120 = vpack.c.b16 %v1472, %v1445
        %v2121 = vpack.c.b16 %v1473, %v1446
        %v2122 = vpack.c.b16 %v1474, %v1447
        %v2123 = vpack.c.b16 %v1475, %v1448
        %v2124 = vpack.c.b16 %v1476, %v1449
        %v2125 = vpack.c.b16 %v1477, %v1450
        %v2126 = vpack.c.b16 %v1478, %v1451
        %v2127 = vpack.c.b16 %v1479, %v1452
        %v2128 = vpack.c.b16 %v1480, %v1453
        %v2129 = vpack.c.b16 %v1481, %v1454
        %v2130 = vpack.c.b16 %v1482, %v1455
        %v2131 = vpack.c.b16 %v1483, %v1456
        %v2132 = vpack.c.b16 %v1484, %v1457
        %v2133 = vpack.c.b16 %v1485, %v1458
        %v2134 = vpack.c.b16 %v1486, %v1459
        %v2135 = vpack.c.b16 %v1487, %v1460
        %v2136 = vpack.c.b16 %v1488, %v1461
        %v2137 = vpack.c.b16 %v1489, %v1462
        %v2138 = vpack.c.b16 %v1490, %v1463
        %v2139 = vpack.c.b16 %v1491, %v1464
        %v2140 = vpack.c.b16 %v1492, %v1465
        %v2141 = vpack.c.b16 %v1493, %v1466
        %v2142 = vpack.c.b16 %v1521, %v1494
        %v2143 = vpack.c.b16 %v1522, %v1495
        %v2144 = vpack.c.b16 %v1523, %v1496
        %v2145 = vpack.c.b16 %v1524, %v1497
        %v2146 = vpack.c.b16 %v1525, %v1498
        %v2147 = vpack.c.b16 %v1526, %v1499
        %v2148 = vpack.c.b16 %v1527, %v1500
        %v2149 = vpack.c.b16 %v1528, %v1501
        %v2150 = vpack.c.b16 %v1529, %v1502
        %v2151 = vpack.c.b16 %v1530, %v1503
        %v2152 = vpack.c.b16 %v1531, %v1504
        %v2153 = vpack.c.b16 %v1532, %v1505
        %v2154 = vpack.c.b16 %v1533, %v1506
        %v2155 = vpack.c.b16 %v1534, %v1507
        %v2156 = vpack.c.b16 %v1535, %v1508
        %v2157 = vpack.c.b16 %v1536, %v1509
        %v2158 = vpack.c.b16 %v1537, %v1510
        %v2159 = vpack.c.b16 %v1538, %v1511
        %v2160 = vpack.c.b16 %v1539, %v1512
        %v2161 = vpack.c.b16 %v1540, %v1513
        %v2162 = vpack.c.b16 %v1541, %v1514
        %v2163 = vpack.c.b16 %v1542, %v1515
        %v2164 = vpack.c.b16 %v1543, %v1516
        %v2165 = vpack.c.b16 %v1544, %v1517
        %v2166 = vpack.c.b16 %v1545, %v1518
        %v2167 = vpack.c.b16 %v1546, %v1519
        %v2168 = vpack.c.b16 %v1547, %v1520
        %v2169 = vpack.c.b16 %v1575, %v1548
        %v2170 = vpack.c.b16 %v1576, %v1549
        %v2171 = vpack.c.b16 %v1577, %v1550
        %v2172 = vpack.c.b16 %v1578, %v1551
        %v2173 = vpack.c.b16 %v1579, %v1552
        %v2174 = vpack.c.b16 %v1580, %v1553
        %v2175 = vpack.c.b16 %v1581, %v1554
        %v2176 = vpack.c.b16 %v1582, %v1555
        %v2177 = vpack.c.b16 %v1583, %v1556
        %v2178 = vpack.c.b16 %v1584, %v1557
        %v2179 = vpack.c.b16 %v1585, %v1558
        %v2180 = vpack.c.b16 %v1586, %v1559
        %v2181 = vpack.c.b16 %v1587, %v1560
        %v2182 = vpack.c.b16 %v1588, %v1561
        %v2183 = vpack.c.b16 %v1589, %v1562
        %v2184 = vpack.c.b16 %v1590, %v1563
        %v2185 = vpack.c.b16 %v1591, %v1564
        %v2186 = vpack.c.b16 %v1592, %v1565
        %v2187 = vpack.c.b16 %v1593, %v1566
        %v2188 = vpack.c.b16 %v1594, %v1567
        %v2189 = vpack.c.b16 %v1595, %v1568
        %v2190 = vpack.c.b16 %v1596, %v1569
        %v2191 = vpack.c.b16 %v1597, %v1570
        %v2192 = vpack.c.b16 %v1598, %v1571
        %v2193 = vpack.c.b16 %v1599, %v1572
        %v2194 = vpack.c.b16 %v1600, %v1573
        %v2195 = vpack.c.b16 %v1601, %v1574
        %v2196 = vpack.c.b16 %v1629, %v1602
        %v2197 = vpack.c.b16 %v1630, %v1603
        %v2198 = vpack.c.b16 %v1631, %v1604
        %v2199 = vpack.c.b16 %v1632, %v1605
        %v2200 = vpack.c.b16 %v1633, %v1606
        %v2201 = vpack.c.b16 %v1634, %v1607
        %v2202 = vpack.c.b16 %v1635, %v1608
        %v2203 = vpack.c.b16 %v1636, %v1609
        %v2204 = vpack.c.b16 %v1637, %v1610
        %v2205 = vpack.c.b16 %v1638, %v1611
        %v2206 = vpack.c.b16 %v1639, %v1612
        %v2207 = vpack.c.b16 %v1640, %v1613
        %v2208 = vpack.c.b16 %v1641, %v1614
        %v2209 = vpack.c.b16 %v1642, %v1615
        %v2210 = vpack.c.b16 %v1643, %v1616
        %v2211 = vpack.c.b16 %v1644, %v1617
        %v2212 = vpack.c.b16 %v1645, %v1618
        %v2213 = vpack.c.b16 %v1646, %v1619
        %v2214 = vpack.c.b16 %v1647, %v1620
        %v2215 = vpack.c.b16 %v1648, %v1621
        %v2216 = vpack.c.b16 %v1649, %v1622
        %v2217 = vpack.c.b16 %v1650, %v1623
        %v2218 = vpack.c.b16 %v1651, %v1624
        %v2219 = vpack.c.b16 %v1652, %v1625
        %v2220 = vpack.c.b16 %v1653, %v1626
        %v2221 = vpack.c.b16 %v1654, %v1627
        %v2222 = vpack.c.b16 %v1655, %v1628
        %v2223 = vpack.c.b16 %v1683, %v1656
        %v2224 = vpack.c.b16 %v1684, %v1657
        %v2225 = vpack.c.b16 %v1685, %v1658
        %v2226 = vpack.c.b16 %v1686, %v1659
        %v2227 = vpack.c.b16 %v1687, %v1660
        %v2228 = vpack.c.b16 %v1688, %v1661
        %v2229 = vpack.c.b16 %v1689, %v1662
        %v2230 = vpack.c.b16 %v1690, %v1663
        %v2231 = vpack.c.b16 %v1691, %v1664
        %v2232 = vpack.c.b16 %v1692, %v1665
        %v2233 = vpack.c.b16 %v1693, %v1666
        %v2234 = vpack.c.b16 %v1694, %v1667
        %v2235 = vpack.c.b16 %v1695, %v1668
        %v2236 = vpack.c.b16 %v1696, %v1669
        %v2237 = vpack.c.b16 %v1697, %v1670
        %v2238 = vpack.c.b16 %v1698, %v1671
        %v2239 = vpack.c.b16 %v1699, %v1672
        %v2240 = vpack.c.b16 %v1700, %v1673
        %v2241 = vpack.c.b16 %v1701, %v1674
        %v2242 = vpack.c.b16 %v1702, %v1675
        %v2243 = vpack.c.b16 %v1703, %v1676
        %v2244 = vpack.c.b16 %v1704, %v1677
        %v2245 = vpack.c.b16 %v1705, %v1678
        %v2246 = vpack.c.b16 %v1706, %v1679
        %v2247 = vpack.c.b16 %v1707, %v1680
        %v2248 = vpack.c.b16 %v1708, %v1681
        %v2249 = vpack.c.b16 %v1709, %v1682
        %v2250 = vpack.c.b16 %v1737, %v1710
        %v2251 = vpack.c.b16 %v1738, %v1711
        %v2252 = vpack.c.b16 %v1739, %v1712
        %v2253 = vpack.c.b16 %v1740, %v1713
        %v2254 = vpack.c.b16 %v1741, %v1714
        %v2255 = vpack.c.b16 %v1742, %v1715
        %v2256 = vpack.c.b16 %v1743, %v1716
        %v2257 = vpack.c.b16 %v1744, %v1717
        %v2258 = vpack.c.b16 %v1745, %v1718
        %v2259 = vpack.c.b16 %v1746, %v1719
        %v2260 = vpack.c.b16 %v1747, %v1720
        %v2261 = vpack.c.b16 %v1748, %v1721
        %v2262 = vpack.c.b16 %v1749, %v1722
        %v2263 = vpack.c.b16 %v1750, %v1723
        %v2264 = vpack.c.b16 %v1751, %v1724
        %v2265 = vpack.c.b16 %v1752, %v1725
        %v2266 = vpack.c.b16 %v1753, %v1726
        %v2267 = vpack.c.b16 %v1754, %v1727
        %v2268 = vpack.c.b16 %v1755, %v1728
        %v2269 = vpack.c.b16 %v1756, %v1729
        %v2270 = vpack.c.b16 %v1757, %v1730
        %v2271 = vpack.c.b16 %v1758, %v1731
        %v2272 = vpack.c.b16 %v1759, %v1732
        %v2273 = vpack.c.b16 %v1760, %v1733
        %v2274 = vpack.c.b16 %v1761, %v1734
        %v2275 = vpack.c.b16 %v1762, %v1735
        %v2276 = vpack.c.b16 %v1763, %v1736
        %v2277 = vpack.c.b16 %v1791, %v1764
        %v2278 = vpack.c.b16 %v1792, %v1765
        %v2279 = vpack.c.b16 %v1793, %v1766
        %v2280 = vpack.c.b16 %v1794, %v1767
        %v2281 = vpack.c.b16 %v1795, %v1768
        %v2282 = vpack.c.b16 %v1796, %v1769
        %v2283 = vpack.c.b16 %v1797, %v1770
        %v2284 = vpack.c.b16 %v1798, %v1771
        %v2285 = vpack.c.b16 %v1799, %v1772
        %v2286 = vpack.c.b16 %v1800, %v1773
        %v2287 = vpack.c.b16 %v1801, %v1774
        %v2288 = vpack.c.b16 %v1802, %v1775
        %v2289 = vpack.c.b16 %v1803, %v1776
        %v2290 = vpack.c.b16 %v1804, %v1777
        %v2291 = vpack.c.b16 %v1805, %v1778
        %v2292 = vpack.c.b16 %v1806, %v1779
        %v2293 = vpack.c.b16 %v1807, %v1780
        %v2294 = vpack.c.b16 %v1808, %v1781
        %v2295 = vpack.c.b16 %v1809, %v1782
        %v2296 = vpack.c.b16 %v1810, %v1783
        %v2297 = vpack.c.b16 %v1811, %v1784
        %v2298 = vpack.c.b16 %v1812, %v1785
        %v2299 = vpack.c.b16 %v1813, %v1786
        %v2300 = vpack.c.b16 %v1814, %v1787
        %v2301 = vpack.c.b16 %v1815, %v1788
        %v2302 = vpack.c.b16 %v1816, %v1789
        %v2303 = vpack.c.b16 %v1817, %v1790
        %v2304 = vpack.c.b16 %v1845, %v1818
        %v2305 = vpack.c.b16 %v1846, %v1819
        %v2306 = vpack.c.b16 %v1847, %v1820
        %v2307 = vpack.c.b16 %v1848, %v1821
        %v2308 = vpack.c.b16 %v1849, %v1822
        %v2309 = vpack.c.b16 %v1850, %v1823
        %v2310 = vpack.c.b16 %v1851, %v1824
        %v2311 = vpack.c.b16 %v1852, %v1825
        %v2312 = vpack.c.b16 %v1853, %v1826
        %v2313 = vpack.c.b16 %v1854, %v1827
        %v2314 = vpack.c.b16 %v1855, %v1828
        %v2315 = vpack.c.b16 %v1856, %v1829
        %v2316 = vpack.c.b16 %v1857, %v1830
        %v2317 = vpack.c.b16 %v1858, %v1831
        %v2318 = vpack.c.b16 %v1859, %v1832
        %v2319 = vpack.c.b16 %v1860, %v1833
        %v2320 = vpack.c.b16 %v1861, %v1834
        %v2321 = vpack.c.b16 %v1862, %v1835
        %v2322 = vpack.c.b16 %v1863, %v1836
        %v2323 = vpack.c.b16 %v1864, %v1837
        %v2324 = vpack.c.b16 %v1865, %v1838
        %v2325 = vpack.c.b16 %v1866, %v1839
        %v2326 = vpack.c.b16 %v1867, %v1840
        %v2327 = vpack.c.b16 %v1868, %v1841
        %v2328 = vpack.c.b16 %v1869, %v1842
        %v2329 = vpack.c.b16 %v1870, %v1843
        %v2330 = vpack.c.b16 %v1871, %v1844
        %v2331 = vpack.c.b16 %v1899, %v1872
        %v2332 = vpack.c.b16 %v1900, %v1873
        %v2333 = vpack.c.b16 %v1901, %v1874
        %v2334 = vpack.c.b16 %v1902, %v1875
        %v2335 = vpack.c.b16 %v1903, %v1876
        %v2336 = vpack.c.b16 %v1904, %v1877
        %v2337 = vpack.c.b16 %v1905, %v1878
        %v2338 = vpack.c.b16 %v1906, %v1879
        %v2339 = vpack.c.b16 %v1907, %v1880
        %v2340 = vpack.c.b16 %v1908, %v1881
        %v2341 = vpack.c.b16 %v1909, %v1882
        %v2342 = vpack.c.b16 %v1910, %v1883
        %v2343 = vpack.c.b16 %v1911, %v1884
        %v2344 = vpack.c.b16 %v1912, %v1885
        %v2345 = vpack.c.b16 %v1913, %v1886
        %v2346 = vpack.c.b16 %v1914, %v1887
        %v2347 = vpack.c.b16 %v1915, %v1888
        %v2348 = vpack.c.b16 %v1916, %v1889
        %v2349 = vpack.c.b16 %v1917, %v1890
        %v2350 = vpack.c.b16 %v1918, %v1891
        %v2351 = vpack.c.b16 %v1919, %v1892
        %v2352 = vpack.c.b16 %v1920, %v1893
        %v2353 = vpack.c.b16 %v1921, %v1894
        %v2354 = vpack.c.b16 %v1922, %v1895
        %v2355 = vpack.c.b16 %v1923, %v1896
        %v2356 = vpack.c.b16 %v1924, %v1897
        %v2357 = vpack.c.b16 %v1925, %v1898
        %v2358 = vpack.c.b16 %v1953, %v1926
        %v2359 = vpack.c.b16 %v1954, %v1927
        %v2360 = vpack.c.b16 %v1955, %v1928
        %v2361 = vpack.c.b16 %v1956, %v1929
        %v2362 = vpack.c.b16 %v1957, %v1930
        %v2363 = vpack.c.b16 %v1958, %v1931
        %v2364 = vpack.c.b16 %v1959, %v1932
        %v2365 = vpack.c.b16 %v1960, %v1933
        %v2366 = vpack.c.b16 %v1961, %v1934
        %v2367 = vpack.c.b16 %v1962, %v1935
        %v2368 = vpack.c.b16 %v1963, %v1936
        %v2369 = vpack.c.b16 %v1964, %v1937
        %v2370 = vpack.c.b16 %v1965, %v1938
        %v2371 = vpack.c.b16 %v1966, %v1939
        %v2372 = vpack.c.b16 %v1967, %v1940
        %v2373 = vpack.c.b16 %v1968, %v1941
        %v2374 = vpack.c.b16 %v1969, %v1942
        %v2375 = vpack.c.b16 %v1970, %v1943
        %v2376 = vpack.c.b16 %v1971, %v1944
        %v2377 = vpack.c.b16 %v1972, %v1945
        %v2378 = vpack.c.b16 %v1973, %v1946
        %v2379 = vpack.c.b16 %v1974, %v1947
        %v2380 = vpack.c.b16 %v1975, %v1948
        %v2381 = vpack.c.b16 %v1976, %v1949
        %v2382 = vpack.c.b16 %v1977, %v1950
        %v2383 = vpack.c.b16 %v1978, %v1951
        %v2384 = vpack.c.b16 %v1979, %v1952
        %v2385 = vpack.c.b16 %v2007, %v1980
        %v2386 = vpack.c.b16 %v2008, %v1981
        %v2387 = vpack.c.b16 %v2009, %v1982
        %v2388 = vpack.c.b16 %v2010, %v1983
        %v2389 = vpack.c.b16 %v2011, %v1984
        %v2390 = vpack.c.b16 %v2012, %v1985
        %v2391 = vpack.c.b16 %v2013, %v1986
        %v2392 = vpack.c.b16 %v2014, %v1987
        %v2393 = vpack.c.b16 %v2015, %v1988
        %v2394 = vpack.c.b16 %v2016, %v1989
        %v2395 = vpack.c.b16 %v2017, %v1990
        %v2396 = vpack.c.b16 %v2018, %v1991
        %v2397 = vpack.c.b16 %v2019, %v1992
        %v2398 = vpack.c.b16 %v2020, %v1993
        %v2399 = vpack.c.b16 %v2021, %v1994
        %v2400 = vpack.c.b16 %v2022, %v1995
        %v2401 = vpack.c.b16 %v2023, %v1996
        %v2402 = vpack.c.b16 %v2024, %v1997
        %v2403 = vpack.c.b16 %v2025, %v1998
        %v2404 = vpack.c.b16 %v2026, %v1999
        %v2405 = vpack.c.b16 %v2027, %v2000
        %v2406 = vpack.c.b16 %v2028, %v2001
        %v2407 = vpack.c.b16 %v2029, %v2002
        %v2408 = vpack.c.b16 %v2030, %v2003
        %v2409 = vpack.c.b16 %v2031, %v2004
        %v2410 = vpack.c.b16 %v2032, %v2005
        %v2411 = vpack.c.b16 %v2033, %v2006
        %vm2763 = vcmask 736256
        %v2765 = vsel %vm2763, %v293, 0
        %vm2767 = vcmask 1044480
        %v2769 = vsel %vm2767, %v2385, 0
        %v2772 = vsel %vm2767, %v2386, 0
        %v2775 = vsel %vm2767, %v2387, 0
        %v2778 = vsel %vm2767, %v2388, 0
        %v2781 = vsel %vm2767, %v2389, 0
        %v2784 = vsel %vm2767, %v2390, 0
        %v2787 = vsel %vm2767, %v2391, 0
        %v2790 = vsel %vm2767, %v2392, 0
        %v2793 = vsel %vm2767, %v2393, 0
        %v2796 = vsel %vm2767, %v2394, 0
        %v2799 = vsel %vm2767, %v2395, 0
        %v2802 = vsel %vm2767, %v2396, 0
        %v2805 = vsel %vm2767, %v2397, 0
        %v2808 = vsel %vm2767, %v2398, 0
        %v2811 = vsel %vm2767, %v2399, 0
        %v2814 = vsel %vm2767, %v2400, 0
        %v2817 = vsel %vm2767, %v2401, 0
        %v2820 = vsel %vm2767, %v2402, 0
        %v2823 = vsel %vm2767, %v2403, 0
        %v2826 = vsel %vm2767, %v2404, 0
        %v2829 = vsel %vm2767, %v2405, 0
        %v2832 = vsel %vm2767, %v2406, 0
        %v2835 = vsel %vm2767, %v2407, 0
        %v2838 = vsel %vm2767, %v2408, 0
        %v2841 = vsel %vm2767, %v2409, 0
        %v2844 = vsel %vm2767, %v2410, 0
        %v2847 = vsel %vm2767, %v2411, 0
        %2849 = vmatprep.subr.bf16.mxu0 %v2035
        %2850 = vmatpush1.bf16.msra.mxu0 %v2034
        %2851 = vmatprep.subr.bf16.mxu0 %v2062
        %2852 = vmatpush1.bf16.msra.mxu0 %v2061
        %2853 = vmatprep.subr.bf16.mxu0 %v2089
        %2854 = vmatpush1.bf16.msra.mxu0 %v2088
        %2855 = vmatprep.subr.bf16.mxu0 %v2116
        %2856 = vmatpush1.bf16.msra.mxu0 %v2115
        %2857 = vmatprep.subr.bf16.mxu0 %v2143
        %2858 = vmatpush1.bf16.msra.mxu0 %v2142
        %2859 = vmatprep.subr.bf16.mxu0 %v2170
        %2860 = vmatpush1.bf16.msra.mxu0 %v2169
        %2861 = vmatprep.subr.bf16.mxu0 %v2197
        %2862 = vmatpush1.bf16.msra.mxu0 %v2196
        %2863 = vmatprep.subr.bf16.mxu0 %v2224
        %2864 = vmatpush1.bf16.msra.mxu0 %v2223
        %2865 = vmatprep.subr.bf16.mxu0 %v2251
        %2866 = vmatpush1.bf16.msra.mxu0 %v2250
        %2867 = vmatprep.subr.bf16.mxu0 %v2278
        %2868 = vmatpush1.bf16.msra.mxu0 %v2277
        %2869 = vmatprep.subr.bf16.mxu0 %v2305
        %2870 = vmatpush1.bf16.msra.mxu0 %v2304
        %2871 = vmatprep.subr.bf16.mxu0 %v2332
        %2872 = vmatpush1.bf16.msra.mxu0 %v2331
        %2873 = vmatprep.subr.bf16.mxu0 %v2359
        %2874 = vmatpush1.bf16.msra.mxu0 %v2358
        %2875 = vmatprep.subr.bf16.mxu0 %v2772
        %2876 = vmatpush1.bf16.msra.mxu0 %v2769
        %2877 = vmatprep.subr.bf16.mxu0 0
        %2878 = vmatpush1.bf16.msra.mxu0 0
        %2879 = vmatprep.subr.bf16.mxu0 0
        %2880 = vmatpush1.bf16.msra.mxu0 0
        %2881 = vmatprep.mubr.bf16.mxu0 %v2765
        %2882 = vmatmul.mubr.bf16.gmra.mrb[0].mxu0 %v292
        %v2883 = vpop.f32.mrb[0].mxu0
        %v2884 = vadd.f32 0.0, %v2883
        %v2885 = vpop.f32.mrb[0].mxu0
        %v2886 = vadd.f32 0.0, %v2885
        %v2887 = vpop.f32.mrb[0].mxu0
        %v2888 = vpop.f32.mrb[0].mxu0
        %2889 = vdwg.mxu0
        %2890 = vmatprep.subr.bf16.mxu0 %v2037
        %2891 = vmatpush1.bf16.msra.mxu0 %v2036
        %2892 = vmatprep.subr.bf16.mxu0 %v2064
        %2893 = vmatpush1.bf16.msra.mxu0 %v2063
        %2894 = vmatprep.subr.bf16.mxu0 %v2091
        %2895 = vmatpush1.bf16.msra.mxu0 %v2090
        %2896 = vmatprep.subr.bf16.mxu0 %v2118
        %2897 = vmatpush1.bf16.msra.mxu0 %v2117
        %2898 = vmatprep.subr.bf16.mxu0 %v2145
        %2899 = vmatpush1.bf16.msra.mxu0 %v2144
        %2900 = vmatprep.subr.bf16.mxu0 %v2172
        %2901 = vmatpush1.bf16.msra.mxu0 %v2171
        %2902 = vmatprep.subr.bf16.mxu0 %v2199
        %2903 = vmatpush1.bf16.msra.mxu0 %v2198
        %2904 = vmatprep.subr.bf16.mxu0 %v2226
        %2905 = vmatpush1.bf16.msra.mxu0 %v2225
        %2906 = vmatprep.subr.bf16.mxu0 %v2253
        %2907 = vmatpush1.bf16.msra.mxu0 %v2252
        %2908 = vmatprep.subr.bf16.mxu0 %v2280
        %2909 = vmatpush1.bf16.msra.mxu0 %v2279
        %2910 = vmatprep.subr.bf16.mxu0 %v2307
        %2911 = vmatpush1.bf16.msra.mxu0 %v2306
        %2912 = vmatprep.subr.bf16.mxu0 %v2334
        %2913 = vmatpush1.bf16.msra.mxu0 %v2333
        %2914 = vmatprep.subr.bf16.mxu0 %v2361
        %2915 = vmatpush1.bf16.msra.mxu0 %v2360
        %2916 = vmatprep.subr.bf16.mxu0 %v2778
        %2917 = vmatpush1.bf16.msra.mxu0 %v2775
        %2918 = vmatprep.subr.bf16.mxu0 0
        %2919 = vmatpush1.bf16.msra.mxu0 0
        %2920 = vmatprep.subr.bf16.mxu0 0
        %2921 = vmatpush1.bf16.msra.mxu0 0
        %2922 = vmatprep.mubr.bf16.mxu0 %v2765
        %2923 = vmatmul.mubr.bf16.gmra.mrb[0].mxu0 %v292
        %v2924 = vpop.f32.mrb[0].mxu0
        %v2925 = vadd.f32 0.0, %v2924
        %v2926 = vpop.f32.mrb[0].mxu0
        %v2927 = vadd.f32 0.0, %v2926
        %v2928 = vpop.f32.mrb[0].mxu0
        %v2929 = vpop.f32.mrb[0].mxu0
        %2930 = vdwg.mxu0
        %2931 = vmatprep.subr.bf16.mxu0 %v2039
        %2932 = vmatpush1.bf16.msra.mxu0 %v2038
        %2933 = vmatprep.subr.bf16.mxu0 %v2066
        %2934 = vmatpush1.bf16.msra.mxu0 %v2065
        %2935 = vmatprep.subr.bf16.mxu0 %v2093
        %2936 = vmatpush1.bf16.msra.mxu0 %v2092
        %2937 = vmatprep.subr.bf16.mxu0 %v2120
        %2938 = vmatpush1.bf16.msra.mxu0 %v2119
        %2939 = vmatprep.subr.bf16.mxu0 %v2147
        %2940 = vmatpush1.bf16.msra.mxu0 %v2146
        %2941 = vmatprep.subr.bf16.mxu0 %v2174
        %2942 = vmatpush1.bf16.msra.mxu0 %v2173
        %2943 = vmatprep.subr.bf16.mxu0 %v2201
        %2944 = vmatpush1.bf16.msra.mxu0 %v2200
        %2945 = vmatprep.subr.bf16.mxu0 %v2228
        %2946 = vmatpush1.bf16.msra.mxu0 %v2227
        %2947 = vmatprep.subr.bf16.mxu0 %v2255
        %2948 = vmatpush1.bf16.msra.mxu0 %v2254
        %2949 = vmatprep.subr.bf16.mxu0 %v2282
        %2950 = vmatpush1.bf16.msra.mxu0 %v2281
        %2951 = vmatprep.subr.bf16.mxu0 %v2309
        %2952 = vmatpush1.bf16.msra.mxu0 %v2308
        %2953 = vmatprep.subr.bf16.mxu0 %v2336
        %2954 = vmatpush1.bf16.msra.mxu0 %v2335
        %2955 = vmatprep.subr.bf16.mxu0 %v2363
        %2956 = vmatpush1.bf16.msra.mxu0 %v2362
        %2957 = vmatprep.subr.bf16.mxu0 %v2784
        %2958 = vmatpush1.bf16.msra.mxu0 %v2781
        %2959 = vmatprep.subr.bf16.mxu0 0
        %2960 = vmatpush1.bf16.msra.mxu0 0
        %2961 = vmatprep.subr.bf16.mxu0 0
        %2962 = vmatpush1.bf16.msra.mxu0 0
        %2963 = vmatprep.mubr.bf16.mxu0 %v2765
        %2964 = vmatmul.mubr.bf16.gmra.mrb[0].mxu0 %v292
        %v2965 = vpop.f32.mrb[0].mxu0
        %v2966 = vadd.f32 0.0, %v2965
        %v2967 = vpop.f32.mrb[0].mxu0
        %v2968 = vadd.f32 0.0, %v2967
        %v2969 = vpop.f32.mrb[0].mxu0
        %v2970 = vpop.f32.mrb[0].mxu0
        %2971 = vdwg.mxu0
        %2972 = vmatprep.subr.bf16.mxu0 %v2041
        %2973 = vmatpush1.bf16.msra.mxu0 %v2040
        %2974 = vmatprep.subr.bf16.mxu0 %v2068
        %2975 = vmatpush1.bf16.msra.mxu0 %v2067
        %2976 = vmatprep.subr.bf16.mxu0 %v2095
        %2977 = vmatpush1.bf16.msra.mxu0 %v2094
        %2978 = vmatprep.subr.bf16.mxu0 %v2122
        %2979 = vmatpush1.bf16.msra.mxu0 %v2121
        %2980 = vmatprep.subr.bf16.mxu0 %v2149
        %2981 = vmatpush1.bf16.msra.mxu0 %v2148
        %2982 = vmatprep.subr.bf16.mxu0 %v2176
        %2983 = vmatpush1.bf16.msra.mxu0 %v2175
        %2984 = vmatprep.subr.bf16.mxu0 %v2203
        %2985 = vmatpush1.bf16.msra.mxu0 %v2202
        %2986 = vmatprep.subr.bf16.mxu0 %v2230
        %2987 = vmatpush1.bf16.msra.mxu0 %v2229
        %2988 = vmatprep.subr.bf16.mxu0 %v2257
        %2989 = vmatpush1.bf16.msra.mxu0 %v2256
        %2990 = vmatprep.subr.bf16.mxu0 %v2284
        %2991 = vmatpush1.bf16.msra.mxu0 %v2283
        %2992 = vmatprep.subr.bf16.mxu0 %v2311
        %2993 = vmatpush1.bf16.msra.mxu0 %v2310
        %2994 = vmatprep.subr.bf16.mxu0 %v2338
        %2995 = vmatpush1.bf16.msra.mxu0 %v2337
        %2996 = vmatprep.subr.bf16.mxu0 %v2365
        %2997 = vmatpush1.bf16.msra.mxu0 %v2364
        %2998 = vmatprep.subr.bf16.mxu0 %v2790
        %2999 = vmatpush1.bf16.msra.mxu0 %v2787
        %3000 = vmatprep.subr.bf16.mxu0 0
        %3001 = vmatpush1.bf16.msra.mxu0 0
        %3002 = vmatprep.subr.bf16.mxu0 0
        %3003 = vmatpush1.bf16.msra.mxu0 0
        %3004 = vmatprep.mubr.bf16.mxu0 %v2765
        %3005 = vmatmul.mubr.bf16.gmra.mrb[0].mxu0 %v292
        %v3006 = vpop.f32.mrb[0].mxu0
        %v3007 = vadd.f32 0.0, %v3006
        %v3008 = vpop.f32.mrb[0].mxu0
        %v3009 = vadd.f32 0.0, %v3008
        %v3010 = vpop.f32.mrb[0].mxu0
        %v3011 = vpop.f32.mrb[0].mxu0
        %3012 = vdwg.mxu0
        %3013 = vmatprep.subr.bf16.mxu0 %v2043
        %3014 = vmatpush1.bf16.msra.mxu0 %v2042
        %3015 = vmatprep.subr.bf16.mxu0 %v2070
        %3016 = vmatpush1.bf16.msra.mxu0 %v2069
        %3017 = vmatprep.subr.bf16.mxu0 %v2097
        %3018 = vmatpush1.bf16.msra.mxu0 %v2096
        %3019 = vmatprep.subr.bf16.mxu0 %v2124
        %3020 = vmatpush1.bf16.msra.mxu0 %v2123
        %3021 = vmatprep.subr.bf16.mxu0 %v2151
        %3022 = vmatpush1.bf16.msra.mxu0 %v2150
        %3023 = vmatprep.subr.bf16.mxu0 %v2178
        %3024 = vmatpush1.bf16.msra.mxu0 %v2177
        %3025 = vmatprep.subr.bf16.mxu0 %v2205
        %3026 = vmatpush1.bf16.msra.mxu0 %v2204
        %3027 = vmatprep.subr.bf16.mxu0 %v2232
        %3028 = vmatpush1.bf16.msra.mxu0 %v2231
        %3029 = vmatprep.subr.bf16.mxu0 %v2259
        %3030 = vmatpush1.bf16.msra.mxu0 %v2258
        %3031 = vmatprep.subr.bf16.mxu0 %v2286
        %3032 = vmatpush1.bf16.msra.mxu0 %v2285
        %3033 = vmatprep.subr.bf16.mxu0 %v2313
        %3034 = vmatpush1.bf16.msra.mxu0 %v2312
        %3035 = vmatprep.subr.bf16.mxu0 %v2340
        %3036 = vmatpush1.bf16.msra.mxu0 %v2339
        %3037 = vmatprep.subr.bf16.mxu0 %v2367
        %3038 = vmatpush1.bf16.msra.mxu0 %v2366
        %3039 = vmatprep.subr.bf16.mxu0 %v2796
        %3040 = vmatpush1.bf16.msra.mxu0 %v2793
        %3041 = vmatprep.subr.bf16.mxu0 0
        %3042 = vmatpush1.bf16.msra.mxu0 0
        %3043 = vmatprep.subr.bf16.mxu0 0
        %3044 = vmatpush1.bf16.msra.mxu0 0
        %3045 = vmatprep.mubr.bf16.mxu0 %v2765
        %3046 = vmatmul.mubr.bf16.gmra.mrb[0].mxu0 %v292
        %v3047 = vpop.f32.mrb[0].mxu0
        %v3048 = vadd.f32 0.0, %v3047
        %v3049 = vpop.f32.mrb[0].mxu0
        %v3050 = vadd.f32 0.0, %v3049
        %v3051 = vpop.f32.mrb[0].mxu0
        %v3052 = vpop.f32.mrb[0].mxu0
        %3053 = vdwg.mxu0
        %3054 = vmatprep.subr.bf16.mxu0 %v2045
        %3055 = vmatpush1.bf16.msra.mxu0 %v2044
        %3056 = vmatprep.subr.bf16.mxu0 %v2072
        %3057 = vmatpush1.bf16.msra.mxu0 %v2071
        %3058 = vmatprep.subr.bf16.mxu0 %v2099
        %3059 = vmatpush1.bf16.msra.mxu0 %v2098
        %3060 = vmatprep.subr.bf16.mxu0 %v2126
        %3061 = vmatpush1.bf16.msra.mxu0 %v2125
        %3062 = vmatprep.subr.bf16.mxu0 %v2153
        %3063 = vmatpush1.bf16.msra.mxu0 %v2152
        %3064 = vmatprep.subr.bf16.mxu0 %v2180
        %3065 = vmatpush1.bf16.msra.mxu0 %v2179
        %3066 = vmatprep.subr.bf16.mxu0 %v2207
        %3067 = vmatpush1.bf16.msra.mxu0 %v2206
        %3068 = vmatprep.subr.bf16.mxu0 %v2234
        %3069 = vmatpush1.bf16.msra.mxu0 %v2233
        %3070 = vmatprep.subr.bf16.mxu0 %v2261
        %3071 = vmatpush1.bf16.msra.mxu0 %v2260
        %3072 = vmatprep.subr.bf16.mxu0 %v2288
        %3073 = vmatpush1.bf16.msra.mxu0 %v2287
        %3074 = vmatprep.subr.bf16.mxu0 %v2315
        %3075 = vmatpush1.bf16.msra.mxu0 %v2314
        %3076 = vmatprep.subr.bf16.mxu0 %v2342
        %3077 = vmatpush1.bf16.msra.mxu0 %v2341
        %3078 = vmatprep.subr.bf16.mxu0 %v2369
        %3079 = vmatpush1.bf16.msra.mxu0 %v2368
        %3080 = vmatprep.subr.bf16.mxu0 %v2802
        %3081 = vmatpush1.bf16.msra.mxu0 %v2799
        %3082 = vmatprep.subr.bf16.mxu0 0
        %3083 = vmatpush1.bf16.msra.mxu0 0
        %3084 = vmatprep.subr.bf16.mxu0 0
        %3085 = vmatpush1.bf16.msra.mxu0 0
        %3086 = vmatprep.mubr.bf16.mxu0 %v2765
        %3087 = vmatmul.mubr.bf16.gmra.mrb[0].mxu0 %v292
        %v3088 = vpop.f32.mrb[0].mxu0
        %v3089 = vadd.f32 0.0, %v3088
        %v3090 = vpop.f32.mrb[0].mxu0
        %v3091 = vadd.f32 0.0, %v3090
        %v3092 = vpop.f32.mrb[0].mxu0
        %v3093 = vpop.f32.mrb[0].mxu0
        %3094 = vdwg.mxu0
        %3095 = vmatprep.subr.bf16.mxu0 %v2047
        %3096 = vmatpush1.bf16.msra.mxu0 %v2046
        %3097 = vmatprep.subr.bf16.mxu0 %v2074
        %3098 = vmatpush1.bf16.msra.mxu0 %v2073
        %3099 = vmatprep.subr.bf16.mxu0 %v2101
        %3100 = vmatpush1.bf16.msra.mxu0 %v2100
        %3101 = vmatprep.subr.bf16.mxu0 %v2128
        %3102 = vmatpush1.bf16.msra.mxu0 %v2127
        %3103 = vmatprep.subr.bf16.mxu0 %v2155
        %3104 = vmatpush1.bf16.msra.mxu0 %v2154
        %3105 = vmatprep.subr.bf16.mxu0 %v2182
        %3106 = vmatpush1.bf16.msra.mxu0 %v2181
        %3107 = vmatprep.subr.bf16.mxu0 %v2209
        %3108 = vmatpush1.bf16.msra.mxu0 %v2208
        %3109 = vmatprep.subr.bf16.mxu0 %v2236
        %3110 = vmatpush1.bf16.msra.mxu0 %v2235
        %3111 = vmatprep.subr.bf16.mxu0 %v2263
        %3112 = vmatpush1.bf16.msra.mxu0 %v2262
        %3113 = vmatprep.subr.bf16.mxu0 %v2290
        %3114 = vmatpush1.bf16.msra.mxu0 %v2289
        %3115 = vmatprep.subr.bf16.mxu0 %v2317
        %3116 = vmatpush1.bf16.msra.mxu0 %v2316
        %3117 = vmatprep.subr.bf16.mxu0 %v2344
        %3118 = vmatpush1.bf16.msra.mxu0 %v2343
        %3119 = vmatprep.subr.bf16.mxu0 %v2371
        %3120 = vmatpush1.bf16.msra.mxu0 %v2370
        %3121 = vmatprep.subr.bf16.mxu0 %v2808
        %3122 = vmatpush1.bf16.msra.mxu0 %v2805
        %3123 = vmatprep.subr.bf16.mxu0 0
        %3124 = vmatpush1.bf16.msra.mxu0 0
        %3125 = vmatprep.subr.bf16.mxu0 0
        %3126 = vmatpush1.bf16.msra.mxu0 0
        %3127 = vmatprep.mubr.bf16.mxu0 %v2765
        %3128 = vmatmul.mubr.bf16.gmra.mrb[0].mxu0 %v292
        %v3129 = vpop.f32.mrb[0].mxu0
        %v3130 = vadd.f32 0.0, %v3129
        %v3131 = vpop.f32.mrb[0].mxu0
        %v3132 = vadd.f32 0.0, %v3131
        %v3133 = vpop.f32.mrb[0].mxu0
        %v3134 = vpop.f32.mrb[0].mxu0
        %3135 = vdwg.mxu0
        %3136 = vmatprep.subr.bf16.mxu0 %v2049
        %3137 = vmatpush1.bf16.msra.mxu0 %v2048
        %3138 = vmatprep.subr.bf16.mxu0 %v2076
        %3139 = vmatpush1.bf16.msra.mxu0 %v2075
        %3140 = vmatprep.subr.bf16.mxu0 %v2103
        %3141 = vmatpush1.bf16.msra.mxu0 %v2102
        %3142 = vmatprep.subr.bf16.mxu0 %v2130
        %3143 = vmatpush1.bf16.msra.mxu0 %v2129
        %3144 = vmatprep.subr.bf16.mxu0 %v2157
        %3145 = vmatpush1.bf16.msra.mxu0 %v2156
        %3146 = vmatprep.subr.bf16.mxu0 %v2184
        %3147 = vmatpush1.bf16.msra.mxu0 %v2183
        %3148 = vmatprep.subr.bf16.mxu0 %v2211
        %3149 = vmatpush1.bf16.msra.mxu0 %v2210
        %3150 = vmatprep.subr.bf16.mxu0 %v2238
        %3151 = vmatpush1.bf16.msra.mxu0 %v2237
        %3152 = vmatprep.subr.bf16.mxu0 %v2265
        %3153 = vmatpush1.bf16.msra.mxu0 %v2264
        %3154 = vmatprep.subr.bf16.mxu0 %v2292
        %3155 = vmatpush1.bf16.msra.mxu0 %v2291
        %3156 = vmatprep.subr.bf16.mxu0 %v2319
        %3157 = vmatpush1.bf16.msra.mxu0 %v2318
        %3158 = vmatprep.subr.bf16.mxu0 %v2346
        %3159 = vmatpush1.bf16.msra.mxu0 %v2345
        %3160 = vmatprep.subr.bf16.mxu0 %v2373
        %3161 = vmatpush1.bf16.msra.mxu0 %v2372
        %3162 = vmatprep.subr.bf16.mxu0 %v2814
        %3163 = vmatpush1.bf16.msra.mxu0 %v2811
        %3164 = vmatprep.subr.bf16.mxu0 0
        %3165 = vmatpush1.bf16.msra.mxu0 0
        %3166 = vmatprep.subr.bf16.mxu0 0
        %3167 = vmatpush1.bf16.msra.mxu0 0
        %3168 = vmatprep.mubr.bf16.mxu0 %v2765
        %3169 = vmatmul.mubr.bf16.gmra.mrb[0].mxu0 %v292
        %v3170 = vpop.f32.mrb[0].mxu0
        %v3171 = vadd.f32 0.0, %v3170
        %v3172 = vpop.f32.mrb[0].mxu0
        %v3173 = vadd.f32 0.0, %v3172
        %v3174 = vpop.f32.mrb[0].mxu0
        %v3175 = vpop.f32.mrb[0].mxu0
        %3176 = vdwg.mxu0
        %3177 = vmatprep.subr.bf16.mxu0 %v2051
        %3178 = vmatpush1.bf16.msra.mxu0 %v2050
        %3179 = vmatprep.subr.bf16.mxu0 %v2078
        %3180 = vmatpush1.bf16.msra.mxu0 %v2077
        %3181 = vmatprep.subr.bf16.mxu0 %v2105
        %3182 = vmatpush1.bf16.msra.mxu0 %v2104
        %3183 = vmatprep.subr.bf16.mxu0 %v2132
        %3184 = vmatpush1.bf16.msra.mxu0 %v2131
        %3185 = vmatprep.subr.bf16.mxu0 %v2159
        %3186 = vmatpush1.bf16.msra.mxu0 %v2158
        %3187 = vmatprep.subr.bf16.mxu0 %v2186
        %3188 = vmatpush1.bf16.msra.mxu0 %v2185
        %3189 = vmatprep.subr.bf16.mxu0 %v2213
        %3190 = vmatpush1.bf16.msra.mxu0 %v2212
        %3191 = vmatprep.subr.bf16.mxu0 %v2240
        %3192 = vmatpush1.bf16.msra.mxu0 %v2239
        %3193 = vmatprep.subr.bf16.mxu0 %v2267
        %3194 = vmatpush1.bf16.msra.mxu0 %v2266
        %3195 = vmatprep.subr.bf16.mxu0 %v2294
        %3196 = vmatpush1.bf16.msra.mxu0 %v2293
        %3197 = vmatprep.subr.bf16.mxu0 %v2321
        %3198 = vmatpush1.bf16.msra.mxu0 %v2320
        %3199 = vmatprep.subr.bf16.mxu0 %v2348
        %3200 = vmatpush1.bf16.msra.mxu0 %v2347
        %3201 = vmatprep.subr.bf16.mxu0 %v2375
        %3202 = vmatpush1.bf16.msra.mxu0 %v2374
        %3203 = vmatprep.subr.bf16.mxu0 %v2820
        %3204 = vmatpush1.bf16.msra.mxu0 %v2817
        %3205 = vmatprep.subr.bf16.mxu0 0
        %3206 = vmatpush1.bf16.msra.mxu0 0
        %3207 = vmatprep.subr.bf16.mxu0 0
        %3208 = vmatpush1.bf16.msra.mxu0 0
        %3209 = vmatprep.mubr.bf16.mxu0 %v2765
        %3210 = vmatmul.mubr.bf16.gmra.mrb[0].mxu0 %v292
        %v3211 = vpop.f32.mrb[0].mxu0
        %v3212 = vadd.f32 0.0, %v3211
        %v3213 = vpop.f32.mrb[0].mxu0
        %v3214 = vadd.f32 0.0, %v3213
        %v3215 = vpop.f32.mrb[0].mxu0
        %v3216 = vpop.f32.mrb[0].mxu0
        %3217 = vdwg.mxu0
        %3218 = vmatprep.subr.bf16.mxu0 %v2053
        %3219 = vmatpush1.bf16.msra.mxu0 %v2052
        %3220 = vmatprep.subr.bf16.mxu0 %v2080
        %3221 = vmatpush1.bf16.msra.mxu0 %v2079
        %3222 = vmatprep.subr.bf16.mxu0 %v2107
        %3223 = vmatpush1.bf16.msra.mxu0 %v2106
        %3224 = vmatprep.subr.bf16.mxu0 %v2134
        %3225 = vmatpush1.bf16.msra.mxu0 %v2133
        %3226 = vmatprep.subr.bf16.mxu0 %v2161
        %3227 = vmatpush1.bf16.msra.mxu0 %v2160
        %3228 = vmatprep.subr.bf16.mxu0 %v2188
        %3229 = vmatpush1.bf16.msra.mxu0 %v2187
        %3230 = vmatprep.subr.bf16.mxu0 %v2215
        %3231 = vmatpush1.bf16.msra.mxu0 %v2214
        %3232 = vmatprep.subr.bf16.mxu0 %v2242
        %3233 = vmatpush1.bf16.msra.mxu0 %v2241
        %3234 = vmatprep.subr.bf16.mxu0 %v2269
        %3235 = vmatpush1.bf16.msra.mxu0 %v2268
        %3236 = vmatprep.subr.bf16.mxu0 %v2296
        %3237 = vmatpush1.bf16.msra.mxu0 %v2295
        %3238 = vmatprep.subr.bf16.mxu0 %v2323
        %3239 = vmatpush1.bf16.msra.mxu0 %v2322
        %3240 = vmatprep.subr.bf16.mxu0 %v2350
        %3241 = vmatpush1.bf16.msra.mxu0 %v2349
        %3242 = vmatprep.subr.bf16.mxu0 %v2377
        %3243 = vmatpush1.bf16.msra.mxu0 %v2376
        %3244 = vmatprep.subr.bf16.mxu0 %v2826
        %3245 = vmatpush1.bf16.msra.mxu0 %v2823
        %3246 = vmatprep.subr.bf16.mxu0 0
        %3247 = vmatpush1.bf16.msra.mxu0 0
        %3248 = vmatprep.subr.bf16.mxu0 0
        %3249 = vmatpush1.bf16.msra.mxu0 0
        %3250 = vmatprep.mubr.bf16.mxu0 %v2765
        %3251 = vmatmul.mubr.bf16.gmra.mrb[0].mxu0 %v292
        %v3252 = vpop.f32.mrb[0].mxu0
        %v3253 = vadd.f32 0.0, %v3252
        %v3254 = vpop.f32.mrb[0].mxu0
        %v3255 = vadd.f32 0.0, %v3254
        %v3256 = vpop.f32.mrb[0].mxu0
        %v3257 = vpop.f32.mrb[0].mxu0
        %3258 = vdwg.mxu0
        %3259 = vmatprep.subr.bf16.mxu0 %v2055
        %3260 = vmatpush1.bf16.msra.mxu0 %v2054
        %3261 = vmatprep.subr.bf16.mxu0 %v2082
        %3262 = vmatpush1.bf16.msra.mxu0 %v2081
        %3263 = vmatprep.subr.bf16.mxu0 %v2109
        %3264 = vmatpush1.bf16.msra.mxu0 %v2108
        %3265 = vmatprep.subr.bf16.mxu0 %v2136
        %3266 = vmatpush1.bf16.msra.mxu0 %v2135
        %3267 = vmatprep.subr.bf16.mxu0 %v2163
        %3268 = vmatpush1.bf16.msra.mxu0 %v2162
        %3269 = vmatprep.subr.bf16.mxu0 %v2190
        %3270 = vmatpush1.bf16.msra.mxu0 %v2189
        %3271 = vmatprep.subr.bf16.mxu0 %v2217
        %3272 = vmatpush1.bf16.msra.mxu0 %v2216
        %3273 = vmatprep.subr.bf16.mxu0 %v2244
        %3274 = vmatpush1.bf16.msra.mxu0 %v2243
        %3275 = vmatprep.subr.bf16.mxu0 %v2271
        %3276 = vmatpush1.bf16.msra.mxu0 %v2270
        %3277 = vmatprep.subr.bf16.mxu0 %v2298
        %3278 = vmatpush1.bf16.msra.mxu0 %v2297
        %3279 = vmatprep.subr.bf16.mxu0 %v2325
        %3280 = vmatpush1.bf16.msra.mxu0 %v2324
        %3281 = vmatprep.subr.bf16.mxu0 %v2352
        %3282 = vmatpush1.bf16.msra.mxu0 %v2351
        %3283 = vmatprep.subr.bf16.mxu0 %v2379
        %3284 = vmatpush1.bf16.msra.mxu0 %v2378
        %3285 = vmatprep.subr.bf16.mxu0 %v2832
        %3286 = vmatpush1.bf16.msra.mxu0 %v2829
        %3287 = vmatprep.subr.bf16.mxu0 0
        %3288 = vmatpush1.bf16.msra.mxu0 0
        %3289 = vmatprep.subr.bf16.mxu0 0
        %3290 = vmatpush1.bf16.msra.mxu0 0
        %3291 = vmatprep.mubr.bf16.mxu0 %v2765
        %3292 = vmatmul.mubr.bf16.gmra.mrb[0].mxu0 %v292
        %v3293 = vpop.f32.mrb[0].mxu0
        %v3294 = vadd.f32 0.0, %v3293
        %v3295 = vpop.f32.mrb[0].mxu0
        %v3296 = vadd.f32 0.0, %v3295
        %v3297 = vpop.f32.mrb[0].mxu0
        %v3298 = vpop.f32.mrb[0].mxu0
        %3299 = vdwg.mxu0
        %3300 = vmatprep.subr.bf16.mxu0 %v2057
        %3301 = vmatpush1.bf16.msra.mxu0 %v2056
        %3302 = vmatprep.subr.bf16.mxu0 %v2084
        %3303 = vmatpush1.bf16.msra.mxu0 %v2083
        %3304 = vmatprep.subr.bf16.mxu0 %v2111
        %3305 = vmatpush1.bf16.msra.mxu0 %v2110
        %3306 = vmatprep.subr.bf16.mxu0 %v2138
        %3307 = vmatpush1.bf16.msra.mxu0 %v2137
        %3308 = vmatprep.subr.bf16.mxu0 %v2165
        %3309 = vmatpush1.bf16.msra.mxu0 %v2164
        %3310 = vmatprep.subr.bf16.mxu0 %v2192
        %3311 = vmatpush1.bf16.msra.mxu0 %v2191
        %3312 = vmatprep.subr.bf16.mxu0 %v2219
        %3313 = vmatpush1.bf16.msra.mxu0 %v2218
        %3314 = vmatprep.subr.bf16.mxu0 %v2246
        %3315 = vmatpush1.bf16.msra.mxu0 %v2245
        %3316 = vmatprep.subr.bf16.mxu0 %v2273
        %3317 = vmatpush1.bf16.msra.mxu0 %v2272
        %3318 = vmatprep.subr.bf16.mxu0 %v2300
        %3319 = vmatpush1.bf16.msra.mxu0 %v2299
        %3320 = vmatprep.subr.bf16.mxu0 %v2327
        %3321 = vmatpush1.bf16.msra.mxu0 %v2326
        %3322 = vmatprep.subr.bf16.mxu0 %v2354
        %3323 = vmatpush1.bf16.msra.mxu0 %v2353
        %3324 = vmatprep.subr.bf16.mxu0 %v2381
        %3325 = vmatpush1.bf16.msra.mxu0 %v2380
        %3326 = vmatprep.subr.bf16.mxu0 %v2838
        %3327 = vmatpush1.bf16.msra.mxu0 %v2835
        %3328 = vmatprep.subr.bf16.mxu0 0
        %3329 = vmatpush1.bf16.msra.mxu0 0
        %3330 = vmatprep.subr.bf16.mxu0 0
        %3331 = vmatpush1.bf16.msra.mxu0 0
        %3332 = vmatprep.mubr.bf16.mxu0 %v2765
        %3333 = vmatmul.mubr.bf16.gmra.mrb[0].mxu0 %v292
        %v3334 = vpop.f32.mrb[0].mxu0
        %v3335 = vadd.f32 0.0, %v3334
        %v3336 = vpop.f32.mrb[0].mxu0
        %v3337 = vadd.f32 0.0, %v3336
        %v3338 = vpop.f32.mrb[0].mxu0
        %v3339 = vpop.f32.mrb[0].mxu0
        %3340 = vdwg.mxu0
        %3341 = vmatprep.subr.bf16.mxu0 %v2059
        %3342 = vmatpush1.bf16.msra.mxu0 %v2058
        %3343 = vmatprep.subr.bf16.mxu0 %v2086
        %3344 = vmatpush1.bf16.msra.mxu0 %v2085
        %3345 = vmatprep.subr.bf16.mxu0 %v2113
        %3346 = vmatpush1.bf16.msra.mxu0 %v2112
        %3347 = vmatprep.subr.bf16.mxu0 %v2140
        %3348 = vmatpush1.bf16.msra.mxu0 %v2139
        %3349 = vmatprep.subr.bf16.mxu0 %v2167
        %3350 = vmatpush1.bf16.msra.mxu0 %v2166
        %3351 = vmatprep.subr.bf16.mxu0 %v2194
        %3352 = vmatpush1.bf16.msra.mxu0 %v2193
        %3353 = vmatprep.subr.bf16.mxu0 %v2221
        %3354 = vmatpush1.bf16.msra.mxu0 %v2220
        %3355 = vmatprep.subr.bf16.mxu0 %v2248
        %3356 = vmatpush1.bf16.msra.mxu0 %v2247
        %3357 = vmatprep.subr.bf16.mxu0 %v2275
        %3358 = vmatpush1.bf16.msra.mxu0 %v2274
        %3359 = vmatprep.subr.bf16.mxu0 %v2302
        %3360 = vmatpush1.bf16.msra.mxu0 %v2301
        %3361 = vmatprep.subr.bf16.mxu0 %v2329
        %3362 = vmatpush1.bf16.msra.mxu0 %v2328
        %3363 = vmatprep.subr.bf16.mxu0 %v2356
        %3364 = vmatpush1.bf16.msra.mxu0 %v2355
        %3365 = vmatprep.subr.bf16.mxu0 %v2383
        %3366 = vmatpush1.bf16.msra.mxu0 %v2382
        %3367 = vmatprep.subr.bf16.mxu0 %v2844
        %3368 = vmatpush1.bf16.msra.mxu0 %v2841
        %3369 = vmatprep.subr.bf16.mxu0 0
        %3370 = vmatpush1.bf16.msra.mxu0 0
        %3371 = vmatprep.subr.bf16.mxu0 0
        %3372 = vmatpush1.bf16.msra.mxu0 0
        %3373 = vmatprep.mubr.bf16.mxu0 %v2765
        %3374 = vmatmul.mubr.bf16.gmra.mrb[0].mxu0 %v292
        %v3375 = vpop.f32.mrb[0].mxu0
        %v3376 = vadd.f32 0.0, %v3375
        %v3377 = vpop.f32.mrb[0].mxu0
        %v3378 = vadd.f32 0.0, %v3377
        %v3379 = vpop.f32.mrb[0].mxu0
        %v3380 = vpop.f32.mrb[0].mxu0
        %3381 = vdwg.mxu0
        %3382 = vmatprep.subr.bf16.mxu0 0
        %3383 = vmatpush1.bf16.msra.mxu0 %v2060
        %3384 = vmatprep.subr.bf16.mxu0 0
        %3385 = vmatpush1.bf16.msra.mxu0 %v2087
        %3386 = vmatprep.subr.bf16.mxu0 0
        %3387 = vmatpush1.bf16.msra.mxu0 %v2114
        %3388 = vmatprep.subr.bf16.mxu0 0
        %3389 = vmatpush1.bf16.msra.mxu0 %v2141
        %3390 = vmatprep.subr.bf16.mxu0 0
        %3391 = vmatpush1.bf16.msra.mxu0 %v2168
        %3392 = vmatprep.subr.bf16.mxu0 0
        %3393 = vmatpush1.bf16.msra.mxu0 %v2195
        %3394 = vmatprep.subr.bf16.mxu0 0
        %3395 = vmatpush1.bf16.msra.mxu0 %v2222
        %3396 = vmatprep.subr.bf16.mxu0 0
        %3397 = vmatpush1.bf16.msra.mxu0 %v2249
        %3398 = vmatprep.subr.bf16.mxu0 0
        %3399 = vmatpush1.bf16.msra.mxu0 %v2276
        %3400 = vmatprep.subr.bf16.mxu0 0
        %3401 = vmatpush1.bf16.msra.mxu0 %v2303
        %3402 = vmatprep.subr.bf16.mxu0 0
        %3403 = vmatpush1.bf16.msra.mxu0 %v2330
        %3404 = vmatprep.subr.bf16.mxu0 0
        %3405 = vmatpush1.bf16.msra.mxu0 %v2357
        %3406 = vmatprep.subr.bf16.mxu0 0
        %3407 = vmatpush1.bf16.msra.mxu0 %v2384
        %3408 = vmatprep.subr.bf16.mxu0 0
        %3409 = vmatpush1.bf16.msra.mxu0 %v2847
        %3410 = vmatprep.subr.bf16.mxu0 0
        %3411 = vmatpush1.bf16.msra.mxu0 0
        %3412 = vmatprep.subr.bf16.mxu0 0
        %3413 = vmatpush1.bf16.msra.mxu0 0
        %3414 = vmatprep.mubr.bf16.mxu0 %v2765
        %3415 = vmatmul.mubr.bf16.gmra.mrb[0].mxu0 %v292
        %v3416 = vpop.f32.mrb[0].mxu0
        %v3417 = vadd.f32 0.0, %v3416
        %v3418 = vpop.f32.mrb[0].mxu0
        %v3419 = vpop.f32.mrb[0].mxu0
        %v3420 = vpop.f32.mrb[0].mxu0
        %3421 = vdwg.mxu0
        %s3422 = scalar_lea.vmem %s214, 1512 [#allocation2]
        %v3423 = vld [vmem:[%s3422] sm:$0xff]
        %v3424 = vld [vmem:[%s3422 + $0x8] sm:$0xff]
        %v3425 = vld [vmem:[%s3422 + $0x10] sm:$0xff]
        %v3426 = vld [vmem:[%s3422 + $0x18] sm:$0xff]
        %v3427 = vld [vmem:[%s3422 + $0x20] sm:$0xff]
        %v3428 = vld [vmem:[%s3422 + $0x28] sm:$0xff]
        %v3429 = vld [vmem:[%s3422 + $0x30] sm:$0x3f]
        %v3430 = vld [vmem:[%s3422 + $0x36] sm:$0xff]
        %v3431 = vld [vmem:[%s3422 + $0x3e] sm:$0xff]
        %v3432 = vld [vmem:[%s3422 + $0x46] sm:$0xff]
        %v3433 = vld [vmem:[%s3422 + $0x4e] sm:$0xff]
        %v3434 = vld [vmem:[%s3422 + $0x56] sm:$0xff]
        %v3435 = vld [vmem:[%s3422 + $0x5e] sm:$0xff]
        %v3436 = vld [vmem:[%s3422 + $0x66] sm:$0x3f]
        %v3437 = vld [vmem:[%s3422 + $0x6c] sm:$0xff]
        %v3438 = vld [vmem:[%s3422 + $0x74] sm:$0xff]
        %v3439 = vld [vmem:[%s3422 + $0x7c] sm:$0xff]
        %v3440 = vld [vmem:[%s3422 + $0x84] sm:$0xff]
        %v3441 = vld [vmem:[%s3422 + $0x8c] sm:$0xff]
        %v3442 = vld [vmem:[%s3422 + $0x94] sm:$0xff]
        %v3443 = vld [vmem:[%s3422 + $0x9c] sm:$0x3f]
        %v3444 = vld [vmem:[%s3422 + $0xa2] sm:$0xff]
        %v3445 = vld [vmem:[%s3422 + $0xaa] sm:$0xff]
        %v3446 = vld [vmem:[%s3422 + $0xb2] sm:$0xff]
        %v3447 = vld [vmem:[%s3422 + $0xba] sm:$0xff]
        %v3448 = vld [vmem:[%s3422 + $0xc2] sm:$0xff]
        %v3449 = vld [vmem:[%s3422 + $0xca] sm:$0xff]
        %v3450 = vld [vmem:[%s3422 + $0xd2] sm:$0x3f]
        %v3451 = vld [vmem:[%s3422 + $0xd8] sm:$0xff]
        %v3452 = vld [vmem:[%s3422 + $0xe0] sm:$0xff]
        %v3453 = vld [vmem:[%s3422 + $0xe8] sm:$0xff]
        %v3454 = vld [vmem:[%s3422 + $0xf0] sm:$0xff]
        %v3455 = vld [vmem:[%s3422 + $0xf8] sm:$0xff]
        %v3456 = vld [vmem:[%s3422 + $0x100] sm:$0xff]
        %v3457 = vld [vmem:[%s3422 + $0x108] sm:$0x3f]
        %v3458 = vld [vmem:[%s3422 + $0x10e] sm:$0xff]
        %v3459 = vld [vmem:[%s3422 + $0x116] sm:$0xff]
        %v3460 = vld [vmem:[%s3422 + $0x11e] sm:$0xff]
        %v3461 = vld [vmem:[%s3422 + $0x126] sm:$0xff]
        %v3462 = vld [vmem:[%s3422 + $0x12e] sm:$0xff]
        %v3463 = vld [vmem:[%s3422 + $0x136] sm:$0xff]
        %v3464 = vld [vmem:[%s3422 + $0x13e] sm:$0x3f]
        %v3465 = vld [vmem:[%s3422 + $0x144] sm:$0xff]
        %v3466 = vld [vmem:[%s3422 + $0x14c] sm:$0xff]
        %v3467 = vld [vmem:[%s3422 + $0x154] sm:$0xff]
        %v3468 = vld [vmem:[%s3422 + $0x15c] sm:$0xff]
        %v3469 = vld [vmem:[%s3422 + $0x164] sm:$0xff]
        %v3470 = vld [vmem:[%s3422 + $0x16c] sm:$0xff]
        %v3471 = vld [vmem:[%s3422 + $0x174] sm:$0x3f]
        %v3472 = vld [vmem:[%s3422 + $0x17a] sm:$0xff]
        %v3473 = vld [vmem:[%s3422 + $0x182] sm:$0xff]
        %v3474 = vld [vmem:[%s3422 + $0x18a] sm:$0xff]
        %v3475 = vld [vmem:[%s3422 + $0x192] sm:$0xff]
        %v3476 = vld [vmem:[%s3422 + $0x19a] sm:$0xff]
        %v3477 = vld [vmem:[%s3422 + $0x1a2] sm:$0xff]
        %v3478 = vld [vmem:[%s3422 + $0x1aa] sm:$0x3f]
        %v3479 = vld [vmem:[%s3422 + $0x1b0] sm:$0xff]
        %v3480 = vld [vmem:[%s3422 + $0x1b8] sm:$0xff]
        %v3481 = vld [vmem:[%s3422 + $0x1c0] sm:$0xff]
        %v3482 = vld [vmem:[%s3422 + $0x1c8] sm:$0xff]
        %v3483 = vld [vmem:[%s3422 + $0x1d0] sm:$0xff]
        %v3484 = vld [vmem:[%s3422 + $0x1d8] sm:$0xff]
        %v3485 = vld [vmem:[%s3422 + $0x1e0] sm:$0x3f]
        %v3486 = vld [vmem:[%s3422 + $0x1e6] sm:$0xff]
        %v3487 = vld [vmem:[%s3422 + $0x1ee] sm:$0xff]
        %v3488 = vld [vmem:[%s3422 + $0x1f6] sm:$0xff]
        %v3489 = vld [vmem:[%s3422 + $0x1fe] sm:$0xff]
        %v3490 = vld [vmem:[%s3422 + $0x206] sm:$0xff]
        %v3491 = vld [vmem:[%s3422 + $0x20e] sm:$0xff]
        %v3492 = vld [vmem:[%s3422 + $0x216] sm:$0x3f]
        %v3493 = vld [vmem:[%s3422 + $0x21c] sm:$0xff]
        %v3494 = vld [vmem:[%s3422 + $0x224] sm:$0xff]
        %v3495 = vld [vmem:[%s3422 + $0x22c] sm:$0xff]
        %v3496 = vld [vmem:[%s3422 + $0x234] sm:$0xff]
        %v3497 = vld [vmem:[%s3422 + $0x23c] sm:$0xff]
        %v3498 = vld [vmem:[%s3422 + $0x244] sm:$0xff]
        %v3499 = vld [vmem:[%s3422 + $0x24c] sm:$0x3f]
        %v3500 = vld [vmem:[%s3422 + $0x252] sm:$0xff]
        %v3501 = vld [vmem:[%s3422 + $0x25a] sm:$0xff]
        %v3502 = vld [vmem:[%s3422 + $0x262] sm:$0xff]
        %v3503 = vld [vmem:[%s3422 + $0x26a] sm:$0xff]
        %v3504 = vld [vmem:[%s3422 + $0x272] sm:$0xff]
        %v3505 = vld [vmem:[%s3422 + $0x27a] sm:$0xff]
        %v3506 = vld [vmem:[%s3422 + $0x282] sm:$0x3f]
        %v3507 = vld [vmem:[%s3422 + $0x288] sm:$0xff]
        %v3508 = vld [vmem:[%s3422 + $0x290] sm:$0xff]
        %v3509 = vld [vmem:[%s3422 + $0x298] sm:$0xff]
        %v3510 = vld [vmem:[%s3422 + $0x2a0] sm:$0xff]
        %v3511 = vld [vmem:[%s3422 + $0x2a8] sm:$0xff]
        %v3512 = vld [vmem:[%s3422 + $0x2b0] sm:$0xff]
        %v3513 = vld [vmem:[%s3422 + $0x2b8] sm:$0x3f]
        %v3514 = vld [vmem:[%s3422 + $0x2be] sm:$0xff]
        %v3515 = vld [vmem:[%s3422 + $0x2c6] sm:$0xff]
        %v3516 = vld [vmem:[%s3422 + $0x2ce] sm:$0xff]
        %v3517 = vld [vmem:[%s3422 + $0x2d6] sm:$0xff]
        %v3518 = vld [vmem:[%s3422 + $0x2de] sm:$0xff]
        %v3519 = vld [vmem:[%s3422 + $0x2e6] sm:$0xff]
        %v3520 = vld [vmem:[%s3422 + $0x2ee] sm:$0x3f]
        %v3521 = vld [vmem:[%s3422 + $0x2f4] sm:$0xff]
        %v3522 = vld [vmem:[%s3422 + $0x2fc] sm:$0xff]
        %v3523 = vld [vmem:[%s3422 + $0x304] sm:$0xff]
        %v3524 = vld [vmem:[%s3422 + $0x30c] sm:$0xff]
        %v3525 = vld [vmem:[%s3422 + $0x314] sm:$0xff]
        %v3526 = vld [vmem:[%s3422 + $0x31c] sm:$0xff]
        %v3527 = vld [vmem:[%s3422 + $0x324] sm:$0x3f]
        %v3528 = vld [vmem:[%s3422 + $0x32a] sm:$0xff]
        %v3529 = vld [vmem:[%s3422 + $0x332] sm:$0xff]
        %v3530 = vld [vmem:[%s3422 + $0x33a] sm:$0xff]
        %v3531 = vld [vmem:[%s3422 + $0x342] sm:$0xff]
        %v3532 = vld [vmem:[%s3422 + $0x34a] sm:$0xff]
        %v3533 = vld [vmem:[%s3422 + $0x352] sm:$0xff]
        %v3534 = vld [vmem:[%s3422 + $0x35a] sm:$0x3f]
        %v3535 = vld [vmem:[%s3422 + $0x360] sm:$0xff]
        %v3536 = vld [vmem:[%s3422 + $0x368] sm:$0xff]
        %v3537 = vld [vmem:[%s3422 + $0x370] sm:$0xff]
        %v3538 = vld [vmem:[%s3422 + $0x378] sm:$0xff]
        %v3539 = vld [vmem:[%s3422 + $0x380] sm:$0xff]
        %v3540 = vld [vmem:[%s3422 + $0x388] sm:$0xff]
        %v3541 = vld [vmem:[%s3422 + $0x390] sm:$0x3f]
        %v3542 = vld [vmem:[%s3422 + $0x396] sm:$0xff]
        %v3543 = vld [vmem:[%s3422 + $0x39e] sm:$0xff]
        %v3544 = vld [vmem:[%s3422 + $0x3a6] sm:$0xff]
        %v3545 = vld [vmem:[%s3422 + $0x3ae] sm:$0xff]
        %v3546 = vld [vmem:[%s3422 + $0x3b6] sm:$0xff]
        %v3547 = vld [vmem:[%s3422 + $0x3be] sm:$0xff]
        %v3548 = vld [vmem:[%s3422 + $0x3c6] sm:$0x3f]
        %v3549 = vld [vmem:[%s3422 + $0x3cc] sm:$0xff]
        %v3550 = vld [vmem:[%s3422 + $0x3d4] sm:$0xff]
        %v3551 = vld [vmem:[%s3422 + $0x3dc] sm:$0xff]
        %v3552 = vld [vmem:[%s3422 + $0x3e4] sm:$0xff]
        %v3553 = vld [vmem:[%s3422 + $0x3ec] sm:$0xff]
        %v3554 = vld [vmem:[%s3422 + $0x3f4] sm:$0xff]
        %v3555 = vld [vmem:[%s3422 + $0x3fc] sm:$0x3f]
        %v3556 = vld [vmem:[%s3422 + $0x402] sm:$0xff]
        %v3557 = vld [vmem:[%s3422 + $0x40a] sm:$0xff]
        %v3558 = vld [vmem:[%s3422 + $0x412] sm:$0xff]
        %v3559 = vld [vmem:[%s3422 + $0x41a] sm:$0xff]
        %v3560 = vld [vmem:[%s3422 + $0x422] sm:$0xff]
        %v3561 = vld [vmem:[%s3422 + $0x42a] sm:$0xff]
        %v3562 = vld [vmem:[%s3422 + $0x432] sm:$0x3f]
        %v3563 = vld [vmem:[%s3422 + $0x438] sm:$0xff]
        %v3564 = vld [vmem:[%s3422 + $0x440] sm:$0xff]
        %v3565 = vld [vmem:[%s3422 + $0x448] sm:$0xff]
        %v3566 = vld [vmem:[%s3422 + $0x450] sm:$0xff]
        %v3567 = vld [vmem:[%s3422 + $0x458] sm:$0xff]
        %v3568 = vld [vmem:[%s3422 + $0x460] sm:$0xff]
        %v3569 = vld [vmem:[%s3422 + $0x468] sm:$0x3f]
        %v3570 = vld [vmem:[%s3422 + $0x46e] sm:$0xff]
        %v3571 = vld [vmem:[%s3422 + $0x476] sm:$0xff]
        %v3572 = vld [vmem:[%s3422 + $0x47e] sm:$0xff]
        %v3573 = vld [vmem:[%s3422 + $0x486] sm:$0xff]
        %v3574 = vld [vmem:[%s3422 + $0x48e] sm:$0xff]
        %v3575 = vld [vmem:[%s3422 + $0x496] sm:$0xff]
        %v3576 = vld [vmem:[%s3422 + $0x49e] sm:$0x3f]
        %v3577 = vld [vmem:[%s3422 + $0x4a4] sm:$0xff]
        %v3578 = vld [vmem:[%s3422 + $0x4ac] sm:$0xff]
        %v3579 = vld [vmem:[%s3422 + $0x4b4] sm:$0xff]
        %v3580 = vld [vmem:[%s3422 + $0x4bc] sm:$0xff]
        %v3581 = vld [vmem:[%s3422 + $0x4c4] sm:$0xff]
        %v3582 = vld [vmem:[%s3422 + $0x4cc] sm:$0xff]
        %v3583 = vld [vmem:[%s3422 + $0x4d4] sm:$0x3f]
        %v3584 = vld [vmem:[%s3422 + $0x4da] sm:$0xff]
        %v3585 = vld [vmem:[%s3422 + $0x4e2] sm:$0xff]
        %v3586 = vld [vmem:[%s3422 + $0x4ea] sm:$0xff]
        %v3587 = vld [vmem:[%s3422 + $0x4f2] sm:$0xff]
        %v3588 = vld [vmem:[%s3422 + $0x4fa] sm:$0xff]
        %v3589 = vld [vmem:[%s3422 + $0x502] sm:$0xff]
        %v3590 = vld [vmem:[%s3422 + $0x50a] sm:$0x3f]
        %v3591 = vld [vmem:[%s3422 + $0x510] sm:$0xff]
        %v3592 = vld [vmem:[%s3422 + $0x518] sm:$0xff]
        %v3593 = vld [vmem:[%s3422 + $0x520] sm:$0xff]
        %v3594 = vld [vmem:[%s3422 + $0x528] sm:$0xff]
        %v3595 = vld [vmem:[%s3422 + $0x530] sm:$0xff]
        %v3596 = vld [vmem:[%s3422 + $0x538] sm:$0xff]
        %v3597 = vld [vmem:[%s3422 + $0x540] sm:$0x3f]
        %v3598 = vld [vmem:[%s3422 + $0x546] sm:$0xff]
        %v3599 = vld [vmem:[%s3422 + $0x54e] sm:$0xff]
        %v3600 = vld [vmem:[%s3422 + $0x556] sm:$0xff]
        %v3601 = vld [vmem:[%s3422 + $0x55e] sm:$0xff]
        %v3602 = vld [vmem:[%s3422 + $0x566] sm:$0xff]
        %v3603 = vld [vmem:[%s3422 + $0x56e] sm:$0xff]
        %v3604 = vld [vmem:[%s3422 + $0x576] sm:$0x3f]
        %v3605 = vld [vmem:[%s3422 + $0x57c] sm:$0xff]
        %v3606 = vld [vmem:[%s3422 + $0x584] sm:$0xff]
        %v3607 = vld [vmem:[%s3422 + $0x58c] sm:$0xff]
        %v3608 = vld [vmem:[%s3422 + $0x594] sm:$0xff]
        %v3609 = vld [vmem:[%s3422 + $0x59c] sm:$0xff]
        %v3610 = vld [vmem:[%s3422 + $0x5a4] sm:$0xff]
        %v3611 = vld [vmem:[%s3422 + $0x5ac] sm:$0x3f]
        %v3612 = vld [vmem:[%s3422 + $0x5b2] sm:$0x55]
        %v3613 = vld [vmem:[%s3422 + $0x5ba] sm:$0x55]
        %v3614 = vld [vmem:[%s3422 + $0x5c2] sm:$0x55]
        %v3615 = vld [vmem:[%s3422 + $0x5ca] sm:$0x55]
        %v3616 = vld [vmem:[%s3422 + $0x5d2] sm:$0x55]
        %v3617 = vld [vmem:[%s3422 + $0x5da] sm:$0x55]
        %v3618 = vld [vmem:[%s3422 + $0x5e2] sm:$0x15]
        %v3619 = vunpack.c.l.s8.bf16 %v3423
        %v3620 = vunpack.c.h.s8.bf16 %v3423
        %v3621 = vunpack.c.l.s8.bf16 %v3424
        %v3622 = vunpack.c.h.s8.bf16 %v3424
        %v3623 = vunpack.c.l.s8.bf16 %v3425
        %v3624 = vunpack.c.h.s8.bf16 %v3425
        %v3625 = vunpack.c.l.s8.bf16 %v3426
        %v3626 = vunpack.c.h.s8.bf16 %v3426
        %v3627 = vunpack.c.l.s8.bf16 %v3427
        %v3628 = vunpack.c.h.s8.bf16 %v3427
        %v3629 = vunpack.c.l.s8.bf16 %v3428
        %v3630 = vunpack.c.h.s8.bf16 %v3428
        %v3631 = vunpack.c.l.s8.bf16 %v3429
        %v3632 = vunpack.c.h.s8.bf16 %v3429
        %v3633 = vunpack.c.l.s8.bf16 %v3430
        %v3634 = vunpack.c.h.s8.bf16 %v3430
        %v3635 = vunpack.c.l.s8.bf16 %v3431
        %v3636 = vunpack.c.h.s8.bf16 %v3431
        %v3637 = vunpack.c.l.s8.bf16 %v3432
        %v3638 = vunpack.c.h.s8.bf16 %v3432
        %v3639 = vunpack.c.l.s8.bf16 %v3433
        %v3640 = vunpack.c.h.s8.bf16 %v3433
        %v3641 = vunpack.c.l.s8.bf16 %v3434
        %v3642 = vunpack.c.h.s8.bf16 %v3434
        %v3643 = vunpack.c.l.s8.bf16 %v3435
        %v3644 = vunpack.c.h.s8.bf16 %v3435
        %v3645 = vunpack.c.l.s8.bf16 %v3436
        %v3646 = vunpack.c.h.s8.bf16 %v3436
        %v3647 = vunpack.c.l.s8.bf16 %v3437
        %v3648 = vunpack.c.h.s8.bf16 %v3437
        %v3649 = vunpack.c.l.s8.bf16 %v3438
        %v3650 = vunpack.c.h.s8.bf16 %v3438
        %v3651 = vunpack.c.l.s8.bf16 %v3439
        %v3652 = vunpack.c.h.s8.bf16 %v3439
        %v3653 = vunpack.c.l.s8.bf16 %v3440
        %v3654 = vunpack.c.h.s8.bf16 %v3440
        %v3655 = vunpack.c.l.s8.bf16 %v3441
        %v3656 = vunpack.c.h.s8.bf16 %v3441
        %v3657 = vunpack.c.l.s8.bf16 %v3442
        %v3658 = vunpack.c.h.s8.bf16 %v3442
        %v3659 = vunpack.c.l.s8.bf16 %v3443
        %v3660 = vunpack.c.h.s8.bf16 %v3443
        %v3661 = vunpack.c.l.s8.bf16 %v3444
        %v3662 = vunpack.c.h.s8.bf16 %v3444
        %v3663 = vunpack.c.l.s8.bf16 %v3445
        %v3664 = vunpack.c.h.s8.bf16 %v3445
        %v3665 = vunpack.c.l.s8.bf16 %v3446
        %v3666 = vunpack.c.h.s8.bf16 %v3446
        %v3667 = vunpack.c.l.s8.bf16 %v3447
        %v3668 = vunpack.c.h.s8.bf16 %v3447
        %v3669 = vunpack.c.l.s8.bf16 %v3448
        %v3670 = vunpack.c.h.s8.bf16 %v3448
        %v3671 = vunpack.c.l.s8.bf16 %v3449
        %v3672 = vunpack.c.h.s8.bf16 %v3449
        %v3673 = vunpack.c.l.s8.bf16 %v3450
        %v3674 = vunpack.c.h.s8.bf16 %v3450
        %v3675 = vunpack.c.l.s8.bf16 %v3451
        %v3676 = vunpack.c.h.s8.bf16 %v3451
        %v3677 = vunpack.c.l.s8.bf16 %v3452
        %v3678 = vunpack.c.h.s8.bf16 %v3452
        %v3679 = vunpack.c.l.s8.bf16 %v3453
        %v3680 = vunpack.c.h.s8.bf16 %v3453
        %v3681 = vunpack.c.l.s8.bf16 %v3454
        %v3682 = vunpack.c.h.s8.bf16 %v3454
        %v3683 = vunpack.c.l.s8.bf16 %v3455
        %v3684 = vunpack.c.h.s8.bf16 %v3455
        %v3685 = vunpack.c.l.s8.bf16 %v3456
        %v3686 = vunpack.c.h.s8.bf16 %v3456
        %v3687 = vunpack.c.l.s8.bf16 %v3457
        %v3688 = vunpack.c.h.s8.bf16 %v3457
        %v3689 = vunpack.c.l.s8.bf16 %v3458
        %v3690 = vunpack.c.h.s8.bf16 %v3458
        %v3691 = vunpack.c.l.s8.bf16 %v3459
        %v3692 = vunpack.c.h.s8.bf16 %v3459
        %v3693 = vunpack.c.l.s8.bf16 %v3460
        %v3694 = vunpack.c.h.s8.bf16 %v3460
        %v3695 = vunpack.c.l.s8.bf16 %v3461
        %v3696 = vunpack.c.h.s8.bf16 %v3461
        %v3697 = vunpack.c.l.s8.bf16 %v3462
        %v3698 = vunpack.c.h.s8.bf16 %v3462
        %v3699 = vunpack.c.l.s8.bf16 %v3463
        %v3700 = vunpack.c.h.s8.bf16 %v3463
        %v3701 = vunpack.c.l.s8.bf16 %v3464
        %v3702 = vunpack.c.h.s8.bf16 %v3464
        %v3703 = vunpack.c.l.s8.bf16 %v3465
        %v3704 = vunpack.c.h.s8.bf16 %v3465
        %v3705 = vunpack.c.l.s8.bf16 %v3466
        %v3706 = vunpack.c.h.s8.bf16 %v3466
        %v3707 = vunpack.c.l.s8.bf16 %v3467
        %v3708 = vunpack.c.h.s8.bf16 %v3467
        %v3709 = vunpack.c.l.s8.bf16 %v3468
        %v3710 = vunpack.c.h.s8.bf16 %v3468
        %v3711 = vunpack.c.l.s8.bf16 %v3469
        %v3712 = vunpack.c.h.s8.bf16 %v3469
        %v3713 = vunpack.c.l.s8.bf16 %v3470
        %v3714 = vunpack.c.h.s8.bf16 %v3470
        %v3715 = vunpack.c.l.s8.bf16 %v3471
        %v3716 = vunpack.c.h.s8.bf16 %v3471
        %v3717 = vunpack.c.l.s8.bf16 %v3472
        %v3718 = vunpack.c.h.s8.bf16 %v3472
        %v3719 = vunpack.c.l.s8.bf16 %v3473
        %v3720 = vunpack.c.h.s8.bf16 %v3473
        %v3721 = vunpack.c.l.s8.bf16 %v3474
        %v3722 = vunpack.c.h.s8.bf16 %v3474
        %v3723 = vunpack.c.l.s8.bf16 %v3475
        %v3724 = vunpack.c.h.s8.bf16 %v3475
        %v3725 = vunpack.c.l.s8.bf16 %v3476
        %v3726 = vunpack.c.h.s8.bf16 %v3476
        %v3727 = vunpack.c.l.s8.bf16 %v3477
        %v3728 = vunpack.c.h.s8.bf16 %v3477
        %v3729 = vunpack.c.l.s8.bf16 %v3478
        %v3730 = vunpack.c.h.s8.bf16 %v3478
        %v3731 = vunpack.c.l.s8.bf16 %v3479
        %v3732 = vunpack.c.h.s8.bf16 %v3479
        %v3733 = vunpack.c.l.s8.bf16 %v3480
        %v3734 = vunpack.c.h.s8.bf16 %v3480
        %v3735 = vunpack.c.l.s8.bf16 %v3481
        %v3736 = vunpack.c.h.s8.bf16 %v3481
        %v3737 = vunpack.c.l.s8.bf16 %v3482
        %v3738 = vunpack.c.h.s8.bf16 %v3482
        %v3739 = vunpack.c.l.s8.bf16 %v3483
        %v3740 = vunpack.c.h.s8.bf16 %v3483
        %v3741 = vunpack.c.l.s8.bf16 %v3484
        %v3742 = vunpack.c.h.s8.bf16 %v3484
        %v3743 = vunpack.c.l.s8.bf16 %v3485
        %v3744 = vunpack.c.h.s8.bf16 %v3485
        %v3745 = vunpack.c.l.s8.bf16 %v3486
        %v3746 = vunpack.c.h.s8.bf16 %v3486
        %v3747 = vunpack.c.l.s8.bf16 %v3487
        %v3748 = vunpack.c.h.s8.bf16 %v3487
        %v3749 = vunpack.c.l.s8.bf16 %v3488
        %v3750 = vunpack.c.h.s8.bf16 %v3488
        %v3751 = vunpack.c.l.s8.bf16 %v3489
        %v3752 = vunpack.c.h.s8.bf16 %v3489
        %v3753 = vunpack.c.l.s8.bf16 %v3490
        %v3754 = vunpack.c.h.s8.bf16 %v3490
        %v3755 = vunpack.c.l.s8.bf16 %v3491
        %v3756 = vunpack.c.h.s8.bf16 %v3491
        %v3757 = vunpack.c.l.s8.bf16 %v3492
        %v3758 = vunpack.c.h.s8.bf16 %v3492
        %v3759 = vunpack.c.l.s8.bf16 %v3493
        %v3760 = vunpack.c.h.s8.bf16 %v3493
        %v3761 = vunpack.c.l.s8.bf16 %v3494
        %v3762 = vunpack.c.h.s8.bf16 %v3494
        %v3763 = vunpack.c.l.s8.bf16 %v3495
        %v3764 = vunpack.c.h.s8.bf16 %v3495
        %v3765 = vunpack.c.l.s8.bf16 %v3496
        %v3766 = vunpack.c.h.s8.bf16 %v3496
        %v3767 = vunpack.c.l.s8.bf16 %v3497
        %v3768 = vunpack.c.h.s8.bf16 %v3497
        %v3769 = vunpack.c.l.s8.bf16 %v3498
        %v3770 = vunpack.c.h.s8.bf16 %v3498
        %v3771 = vunpack.c.l.s8.bf16 %v3499
        %v3772 = vunpack.c.h.s8.bf16 %v3499
        %v3773 = vunpack.c.l.s8.bf16 %v3500
        %v3774 = vunpack.c.h.s8.bf16 %v3500
        %v3775 = vunpack.c.l.s8.bf16 %v3501
        %v3776 = vunpack.c.h.s8.bf16 %v3501
        %v3777 = vunpack.c.l.s8.bf16 %v3502
        %v3778 = vunpack.c.h.s8.bf16 %v3502
        %v3779 = vunpack.c.l.s8.bf16 %v3503
        %v3780 = vunpack.c.h.s8.bf16 %v3503
        %v3781 = vunpack.c.l.s8.bf16 %v3504
        %v3782 = vunpack.c.h.s8.bf16 %v3504
        %v3783 = vunpack.c.l.s8.bf16 %v3505
        %v3784 = vunpack.c.h.s8.bf16 %v3505
        %v3785 = vunpack.c.l.s8.bf16 %v3506
        %v3786 = vunpack.c.h.s8.bf16 %v3506
        %v3787 = vunpack.c.l.s8.bf16 %v3507
        %v3788 = vunpack.c.h.s8.bf16 %v3507
        %v3789 = vunpack.c.l.s8.bf16 %v3508
        %v3790 = vunpack.c.h.s8.bf16 %v3508
        %v3791 = vunpack.c.l.s8.bf16 %v3509
        %v3792 = vunpack.c.h.s8.bf16 %v3509
        %v3793 = vunpack.c.l.s8.bf16 %v3510
        %v3794 = vunpack.c.h.s8.bf16 %v3510
        %v3795 = vunpack.c.l.s8.bf16 %v3511
        %v3796 = vunpack.c.h.s8.bf16 %v3511
        %v3797 = vunpack.c.l.s8.bf16 %v3512
        %v3798 = vunpack.c.h.s8.bf16 %v3512
        %v3799 = vunpack.c.l.s8.bf16 %v3513
        %v3800 = vunpack.c.h.s8.bf16 %v3513
        %v3801 = vunpack.c.l.s8.bf16 %v3514
        %v3802 = vunpack.c.h.s8.bf16 %v3514
        %v3803 = vunpack.c.l.s8.bf16 %v3515
        %v3804 = vunpack.c.h.s8.bf16 %v3515
        %v3805 = vunpack.c.l.s8.bf16 %v3516
        %v3806 = vunpack.c.h.s8.bf16 %v3516
        %v3807 = vunpack.c.l.s8.bf16 %v3517
        %v3808 = vunpack.c.h.s8.bf16 %v3517
        %v3809 = vunpack.c.l.s8.bf16 %v3518
        %v3810 = vunpack.c.h.s8.bf16 %v3518
        %v3811 = vunpack.c.l.s8.bf16 %v3519
        %v3812 = vunpack.c.h.s8.bf16 %v3519
        %v3813 = vunpack.c.l.s8.bf16 %v3520
        %v3814 = vunpack.c.h.s8.bf16 %v3520
        %v3815 = vunpack.c.l.s8.bf16 %v3521
        %v3816 = vunpack.c.h.s8.bf16 %v3521
        %v3817 = vunpack.c.l.s8.bf16 %v3522
        %v3818 = vunpack.c.h.s8.bf16 %v3522
        %v3819 = vunpack.c.l.s8.bf16 %v3523
        %v3820 = vunpack.c.h.s8.bf16 %v3523
        %v3821 = vunpack.c.l.s8.bf16 %v3524
        %v3822 = vunpack.c.h.s8.bf16 %v3524
        %v3823 = vunpack.c.l.s8.bf16 %v3525
        %v3824 = vunpack.c.h.s8.bf16 %v3525
        %v3825 = vunpack.c.l.s8.bf16 %v3526
        %v3826 = vunpack.c.h.s8.bf16 %v3526
        %v3827 = vunpack.c.l.s8.bf16 %v3527
        %v3828 = vunpack.c.h.s8.bf16 %v3527
        %v3829 = vunpack.c.l.s8.bf16 %v3528
        %v3830 = vunpack.c.h.s8.bf16 %v3528
        %v3831 = vunpack.c.l.s8.bf16 %v3529
        %v3832 = vunpack.c.h.s8.bf16 %v3529
        %v3833 = vunpack.c.l.s8.bf16 %v3530
        %v3834 = vunpack.c.h.s8.bf16 %v3530
        %v3835 = vunpack.c.l.s8.bf16 %v3531
        %v3836 = vunpack.c.h.s8.bf16 %v3531
        %v3837 = vunpack.c.l.s8.bf16 %v3532
        %v3838 = vunpack.c.h.s8.bf16 %v3532
        %v3839 = vunpack.c.l.s8.bf16 %v3533
        %v3840 = vunpack.c.h.s8.bf16 %v3533
        %v3841 = vunpack.c.l.s8.bf16 %v3534
        %v3842 = vunpack.c.h.s8.bf16 %v3534
        %v3843 = vunpack.c.l.s8.bf16 %v3535
        %v3844 = vunpack.c.h.s8.bf16 %v3535
        %v3845 = vunpack.c.l.s8.bf16 %v3536
        %v3846 = vunpack.c.h.s8.bf16 %v3536
        %v3847 = vunpack.c.l.s8.bf16 %v3537
        %v3848 = vunpack.c.h.s8.bf16 %v3537
        %v3849 = vunpack.c.l.s8.bf16 %v3538
        %v3850 = vunpack.c.h.s8.bf16 %v3538
        %v3851 = vunpack.c.l.s8.bf16 %v3539
        %v3852 = vunpack.c.h.s8.bf16 %v3539
        %v3853 = vunpack.c.l.s8.bf16 %v3540
        %v3854 = vunpack.c.h.s8.bf16 %v3540
        %v3855 = vunpack.c.l.s8.bf16 %v3541
        %v3856 = vunpack.c.h.s8.bf16 %v3541
        %v3857 = vunpack.c.l.s8.bf16 %v3542
        %v3858 = vunpack.c.h.s8.bf16 %v3542
        %v3859 = vunpack.c.l.s8.bf16 %v3543
        %v3860 = vunpack.c.h.s8.bf16 %v3543
        %v3861 = vunpack.c.l.s8.bf16 %v3544
        %v3862 = vunpack.c.h.s8.bf16 %v3544
        %v3863 = vunpack.c.l.s8.bf16 %v3545
        %v3864 = vunpack.c.h.s8.bf16 %v3545
        %v3865 = vunpack.c.l.s8.bf16 %v3546
        %v3866 = vunpack.c.h.s8.bf16 %v3546
        %v3867 = vunpack.c.l.s8.bf16 %v3547
        %v3868 = vunpack.c.h.s8.bf16 %v3547
        %v3869 = vunpack.c.l.s8.bf16 %v3548
        %v3870 = vunpack.c.h.s8.bf16 %v3548
        %v3871 = vunpack.c.l.s8.bf16 %v3549
        %v3872 = vunpack.c.h.s8.bf16 %v3549
        %v3873 = vunpack.c.l.s8.bf16 %v3550
        %v3874 = vunpack.c.h.s8.bf16 %v3550
        %v3875 = vunpack.c.l.s8.bf16 %v3551
        %v3876 = vunpack.c.h.s8.bf16 %v3551
        %v3877 = vunpack.c.l.s8.bf16 %v3552
        %v3878 = vunpack.c.h.s8.bf16 %v3552
        %v3879 = vunpack.c.l.s8.bf16 %v3553
        %v3880 = vunpack.c.h.s8.bf16 %v3553
        %v3881 = vunpack.c.l.s8.bf16 %v3554
        %v3882 = vunpack.c.h.s8.bf16 %v3554
        %v3883 = vunpack.c.l.s8.bf16 %v3555
        %v3884 = vunpack.c.h.s8.bf16 %v3555
        %v3885 = vunpack.c.l.s8.bf16 %v3556
        %v3886 = vunpack.c.h.s8.bf16 %v3556
        %v3887 = vunpack.c.l.s8.bf16 %v3557
        %v3888 = vunpack.c.h.s8.bf16 %v3557
        %v3889 = vunpack.c.l.s8.bf16 %v3558
        %v3890 = vunpack.c.h.s8.bf16 %v3558
        %v3891 = vunpack.c.l.s8.bf16 %v3559
        %v3892 = vunpack.c.h.s8.bf16 %v3559
        %v3893 = vunpack.c.l.s8.bf16 %v3560
        %v3894 = vunpack.c.h.s8.bf16 %v3560
        %v3895 = vunpack.c.l.s8.bf16 %v3561
        %v3896 = vunpack.c.h.s8.bf16 %v3561
        %v3897 = vunpack.c.l.s8.bf16 %v3562
        %v3898 = vunpack.c.h.s8.bf16 %v3562
        %v3899 = vunpack.c.l.s8.bf16 %v3563
        %v3900 = vunpack.c.h.s8.bf16 %v3563
        %v3901 = vunpack.c.l.s8.bf16 %v3564
        %v3902 = vunpack.c.h.s8.bf16 %v3564
        %v3903 = vunpack.c.l.s8.bf16 %v3565
        %v3904 = vunpack.c.h.s8.bf16 %v3565
        %v3905 = vunpack.c.l.s8.bf16 %v3566
        %v3906 = vunpack.c.h.s8.bf16 %v3566
        %v3907 = vunpack.c.l.s8.bf16 %v3567
        %v3908 = vunpack.c.h.s8.bf16 %v3567
        %v3909 = vunpack.c.l.s8.bf16 %v3568
        %v3910 = vunpack.c.h.s8.bf16 %v3568
        %v3911 = vunpack.c.l.s8.bf16 %v3569
        %v3912 = vunpack.c.h.s8.bf16 %v3569
        %v3913 = vunpack.c.l.s8.bf16 %v3570
        %v3914 = vunpack.c.h.s8.bf16 %v3570
        %v3915 = vunpack.c.l.s8.bf16 %v3571
        %v3916 = vunpack.c.h.s8.bf16 %v3571
        %v3917 = vunpack.c.l.s8.bf16 %v3572
        %v3918 = vunpack.c.h.s8.bf16 %v3572
        %v3919 = vunpack.c.l.s8.bf16 %v3573
        %v3920 = vunpack.c.h.s8.bf16 %v3573
        %v3921 = vunpack.c.l.s8.bf16 %v3574
        %v3922 = vunpack.c.h.s8.bf16 %v3574
        %v3923 = vunpack.c.l.s8.bf16 %v3575
        %v3924 = vunpack.c.h.s8.bf16 %v3575
        %v3925 = vunpack.c.l.s8.bf16 %v3576
        %v3926 = vunpack.c.h.s8.bf16 %v3576
        %v3927 = vunpack.c.l.s8.bf16 %v3577
        %v3928 = vunpack.c.h.s8.bf16 %v3577
        %v3929 = vunpack.c.l.s8.bf16 %v3578
        %v3930 = vunpack.c.h.s8.bf16 %v3578
        %v3931 = vunpack.c.l.s8.bf16 %v3579
        %v3932 = vunpack.c.h.s8.bf16 %v3579
        %v3933 = vunpack.c.l.s8.bf16 %v3580
        %v3934 = vunpack.c.h.s8.bf16 %v3580
        %v3935 = vunpack.c.l.s8.bf16 %v3581
        %v3936 = vunpack.c.h.s8.bf16 %v3581
        %v3937 = vunpack.c.l.s8.bf16 %v3582
        %v3938 = vunpack.c.h.s8.bf16 %v3582
        %v3939 = vunpack.c.l.s8.bf16 %v3583
        %v3940 = vunpack.c.h.s8.bf16 %v3583
        %v3941 = vunpack.c.l.s8.bf16 %v3584
        %v3942 = vunpack.c.h.s8.bf16 %v3584
        %v3943 = vunpack.c.l.s8.bf16 %v3585
        %v3944 = vunpack.c.h.s8.bf16 %v3585
        %v3945 = vunpack.c.l.s8.bf16 %v3586
        %v3946 = vunpack.c.h.s8.bf16 %v3586
        %v3947 = vunpack.c.l.s8.bf16 %v3587
        %v3948 = vunpack.c.h.s8.bf16 %v3587
        %v3949 = vunpack.c.l.s8.bf16 %v3588
        %v3950 = vunpack.c.h.s8.bf16 %v3588
        %v3951 = vunpack.c.l.s8.bf16 %v3589
        %v3952 = vunpack.c.h.s8.bf16 %v3589
        %v3953 = vunpack.c.l.s8.bf16 %v3590
        %v3954 = vunpack.c.h.s8.bf16 %v3590
        %v3955 = vunpack.c.l.s8.bf16 %v3591
        %v3956 = vunpack.c.h.s8.bf16 %v3591
        %v3957 = vunpack.c.l.s8.bf16 %v3592
        %v3958 = vunpack.c.h.s8.bf16 %v3592
        %v3959 = vunpack.c.l.s8.bf16 %v3593
        %v3960 = vunpack.c.h.s8.bf16 %v3593
        %v3961 = vunpack.c.l.s8.bf16 %v3594
        %v3962 = vunpack.c.h.s8.bf16 %v3594
        %v3963 = vunpack.c.l.s8.bf16 %v3595
        %v3964 = vunpack.c.h.s8.bf16 %v3595
        %v3965 = vunpack.c.l.s8.bf16 %v3596
        %v3966 = vunpack.c.h.s8.bf16 %v3596
        %v3967 = vunpack.c.l.s8.bf16 %v3597
        %v3968 = vunpack.c.h.s8.bf16 %v3597
        %v3969 = vunpack.c.l.s8.bf16 %v3598
        %v3970 = vunpack.c.h.s8.bf16 %v3598
        %v3971 = vunpack.c.l.s8.bf16 %v3599
        %v3972 = vunpack.c.h.s8.bf16 %v3599
        %v3973 = vunpack.c.l.s8.bf16 %v3600
        %v3974 = vunpack.c.h.s8.bf16 %v3600
        %v3975 = vunpack.c.l.s8.bf16 %v3601
        %v3976 = vunpack.c.h.s8.bf16 %v3601
        %v3977 = vunpack.c.l.s8.bf16 %v3602
        %v3978 = vunpack.c.h.s8.bf16 %v3602
        %v3979 = vunpack.c.l.s8.bf16 %v3603
        %v3980 = vunpack.c.h.s8.bf16 %v3603
        %v3981 = vunpack.c.l.s8.bf16 %v3604
        %v3982 = vunpack.c.h.s8.bf16 %v3604
        %v3983 = vunpack.c.l.s8.bf16 %v3605
        %v3984 = vunpack.c.h.s8.bf16 %v3605
        %v3985 = vunpack.c.l.s8.bf16 %v3606
        %v3986 = vunpack.c.h.s8.bf16 %v3606
        %v3987 = vunpack.c.l.s8.bf16 %v3607
        %v3988 = vunpack.c.h.s8.bf16 %v3607
        %v3989 = vunpack.c.l.s8.bf16 %v3608
        %v3990 = vunpack.c.h.s8.bf16 %v3608
        %v3991 = vunpack.c.l.s8.bf16 %v3609
        %v3992 = vunpack.c.h.s8.bf16 %v3609
        %v3993 = vunpack.c.l.s8.bf16 %v3610
        %v3994 = vunpack.c.h.s8.bf16 %v3610
        %v3995 = vunpack.c.l.s8.bf16 %v3611
        %v3996 = vunpack.c.h.s8.bf16 %v3611
        %v3997 = vunpack.c.l.s8.bf16 %v3612
        %v3998 = vunpack.c.h.s8.bf16 %v3612
        %v3999 = vunpack.c.l.s8.bf16 %v3613
        %v4000 = vunpack.c.h.s8.bf16 %v3613
        %v4001 = vunpack.c.l.s8.bf16 %v3614
        %v4002 = vunpack.c.h.s8.bf16 %v3614
        %v4003 = vunpack.c.l.s8.bf16 %v3615
        %v4004 = vunpack.c.h.s8.bf16 %v3615
        %v4005 = vunpack.c.l.s8.bf16 %v3616
        %v4006 = vunpack.c.h.s8.bf16 %v3616
        %v4007 = vunpack.c.l.s8.bf16 %v3617
        %v4008 = vunpack.c.h.s8.bf16 %v3617
        %v4009 = vunpack.c.l.s8.bf16 %v3618
        %v4010 = vunpack.c.h.s8.bf16 %v3618
        %v4403 = vunpack.c.l.b16 %v3619
        %v4404 = vunpack.c.h.b16 %v3619
        %v4405 = vunpack.c.l.b16 %v3620
        %v4406 = vunpack.c.h.b16 %v3620
        %v4407 = vunpack.c.l.b16 %v3621
        %v4408 = vunpack.c.h.b16 %v3621
        %v4409 = vunpack.c.l.b16 %v3622
        %v4410 = vunpack.c.h.b16 %v3622
        %v4411 = vunpack.c.l.b16 %v3623
        %v4412 = vunpack.c.h.b16 %v3623
        %v4413 = vunpack.c.l.b16 %v3624
        %v4414 = vunpack.c.h.b16 %v3624
        %v4415 = vunpack.c.l.b16 %v3625
        %v4416 = vunpack.c.h.b16 %v3625
        %v4417 = vunpack.c.l.b16 %v3626
        %v4418 = vunpack.c.h.b16 %v3626
        %v4419 = vunpack.c.l.b16 %v3627
        %v4420 = vunpack.c.h.b16 %v3627
        %v4421 = vunpack.c.l.b16 %v3628
        %v4422 = vunpack.c.h.b16 %v3628
        %v4423 = vunpack.c.l.b16 %v3629
        %v4424 = vunpack.c.h.b16 %v3629
        %v4425 = vunpack.c.l.b16 %v3630
        %v4426 = vunpack.c.h.b16 %v3630
        %v4427 = vunpack.c.l.b16 %v3631
        %v4428 = vunpack.c.h.b16 %v3631
        %v4429 = vunpack.c.l.b16 %v3632
        %v4430 = vunpack.c.l.b16 %v3633
        %v4431 = vunpack.c.h.b16 %v3633
        %v4432 = vunpack.c.l.b16 %v3634
        %v4433 = vunpack.c.h.b16 %v3634
        %v4434 = vunpack.c.l.b16 %v3635
        %v4435 = vunpack.c.h.b16 %v3635
        %v4436 = vunpack.c.l.b16 %v3636
        %v4437 = vunpack.c.h.b16 %v3636
        %v4438 = vunpack.c.l.b16 %v3637
        %v4439 = vunpack.c.h.b16 %v3637
        %v4440 = vunpack.c.l.b16 %v3638
        %v4441 = vunpack.c.h.b16 %v3638
        %v4442 = vunpack.c.l.b16 %v3639
        %v4443 = vunpack.c.h.b16 %v3639
        %v4444 = vunpack.c.l.b16 %v3640
        %v4445 = vunpack.c.h.b16 %v3640
        %v4446 = vunpack.c.l.b16 %v3641
        %v4447 = vunpack.c.h.b16 %v3641
        %v4448 = vunpack.c.l.b16 %v3642
        %v4449 = vunpack.c.h.b16 %v3642
        %v4450 = vunpack.c.l.b16 %v3643
        %v4451 = vunpack.c.h.b16 %v3643
        %v4452 = vunpack.c.l.b16 %v3644
        %v4453 = vunpack.c.h.b16 %v3644
        %v4454 = vunpack.c.l.b16 %v3645
        %v4455 = vunpack.c.h.b16 %v3645
        %v4456 = vunpack.c.l.b16 %v3646
        %v4457 = vunpack.c.l.b16 %v3647
        %v4458 = vunpack.c.h.b16 %v3647
        %v4459 = vunpack.c.l.b16 %v3648
        %v4460 = vunpack.c.h.b16 %v3648
        %v4461 = vunpack.c.l.b16 %v3649
        %v4462 = vunpack.c.h.b16 %v3649
        %v4463 = vunpack.c.l.b16 %v3650
        %v4464 = vunpack.c.h.b16 %v3650
        %v4465 = vunpack.c.l.b16 %v3651
        %v4466 = vunpack.c.h.b16 %v3651
        %v4467 = vunpack.c.l.b16 %v3652
        %v4468 = vunpack.c.h.b16 %v3652
        %v4469 = vunpack.c.l.b16 %v3653
        %v4470 = vunpack.c.h.b16 %v3653
        %v4471 = vunpack.c.l.b16 %v3654
        %v4472 = vunpack.c.h.b16 %v3654
        %v4473 = vunpack.c.l.b16 %v3655
        %v4474 = vunpack.c.h.b16 %v3655
        %v4475 = vunpack.c.l.b16 %v3656
        %v4476 = vunpack.c.h.b16 %v3656
        %v4477 = vunpack.c.l.b16 %v3657
        %v4478 = vunpack.c.h.b16 %v3657
        %v4479 = vunpack.c.l.b16 %v3658
        %v4480 = vunpack.c.h.b16 %v3658
        %v4481 = vunpack.c.l.b16 %v3659
        %v4482 = vunpack.c.h.b16 %v3659
        %v4483 = vunpack.c.l.b16 %v3660
        %v4484 = vunpack.c.l.b16 %v3661
        %v4485 = vunpack.c.h.b16 %v3661
        %v4486 = vunpack.c.l.b16 %v3662
        %v4487 = vunpack.c.h.b16 %v3662
        %v4488 = vunpack.c.l.b16 %v3663
        %v4489 = vunpack.c.h.b16 %v3663
        %v4490 = vunpack.c.l.b16 %v3664
        %v4491 = vunpack.c.h.b16 %v3664
        %v4492 = vunpack.c.l.b16 %v3665
        %v4493 = vunpack.c.h.b16 %v3665
        %v4494 = vunpack.c.l.b16 %v3666
        %v4495 = vunpack.c.h.b16 %v3666
        %v4496 = vunpack.c.l.b16 %v3667
        %v4497 = vunpack.c.h.b16 %v3667
        %v4498 = vunpack.c.l.b16 %v3668
        %v4499 = vunpack.c.h.b16 %v3668
        %v4500 = vunpack.c.l.b16 %v3669
        %v4501 = vunpack.c.h.b16 %v3669
        %v4502 = vunpack.c.l.b16 %v3670
        %v4503 = vunpack.c.h.b16 %v3670
        %v4504 = vunpack.c.l.b16 %v3671
        %v4505 = vunpack.c.h.b16 %v3671
        %v4506 = vunpack.c.l.b16 %v3672
        %v4507 = vunpack.c.h.b16 %v3672
        %v4508 = vunpack.c.l.b16 %v3673
        %v4509 = vunpack.c.h.b16 %v3673
        %v4510 = vunpack.c.l.b16 %v3674
        %v4511 = vunpack.c.l.b16 %v3675
        %v4512 = vunpack.c.h.b16 %v3675
        %v4513 = vunpack.c.l.b16 %v3676
        %v4514 = vunpack.c.h.b16 %v3676
        %v4515 = vunpack.c.l.b16 %v3677
        %v4516 = vunpack.c.h.b16 %v3677
        %v4517 = vunpack.c.l.b16 %v3678
        %v4518 = vunpack.c.h.b16 %v3678
        %v4519 = vunpack.c.l.b16 %v3679
        %v4520 = vunpack.c.h.b16 %v3679
        %v4521 = vunpack.c.l.b16 %v3680
        %v4522 = vunpack.c.h.b16 %v3680
        %v4523 = vunpack.c.l.b16 %v3681
        %v4524 = vunpack.c.h.b16 %v3681
        %v4525 = vunpack.c.l.b16 %v3682
        %v4526 = vunpack.c.h.b16 %v3682
        %v4527 = vunpack.c.l.b16 %v3683
        %v4528 = vunpack.c.h.b16 %v3683
        %v4529 = vunpack.c.l.b16 %v3684
        %v4530 = vunpack.c.h.b16 %v3684
        %v4531 = vunpack.c.l.b16 %v3685
        %v4532 = vunpack.c.h.b16 %v3685
        %v4533 = vunpack.c.l.b16 %v3686
        %v4534 = vunpack.c.h.b16 %v3686
        %v4535 = vunpack.c.l.b16 %v3687
        %v4536 = vunpack.c.h.b16 %v3687
        %v4537 = vunpack.c.l.b16 %v3688
        %v4538 = vunpack.c.l.b16 %v3689
        %v4539 = vunpack.c.h.b16 %v3689
        %v4540 = vunpack.c.l.b16 %v3690
        %v4541 = vunpack.c.h.b16 %v3690
        %v4542 = vunpack.c.l.b16 %v3691
        %v4543 = vunpack.c.h.b16 %v3691
        %v4544 = vunpack.c.l.b16 %v3692
        %v4545 = vunpack.c.h.b16 %v3692
        %v4546 = vunpack.c.l.b16 %v3693
        %v4547 = vunpack.c.h.b16 %v3693
        %v4548 = vunpack.c.l.b16 %v3694
        %v4549 = vunpack.c.h.b16 %v3694
        %v4550 = vunpack.c.l.b16 %v3695
        %v4551 = vunpack.c.h.b16 %v3695
        %v4552 = vunpack.c.l.b16 %v3696
        %v4553 = vunpack.c.h.b16 %v3696
        %v4554 = vunpack.c.l.b16 %v3697
        %v4555 = vunpack.c.h.b16 %v3697
        %v4556 = vunpack.c.l.b16 %v3698
        %v4557 = vunpack.c.h.b16 %v3698
        %v4558 = vunpack.c.l.b16 %v3699
        %v4559 = vunpack.c.h.b16 %v3699
        %v4560 = vunpack.c.l.b16 %v3700
        %v4561 = vunpack.c.h.b16 %v3700
        %v4562 = vunpack.c.l.b16 %v3701
        %v4563 = vunpack.c.h.b16 %v3701
        %v4564 = vunpack.c.l.b16 %v3702
        %v4565 = vunpack.c.l.b16 %v3703
        %v4566 = vunpack.c.h.b16 %v3703
        %v4567 = vunpack.c.l.b16 %v3704
        %v4568 = vunpack.c.h.b16 %v3704
        %v4569 = vunpack.c.l.b16 %v3705
        %v4570 = vunpack.c.h.b16 %v3705
        %v4571 = vunpack.c.l.b16 %v3706
        %v4572 = vunpack.c.h.b16 %v3706
        %v4573 = vunpack.c.l.b16 %v3707
        %v4574 = vunpack.c.h.b16 %v3707
        %v4575 = vunpack.c.l.b16 %v3708
        %v4576 = vunpack.c.h.b16 %v3708
        %v4577 = vunpack.c.l.b16 %v3709
        %v4578 = vunpack.c.h.b16 %v3709
        %v4579 = vunpack.c.l.b16 %v3710
        %v4580 = vunpack.c.h.b16 %v3710
        %v4581 = vunpack.c.l.b16 %v3711
        %v4582 = vunpack.c.h.b16 %v3711
        %v4583 = vunpack.c.l.b16 %v3712
        %v4584 = vunpack.c.h.b16 %v3712
        %v4585 = vunpack.c.l.b16 %v3713
        %v4586 = vunpack.c.h.b16 %v3713
        %v4587 = vunpack.c.l.b16 %v3714
        %v4588 = vunpack.c.h.b16 %v3714
        %v4589 = vunpack.c.l.b16 %v3715
        %v4590 = vunpack.c.h.b16 %v3715
        %v4591 = vunpack.c.l.b16 %v3716
        %v4592 = vunpack.c.l.b16 %v3717
        %v4593 = vunpack.c.h.b16 %v3717
        %v4594 = vunpack.c.l.b16 %v3718
        %v4595 = vunpack.c.h.b16 %v3718
        %v4596 = vunpack.c.l.b16 %v3719
        %v4597 = vunpack.c.h.b16 %v3719
        %v4598 = vunpack.c.l.b16 %v3720
        %v4599 = vunpack.c.h.b16 %v3720
        %v4600 = vunpack.c.l.b16 %v3721
        %v4601 = vunpack.c.h.b16 %v3721
        %v4602 = vunpack.c.l.b16 %v3722
        %v4603 = vunpack.c.h.b16 %v3722
        %v4604 = vunpack.c.l.b16 %v3723
        %v4605 = vunpack.c.h.b16 %v3723
        %v4606 = vunpack.c.l.b16 %v3724
        %v4607 = vunpack.c.h.b16 %v3724
        %v4608 = vunpack.c.l.b16 %v3725
        %v4609 = vunpack.c.h.b16 %v3725
        %v4610 = vunpack.c.l.b16 %v3726
        %v4611 = vunpack.c.h.b16 %v3726
        %v4612 = vunpack.c.l.b16 %v3727
        %v4613 = vunpack.c.h.b16 %v3727
        %v4614 = vunpack.c.l.b16 %v3728
        %v4615 = vunpack.c.h.b16 %v3728
        %v4616 = vunpack.c.l.b16 %v3729
        %v4617 = vunpack.c.h.b16 %v3729
        %v4618 = vunpack.c.l.b16 %v3730
        %v4619 = vunpack.c.l.b16 %v3731
        %v4620 = vunpack.c.h.b16 %v3731
        %v4621 = vunpack.c.l.b16 %v3732
        %v4622 = vunpack.c.h.b16 %v3732
        %v4623 = vunpack.c.l.b16 %v3733
        %v4624 = vunpack.c.h.b16 %v3733
        %v4625 = vunpack.c.l.b16 %v3734
        %v4626 = vunpack.c.h.b16 %v3734
        %v4627 = vunpack.c.l.b16 %v3735
        %v4628 = vunpack.c.h.b16 %v3735
        %v4629 = vunpack.c.l.b16 %v3736
        %v4630 = vunpack.c.h.b16 %v3736
        %v4631 = vunpack.c.l.b16 %v3737
        %v4632 = vunpack.c.h.b16 %v3737
        %v4633 = vunpack.c.l.b16 %v3738
        %v4634 = vunpack.c.h.b16 %v3738
        %v4635 = vunpack.c.l.b16 %v3739
        %v4636 = vunpack.c.h.b16 %v3739
        %v4637 = vunpack.c.l.b16 %v3740
        %v4638 = vunpack.c.h.b16 %v3740
        %v4639 = vunpack.c.l.b16 %v3741
        %v4640 = vunpack.c.h.b16 %v3741
        %v4641 = vunpack.c.l.b16 %v3742
        %v4642 = vunpack.c.h.b16 %v3742
        %v4643 = vunpack.c.l.b16 %v3743
        %v4644 = vunpack.c.h.b16 %v3743
        %v4645 = vunpack.c.l.b16 %v3744
        %v4646 = vunpack.c.l.b16 %v3745
        %v4647 = vunpack.c.h.b16 %v3745
        %v4648 = vunpack.c.l.b16 %v3746
        %v4649 = vunpack.c.h.b16 %v3746
        %v4650 = vunpack.c.l.b16 %v3747
        %v4651 = vunpack.c.h.b16 %v3747
        %v4652 = vunpack.c.l.b16 %v3748
        %v4653 = vunpack.c.h.b16 %v3748
        %v4654 = vunpack.c.l.b16 %v3749
        %v4655 = vunpack.c.h.b16 %v3749
        %v4656 = vunpack.c.l.b16 %v3750
        %v4657 = vunpack.c.h.b16 %v3750
        %v4658 = vunpack.c.l.b16 %v3751
        %v4659 = vunpack.c.h.b16 %v3751
        %v4660 = vunpack.c.l.b16 %v3752
        %v4661 = vunpack.c.h.b16 %v3752
        %v4662 = vunpack.c.l.b16 %v3753
        %v4663 = vunpack.c.h.b16 %v3753
        %v4664 = vunpack.c.l.b16 %v3754
        %v4665 = vunpack.c.h.b16 %v3754
        %v4666 = vunpack.c.l.b16 %v3755
        %v4667 = vunpack.c.h.b16 %v3755
        %v4668 = vunpack.c.l.b16 %v3756
        %v4669 = vunpack.c.h.b16 %v3756
        %v4670 = vunpack.c.l.b16 %v3757
        %v4671 = vunpack.c.h.b16 %v3757
        %v4672 = vunpack.c.l.b16 %v3758
        %v4673 = vunpack.c.l.b16 %v3759
        %v4674 = vunpack.c.h.b16 %v3759
        %v4675 = vunpack.c.l.b16 %v3760
        %v4676 = vunpack.c.h.b16 %v3760
        %v4677 = vunpack.c.l.b16 %v3761
        %v4678 = vunpack.c.h.b16 %v3761
        %v4679 = vunpack.c.l.b16 %v3762
        %v4680 = vunpack.c.h.b16 %v3762
        %v4681 = vunpack.c.l.b16 %v3763
        %v4682 = vunpack.c.h.b16 %v3763
        %v4683 = vunpack.c.l.b16 %v3764
        %v4684 = vunpack.c.h.b16 %v3764
        %v4685 = vunpack.c.l.b16 %v3765
        %v4686 = vunpack.c.h.b16 %v3765
        %v4687 = vunpack.c.l.b16 %v3766
        %v4688 = vunpack.c.h.b16 %v3766
        %v4689 = vunpack.c.l.b16 %v3767
        %v4690 = vunpack.c.h.b16 %v3767
        %v4691 = vunpack.c.l.b16 %v3768
        %v4692 = vunpack.c.h.b16 %v3768
        %v4693 = vunpack.c.l.b16 %v3769
        %v4694 = vunpack.c.h.b16 %v3769
        %v4695 = vunpack.c.l.b16 %v3770
        %v4696 = vunpack.c.h.b16 %v3770
        %v4697 = vunpack.c.l.b16 %v3771
        %v4698 = vunpack.c.h.b16 %v3771
        %v4699 = vunpack.c.l.b16 %v3772
        %v4700 = vunpack.c.l.b16 %v3773
        %v4701 = vunpack.c.h.b16 %v3773
        %v4702 = vunpack.c.l.b16 %v3774
        %v4703 = vunpack.c.h.b16 %v3774
        %v4704 = vunpack.c.l.b16 %v3775
        %v4705 = vunpack.c.h.b16 %v3775
        %v4706 = vunpack.c.l.b16 %v3776
        %v4707 = vunpack.c.h.b16 %v3776
        %v4708 = vunpack.c.l.b16 %v3777
        %v4709 = vunpack.c.h.b16 %v3777
        %v4710 = vunpack.c.l.b16 %v3778
        %v4711 = vunpack.c.h.b16 %v3778
        %v4712 = vunpack.c.l.b16 %v3779
        %v4713 = vunpack.c.h.b16 %v3779
        %v4714 = vunpack.c.l.b16 %v3780
        %v4715 = vunpack.c.h.b16 %v3780
        %v4716 = vunpack.c.l.b16 %v3781
        %v4717 = vunpack.c.h.b16 %v3781
        %v4718 = vunpack.c.l.b16 %v3782
        %v4719 = vunpack.c.h.b16 %v3782
        %v4720 = vunpack.c.l.b16 %v3783
        %v4721 = vunpack.c.h.b16 %v3783
        %v4722 = vunpack.c.l.b16 %v3784
        %v4723 = vunpack.c.h.b16 %v3784
        %v4724 = vunpack.c.l.b16 %v3785
        %v4725 = vunpack.c.h.b16 %v3785
        %v4726 = vunpack.c.l.b16 %v3786
        %v4727 = vunpack.c.l.b16 %v3787
        %v4728 = vunpack.c.h.b16 %v3787
        %v4729 = vunpack.c.l.b16 %v3788
        %v4730 = vunpack.c.h.b16 %v3788
        %v4731 = vunpack.c.l.b16 %v3789
        %v4732 = vunpack.c.h.b16 %v3789
        %v4733 = vunpack.c.l.b16 %v3790
        %v4734 = vunpack.c.h.b16 %v3790
        %v4735 = vunpack.c.l.b16 %v3791
        %v4736 = vunpack.c.h.b16 %v3791
        %v4737 = vunpack.c.l.b16 %v3792
        %v4738 = vunpack.c.h.b16 %v3792
        %v4739 = vunpack.c.l.b16 %v3793
        %v4740 = vunpack.c.h.b16 %v3793
        %v4741 = vunpack.c.l.b16 %v3794
        %v4742 = vunpack.c.h.b16 %v3794
        %v4743 = vunpack.c.l.b16 %v3795
        %v4744 = vunpack.c.h.b16 %v3795
        %v4745 = vunpack.c.l.b16 %v3796
        %v4746 = vunpack.c.h.b16 %v3796
        %v4747 = vunpack.c.l.b16 %v3797
        %v4748 = vunpack.c.h.b16 %v3797
        %v4749 = vunpack.c.l.b16 %v3798
        %v4750 = vunpack.c.h.b16 %v3798
        %v4751 = vunpack.c.l.b16 %v3799
        %v4752 = vunpack.c.h.b16 %v3799
        %v4753 = vunpack.c.l.b16 %v3800
        %v4754 = vunpack.c.l.b16 %v3801
        %v4755 = vunpack.c.h.b16 %v3801
        %v4756 = vunpack.c.l.b16 %v3802
        %v4757 = vunpack.c.h.b16 %v3802
        %v4758 = vunpack.c.l.b16 %v3803
        %v4759 = vunpack.c.h.b16 %v3803
        %v4760 = vunpack.c.l.b16 %v3804
        %v4761 = vunpack.c.h.b16 %v3804
        %v4762 = vunpack.c.l.b16 %v3805
        %v4763 = vunpack.c.h.b16 %v3805
        %v4764 = vunpack.c.l.b16 %v3806
        %v4765 = vunpack.c.h.b16 %v3806
        %v4766 = vunpack.c.l.b16 %v3807
        %v4767 = vunpack.c.h.b16 %v3807
        %v4768 = vunpack.c.l.b16 %v3808
        %v4769 = vunpack.c.h.b16 %v3808
        %v4770 = vunpack.c.l.b16 %v3809
        %v4771 = vunpack.c.h.b16 %v3809
        %v4772 = vunpack.c.l.b16 %v3810
        %v4773 = vunpack.c.h.b16 %v3810
        %v4774 = vunpack.c.l.b16 %v3811
        %v4775 = vunpack.c.h.b16 %v3811
        %v4776 = vunpack.c.l.b16 %v3812
        %v4777 = vunpack.c.h.b16 %v3812
        %v4778 = vunpack.c.l.b16 %v3813
        %v4779 = vunpack.c.h.b16 %v3813
        %v4780 = vunpack.c.l.b16 %v3814
        %v4781 = vunpack.c.l.b16 %v3815
        %v4782 = vunpack.c.h.b16 %v3815
        %v4783 = vunpack.c.l.b16 %v3816
        %v4784 = vunpack.c.h.b16 %v3816
        %v4785 = vunpack.c.l.b16 %v3817
        %v4786 = vunpack.c.h.b16 %v3817
        %v4787 = vunpack.c.l.b16 %v3818
        %v4788 = vunpack.c.h.b16 %v3818
        %v4789 = vunpack.c.l.b16 %v3819
        %v4790 = vunpack.c.h.b16 %v3819
        %v4791 = vunpack.c.l.b16 %v3820
        %v4792 = vunpack.c.h.b16 %v3820
        %v4793 = vunpack.c.l.b16 %v3821
        %v4794 = vunpack.c.h.b16 %v3821
        %v4795 = vunpack.c.l.b16 %v3822
        %v4796 = vunpack.c.h.b16 %v3822
        %v4797 = vunpack.c.l.b16 %v3823
        %v4798 = vunpack.c.h.b16 %v3823
        %v4799 = vunpack.c.l.b16 %v3824
        %v4800 = vunpack.c.h.b16 %v3824
        %v4801 = vunpack.c.l.b16 %v3825
        %v4802 = vunpack.c.h.b16 %v3825
        %v4803 = vunpack.c.l.b16 %v3826
        %v4804 = vunpack.c.h.b16 %v3826
        %v4805 = vunpack.c.l.b16 %v3827
        %v4806 = vunpack.c.h.b16 %v3827
        %v4807 = vunpack.c.l.b16 %v3828
        %v4808 = vunpack.c.l.b16 %v3829
        %v4809 = vunpack.c.h.b16 %v3829
        %v4810 = vunpack.c.l.b16 %v3830
        %v4811 = vunpack.c.h.b16 %v3830
        %v4812 = vunpack.c.l.b16 %v3831
        %v4813 = vunpack.c.h.b16 %v3831
        %v4814 = vunpack.c.l.b16 %v3832
        %v4815 = vunpack.c.h.b16 %v3832
        %v4816 = vunpack.c.l.b16 %v3833
        %v4817 = vunpack.c.h.b16 %v3833
        %v4818 = vunpack.c.l.b16 %v3834
        %v4819 = vunpack.c.h.b16 %v3834
        %v4820 = vunpack.c.l.b16 %v3835
        %v4821 = vunpack.c.h.b16 %v3835
        %v4822 = vunpack.c.l.b16 %v3836
        %v4823 = vunpack.c.h.b16 %v3836
        %v4824 = vunpack.c.l.b16 %v3837
        %v4825 = vunpack.c.h.b16 %v3837
        %v4826 = vunpack.c.l.b16 %v3838
        %v4827 = vunpack.c.h.b16 %v3838
        %v4828 = vunpack.c.l.b16 %v3839
        %v4829 = vunpack.c.h.b16 %v3839
        %v4830 = vunpack.c.l.b16 %v3840
        %v4831 = vunpack.c.h.b16 %v3840
        %v4832 = vunpack.c.l.b16 %v3841
        %v4833 = vunpack.c.h.b16 %v3841
        %v4834 = vunpack.c.l.b16 %v3842
        %v4835 = vunpack.c.l.b16 %v3843
        %v4836 = vunpack.c.h.b16 %v3843
        %v4837 = vunpack.c.l.b16 %v3844
        %v4838 = vunpack.c.h.b16 %v3844
        %v4839 = vunpack.c.l.b16 %v3845
        %v4840 = vunpack.c.h.b16 %v3845
        %v4841 = vunpack.c.l.b16 %v3846
        %v4842 = vunpack.c.h.b16 %v3846
        %v4843 = vunpack.c.l.b16 %v3847
        %v4844 = vunpack.c.h.b16 %v3847
        %v4845 = vunpack.c.l.b16 %v3848
        %v4846 = vunpack.c.h.b16 %v3848
        %v4847 = vunpack.c.l.b16 %v3849
        %v4848 = vunpack.c.h.b16 %v3849
        %v4849 = vunpack.c.l.b16 %v3850
        %v4850 = vunpack.c.h.b16 %v3850
        %v4851 = vunpack.c.l.b16 %v3851
        %v4852 = vunpack.c.h.b16 %v3851
        %v4853 = vunpack.c.l.b16 %v3852
        %v4854 = vunpack.c.h.b16 %v3852
        %v4855 = vunpack.c.l.b16 %v3853
        %v4856 = vunpack.c.h.b16 %v3853
        %v4857 = vunpack.c.l.b16 %v3854
        %v4858 = vunpack.c.h.b16 %v3854
        %v4859 = vunpack.c.l.b16 %v3855
        %v4860 = vunpack.c.h.b16 %v3855
        %v4861 = vunpack.c.l.b16 %v3856
        %v4862 = vunpack.c.l.b16 %v3857
        %v4863 = vunpack.c.h.b16 %v3857
        %v4864 = vunpack.c.l.b16 %v3858
        %v4865 = vunpack.c.h.b16 %v3858
        %v4866 = vunpack.c.l.b16 %v3859
        %v4867 = vunpack.c.h.b16 %v3859
        %v4868 = vunpack.c.l.b16 %v3860
        %v4869 = vunpack.c.h.b16 %v3860
        %v4870 = vunpack.c.l.b16 %v3861
        %v4871 = vunpack.c.h.b16 %v3861
        %v4872 = vunpack.c.l.b16 %v3862
        %v4873 = vunpack.c.h.b16 %v3862
        %v4874 = vunpack.c.l.b16 %v3863
        %v4875 = vunpack.c.h.b16 %v3863
        %v4876 = vunpack.c.l.b16 %v3864
        %v4877 = vunpack.c.h.b16 %v3864
        %v4878 = vunpack.c.l.b16 %v3865
        %v4879 = vunpack.c.h.b16 %v3865
        %v4880 = vunpack.c.l.b16 %v3866
        %v4881 = vunpack.c.h.b16 %v3866
        %v4882 = vunpack.c.l.b16 %v3867
        %v4883 = vunpack.c.h.b16 %v3867
        %v4884 = vunpack.c.l.b16 %v3868
        %v4885 = vunpack.c.h.b16 %v3868
        %v4886 = vunpack.c.l.b16 %v3869
        %v4887 = vunpack.c.h.b16 %v3869
        %v4888 = vunpack.c.l.b16 %v3870
        %v4889 = vunpack.c.l.b16 %v3871
        %v4890 = vunpack.c.h.b16 %v3871
        %v4891 = vunpack.c.l.b16 %v3872
        %v4892 = vunpack.c.h.b16 %v3872
        %v4893 = vunpack.c.l.b16 %v3873
        %v4894 = vunpack.c.h.b16 %v3873
        %v4895 = vunpack.c.l.b16 %v3874
        %v4896 = vunpack.c.h.b16 %v3874
        %v4897 = vunpack.c.l.b16 %v3875
        %v4898 = vunpack.c.h.b16 %v3875
        %v4899 = vunpack.c.l.b16 %v3876
        %v4900 = vunpack.c.h.b16 %v3876
        %v4901 = vunpack.c.l.b16 %v3877
        %v4902 = vunpack.c.h.b16 %v3877
        %v4903 = vunpack.c.l.b16 %v3878
        %v4904 = vunpack.c.h.b16 %v3878
        %v4905 = vunpack.c.l.b16 %v3879
        %v4906 = vunpack.c.h.b16 %v3879
        %v4907 = vunpack.c.l.b16 %v3880
        %v4908 = vunpack.c.h.b16 %v3880
        %v4909 = vunpack.c.l.b16 %v3881
        %v4910 = vunpack.c.h.b16 %v3881
        %v4911 = vunpack.c.l.b16 %v3882
        %v4912 = vunpack.c.h.b16 %v3882
        %v4913 = vunpack.c.l.b16 %v3883
        %v4914 = vunpack.c.h.b16 %v3883
        %v4915 = vunpack.c.l.b16 %v3884
        %v4916 = vunpack.c.l.b16 %v3885
        %v4917 = vunpack.c.h.b16 %v3885
        %v4918 = vunpack.c.l.b16 %v3886
        %v4919 = vunpack.c.h.b16 %v3886
        %v4920 = vunpack.c.l.b16 %v3887
        %v4921 = vunpack.c.h.b16 %v3887
        %v4922 = vunpack.c.l.b16 %v3888
        %v4923 = vunpack.c.h.b16 %v3888
        %v4924 = vunpack.c.l.b16 %v3889
        %v4925 = vunpack.c.h.b16 %v3889
        %v4926 = vunpack.c.l.b16 %v3890
        %v4927 = vunpack.c.h.b16 %v3890
        %v4928 = vunpack.c.l.b16 %v3891
        %v4929 = vunpack.c.h.b16 %v3891
        %v4930 = vunpack.c.l.b16 %v3892
        %v4931 = vunpack.c.h.b16 %v3892
        %v4932 = vunpack.c.l.b16 %v3893
        %v4933 = vunpack.c.h.b16 %v3893
        %v4934 = vunpack.c.l.b16 %v3894
        %v4935 = vunpack.c.h.b16 %v3894
        %v4936 = vunpack.c.l.b16 %v3895
        %v4937 = vunpack.c.h.b16 %v3895
        %v4938 = vunpack.c.l.b16 %v3896
        %v4939 = vunpack.c.h.b16 %v3896
        %v4940 = vunpack.c.l.b16 %v3897
        %v4941 = vunpack.c.h.b16 %v3897
        %v4942 = vunpack.c.l.b16 %v3898
        %v4943 = vunpack.c.l.b16 %v3899
        %v4944 = vunpack.c.h.b16 %v3899
        %v4945 = vunpack.c.l.b16 %v3900
        %v4946 = vunpack.c.h.b16 %v3900
        %v4947 = vunpack.c.l.b16 %v3901
        %v4948 = vunpack.c.h.b16 %v3901
        %v4949 = vunpack.c.l.b16 %v3902
        %v4950 = vunpack.c.h.b16 %v3902
        %v4951 = vunpack.c.l.b16 %v3903
        %v4952 = vunpack.c.h.b16 %v3903
        %v4953 = vunpack.c.l.b16 %v3904
        %v4954 = vunpack.c.h.b16 %v3904
        %v4955 = vunpack.c.l.b16 %v3905
        %v4956 = vunpack.c.h.b16 %v3905
        %v4957 = vunpack.c.l.b16 %v3906
        %v4958 = vunpack.c.h.b16 %v3906
        %v4959 = vunpack.c.l.b16 %v3907
        %v4960 = vunpack.c.h.b16 %v3907
        %v4961 = vunpack.c.l.b16 %v3908
        %v4962 = vunpack.c.h.b16 %v3908
        %v4963 = vunpack.c.l.b16 %v3909
        %v4964 = vunpack.c.h.b16 %v3909
        %v4965 = vunpack.c.l.b16 %v3910
        %v4966 = vunpack.c.h.b16 %v3910
        %v4967 = vunpack.c.l.b16 %v3911
        %v4968 = vunpack.c.h.b16 %v3911
        %v4969 = vunpack.c.l.b16 %v3912
        %v4970 = vunpack.c.l.b16 %v3913
        %v4971 = vunpack.c.h.b16 %v3913
        %v4972 = vunpack.c.l.b16 %v3914
        %v4973 = vunpack.c.h.b16 %v3914
        %v4974 = vunpack.c.l.b16 %v3915
        %v4975 = vunpack.c.h.b16 %v3915
        %v4976 = vunpack.c.l.b16 %v3916
        %v4977 = vunpack.c.h.b16 %v3916
        %v4978 = vunpack.c.l.b16 %v3917
        %v4979 = vunpack.c.h.b16 %v3917
        %v4980 = vunpack.c.l.b16 %v3918
        %v4981 = vunpack.c.h.b16 %v3918
        %v4982 = vunpack.c.l.b16 %v3919
        %v4983 = vunpack.c.h.b16 %v3919
        %v4984 = vunpack.c.l.b16 %v3920
        %v4985 = vunpack.c.h.b16 %v3920
        %v4986 = vunpack.c.l.b16 %v3921
        %v4987 = vunpack.c.h.b16 %v3921
        %v4988 = vunpack.c.l.b16 %v3922
        %v4989 = vunpack.c.h.b16 %v3922
        %v4990 = vunpack.c.l.b16 %v3923
        %v4991 = vunpack.c.h.b16 %v3923
        %v4992 = vunpack.c.l.b16 %v3924
        %v4993 = vunpack.c.h.b16 %v3924
        %v4994 = vunpack.c.l.b16 %v3925
        %v4995 = vunpack.c.h.b16 %v3925
        %v4996 = vunpack.c.l.b16 %v3926
        %v4997 = vunpack.c.l.b16 %v3927
        %v4998 = vunpack.c.h.b16 %v3927
        %v4999 = vunpack.c.l.b16 %v3928
        %v5000 = vunpack.c.h.b16 %v3928
        %v5001 = vunpack.c.l.b16 %v3929
        %v5002 = vunpack.c.h.b16 %v3929
        %v5003 = vunpack.c.l.b16 %v3930
        %v5004 = vunpack.c.h.b16 %v3930
        %v5005 = vunpack.c.l.b16 %v3931
        %v5006 = vunpack.c.h.b16 %v3931
        %v5007 = vunpack.c.l.b16 %v3932
        %v5008 = vunpack.c.h.b16 %v3932
        %v5009 = vunpack.c.l.b16 %v3933
        %v5010 = vunpack.c.h.b16 %v3933
        %v5011 = vunpack.c.l.b16 %v3934
        %v5012 = vunpack.c.h.b16 %v3934
        %v5013 = vunpack.c.l.b16 %v3935
        %v5014 = vunpack.c.h.b16 %v3935
        %v5015 = vunpack.c.l.b16 %v3936
        %v5016 = vunpack.c.h.b16 %v3936
        %v5017 = vunpack.c.l.b16 %v3937
        %v5018 = vunpack.c.h.b16 %v3937
        %v5019 = vunpack.c.l.b16 %v3938
        %v5020 = vunpack.c.h.b16 %v3938
        %v5021 = vunpack.c.l.b16 %v3939
        %v5022 = vunpack.c.h.b16 %v3939
        %v5023 = vunpack.c.l.b16 %v3940
        %v5024 = vunpack.c.l.b16 %v3941
        %v5025 = vunpack.c.h.b16 %v3941
        %v5026 = vunpack.c.l.b16 %v3942
        %v5027 = vunpack.c.h.b16 %v3942
        %v5028 = vunpack.c.l.b16 %v3943
        %v5029 = vunpack.c.h.b16 %v3943
        %v5030 = vunpack.c.l.b16 %v3944
        %v5031 = vunpack.c.h.b16 %v3944
        %v5032 = vunpack.c.l.b16 %v3945
        %v5033 = vunpack.c.h.b16 %v3945
        %v5034 = vunpack.c.l.b16 %v3946
        %v5035 = vunpack.c.h.b16 %v3946
        %v5036 = vunpack.c.l.b16 %v3947
        %v5037 = vunpack.c.h.b16 %v3947
        %v5038 = vunpack.c.l.b16 %v3948
        %v5039 = vunpack.c.h.b16 %v3948
        %v5040 = vunpack.c.l.b16 %v3949
        %v5041 = vunpack.c.h.b16 %v3949
        %v5042 = vunpack.c.l.b16 %v3950
        %v5043 = vunpack.c.h.b16 %v3950
        %v5044 = vunpack.c.l.b16 %v3951
        %v5045 = vunpack.c.h.b16 %v3951
        %v5046 = vunpack.c.l.b16 %v3952
        %v5047 = vunpack.c.h.b16 %v3952
        %v5048 = vunpack.c.l.b16 %v3953
        %v5049 = vunpack.c.h.b16 %v3953
        %v5050 = vunpack.c.l.b16 %v3954
        %v5051 = vunpack.c.l.b16 %v3955
        %v5052 = vunpack.c.h.b16 %v3955
        %v5053 = vunpack.c.l.b16 %v3956
        %v5054 = vunpack.c.h.b16 %v3956
        %v5055 = vunpack.c.l.b16 %v3957
        %v5056 = vunpack.c.h.b16 %v3957
        %v5057 = vunpack.c.l.b16 %v3958
        %v5058 = vunpack.c.h.b16 %v3958
        %v5059 = vunpack.c.l.b16 %v3959
        %v5060 = vunpack.c.h.b16 %v3959
        %v5061 = vunpack.c.l.b16 %v3960
        %v5062 = vunpack.c.h.b16 %v3960
        %v5063 = vunpack.c.l.b16 %v3961
        %v5064 = vunpack.c.h.b16 %v3961
        %v5065 = vunpack.c.l.b16 %v3962
        %v5066 = vunpack.c.h.b16 %v3962
        %v5067 = vunpack.c.l.b16 %v3963
        %v5068 = vunpack.c.h.b16 %v3963
        %v5069 = vunpack.c.l.b16 %v3964
        %v5070 = vunpack.c.h.b16 %v3964
        %v5071 = vunpack.c.l.b16 %v3965
        %v5072 = vunpack.c.h.b16 %v3965
        %v5073 = vunpack.c.l.b16 %v3966
        %v5074 = vunpack.c.h.b16 %v3966
        %v5075 = vunpack.c.l.b16 %v3967
        %v5076 = vunpack.c.h.b16 %v3967
        %v5077 = vunpack.c.l.b16 %v3968
        %v5078 = vunpack.c.l.b16 %v3969
        %v5079 = vunpack.c.h.b16 %v3969
        %v5080 = vunpack.c.l.b16 %v3970
        %v5081 = vunpack.c.h.b16 %v3970
        %v5082 = vunpack.c.l.b16 %v3971
        %v5083 = vunpack.c.h.b16 %v3971
        %v5084 = vunpack.c.l.b16 %v3972
        %v5085 = vunpack.c.h.b16 %v3972
        %v5086 = vunpack.c.l.b16 %v3973
        %v5087 = vunpack.c.h.b16 %v3973
        %v5088 = vunpack.c.l.b16 %v3974
        %v5089 = vunpack.c.h.b16 %v3974
        %v5090 = vunpack.c.l.b16 %v3975
        %v5091 = vunpack.c.h.b16 %v3975
        %v5092 = vunpack.c.l.b16 %v3976
        %v5093 = vunpack.c.h.b16 %v3976
        %v5094 = vunpack.c.l.b16 %v3977
        %v5095 = vunpack.c.h.b16 %v3977
        %v5096 = vunpack.c.l.b16 %v3978
        %v5097 = vunpack.c.h.b16 %v3978
        %v5098 = vunpack.c.l.b16 %v3979
        %v5099 = vunpack.c.h.b16 %v3979
        %v5100 = vunpack.c.l.b16 %v3980
        %v5101 = vunpack.c.h.b16 %v3980
        %v5102 = vunpack.c.l.b16 %v3981
        %v5103 = vunpack.c.h.b16 %v3981
        %v5104 = vunpack.c.l.b16 %v3982
        %v5105 = vunpack.c.l.b16 %v3983
        %v5106 = vunpack.c.h.b16 %v3983
        %v5107 = vunpack.c.l.b16 %v3984
        %v5108 = vunpack.c.h.b16 %v3984
        %v5109 = vunpack.c.l.b16 %v3985
        %v5110 = vunpack.c.h.b16 %v3985
        %v5111 = vunpack.c.l.b16 %v3986
        %v5112 = vunpack.c.h.b16 %v3986
        %v5113 = vunpack.c.l.b16 %v3987
        %v5114 = vunpack.c.h.b16 %v3987
        %v5115 = vunpack.c.l.b16 %v3988
        %v5116 = vunpack.c.h.b16 %v3988
        %v5117 = vunpack.c.l.b16 %v3989
        %v5118 = vunpack.c.h.b16 %v3989
        %v5119 = vunpack.c.l.b16 %v3990
        %v5120 = vunpack.c.h.b16 %v3990
        %v5121 = vunpack.c.l.b16 %v3991
        %v5122 = vunpack.c.h.b16 %v3991
        %v5123 = vunpack.c.l.b16 %v3992
        %v5124 = vunpack.c.h.b16 %v3992
        %v5125 = vunpack.c.l.b16 %v3993
        %v5126 = vunpack.c.h.b16 %v3993
        %v5127 = vunpack.c.l.b16 %v3994
        %v5128 = vunpack.c.h.b16 %v3994
        %v5129 = vunpack.c.l.b16 %v3995
        %v5130 = vunpack.c.h.b16 %v3995
        %v5131 = vunpack.c.l.b16 %v3996
        %v5132 = vunpack.c.l.b16 %v3997
        %v5133 = vunpack.c.h.b16 %v3997
        %v5134 = vunpack.c.l.b16 %v3998
        %v5135 = vunpack.c.h.b16 %v3998
        %v5136 = vunpack.c.l.b16 %v3999
        %v5137 = vunpack.c.h.b16 %v3999
        %v5138 = vunpack.c.l.b16 %v4000
        %v5139 = vunpack.c.h.b16 %v4000
        %v5140 = vunpack.c.l.b16 %v4001
        %v5141 = vunpack.c.h.b16 %v4001
        %v5142 = vunpack.c.l.b16 %v4002
        %v5143 = vunpack.c.h.b16 %v4002
        %v5144 = vunpack.c.l.b16 %v4003
        %v5145 = vunpack.c.h.b16 %v4003
        %v5146 = vunpack.c.l.b16 %v4004
        %v5147 = vunpack.c.h.b16 %v4004
        %v5148 = vunpack.c.l.b16 %v4005
        %v5149 = vunpack.c.h.b16 %v4005
        %v5150 = vunpack.c.l.b16 %v4006
        %v5151 = vunpack.c.h.b16 %v4006
        %v5152 = vunpack.c.l.b16 %v4007
        %v5153 = vunpack.c.h.b16 %v4007
        %v5154 = vunpack.c.l.b16 %v4008
        %v5155 = vunpack.c.h.b16 %v4008
        %v5156 = vunpack.c.l.b16 %v4009
        %v5157 = vunpack.c.h.b16 %v4009
        %v5158 = vunpack.c.l.b16 %v4010
        %v5159 = vpack.c.b16 %v4430, %v4403
        %v5160 = vpack.c.b16 %v4431, %v4404
        %v5161 = vpack.c.b16 %v4432, %v4405
        %v5162 = vpack.c.b16 %v4433, %v4406
        %v5163 = vpack.c.b16 %v4434, %v4407
        %v5164 = vpack.c.b16 %v4435, %v4408
        %v5165 = vpack.c.b16 %v4436, %v4409
        %v5166 = vpack.c.b16 %v4437, %v4410
        %v5167 = vpack.c.b16 %v4438, %v4411
        %v5168 = vpack.c.b16 %v4439, %v4412
        %v5169 = vpack.c.b16 %v4440, %v4413
        %v5170 = vpack.c.b16 %v4441, %v4414
        %v5171 = vpack.c.b16 %v4442, %v4415
        %v5172 = vpack.c.b16 %v4443, %v4416
        %v5173 = vpack.c.b16 %v4444, %v4417
        %v5174 = vpack.c.b16 %v4445, %v4418
        %v5175 = vpack.c.b16 %v4446, %v4419
        %v5176 = vpack.c.b16 %v4447, %v4420
        %v5177 = vpack.c.b16 %v4448, %v4421
        %v5178 = vpack.c.b16 %v4449, %v4422
        %v5179 = vpack.c.b16 %v4450, %v4423
        %v5180 = vpack.c.b16 %v4451, %v4424
        %v5181 = vpack.c.b16 %v4452, %v4425
        %v5182 = vpack.c.b16 %v4453, %v4426
        %v5183 = vpack.c.b16 %v4454, %v4427
        %v5184 = vpack.c.b16 %v4455, %v4428
        %v5185 = vpack.c.b16 %v4456, %v4429
        %v5186 = vpack.c.b16 %v4484, %v4457
        %v5187 = vpack.c.b16 %v4485, %v4458
        %v5188 = vpack.c.b16 %v4486, %v4459
        %v5189 = vpack.c.b16 %v4487, %v4460
        %v5190 = vpack.c.b16 %v4488, %v4461
        %v5191 = vpack.c.b16 %v4489, %v4462
        %v5192 = vpack.c.b16 %v4490, %v4463
        %v5193 = vpack.c.b16 %v4491, %v4464
        %v5194 = vpack.c.b16 %v4492, %v4465
        %v5195 = vpack.c.b16 %v4493, %v4466
        %v5196 = vpack.c.b16 %v4494, %v4467
        %v5197 = vpack.c.b16 %v4495, %v4468
        %v5198 = vpack.c.b16 %v4496, %v4469
        %v5199 = vpack.c.b16 %v4497, %v4470
        %v5200 = vpack.c.b16 %v4498, %v4471
        %v5201 = vpack.c.b16 %v4499, %v4472
        %v5202 = vpack.c.b16 %v4500, %v4473
        %v5203 = vpack.c.b16 %v4501, %v4474
        %v5204 = vpack.c.b16 %v4502, %v4475
        %v5205 = vpack.c.b16 %v4503, %v4476
        %v5206 = vpack.c.b16 %v4504, %v4477
        %v5207 = vpack.c.b16 %v4505, %v4478
        %v5208 = vpack.c.b16 %v4506, %v4479
        %v5209 = vpack.c.b16 %v4507, %v4480
        %v5210 = vpack.c.b16 %v4508, %v4481
        %v5211 = vpack.c.b16 %v4509, %v4482
        %v5212 = vpack.c.b16 %v4510, %v4483
        %v5213 = vpack.c.b16 %v4538, %v4511
        %v5214 = vpack.c.b16 %v4539, %v4512
        %v5215 = vpack.c.b16 %v4540, %v4513
        %v5216 = vpack.c.b16 %v4541, %v4514
        %v5217 = vpack.c.b16 %v4542, %v4515
        %v5218 = vpack.c.b16 %v4543, %v4516
        %v5219 = vpack.c.b16 %v4544, %v4517
        %v5220 = vpack.c.b16 %v4545, %v4518
        %v5221 = vpack.c.b16 %v4546, %v4519
        %v5222 = vpack.c.b16 %v4547, %v4520
        %v5223 = vpack.c.b16 %v4548, %v4521
        %v5224 = vpack.c.b16 %v4549, %v4522
        %v5225 = vpack.c.b16 %v4550, %v4523
        %v5226 = vpack.c.b16 %v4551, %v4524
        %v5227 = vpack.c.b16 %v4552, %v4525
        %v5228 = vpack.c.b16 %v4553, %v4526
        %v5229 = vpack.c.b16 %v4554, %v4527
        %v5230 = vpack.c.b16 %v4555, %v4528
        %v5231 = vpack.c.b16 %v4556, %v4529
        %v5232 = vpack.c.b16 %v4557, %v4530
        %v5233 = vpack.c.b16 %v4558, %v4531
        %v5234 = vpack.c.b16 %v4559, %v4532
        %v5235 = vpack.c.b16 %v4560, %v4533
        %v5236 = vpack.c.b16 %v4561, %v4534
        %v5237 = vpack.c.b16 %v4562, %v4535
        %v5238 = vpack.c.b16 %v4563, %v4536
        %v5239 = vpack.c.b16 %v4564, %v4537
        %v5240 = vpack.c.b16 %v4592, %v4565
        %v5241 = vpack.c.b16 %v4593, %v4566
        %v5242 = vpack.c.b16 %v4594, %v4567
        %v5243 = vpack.c.b16 %v4595, %v4568
        %v5244 = vpack.c.b16 %v4596, %v4569
        %v5245 = vpack.c.b16 %v4597, %v4570
        %v5246 = vpack.c.b16 %v4598, %v4571
        %v5247 = vpack.c.b16 %v4599, %v4572
        %v5248 = vpack.c.b16 %v4600, %v4573
        %v5249 = vpack.c.b16 %v4601, %v4574
        %v5250 = vpack.c.b16 %v4602, %v4575
        %v5251 = vpack.c.b16 %v4603, %v4576
        %v5252 = vpack.c.b16 %v4604, %v4577
        %v5253 = vpack.c.b16 %v4605, %v4578
        %v5254 = vpack.c.b16 %v4606, %v4579
        %v5255 = vpack.c.b16 %v4607, %v4580
        %v5256 = vpack.c.b16 %v4608, %v4581
        %v5257 = vpack.c.b16 %v4609, %v4582
        %v5258 = vpack.c.b16 %v4610, %v4583
        %v5259 = vpack.c.b16 %v4611, %v4584
        %v5260 = vpack.c.b16 %v4612, %v4585
        %v5261 = vpack.c.b16 %v4613, %v4586
        %v5262 = vpack.c.b16 %v4614, %v4587
        %v5263 = vpack.c.b16 %v4615, %v4588
        %v5264 = vpack.c.b16 %v4616, %v4589
        %v5265 = vpack.c.b16 %v4617, %v4590
        %v5266 = vpack.c.b16 %v4618, %v4591
        %v5267 = vpack.c.b16 %v4646, %v4619
        %v5268 = vpack.c.b16 %v4647, %v4620
        %v5269 = vpack.c.b16 %v4648, %v4621
        %v5270 = vpack.c.b16 %v4649, %v4622
        %v5271 = vpack.c.b16 %v4650, %v4623
        %v5272 = vpack.c.b16 %v4651, %v4624
        %v5273 = vpack.c.b16 %v4652, %v4625
        %v5274 = vpack.c.b16 %v4653, %v4626
        %v5275 = vpack.c.b16 %v4654, %v4627
        %v5276 = vpack.c.b16 %v4655, %v4628
        %v5277 = vpack.c.b16 %v4656, %v4629
        %v5278 = vpack.c.b16 %v4657, %v4630
        %v5279 = vpack.c.b16 %v4658, %v4631
        %v5280 = vpack.c.b16 %v4659, %v4632
        %v5281 = vpack.c.b16 %v4660, %v4633
        %v5282 = vpack.c.b16 %v4661, %v4634
        %v5283 = vpack.c.b16 %v4662, %v4635
        %v5284 = vpack.c.b16 %v4663, %v4636
        %v5285 = vpack.c.b16 %v4664, %v4637
        %v5286 = vpack.c.b16 %v4665, %v4638
        %v5287 = vpack.c.b16 %v4666, %v4639
        %v5288 = vpack.c.b16 %v4667, %v4640
        %v5289 = vpack.c.b16 %v4668, %v4641
        %v5290 = vpack.c.b16 %v4669, %v4642
        %v5291 = vpack.c.b16 %v4670, %v4643
        %v5292 = vpack.c.b16 %v4671, %v4644
        %v5293 = vpack.c.b16 %v4672, %v4645
        %v5294 = vpack.c.b16 %v4700, %v4673
        %v5295 = vpack.c.b16 %v4701, %v4674
        %v5296 = vpack.c.b16 %v4702, %v4675
        %v5297 = vpack.c.b16 %v4703, %v4676
        %v5298 = vpack.c.b16 %v4704, %v4677
        %v5299 = vpack.c.b16 %v4705, %v4678
        %v5300 = vpack.c.b16 %v4706, %v4679
        %v5301 = vpack.c.b16 %v4707, %v4680
        %v5302 = vpack.c.b16 %v4708, %v4681
        %v5303 = vpack.c.b16 %v4709, %v4682
        %v5304 = vpack.c.b16 %v4710, %v4683
        %v5305 = vpack.c.b16 %v4711, %v4684
        %v5306 = vpack.c.b16 %v4712, %v4685
        %v5307 = vpack.c.b16 %v4713, %v4686
        %v5308 = vpack.c.b16 %v4714, %v4687
        %v5309 = vpack.c.b16 %v4715, %v4688
        %v5310 = vpack.c.b16 %v4716, %v4689
        %v5311 = vpack.c.b16 %v4717, %v4690
        %v5312 = vpack.c.b16 %v4718, %v4691
        %v5313 = vpack.c.b16 %v4719, %v4692
        %v5314 = vpack.c.b16 %v4720, %v4693
        %v5315 = vpack.c.b16 %v4721, %v4694
        %v5316 = vpack.c.b16 %v4722, %v4695
        %v5317 = vpack.c.b16 %v4723, %v4696
        %v5318 = vpack.c.b16 %v4724, %v4697
        %v5319 = vpack.c.b16 %v4725, %v4698
        %v5320 = vpack.c.b16 %v4726, %v4699
        %v5321 = vpack.c.b16 %v4754, %v4727
        %v5322 = vpack.c.b16 %v4755, %v4728
        %v5323 = vpack.c.b16 %v4756, %v4729
        %v5324 = vpack.c.b16 %v4757, %v4730
        %v5325 = vpack.c.b16 %v4758, %v4731
        %v5326 = vpack.c.b16 %v4759, %v4732
        %v5327 = vpack.c.b16 %v4760, %v4733
        %v5328 = vpack.c.b16 %v4761, %v4734
        %v5329 = vpack.c.b16 %v4762, %v4735
        %v5330 = vpack.c.b16 %v4763, %v4736
        %v5331 = vpack.c.b16 %v4764, %v4737
        %v5332 = vpack.c.b16 %v4765, %v4738
        %v5333 = vpack.c.b16 %v4766, %v4739
        %v5334 = vpack.c.b16 %v4767, %v4740
        %v5335 = vpack.c.b16 %v4768, %v4741
        %v5336 = vpack.c.b16 %v4769, %v4742
        %v5337 = vpack.c.b16 %v4770, %v4743
        %v5338 = vpack.c.b16 %v4771, %v4744
        %v5339 = vpack.c.b16 %v4772, %v4745
        %v5340 = vpack.c.b16 %v4773, %v4746
        %v5341 = vpack.c.b16 %v4774, %v4747
        %v5342 = vpack.c.b16 %v4775, %v4748
        %v5343 = vpack.c.b16 %v4776, %v4749
        %v5344 = vpack.c.b16 %v4777, %v4750
        %v5345 = vpack.c.b16 %v4778, %v4751
        %v5346 = vpack.c.b16 %v4779, %v4752
        %v5347 = vpack.c.b16 %v4780, %v4753
        %v5348 = vpack.c.b16 %v4808, %v4781
        %v5349 = vpack.c.b16 %v4809, %v4782
        %v5350 = vpack.c.b16 %v4810, %v4783
        %v5351 = vpack.c.b16 %v4811, %v4784
        %v5352 = vpack.c.b16 %v4812, %v4785
        %v5353 = vpack.c.b16 %v4813, %v4786
        %v5354 = vpack.c.b16 %v4814, %v4787
        %v5355 = vpack.c.b16 %v4815, %v4788
        %v5356 = vpack.c.b16 %v4816, %v4789
        %v5357 = vpack.c.b16 %v4817, %v4790
        %v5358 = vpack.c.b16 %v4818, %v4791
        %v5359 = vpack.c.b16 %v4819, %v4792
        %v5360 = vpack.c.b16 %v4820, %v4793
        %v5361 = vpack.c.b16 %v4821, %v4794
        %v5362 = vpack.c.b16 %v4822, %v4795
        %v5363 = vpack.c.b16 %v4823, %v4796
        %v5364 = vpack.c.b16 %v4824, %v4797
        %v5365 = vpack.c.b16 %v4825, %v4798
        %v5366 = vpack.c.b16 %v4826, %v4799
        %v5367 = vpack.c.b16 %v4827, %v4800
        %v5368 = vpack.c.b16 %v4828, %v4801
        %v5369 = vpack.c.b16 %v4829, %v4802
        %v5370 = vpack.c.b16 %v4830, %v4803
        %v5371 = vpack.c.b16 %v4831, %v4804
        %v5372 = vpack.c.b16 %v4832, %v4805
        %v5373 = vpack.c.b16 %v4833, %v4806
        %v5374 = vpack.c.b16 %v4834, %v4807
        %v5375 = vpack.c.b16 %v4862, %v4835
        %v5376 = vpack.c.b16 %v4863, %v4836
        %v5377 = vpack.c.b16 %v4864, %v4837
        %v5378 = vpack.c.b16 %v4865, %v4838
        %v5379 = vpack.c.b16 %v4866, %v4839
        %v5380 = vpack.c.b16 %v4867, %v4840
        %v5381 = vpack.c.b16 %v4868, %v4841
        %v5382 = vpack.c.b16 %v4869, %v4842
        %v5383 = vpack.c.b16 %v4870, %v4843
        %v5384 = vpack.c.b16 %v4871, %v4844
        %v5385 = vpack.c.b16 %v4872, %v4845
        %v5386 = vpack.c.b16 %v4873, %v4846
        %v5387 = vpack.c.b16 %v4874, %v4847
        %v5388 = vpack.c.b16 %v4875, %v4848
        %v5389 = vpack.c.b16 %v4876, %v4849
        %v5390 = vpack.c.b16 %v4877, %v4850
        %v5391 = vpack.c.b16 %v4878, %v4851
        %v5392 = vpack.c.b16 %v4879, %v4852
        %v5393 = vpack.c.b16 %v4880, %v4853
        %v5394 = vpack.c.b16 %v4881, %v4854
        %v5395 = vpack.c.b16 %v4882, %v4855
        %v5396 = vpack.c.b16 %v4883, %v4856
        %v5397 = vpack.c.b16 %v4884, %v4857
        %v5398 = vpack.c.b16 %v4885, %v4858
        %v5399 = vpack.c.b16 %v4886, %v4859
        %v5400 = vpack.c.b16 %v4887, %v4860
        %v5401 = vpack.c.b16 %v4888, %v4861
        %v5402 = vpack.c.b16 %v4916, %v4889
        %v5403 = vpack.c.b16 %v4917, %v4890
        %v5404 = vpack.c.b16 %v4918, %v4891
        %v5405 = vpack.c.b16 %v4919, %v4892
        %v5406 = vpack.c.b16 %v4920, %v4893
        %v5407 = vpack.c.b16 %v4921, %v4894
        %v5408 = vpack.c.b16 %v4922, %v4895
        %v5409 = vpack.c.b16 %v4923, %v4896
        %v5410 = vpack.c.b16 %v4924, %v4897
        %v5411 = vpack.c.b16 %v4925, %v4898
        %v5412 = vpack.c.b16 %v4926, %v4899
        %v5413 = vpack.c.b16 %v4927, %v4900
        %v5414 = vpack.c.b16 %v4928, %v4901
        %v5415 = vpack.c.b16 %v4929, %v4902
        %v5416 = vpack.c.b16 %v4930, %v4903
        %v5417 = vpack.c.b16 %v4931, %v4904
        %v5418 = vpack.c.b16 %v4932, %v4905
        %v5419 = vpack.c.b16 %v4933, %v4906
        %v5420 = vpack.c.b16 %v4934, %v4907
        %v5421 = vpack.c.b16 %v4935, %v4908
        %v5422 = vpack.c.b16 %v4936, %v4909
        %v5423 = vpack.c.b16 %v4937, %v4910
        %v5424 = vpack.c.b16 %v4938, %v4911
        %v5425 = vpack.c.b16 %v4939, %v4912
        %v5426 = vpack.c.b16 %v4940, %v4913
        %v5427 = vpack.c.b16 %v4941, %v4914
        %v5428 = vpack.c.b16 %v4942, %v4915
        %v5429 = vpack.c.b16 %v4970, %v4943
        %v5430 = vpack.c.b16 %v4971, %v4944
        %v5431 = vpack.c.b16 %v4972, %v4945
        %v5432 = vpack.c.b16 %v4973, %v4946
        %v5433 = vpack.c.b16 %v4974, %v4947
        %v5434 = vpack.c.b16 %v4975, %v4948
        %v5435 = vpack.c.b16 %v4976, %v4949
        %v5436 = vpack.c.b16 %v4977, %v4950
        %v5437 = vpack.c.b16 %v4978, %v4951
        %v5438 = vpack.c.b16 %v4979, %v4952
        %v5439 = vpack.c.b16 %v4980, %v4953
        %v5440 = vpack.c.b16 %v4981, %v4954
        %v5441 = vpack.c.b16 %v4982, %v4955
        %v5442 = vpack.c.b16 %v4983, %v4956
        %v5443 = vpack.c.b16 %v4984, %v4957
        %v5444 = vpack.c.b16 %v4985, %v4958
        %v5445 = vpack.c.b16 %v4986, %v4959
        %v5446 = vpack.c.b16 %v4987, %v4960
        %v5447 = vpack.c.b16 %v4988, %v4961
        %v5448 = vpack.c.b16 %v4989, %v4962
        %v5449 = vpack.c.b16 %v4990, %v4963
        %v5450 = vpack.c.b16 %v4991, %v4964
        %v5451 = vpack.c.b16 %v4992, %v4965
        %v5452 = vpack.c.b16 %v4993, %v4966
        %v5453 = vpack.c.b16 %v4994, %v4967
        %v5454 = vpack.c.b16 %v4995, %v4968
        %v5455 = vpack.c.b16 %v4996, %v4969
        %v5456 = vpack.c.b16 %v5024, %v4997
        %v5457 = vpack.c.b16 %v5025, %v4998
        %v5458 = vpack.c.b16 %v5026, %v4999
        %v5459 = vpack.c.b16 %v5027, %v5000
        %v5460 = vpack.c.b16 %v5028, %v5001
        %v5461 = vpack.c.b16 %v5029, %v5002
        %v5462 = vpack.c.b16 %v5030, %v5003
        %v5463 = vpack.c.b16 %v5031, %v5004
        %v5464 = vpack.c.b16 %v5032, %v5005
        %v5465 = vpack.c.b16 %v5033, %v5006
        %v5466 = vpack.c.b16 %v5034, %v5007
        %v5467 = vpack.c.b16 %v5035, %v5008
        %v5468 = vpack.c.b16 %v5036, %v5009
        %v5469 = vpack.c.b16 %v5037, %v5010
        %v5470 = vpack.c.b16 %v5038, %v5011
        %v5471 = vpack.c.b16 %v5039, %v5012
        %v5472 = vpack.c.b16 %v5040, %v5013
        %v5473 = vpack.c.b16 %v5041, %v5014
        %v5474 = vpack.c.b16 %v5042, %v5015
        %v5475 = vpack.c.b16 %v5043, %v5016
        %v5476 = vpack.c.b16 %v5044, %v5017
        %v5477 = vpack.c.b16 %v5045, %v5018
        %v5478 = vpack.c.b16 %v5046, %v5019
        %v5479 = vpack.c.b16 %v5047, %v5020
        %v5480 = vpack.c.b16 %v5048, %v5021
        %v5481 = vpack.c.b16 %v5049, %v5022
        %v5482 = vpack.c.b16 %v5050, %v5023
        %v5483 = vpack.c.b16 %v5078, %v5051
        %v5484 = vpack.c.b16 %v5079, %v5052
        %v5485 = vpack.c.b16 %v5080, %v5053
        %v5486 = vpack.c.b16 %v5081, %v5054
        %v5487 = vpack.c.b16 %v5082, %v5055
        %v5488 = vpack.c.b16 %v5083, %v5056
        %v5489 = vpack.c.b16 %v5084, %v5057
        %v5490 = vpack.c.b16 %v5085, %v5058
        %v5491 = vpack.c.b16 %v5086, %v5059
        %v5492 = vpack.c.b16 %v5087, %v5060
        %v5493 = vpack.c.b16 %v5088, %v5061
        %v5494 = vpack.c.b16 %v5089, %v5062
        %v5495 = vpack.c.b16 %v5090, %v5063
        %v5496 = vpack.c.b16 %v5091, %v5064
        %v5497 = vpack.c.b16 %v5092, %v5065
        %v5498 = vpack.c.b16 %v5093, %v5066
        %v5499 = vpack.c.b16 %v5094, %v5067
        %v5500 = vpack.c.b16 %v5095, %v5068
        %v5501 = vpack.c.b16 %v5096, %v5069
        %v5502 = vpack.c.b16 %v5097, %v5070
        %v5503 = vpack.c.b16 %v5098, %v5071
        %v5504 = vpack.c.b16 %v5099, %v5072
        %v5505 = vpack.c.b16 %v5100, %v5073
        %v5506 = vpack.c.b16 %v5101, %v5074
        %v5507 = vpack.c.b16 %v5102, %v5075
        %v5508 = vpack.c.b16 %v5103, %v5076
        %v5509 = vpack.c.b16 %v5104, %v5077
        %v5510 = vpack.c.b16 %v5132, %v5105
        %v5511 = vpack.c.b16 %v5133, %v5106
        %v5512 = vpack.c.b16 %v5134, %v5107
        %v5513 = vpack.c.b16 %v5135, %v5108
        %v5514 = vpack.c.b16 %v5136, %v5109
        %v5515 = vpack.c.b16 %v5137, %v5110
        %v5516 = vpack.c.b16 %v5138, %v5111
        %v5517 = vpack.c.b16 %v5139, %v5112
        %v5518 = vpack.c.b16 %v5140, %v5113
        %v5519 = vpack.c.b16 %v5141, %v5114
        %v5520 = vpack.c.b16 %v5142, %v5115
        %v5521 = vpack.c.b16 %v5143, %v5116
        %v5522 = vpack.c.b16 %v5144, %v5117
        %v5523 = vpack.c.b16 %v5145, %v5118
        %v5524 = vpack.c.b16 %v5146, %v5119
        %v5525 = vpack.c.b16 %v5147, %v5120
        %v5526 = vpack.c.b16 %v5148, %v5121
        %v5527 = vpack.c.b16 %v5149, %v5122
        %v5528 = vpack.c.b16 %v5150, %v5123
        %v5529 = vpack.c.b16 %v5151, %v5124
        %v5530 = vpack.c.b16 %v5152, %v5125
        %v5531 = vpack.c.b16 %v5153, %v5126
        %v5532 = vpack.c.b16 %v5154, %v5127
        %v5533 = vpack.c.b16 %v5155, %v5128
        %v5534 = vpack.c.b16 %v5156, %v5129
        %v5535 = vpack.c.b16 %v5157, %v5130
        %v5536 = vpack.c.b16 %v5158, %v5131
        %v5889 = vsel %vm2763, %v295, 0
        %v5892 = vsel %vm2767, %v5510, 0
        %v5895 = vsel %vm2767, %v5511, 0
        %v5898 = vsel %vm2767, %v5512, 0
        %v5901 = vsel %vm2767, %v5513, 0
        %v5904 = vsel %vm2767, %v5514, 0
        %v5907 = vsel %vm2767, %v5515, 0
        %v5910 = vsel %vm2767, %v5516, 0
        %v5913 = vsel %vm2767, %v5517, 0
        %v5916 = vsel %vm2767, %v5518, 0
        %v5919 = vsel %vm2767, %v5519, 0
        %v5922 = vsel %vm2767, %v5520, 0
        %v5925 = vsel %vm2767, %v5521, 0
        %v5928 = vsel %vm2767, %v5522, 0
        %v5931 = vsel %vm2767, %v5523, 0
        %v5934 = vsel %vm2767, %v5524, 0
        %v5937 = vsel %vm2767, %v5525, 0
        %v5940 = vsel %vm2767, %v5526, 0
        %v5943 = vsel %vm2767, %v5527, 0
        %v5946 = vsel %vm2767, %v5528, 0
        %v5949 = vsel %vm2767, %v5529, 0
        %v5952 = vsel %vm2767, %v5530, 0
        %v5955 = vsel %vm2767, %v5531, 0
        %v5958 = vsel %vm2767, %v5532, 0
        %v5961 = vsel %vm2767, %v5533, 0
        %v5964 = vsel %vm2767, %v5534, 0
        %v5967 = vsel %vm2767, %v5535, 0
        %v5970 = vsel %vm2767, %v5536, 0
        %5972 = vmatprep.subr.bf16.mxu0 %v5160
        %5973 = vmatpush1.bf16.msra.mxu0 %v5159
        %5974 = vmatprep.subr.bf16.mxu0 %v5187
        %5975 = vmatpush1.bf16.msra.mxu0 %v5186
        %5976 = vmatprep.subr.bf16.mxu0 %v5214
        %5977 = vmatpush1.bf16.msra.mxu0 %v5213
        %5978 = vmatprep.subr.bf16.mxu0 %v5241
        %5979 = vmatpush1.bf16.msra.mxu0 %v5240
        %5980 = vmatprep.subr.bf16.mxu0 %v5268
        %5981 = vmatpush1.bf16.msra.mxu0 %v5267
        %5982 = vmatprep.subr.bf16.mxu0 %v5295
        %5983 = vmatpush1.bf16.msra.mxu0 %v5294
        %5984 = vmatprep.subr.bf16.mxu0 %v5322
        %5985 = vmatpush1.bf16.msra.mxu0 %v5321
        %5986 = vmatprep.subr.bf16.mxu0 %v5349
        %5987 = vmatpush1.bf16.msra.mxu0 %v5348
        %5988 = vmatprep.subr.bf16.mxu0 %v5376
        %5989 = vmatpush1.bf16.msra.mxu0 %v5375
        %5990 = vmatprep.subr.bf16.mxu0 %v5403
        %5991 = vmatpush1.bf16.msra.mxu0 %v5402
        %5992 = vmatprep.subr.bf16.mxu0 %v5430
        %5993 = vmatpush1.bf16.msra.mxu0 %v5429
        %5994 = vmatprep.subr.bf16.mxu0 %v5457
        %5995 = vmatpush1.bf16.msra.mxu0 %v5456
        %5996 = vmatprep.subr.bf16.mxu0 %v5484
        %5997 = vmatpush1.bf16.msra.mxu0 %v5483
        %5998 = vmatprep.subr.bf16.mxu0 %v5895
        %5999 = vmatpush1.bf16.msra.mxu0 %v5892
        %6000 = vmatprep.subr.bf16.mxu0 0
        %6001 = vmatpush1.bf16.msra.mxu0 0
        %6002 = vmatprep.subr.bf16.mxu0 0
        %6003 = vmatpush1.bf16.msra.mxu0 0
        %6004 = vmatprep.mubr.bf16.mxu0 %v5889
        %6005 = vmatmul.mubr.bf16.gmra.mrb[0].mxu0 %v294
        %v6006 = vpop.f32.mrb[0].mxu0
        %v6007 = vadd.f32 0.0, %v6006
        %v6008 = vpop.f32.mrb[0].mxu0
        %v6009 = vadd.f32 0.0, %v6008
        %v6010 = vpop.f32.mrb[0].mxu0
        %v6011 = vpop.f32.mrb[0].mxu0
        %6012 = vdwg.mxu0
        %6013 = vmatprep.subr.bf16.mxu0 %v5162
        %6014 = vmatpush1.bf16.msra.mxu0 %v5161
        %6015 = vmatprep.subr.bf16.mxu0 %v5189
        %6016 = vmatpush1.bf16.msra.mxu0 %v5188
        %6017 = vmatprep.subr.bf16.mxu0 %v5216
        %6018 = vmatpush1.bf16.msra.mxu0 %v5215
        %6019 = vmatprep.subr.bf16.mxu0 %v5243
        %6020 = vmatpush1.bf16.msra.mxu0 %v5242
        %6021 = vmatprep.subr.bf16.mxu0 %v5270
        %6022 = vmatpush1.bf16.msra.mxu0 %v5269
        %6023 = vmatprep.subr.bf16.mxu0 %v5297
        %6024 = vmatpush1.bf16.msra.mxu0 %v5296
        %6025 = vmatprep.subr.bf16.mxu0 %v5324
        %6026 = vmatpush1.bf16.msra.mxu0 %v5323
        %6027 = vmatprep.subr.bf16.mxu0 %v5351
        %6028 = vmatpush1.bf16.msra.mxu0 %v5350
        %6029 = vmatprep.subr.bf16.mxu0 %v5378
        %6030 = vmatpush1.bf16.msra.mxu0 %v5377
        %6031 = vmatprep.subr.bf16.mxu0 %v5405
        %6032 = vmatpush1.bf16.msra.mxu0 %v5404
        %6033 = vmatprep.subr.bf16.mxu0 %v5432
        %6034 = vmatpush1.bf16.msra.mxu0 %v5431
        %6035 = vmatprep.subr.bf16.mxu0 %v5459
        %6036 = vmatpush1.bf16.msra.mxu0 %v5458
        %6037 = vmatprep.subr.bf16.mxu0 %v5486
        %6038 = vmatpush1.bf16.msra.mxu0 %v5485
        %6039 = vmatprep.subr.bf16.mxu0 %v5901
        %6040 = vmatpush1.bf16.msra.mxu0 %v5898
        %6041 = vmatprep.subr.bf16.mxu0 0
        %6042 = vmatpush1.bf16.msra.mxu0 0
        %6043 = vmatprep.subr.bf16.mxu0 0
        %6044 = vmatpush1.bf16.msra.mxu0 0
        %6045 = vmatprep.mubr.bf16.mxu0 %v5889
        %6046 = vmatmul.mubr.bf16.gmra.mrb[0].mxu0 %v294
        %v6047 = vpop.f32.mrb[0].mxu0
        %v6048 = vadd.f32 0.0, %v6047
        %v6049 = vpop.f32.mrb[0].mxu0
        %v6050 = vadd.f32 0.0, %v6049
        %v6051 = vpop.f32.mrb[0].mxu0
        %v6052 = vpop.f32.mrb[0].mxu0
        %6053 = vdwg.mxu0
        %6054 = vmatprep.subr.bf16.mxu0 %v5164
        %6055 = vmatpush1.bf16.msra.mxu0 %v5163
        %6056 = vmatprep.subr.bf16.mxu0 %v5191
        %6057 = vmatpush1.bf16.msra.mxu0 %v5190
        %6058 = vmatprep.subr.bf16.mxu0 %v5218
        %6059 = vmatpush1.bf16.msra.mxu0 %v5217
        %6060 = vmatprep.subr.bf16.mxu0 %v5245
        %6061 = vmatpush1.bf16.msra.mxu0 %v5244
        %6062 = vmatprep.subr.bf16.mxu0 %v5272
        %6063 = vmatpush1.bf16.msra.mxu0 %v5271
        %6064 = vmatprep.subr.bf16.mxu0 %v5299
        %6065 = vmatpush1.bf16.msra.mxu0 %v5298
        %6066 = vmatprep.subr.bf16.mxu0 %v5326
        %6067 = vmatpush1.bf16.msra.mxu0 %v5325
        %6068 = vmatprep.subr.bf16.mxu0 %v5353
        %6069 = vmatpush1.bf16.msra.mxu0 %v5352
        %6070 = vmatprep.subr.bf16.mxu0 %v5380
        %6071 = vmatpush1.bf16.msra.mxu0 %v5379
        %6072 = vmatprep.subr.bf16.mxu0 %v5407
        %6073 = vmatpush1.bf16.msra.mxu0 %v5406
        %6074 = vmatprep.subr.bf16.mxu0 %v5434
        %6075 = vmatpush1.bf16.msra.mxu0 %v5433
        %6076 = vmatprep.subr.bf16.mxu0 %v5461
        %6077 = vmatpush1.bf16.msra.mxu0 %v5460
        %6078 = vmatprep.subr.bf16.mxu0 %v5488
        %6079 = vmatpush1.bf16.msra.mxu0 %v5487
        %6080 = vmatprep.subr.bf16.mxu0 %v5907
        %6081 = vmatpush1.bf16.msra.mxu0 %v5904
        %6082 = vmatprep.subr.bf16.mxu0 0
        %6083 = vmatpush1.bf16.msra.mxu0 0
        %6084 = vmatprep.subr.bf16.mxu0 0
        %6085 = vmatpush1.bf16.msra.mxu0 0
        %6086 = vmatprep.mubr.bf16.mxu0 %v5889
        %6087 = vmatmul.mubr.bf16.gmra.mrb[0].mxu0 %v294
        %v6088 = vpop.f32.mrb[0].mxu0
        %v6089 = vadd.f32 0.0, %v6088
        %v6090 = vpop.f32.mrb[0].mxu0
        %v6091 = vadd.f32 0.0, %v6090
        %v6092 = vpop.f32.mrb[0].mxu0
        %v6093 = vpop.f32.mrb[0].mxu0
        %6094 = vdwg.mxu0
        %6095 = vmatprep.subr.bf16.mxu0 %v5166
        %6096 = vmatpush1.bf16.msra.mxu0 %v5165
        %6097 = vmatprep.subr.bf16.mxu0 %v5193
        %6098 = vmatpush1.bf16.msra.mxu0 %v5192
        %6099 = vmatprep.subr.bf16.mxu0 %v5220
        %6100 = vmatpush1.bf16.msra.mxu0 %v5219
        %6101 = vmatprep.subr.bf16.mxu0 %v5247
        %6102 = vmatpush1.bf16.msra.mxu0 %v5246
        %6103 = vmatprep.subr.bf16.mxu0 %v5274
        %6104 = vmatpush1.bf16.msra.mxu0 %v5273
        %6105 = vmatprep.subr.bf16.mxu0 %v5301
        %6106 = vmatpush1.bf16.msra.mxu0 %v5300
        %6107 = vmatprep.subr.bf16.mxu0 %v5328
        %6108 = vmatpush1.bf16.msra.mxu0 %v5327
        %6109 = vmatprep.subr.bf16.mxu0 %v5355
        %6110 = vmatpush1.bf16.msra.mxu0 %v5354
        %6111 = vmatprep.subr.bf16.mxu0 %v5382
        %6112 = vmatpush1.bf16.msra.mxu0 %v5381
        %6113 = vmatprep.subr.bf16.mxu0 %v5409
        %6114 = vmatpush1.bf16.msra.mxu0 %v5408
        %6115 = vmatprep.subr.bf16.mxu0 %v5436
        %6116 = vmatpush1.bf16.msra.mxu0 %v5435
        %6117 = vmatprep.subr.bf16.mxu0 %v5463
        %6118 = vmatpush1.bf16.msra.mxu0 %v5462
        %6119 = vmatprep.subr.bf16.mxu0 %v5490
        %6120 = vmatpush1.bf16.msra.mxu0 %v5489
        %6121 = vmatprep.subr.bf16.mxu0 %v5913
        %6122 = vmatpush1.bf16.msra.mxu0 %v5910
        %6123 = vmatprep.subr.bf16.mxu0 0
        %6124 = vmatpush1.bf16.msra.mxu0 0
        %6125 = vmatprep.subr.bf16.mxu0 0
        %6126 = vmatpush1.bf16.msra.mxu0 0
        %6127 = vmatprep.mubr.bf16.mxu0 %v5889
        %6128 = vmatmul.mubr.bf16.gmra.mrb[0].mxu0 %v294
        %v6129 = vpop.f32.mrb[0].mxu0
        %v6130 = vadd.f32 0.0, %v6129
        %v6131 = vpop.f32.mrb[0].mxu0
        %v6132 = vadd.f32 0.0, %v6131
        %v6133 = vpop.f32.mrb[0].mxu0
        %v6134 = vpop.f32.mrb[0].mxu0
        %6135 = vdwg.mxu0
        %6136 = vmatprep.subr.bf16.mxu0 %v5168
        %6137 = vmatpush1.bf16.msra.mxu0 %v5167
        %6138 = vmatprep.subr.bf16.mxu0 %v5195
        %6139 = vmatpush1.bf16.msra.mxu0 %v5194
        %6140 = vmatprep.subr.bf16.mxu0 %v5222
        %6141 = vmatpush1.bf16.msra.mxu0 %v5221
        %6142 = vmatprep.subr.bf16.mxu0 %v5249
        %6143 = vmatpush1.bf16.msra.mxu0 %v5248
        %6144 = vmatprep.subr.bf16.mxu0 %v5276
        %6145 = vmatpush1.bf16.msra.mxu0 %v5275
        %6146 = vmatprep.subr.bf16.mxu0 %v5303
        %6147 = vmatpush1.bf16.msra.mxu0 %v5302
        %6148 = vmatprep.subr.bf16.mxu0 %v5330
        %6149 = vmatpush1.bf16.msra.mxu0 %v5329
        %6150 = vmatprep.subr.bf16.mxu0 %v5357
        %6151 = vmatpush1.bf16.msra.mxu0 %v5356
        %6152 = vmatprep.subr.bf16.mxu0 %v5384
        %6153 = vmatpush1.bf16.msra.mxu0 %v5383
        %6154 = vmatprep.subr.bf16.mxu0 %v5411
        %6155 = vmatpush1.bf16.msra.mxu0 %v5410
        %6156 = vmatprep.subr.bf16.mxu0 %v5438
        %6157 = vmatpush1.bf16.msra.mxu0 %v5437
        %6158 = vmatprep.subr.bf16.mxu0 %v5465
        %6159 = vmatpush1.bf16.msra.mxu0 %v5464
        %6160 = vmatprep.subr.bf16.mxu0 %v5492
        %6161 = vmatpush1.bf16.msra.mxu0 %v5491
        %6162 = vmatprep.subr.bf16.mxu0 %v5919
        %6163 = vmatpush1.bf16.msra.mxu0 %v5916
        %6164 = vmatprep.subr.bf16.mxu0 0
        %6165 = vmatpush1.bf16.msra.mxu0 0
        %6166 = vmatprep.subr.bf16.mxu0 0
        %6167 = vmatpush1.bf16.msra.mxu0 0
        %6168 = vmatprep.mubr.bf16.mxu0 %v5889
        %6169 = vmatmul.mubr.bf16.gmra.mrb[0].mxu0 %v294
        %v6170 = vpop.f32.mrb[0].mxu0
        %v6171 = vadd.f32 0.0, %v6170
        %v6172 = vpop.f32.mrb[0].mxu0
        %v6173 = vadd.f32 0.0, %v6172
        %v6174 = vpop.f32.mrb[0].mxu0
        %v6175 = vpop.f32.mrb[0].mxu0
        %6176 = vdwg.mxu0
        %6177 = vmatprep.subr.bf16.mxu0 %v5170
        %6178 = vmatpush1.bf16.msra.mxu0 %v5169
        %6179 = vmatprep.subr.bf16.mxu0 %v5197
        %6180 = vmatpush1.bf16.msra.mxu0 %v5196
        %6181 = vmatprep.subr.bf16.mxu0 %v5224
        %6182 = vmatpush1.bf16.msra.mxu0 %v5223
        %6183 = vmatprep.subr.bf16.mxu0 %v5251
        %6184 = vmatpush1.bf16.msra.mxu0 %v5250
        %6185 = vmatprep.subr.bf16.mxu0 %v5278
        %6186 = vmatpush1.bf16.msra.mxu0 %v5277
        %6187 = vmatprep.subr.bf16.mxu0 %v5305
        %6188 = vmatpush1.bf16.msra.mxu0 %v5304
        %6189 = vmatprep.subr.bf16.mxu0 %v5332
        %6190 = vmatpush1.bf16.msra.mxu0 %v5331
        %6191 = vmatprep.subr.bf16.mxu0 %v5359
        %6192 = vmatpush1.bf16.msra.mxu0 %v5358
        %6193 = vmatprep.subr.bf16.mxu0 %v5386
        %6194 = vmatpush1.bf16.msra.mxu0 %v5385
        %6195 = vmatprep.subr.bf16.mxu0 %v5413
        %6196 = vmatpush1.bf16.msra.mxu0 %v5412
        %6197 = vmatprep.subr.bf16.mxu0 %v5440
        %6198 = vmatpush1.bf16.msra.mxu0 %v5439
        %6199 = vmatprep.subr.bf16.mxu0 %v5467
        %6200 = vmatpush1.bf16.msra.mxu0 %v5466
        %6201 = vmatprep.subr.bf16.mxu0 %v5494
        %6202 = vmatpush1.bf16.msra.mxu0 %v5493
        %6203 = vmatprep.subr.bf16.mxu0 %v5925
        %6204 = vmatpush1.bf16.msra.mxu0 %v5922
        %6205 = vmatprep.subr.bf16.mxu0 0
        %6206 = vmatpush1.bf16.msra.mxu0 0
        %6207 = vmatprep.subr.bf16.mxu0 0
        %6208 = vmatpush1.bf16.msra.mxu0 0
        %6209 = vmatprep.mubr.bf16.mxu0 %v5889
        %6210 = vmatmul.mubr.bf16.gmra.mrb[0].mxu0 %v294
        %v6211 = vpop.f32.mrb[0].mxu0
        %v6212 = vadd.f32 0.0, %v6211
        %v6213 = vpop.f32.mrb[0].mxu0
        %v6214 = vadd.f32 0.0, %v6213
        %v6215 = vpop.f32.mrb[0].mxu0
        %v6216 = vpop.f32.mrb[0].mxu0
        %6217 = vdwg.mxu0
        %6218 = vmatprep.subr.bf16.mxu0 %v5172
        %6219 = vmatpush1.bf16.msra.mxu0 %v5171
        %6220 = vmatprep.subr.bf16.mxu0 %v5199
        %6221 = vmatpush1.bf16.msra.mxu0 %v5198
        %6222 = vmatprep.subr.bf16.mxu0 %v5226
        %6223 = vmatpush1.bf16.msra.mxu0 %v5225
        %6224 = vmatprep.subr.bf16.mxu0 %v5253
        %6225 = vmatpush1.bf16.msra.mxu0 %v5252
        %6226 = vmatprep.subr.bf16.mxu0 %v5280
        %6227 = vmatpush1.bf16.msra.mxu0 %v5279
        %6228 = vmatprep.subr.bf16.mxu0 %v5307
        %6229 = vmatpush1.bf16.msra.mxu0 %v5306
        %6230 = vmatprep.subr.bf16.mxu0 %v5334
        %6231 = vmatpush1.bf16.msra.mxu0 %v5333
        %6232 = vmatprep.subr.bf16.mxu0 %v5361
        %6233 = vmatpush1.bf16.msra.mxu0 %v5360
        %6234 = vmatprep.subr.bf16.mxu0 %v5388
        %6235 = vmatpush1.bf16.msra.mxu0 %v5387
        %6236 = vmatprep.subr.bf16.mxu0 %v5415
        %6237 = vmatpush1.bf16.msra.mxu0 %v5414
        %6238 = vmatprep.subr.bf16.mxu0 %v5442
        %6239 = vmatpush1.bf16.msra.mxu0 %v5441
        %6240 = vmatprep.subr.bf16.mxu0 %v5469
        %6241 = vmatpush1.bf16.msra.mxu0 %v5468
        %6242 = vmatprep.subr.bf16.mxu0 %v5496
        %6243 = vmatpush1.bf16.msra.mxu0 %v5495
        %6244 = vmatprep.subr.bf16.mxu0 %v5931
        %6245 = vmatpush1.bf16.msra.mxu0 %v5928
        %6246 = vmatprep.subr.bf16.mxu0 0
        %6247 = vmatpush1.bf16.msra.mxu0 0
        %6248 = vmatprep.subr.bf16.mxu0 0
        %6249 = vmatpush1.bf16.msra.mxu0 0
        %6250 = vmatprep.mubr.bf16.mxu0 %v5889
        %6251 = vmatmul.mubr.bf16.gmra.mrb[0].mxu0 %v294
        %v6252 = vpop.f32.mrb[0].mxu0
        %v6253 = vadd.f32 0.0, %v6252
        %v6254 = vpop.f32.mrb[0].mxu0
        %v6255 = vadd.f32 0.0, %v6254
        %v6256 = vpop.f32.mrb[0].mxu0
        %v6257 = vpop.f32.mrb[0].mxu0
        %6258 = vdwg.mxu0
        %6259 = vmatprep.subr.bf16.mxu0 %v5174
        %6260 = vmatpush1.bf16.msra.mxu0 %v5173
        %6261 = vmatprep.subr.bf16.mxu0 %v5201
        %6262 = vmatpush1.bf16.msra.mxu0 %v5200
        %6263 = vmatprep.subr.bf16.mxu0 %v5228
        %6264 = vmatpush1.bf16.msra.mxu0 %v5227
        %6265 = vmatprep.subr.bf16.mxu0 %v5255
        %6266 = vmatpush1.bf16.msra.mxu0 %v5254
        %6267 = vmatprep.subr.bf16.mxu0 %v5282
        %6268 = vmatpush1.bf16.msra.mxu0 %v5281
        %6269 = vmatprep.subr.bf16.mxu0 %v5309
        %6270 = vmatpush1.bf16.msra.mxu0 %v5308
        %6271 = vmatprep.subr.bf16.mxu0 %v5336
        %6272 = vmatpush1.bf16.msra.mxu0 %v5335
        %6273 = vmatprep.subr.bf16.mxu0 %v5363
        %6274 = vmatpush1.bf16.msra.mxu0 %v5362
        %6275 = vmatprep.subr.bf16.mxu0 %v5390
        %6276 = vmatpush1.bf16.msra.mxu0 %v5389
        %6277 = vmatprep.subr.bf16.mxu0 %v5417
        %6278 = vmatpush1.bf16.msra.mxu0 %v5416
        %6279 = vmatprep.subr.bf16.mxu0 %v5444
        %6280 = vmatpush1.bf16.msra.mxu0 %v5443
        %6281 = vmatprep.subr.bf16.mxu0 %v5471
        %6282 = vmatpush1.bf16.msra.mxu0 %v5470
        %6283 = vmatprep.subr.bf16.mxu0 %v5498
        %6284 = vmatpush1.bf16.msra.mxu0 %v5497
        %6285 = vmatprep.subr.bf16.mxu0 %v5937
        %6286 = vmatpush1.bf16.msra.mxu0 %v5934
        %6287 = vmatprep.subr.bf16.mxu0 0
        %6288 = vmatpush1.bf16.msra.mxu0 0
        %6289 = vmatprep.subr.bf16.mxu0 0
        %6290 = vmatpush1.bf16.msra.mxu0 0
        %6291 = vmatprep.mubr.bf16.mxu0 %v5889
        %6292 = vmatmul.mubr.bf16.gmra.mrb[0].mxu0 %v294
        %v6293 = vpop.f32.mrb[0].mxu0
        %v6294 = vadd.f32 0.0, %v6293
        %v6295 = vpop.f32.mrb[0].mxu0
        %v6296 = vadd.f32 0.0, %v6295
        %v6297 = vpop.f32.mrb[0].mxu0
        %v6298 = vpop.f32.mrb[0].mxu0
        %6299 = vdwg.mxu0
        %6300 = vmatprep.subr.bf16.mxu0 %v5176
        %6301 = vmatpush1.bf16.msra.mxu0 %v5175
        %6302 = vmatprep.subr.bf16.mxu0 %v5203
        %6303 = vmatpush1.bf16.msra.mxu0 %v5202
        %6304 = vmatprep.subr.bf16.mxu0 %v5230
        %6305 = vmatpush1.bf16.msra.mxu0 %v5229
        %6306 = vmatprep.subr.bf16.mxu0 %v5257
        %6307 = vmatpush1.bf16.msra.mxu0 %v5256
        %6308 = vmatprep.subr.bf16.mxu0 %v5284
        %6309 = vmatpush1.bf16.msra.mxu0 %v5283
        %6310 = vmatprep.subr.bf16.mxu0 %v5311
        %6311 = vmatpush1.bf16.msra.mxu0 %v5310
        %6312 = vmatprep.subr.bf16.mxu0 %v5338
        %6313 = vmatpush1.bf16.msra.mxu0 %v5337
        %6314 = vmatprep.subr.bf16.mxu0 %v5365
        %6315 = vmatpush1.bf16.msra.mxu0 %v5364
        %6316 = vmatprep.subr.bf16.mxu0 %v5392
        %6317 = vmatpush1.bf16.msra.mxu0 %v5391
        %6318 = vmatprep.subr.bf16.mxu0 %v5419
        %6319 = vmatpush1.bf16.msra.mxu0 %v5418
        %6320 = vmatprep.subr.bf16.mxu0 %v5446
        %6321 = vmatpush1.bf16.msra.mxu0 %v5445
        %6322 = vmatprep.subr.bf16.mxu0 %v5473
        %6323 = vmatpush1.bf16.msra.mxu0 %v5472
        %6324 = vmatprep.subr.bf16.mxu0 %v5500
        %6325 = vmatpush1.bf16.msra.mxu0 %v5499
        %6326 = vmatprep.subr.bf16.mxu0 %v5943
        %6327 = vmatpush1.bf16.msra.mxu0 %v5940
        %6328 = vmatprep.subr.bf16.mxu0 0
        %6329 = vmatpush1.bf16.msra.mxu0 0
        %6330 = vmatprep.subr.bf16.mxu0 0
        %6331 = vmatpush1.bf16.msra.mxu0 0
        %6332 = vmatprep.mubr.bf16.mxu0 %v5889
        %6333 = vmatmul.mubr.bf16.gmra.mrb[0].mxu0 %v294
        %v6334 = vpop.f32.mrb[0].mxu0
        %v6335 = vadd.f32 0.0, %v6334
        %v6336 = vpop.f32.mrb[0].mxu0
        %v6337 = vadd.f32 0.0, %v6336
        %v6338 = vpop.f32.mrb[0].mxu0
        %v6339 = vpop.f32.mrb[0].mxu0
        %6340 = vdwg.mxu0
        %6341 = vmatprep.subr.bf16.mxu0 %v5178
        %6342 = vmatpush1.bf16.msra.mxu0 %v5177
        %6343 = vmatprep.subr.bf16.mxu0 %v5205
        %6344 = vmatpush1.bf16.msra.mxu0 %v5204
        %6345 = vmatprep.subr.bf16.mxu0 %v5232
        %6346 = vmatpush1.bf16.msra.mxu0 %v5231
        %6347 = vmatprep.subr.bf16.mxu0 %v5259
        %6348 = vmatpush1.bf16.msra.mxu0 %v5258
        %6349 = vmatprep.subr.bf16.mxu0 %v5286
        %6350 = vmatpush1.bf16.msra.mxu0 %v5285
        %6351 = vmatprep.subr.bf16.mxu0 %v5313
        %6352 = vmatpush1.bf16.msra.mxu0 %v5312
        %6353 = vmatprep.subr.bf16.mxu0 %v5340
        %6354 = vmatpush1.bf16.msra.mxu0 %v5339
        %6355 = vmatprep.subr.bf16.mxu0 %v5367
        %6356 = vmatpush1.bf16.msra.mxu0 %v5366
        %6357 = vmatprep.subr.bf16.mxu0 %v5394
        %6358 = vmatpush1.bf16.msra.mxu0 %v5393
        %6359 = vmatprep.subr.bf16.mxu0 %v5421
        %6360 = vmatpush1.bf16.msra.mxu0 %v5420
        %6361 = vmatprep.subr.bf16.mxu0 %v5448
        %6362 = vmatpush1.bf16.msra.mxu0 %v5447
        %6363 = vmatprep.subr.bf16.mxu0 %v5475
        %6364 = vmatpush1.bf16.msra.mxu0 %v5474
        %6365 = vmatprep.subr.bf16.mxu0 %v5502
        %6366 = vmatpush1.bf16.msra.mxu0 %v5501
        %6367 = vmatprep.subr.bf16.mxu0 %v5949
        %6368 = vmatpush1.bf16.msra.mxu0 %v5946
        %6369 = vmatprep.subr.bf16.mxu0 0
        %6370 = vmatpush1.bf16.msra.mxu0 0
        %6371 = vmatprep.subr.bf16.mxu0 0
        %6372 = vmatpush1.bf16.msra.mxu0 0
        %6373 = vmatprep.mubr.bf16.mxu0 %v5889
        %6374 = vmatmul.mubr.bf16.gmra.mrb[0].mxu0 %v294
        %v6375 = vpop.f32.mrb[0].mxu0
        %v6376 = vadd.f32 0.0, %v6375
        %v6377 = vpop.f32.mrb[0].mxu0
        %v6378 = vadd.f32 0.0, %v6377
        %v6379 = vpop.f32.mrb[0].mxu0
        %v6380 = vpop.f32.mrb[0].mxu0
        %6381 = vdwg.mxu0
        %6382 = vmatprep.subr.bf16.mxu0 %v5180
        %6383 = vmatpush1.bf16.msra.mxu0 %v5179
        %6384 = vmatprep.subr.bf16.mxu0 %v5207
        %6385 = vmatpush1.bf16.msra.mxu0 %v5206
        %6386 = vmatprep.subr.bf16.mxu0 %v5234
        %6387 = vmatpush1.bf16.msra.mxu0 %v5233
        %6388 = vmatprep.subr.bf16.mxu0 %v5261
        %6389 = vmatpush1.bf16.msra.mxu0 %v5260
        %6390 = vmatprep.subr.bf16.mxu0 %v5288
        %6391 = vmatpush1.bf16.msra.mxu0 %v5287
        %6392 = vmatprep.subr.bf16.mxu0 %v5315
        %6393 = vmatpush1.bf16.msra.mxu0 %v5314
        %6394 = vmatprep.subr.bf16.mxu0 %v5342
        %6395 = vmatpush1.bf16.msra.mxu0 %v5341
        %6396 = vmatprep.subr.bf16.mxu0 %v5369
        %6397 = vmatpush1.bf16.msra.mxu0 %v5368
        %6398 = vmatprep.subr.bf16.mxu0 %v5396
        %6399 = vmatpush1.bf16.msra.mxu0 %v5395
        %6400 = vmatprep.subr.bf16.mxu0 %v5423
        %6401 = vmatpush1.bf16.msra.mxu0 %v5422
        %6402 = vmatprep.subr.bf16.mxu0 %v5450
        %6403 = vmatpush1.bf16.msra.mxu0 %v5449
        %6404 = vmatprep.subr.bf16.mxu0 %v5477
        %6405 = vmatpush1.bf16.msra.mxu0 %v5476
        %6406 = vmatprep.subr.bf16.mxu0 %v5504
        %6407 = vmatpush1.bf16.msra.mxu0 %v5503
        %6408 = vmatprep.subr.bf16.mxu0 %v5955
        %6409 = vmatpush1.bf16.msra.mxu0 %v5952
        %6410 = vmatprep.subr.bf16.mxu0 0
        %6411 = vmatpush1.bf16.msra.mxu0 0
        %6412 = vmatprep.subr.bf16.mxu0 0
        %6413 = vmatpush1.bf16.msra.mxu0 0
        %6414 = vmatprep.mubr.bf16.mxu0 %v5889
        %6415 = vmatmul.mubr.bf16.gmra.mrb[0].mxu0 %v294
        %v6416 = vpop.f32.mrb[0].mxu0
        %v6417 = vadd.f32 0.0, %v6416
        %v6418 = vpop.f32.mrb[0].mxu0
        %v6419 = vadd.f32 0.0, %v6418
        %v6420 = vpop.f32.mrb[0].mxu0
        %v6421 = vpop.f32.mrb[0].mxu0
        %6422 = vdwg.mxu0
        %6423 = vmatprep.subr.bf16.mxu0 %v5182
        %6424 = vmatpush1.bf16.msra.mxu0 %v5181
        %6425 = vmatprep.subr.bf16.mxu0 %v5209
        %6426 = vmatpush1.bf16.msra.mxu0 %v5208
        %6427 = vmatprep.subr.bf16.mxu0 %v5236
        %6428 = vmatpush1.bf16.msra.mxu0 %v5235
        %6429 = vmatprep.subr.bf16.mxu0 %v5263
        %6430 = vmatpush1.bf16.msra.mxu0 %v5262
        %6431 = vmatprep.subr.bf16.mxu0 %v5290
        %6432 = vmatpush1.bf16.msra.mxu0 %v5289
        %6433 = vmatprep.subr.bf16.mxu0 %v5317
        %6434 = vmatpush1.bf16.msra.mxu0 %v5316
        %6435 = vmatprep.subr.bf16.mxu0 %v5344
        %6436 = vmatpush1.bf16.msra.mxu0 %v5343
        %6437 = vmatprep.subr.bf16.mxu0 %v5371
        %6438 = vmatpush1.bf16.msra.mxu0 %v5370
        %6439 = vmatprep.subr.bf16.mxu0 %v5398
        %6440 = vmatpush1.bf16.msra.mxu0 %v5397
        %6441 = vmatprep.subr.bf16.mxu0 %v5425
        %6442 = vmatpush1.bf16.msra.mxu0 %v5424
        %6443 = vmatprep.subr.bf16.mxu0 %v5452
        %6444 = vmatpush1.bf16.msra.mxu0 %v5451
        %6445 = vmatprep.subr.bf16.mxu0 %v5479
        %6446 = vmatpush1.bf16.msra.mxu0 %v5478
        %6447 = vmatprep.subr.bf16.mxu0 %v5506
        %6448 = vmatpush1.bf16.msra.mxu0 %v5505
        %6449 = vmatprep.subr.bf16.mxu0 %v5961
        %6450 = vmatpush1.bf16.msra.mxu0 %v5958
        %6451 = vmatprep.subr.bf16.mxu0 0
        %6452 = vmatpush1.bf16.msra.mxu0 0
        %6453 = vmatprep.subr.bf16.mxu0 0
        %6454 = vmatpush1.bf16.msra.mxu0 0
        %6455 = vmatprep.mubr.bf16.mxu0 %v5889
        %6456 = vmatmul.mubr.bf16.gmra.mrb[0].mxu0 %v294
        %v6457 = vpop.f32.mrb[0].mxu0
        %v6458 = vadd.f32 0.0, %v6457
        %v6459 = vpop.f32.mrb[0].mxu0
        %v6460 = vadd.f32 0.0, %v6459
        %v6461 = vpop.f32.mrb[0].mxu0
        %v6462 = vpop.f32.mrb[0].mxu0
        %6463 = vdwg.mxu0
        %6464 = vmatprep.subr.bf16.mxu0 %v5184
        %6465 = vmatpush1.bf16.msra.mxu0 %v5183
        %6466 = vmatprep.subr.bf16.mxu0 %v5211
        %6467 = vmatpush1.bf16.msra.mxu0 %v5210
        %6468 = vmatprep.subr.bf16.mxu0 %v5238
        %6469 = vmatpush1.bf16.msra.mxu0 %v5237
        %6470 = vmatprep.subr.bf16.mxu0 %v5265
        %6471 = vmatpush1.bf16.msra.mxu0 %v5264
        %6472 = vmatprep.subr.bf16.mxu0 %v5292
        %6473 = vmatpush1.bf16.msra.mxu0 %v5291
        %6474 = vmatprep.subr.bf16.mxu0 %v5319
        %6475 = vmatpush1.bf16.msra.mxu0 %v5318
        %6476 = vmatprep.subr.bf16.mxu0 %v5346
        %6477 = vmatpush1.bf16.msra.mxu0 %v5345
        %6478 = vmatprep.subr.bf16.mxu0 %v5373
        %6479 = vmatpush1.bf16.msra.mxu0 %v5372
        %6480 = vmatprep.subr.bf16.mxu0 %v5400
        %6481 = vmatpush1.bf16.msra.mxu0 %v5399
        %6482 = vmatprep.subr.bf16.mxu0 %v5427
        %6483 = vmatpush1.bf16.msra.mxu0 %v5426
        %6484 = vmatprep.subr.bf16.mxu0 %v5454
        %6485 = vmatpush1.bf16.msra.mxu0 %v5453
        %6486 = vmatprep.subr.bf16.mxu0 %v5481
        %6487 = vmatpush1.bf16.msra.mxu0 %v5480
        %6488 = vmatprep.subr.bf16.mxu0 %v5508
        %6489 = vmatpush1.bf16.msra.mxu0 %v5507
        %6490 = vmatprep.subr.bf16.mxu0 %v5967
        %6491 = vmatpush1.bf16.msra.mxu0 %v5964
        %6492 = vmatprep.subr.bf16.mxu0 0
        %6493 = vmatpush1.bf16.msra.mxu0 0
        %6494 = vmatprep.subr.bf16.mxu0 0
        %6495 = vmatpush1.bf16.msra.mxu0 0
        %6496 = vmatprep.mubr.bf16.mxu0 %v5889
        %6497 = vmatmul.mubr.bf16.gmra.mrb[0].mxu0 %v294
        %v6498 = vpop.f32.mrb[0].mxu0
        %v6499 = vadd.f32 0.0, %v6498
        %v6500 = vpop.f32.mrb[0].mxu0
        %v6501 = vadd.f32 0.0, %v6500
        %v6502 = vpop.f32.mrb[0].mxu0
        %v6503 = vpop.f32.mrb[0].mxu0
        %6504 = vdwg.mxu0
        %6505 = vmatprep.subr.bf16.mxu0 0
        %6506 = vmatpush1.bf16.msra.mxu0 %v5185
        %6507 = vmatprep.subr.bf16.mxu0 0
        %6508 = vmatpush1.bf16.msra.mxu0 %v5212
        %6509 = vmatprep.subr.bf16.mxu0 0
        %6510 = vmatpush1.bf16.msra.mxu0 %v5239
        %6511 = vmatprep.subr.bf16.mxu0 0
        %6512 = vmatpush1.bf16.msra.mxu0 %v5266
        %6513 = vmatprep.subr.bf16.mxu0 0
        %6514 = vmatpush1.bf16.msra.mxu0 %v5293
        %6515 = vmatprep.subr.bf16.mxu0 0
        %6516 = vmatpush1.bf16.msra.mxu0 %v5320
        %6517 = vmatprep.subr.bf16.mxu0 0
        %6518 = vmatpush1.bf16.msra.mxu0 %v5347
        %6519 = vmatprep.subr.bf16.mxu0 0
        %6520 = vmatpush1.bf16.msra.mxu0 %v5374
        %6521 = vmatprep.subr.bf16.mxu0 0
        %6522 = vmatpush1.bf16.msra.mxu0 %v5401
        %6523 = vmatprep.subr.bf16.mxu0 0
        %6524 = vmatpush1.bf16.msra.mxu0 %v5428
        %6525 = vmatprep.subr.bf16.mxu0 0
        %6526 = vmatpush1.bf16.msra.mxu0 %v5455
        %6527 = vmatprep.subr.bf16.mxu0 0
        %6528 = vmatpush1.bf16.msra.mxu0 %v5482
        %6529 = vmatprep.subr.bf16.mxu0 0
        %6530 = vmatpush1.bf16.msra.mxu0 %v5509
        %6531 = vmatprep.subr.bf16.mxu0 0
        %6532 = vmatpush1.bf16.msra.mxu0 %v5970
        %6533 = vmatprep.subr.bf16.mxu0 0
        %6534 = vmatpush1.bf16.msra.mxu0 0
        %6535 = vmatprep.subr.bf16.mxu0 0
        %6536 = vmatpush1.bf16.msra.mxu0 0
        %6537 = vmatprep.mubr.bf16.mxu0 %v5889
        %6538 = vmatmul.mubr.bf16.gmra.mrb[0].mxu0 %v294
        %v6539 = vpop.f32.mrb[0].mxu0
        %v6540 = vadd.f32 0.0, %v6539
        %v6541 = vpop.f32.mrb[0].mxu0
        %v6542 = vpop.f32.mrb[0].mxu0
        %v6543 = vpop.f32.mrb[0].mxu0
        %6544 = vdwg.mxu0
        %s6545 = scalar_lea.vmem %s214, 3024 [#allocation2]
        %v6546 = vld [vmem:[%s6545] sm:$0xff]
        %v6547 = vld [vmem:[%s6545 + $0x8] sm:$0xff]
        %v6548 = vld [vmem:[%s6545 + $0x10] sm:$0xff]
        %v6549 = vld [vmem:[%s6545 + $0x18] sm:$0xff]
        %v6550 = vld [vmem:[%s6545 + $0x20] sm:$0xff]
        %v6551 = vld [vmem:[%s6545 + $0x28] sm:$0xff]
        %v6552 = vld [vmem:[%s6545 + $0x30] sm:$0x3f]
        %v6553 = vld [vmem:[%s6545 + $0x36] sm:$0xff]
        %v6554 = vld [vmem:[%s6545 + $0x3e] sm:$0xff]
        %v6555 = vld [vmem:[%s6545 + $0x46] sm:$0xff]
        %v6556 = vld [vmem:[%s6545 + $0x4e] sm:$0xff]
        %v6557 = vld [vmem:[%s6545 + $0x56] sm:$0xff]
        %v6558 = vld [vmem:[%s6545 + $0x5e] sm:$0xff]
        %v6559 = vld [vmem:[%s6545 + $0x66] sm:$0x3f]
        %v6560 = vld [vmem:[%s6545 + $0x6c] sm:$0xff]
        %v6561 = vld [vmem:[%s6545 + $0x74] sm:$0xff]
        %v6562 = vld [vmem:[%s6545 + $0x7c] sm:$0xff]
        %v6563 = vld [vmem:[%s6545 + $0x84] sm:$0xff]
        %v6564 = vld [vmem:[%s6545 + $0x8c] sm:$0xff]
        %v6565 = vld [vmem:[%s6545 + $0x94] sm:$0xff]
        %v6566 = vld [vmem:[%s6545 + $0x9c] sm:$0x3f]
        %v6567 = vld [vmem:[%s6545 + $0xa2] sm:$0xff]
        %v6568 = vld [vmem:[%s6545 + $0xaa] sm:$0xff]
        %v6569 = vld [vmem:[%s6545 + $0xb2] sm:$0xff]
        %v6570 = vld [vmem:[%s6545 + $0xba] sm:$0xff]
        %v6571 = vld [vmem:[%s6545 + $0xc2] sm:$0xff]
        %v6572 = vld [vmem:[%s6545 + $0xca] sm:$0xff]
        %v6573 = vld [vmem:[%s6545 + $0xd2] sm:$0x3f]
        %v6574 = vld [vmem:[%s6545 + $0xd8] sm:$0xff]
        %v6575 = vld [vmem:[%s6545 + $0xe0] sm:$0xff]
        %v6576 = vld [vmem:[%s6545 + $0xe8] sm:$0xff]
        %v6577 = vld [vmem:[%s6545 + $0xf0] sm:$0xff]
        %v6578 = vld [vmem:[%s6545 + $0xf8] sm:$0xff]
        %v6579 = vld [vmem:[%s6545 + $0x100] sm:$0xff]
        %v6580 = vld [vmem:[%s6545 + $0x108] sm:$0x3f]
        %v6581 = vld [vmem:[%s6545 + $0x10e] sm:$0xff]
        %v6582 = vld [vmem:[%s6545 + $0x116] sm:$0xff]
        %v6583 = vld [vmem:[%s6545 + $0x11e] sm:$0xff]
        %v6584 = vld [vmem:[%s6545 + $0x126] sm:$0xff]
        %v6585 = vld [vmem:[%s6545 + $0x12e] sm:$0xff]
        %v6586 = vld [vmem:[%s6545 + $0x136] sm:$0xff]
        %v6587 = vld [vmem:[%s6545 + $0x13e] sm:$0x3f]
        %v6588 = vld [vmem:[%s6545 + $0x144] sm:$0xff]
        %v6589 = vld [vmem:[%s6545 + $0x14c] sm:$0xff]
        %v6590 = vld [vmem:[%s6545 + $0x154] sm:$0xff]
        %v6591 = vld [vmem:[%s6545 + $0x15c] sm:$0xff]
        %v6592 = vld [vmem:[%s6545 + $0x164] sm:$0xff]
        %v6593 = vld [vmem:[%s6545 + $0x16c] sm:$0xff]
        %v6594 = vld [vmem:[%s6545 + $0x174] sm:$0x3f]
        %v6595 = vld [vmem:[%s6545 + $0x17a] sm:$0xff]
        %v6596 = vld [vmem:[%s6545 + $0x182] sm:$0xff]
        %v6597 = vld [vmem:[%s6545 + $0x18a] sm:$0xff]
        %v6598 = vld [vmem:[%s6545 + $0x192] sm:$0xff]
        %v6599 = vld [vmem:[%s6545 + $0x19a] sm:$0xff]
        %v6600 = vld [vmem:[%s6545 + $0x1a2] sm:$0xff]
        %v6601 = vld [vmem:[%s6545 + $0x1aa] sm:$0x3f]
        %v6602 = vld [vmem:[%s6545 + $0x1b0] sm:$0xff]
        %v6603 = vld [vmem:[%s6545 + $0x1b8] sm:$0xff]
        %v6604 = vld [vmem:[%s6545 + $0x1c0] sm:$0xff]
        %v6605 = vld [vmem:[%s6545 + $0x1c8] sm:$0xff]
        %v6606 = vld [vmem:[%s6545 + $0x1d0] sm:$0xff]
        %v6607 = vld [vmem:[%s6545 + $0x1d8] sm:$0xff]
        %v6608 = vld [vmem:[%s6545 + $0x1e0] sm:$0x3f]
        %v6609 = vld [vmem:[%s6545 + $0x1e6] sm:$0xff]
        %v6610 = vld [vmem:[%s6545 + $0x1ee] sm:$0xff]
        %v6611 = vld [vmem:[%s6545 + $0x1f6] sm:$0xff]
        %v6612 = vld [vmem:[%s6545 + $0x1fe] sm:$0xff]
        %v6613 = vld [vmem:[%s6545 + $0x206] sm:$0xff]
        %v6614 = vld [vmem:[%s6545 + $0x20e] sm:$0xff]
        %v6615 = vld [vmem:[%s6545 + $0x216] sm:$0x3f]
        %v6616 = vld [vmem:[%s6545 + $0x21c] sm:$0xff]
        %v6617 = vld [vmem:[%s6545 + $0x224] sm:$0xff]
        %v6618 = vld [vmem:[%s6545 + $0x22c] sm:$0xff]
        %v6619 = vld [vmem:[%s6545 + $0x234] sm:$0xff]
        %v6620 = vld [vmem:[%s6545 + $0x23c] sm:$0xff]
        %v6621 = vld [vmem:[%s6545 + $0x244] sm:$0xff]
        %v6622 = vld [vmem:[%s6545 + $0x24c] sm:$0x3f]
        %v6623 = vld [vmem:[%s6545 + $0x252] sm:$0xff]
        %v6624 = vld [vmem:[%s6545 + $0x25a] sm:$0xff]
        %v6625 = vld [vmem:[%s6545 + $0x262] sm:$0xff]
        %v6626 = vld [vmem:[%s6545 + $0x26a] sm:$0xff]
        %v6627 = vld [vmem:[%s6545 + $0x272] sm:$0xff]
        %v6628 = vld [vmem:[%s6545 + $0x27a] sm:$0xff]
        %v6629 = vld [vmem:[%s6545 + $0x282] sm:$0x3f]
        %v6630 = vld [vmem:[%s6545 + $0x288] sm:$0xff]
        %v6631 = vld [vmem:[%s6545 + $0x290] sm:$0xff]
        %v6632 = vld [vmem:[%s6545 + $0x298] sm:$0xff]
        %v6633 = vld [vmem:[%s6545 + $0x2a0] sm:$0xff]
        %v6634 = vld [vmem:[%s6545 + $0x2a8] sm:$0xff]
        %v6635 = vld [vmem:[%s6545 + $0x2b0] sm:$0xff]
        %v6636 = vld [vmem:[%s6545 + $0x2b8] sm:$0x3f]
        %v6637 = vld [vmem:[%s6545 + $0x2be] sm:$0xff]
        %v6638 = vld [vmem:[%s6545 + $0x2c6] sm:$0xff]
        %v6639 = vld [vmem:[%s6545 + $0x2ce] sm:$0xff]
        %v6640 = vld [vmem:[%s6545 + $0x2d6] sm:$0xff]
        %v6641 = vld [vmem:[%s6545 + $0x2de] sm:$0xff]
        %v6642 = vld [vmem:[%s6545 + $0x2e6] sm:$0xff]
        %v6643 = vld [vmem:[%s6545 + $0x2ee] sm:$0x3f]
        %v6644 = vld [vmem:[%s6545 + $0x2f4] sm:$0xff]
        %v6645 = vld [vmem:[%s6545 + $0x2fc] sm:$0xff]
        %v6646 = vld [vmem:[%s6545 + $0x304] sm:$0xff]
        %v6647 = vld [vmem:[%s6545 + $0x30c] sm:$0xff]
        %v6648 = vld [vmem:[%s6545 + $0x314] sm:$0xff]
        %v6649 = vld [vmem:[%s6545 + $0x31c] sm:$0xff]
        %v6650 = vld [vmem:[%s6545 + $0x324] sm:$0x3f]
        %v6651 = vld [vmem:[%s6545 + $0x32a] sm:$0xff]
        %v6652 = vld [vmem:[%s6545 + $0x332] sm:$0xff]
        %v6653 = vld [vmem:[%s6545 + $0x33a] sm:$0xff]
        %v6654 = vld [vmem:[%s6545 + $0x342] sm:$0xff]
        %v6655 = vld [vmem:[%s6545 + $0x34a] sm:$0xff]
        %v6656 = vld [vmem:[%s6545 + $0x352] sm:$0xff]
        %v6657 = vld [vmem:[%s6545 + $0x35a] sm:$0x3f]
        %v6658 = vld [vmem:[%s6545 + $0x360] sm:$0xff]
        %v6659 = vld [vmem:[%s6545 + $0x368] sm:$0xff]
        %v6660 = vld [vmem:[%s6545 + $0x370] sm:$0xff]
        %v6661 = vld [vmem:[%s6545 + $0x378] sm:$0xff]
        %v6662 = vld [vmem:[%s6545 + $0x380] sm:$0xff]
        %v6663 = vld [vmem:[%s6545 + $0x388] sm:$0xff]
        %v6664 = vld [vmem:[%s6545 + $0x390] sm:$0x3f]
        %v6665 = vld [vmem:[%s6545 + $0x396] sm:$0xff]
        %v6666 = vld [vmem:[%s6545 + $0x39e] sm:$0xff]
        %v6667 = vld [vmem:[%s6545 + $0x3a6] sm:$0xff]
        %v6668 = vld [vmem:[%s6545 + $0x3ae] sm:$0xff]
        %v6669 = vld [vmem:[%s6545 + $0x3b6] sm:$0xff]
        %v6670 = vld [vmem:[%s6545 + $0x3be] sm:$0xff]
        %v6671 = vld [vmem:[%s6545 + $0x3c6] sm:$0x3f]
        %v6672 = vld [vmem:[%s6545 + $0x3cc] sm:$0xff]
        %v6673 = vld [vmem:[%s6545 + $0x3d4] sm:$0xff]
        %v6674 = vld [vmem:[%s6545 + $0x3dc] sm:$0xff]
        %v6675 = vld [vmem:[%s6545 + $0x3e4] sm:$0xff]
        %v6676 = vld [vmem:[%s6545 + $0x3ec] sm:$0xff]
        %v6677 = vld [vmem:[%s6545 + $0x3f4] sm:$0xff]
        %v6678 = vld [vmem:[%s6545 + $0x3fc] sm:$0x3f]
        %v6679 = vld [vmem:[%s6545 + $0x402] sm:$0xff]
        %v6680 = vld [vmem:[%s6545 + $0x40a] sm:$0xff]
        %v6681 = vld [vmem:[%s6545 + $0x412] sm:$0xff]
        %v6682 = vld [vmem:[%s6545 + $0x41a] sm:$0xff]
        %v6683 = vld [vmem:[%s6545 + $0x422] sm:$0xff]
        %v6684 = vld [vmem:[%s6545 + $0x42a] sm:$0xff]
        %v6685 = vld [vmem:[%s6545 + $0x432] sm:$0x3f]
        %v6686 = vld [vmem:[%s6545 + $0x438] sm:$0xff]
        %v6687 = vld [vmem:[%s6545 + $0x440] sm:$0xff]
        %v6688 = vld [vmem:[%s6545 + $0x448] sm:$0xff]
        %v6689 = vld [vmem:[%s6545 + $0x450] sm:$0xff]
        %v6690 = vld [vmem:[%s6545 + $0x458] sm:$0xff]
        %v6691 = vld [vmem:[%s6545 + $0x460] sm:$0xff]
        %v6692 = vld [vmem:[%s6545 + $0x468] sm:$0x3f]
        %v6693 = vld [vmem:[%s6545 + $0x46e] sm:$0xff]
        %v6694 = vld [vmem:[%s6545 + $0x476] sm:$0xff]
        %v6695 = vld [vmem:[%s6545 + $0x47e] sm:$0xff]
        %v6696 = vld [vmem:[%s6545 + $0x486] sm:$0xff]
        %v6697 = vld [vmem:[%s6545 + $0x48e] sm:$0xff]
        %v6698 = vld [vmem:[%s6545 + $0x496] sm:$0xff]
        %v6699 = vld [vmem:[%s6545 + $0x49e] sm:$0x3f]
        %v6700 = vld [vmem:[%s6545 + $0x4a4] sm:$0xff]
        %v6701 = vld [vmem:[%s6545 + $0x4ac] sm:$0xff]
        %v6702 = vld [vmem:[%s6545 + $0x4b4] sm:$0xff]
        %v6703 = vld [vmem:[%s6545 + $0x4bc] sm:$0xff]
        %v6704 = vld [vmem:[%s6545 + $0x4c4] sm:$0xff]
        %v6705 = vld [vmem:[%s6545 + $0x4cc] sm:$0xff]
        %v6706 = vld [vmem:[%s6545 + $0x4d4] sm:$0x3f]
        %v6707 = vld [vmem:[%s6545 + $0x4da] sm:$0xff]
        %v6708 = vld [vmem:[%s6545 + $0x4e2] sm:$0xff]
        %v6709 = vld [vmem:[%s6545 + $0x4ea] sm:$0xff]
        %v6710 = vld [vmem:[%s6545 + $0x4f2] sm:$0xff]
        %v6711 = vld [vmem:[%s6545 + $0x4fa] sm:$0xff]
        %v6712 = vld [vmem:[%s6545 + $0x502] sm:$0xff]
        %v6713 = vld [vmem:[%s6545 + $0x50a] sm:$0x3f]
        %v6714 = vld [vmem:[%s6545 + $0x510] sm:$0xff]
        %v6715 = vld [vmem:[%s6545 + $0x518] sm:$0xff]
        %v6716 = vld [vmem:[%s6545 + $0x520] sm:$0xff]
        %v6717 = vld [vmem:[%s6545 + $0x528] sm:$0xff]
        %v6718 = vld [vmem:[%s6545 + $0x530] sm:$0xff]
        %v6719 = vld [vmem:[%s6545 + $0x538] sm:$0xff]
        %v6720 = vld [vmem:[%s6545 + $0x540] sm:$0x3f]
        %v6721 = vld [vmem:[%s6545 + $0x546] sm:$0xff]
        %v6722 = vld [vmem:[%s6545 + $0x54e] sm:$0xff]
        %v6723 = vld [vmem:[%s6545 + $0x556] sm:$0xff]
        %v6724 = vld [vmem:[%s6545 + $0x55e] sm:$0xff]
        %v6725 = vld [vmem:[%s6545 + $0x566] sm:$0xff]
        %v6726 = vld [vmem:[%s6545 + $0x56e] sm:$0xff]
        %v6727 = vld [vmem:[%s6545 + $0x576] sm:$0x3f]
        %v6728 = vld [vmem:[%s6545 + $0x57c] sm:$0xff]
        %v6729 = vld [vmem:[%s6545 + $0x584] sm:$0xff]
        %v6730 = vld [vmem:[%s6545 + $0x58c] sm:$0xff]
        %v6731 = vld [vmem:[%s6545 + $0x594] sm:$0xff]
        %v6732 = vld [vmem:[%s6545 + $0x59c] sm:$0xff]
        %v6733 = vld [vmem:[%s6545 + $0x5a4] sm:$0xff]
        %v6734 = vld [vmem:[%s6545 + $0x5ac] sm:$0x3f]
        %v6735 = vld [vmem:[%s6545 + $0x5b2] sm:$0x55]
        %v6736 = vld [vmem:[%s6545 + $0x5ba] sm:$0x55]
        %v6737 = vld [vmem:[%s6545 + $0x5c2] sm:$0x55]
        %v6738 = vld [vmem:[%s6545 + $0x5ca] sm:$0x55]
        %v6739 = vld [vmem:[%s6545 + $0x5d2] sm:$0x55]
        %v6740 = vld [vmem:[%s6545 + $0x5da] sm:$0x55]
        %v6741 = vld [vmem:[%s6545 + $0x5e2] sm:$0x15]
        %v6742 = vunpack.c.l.s8.bf16 %v6546
        %v6743 = vunpack.c.h.s8.bf16 %v6546
        %v6744 = vunpack.c.l.s8.bf16 %v6547
        %v6745 = vunpack.c.h.s8.bf16 %v6547
        %v6746 = vunpack.c.l.s8.bf16 %v6548
        %v6747 = vunpack.c.h.s8.bf16 %v6548
        %v6748 = vunpack.c.l.s8.bf16 %v6549
        %v6749 = vunpack.c.h.s8.bf16 %v6549
        %v6750 = vunpack.c.l.s8.bf16 %v6550
        %v6751 = vunpack.c.h.s8.bf16 %v6550
        %v6752 = vunpack.c.l.s8.bf16 %v6551
        %v6753 = vunpack.c.h.s8.bf16 %v6551
        %v6754 = vunpack.c.l.s8.bf16 %v6552
        %v6755 = vunpack.c.h.s8.bf16 %v6552
        %v6756 = vunpack.c.l.s8.bf16 %v6553
        %v6757 = vunpack.c.h.s8.bf16 %v6553
        %v6758 = vunpack.c.l.s8.bf16 %v6554
        %v6759 = vunpack.c.h.s8.bf16 %v6554
        %v6760 = vunpack.c.l.s8.bf16 %v6555
        %v6761 = vunpack.c.h.s8.bf16 %v6555
        %v6762 = vunpack.c.l.s8.bf16 %v6556
        %v6763 = vunpack.c.h.s8.bf16 %v6556
        %v6764 = vunpack.c.l.s8.bf16 %v6557
        %v6765 = vunpack.c.h.s8.bf16 %v6557
        %v6766 = vunpack.c.l.s8.bf16 %v6558
        %v6767 = vunpack.c.h.s8.bf16 %v6558
        %v6768 = vunpack.c.l.s8.bf16 %v6559
        %v6769 = vunpack.c.h.s8.bf16 %v6559
        %v6770 = vunpack.c.l.s8.bf16 %v6560
        %v6771 = vunpack.c.h.s8.bf16 %v6560
        %v6772 = vunpack.c.l.s8.bf16 %v6561
        %v6773 = vunpack.c.h.s8.bf16 %v6561
        %v6774 = vunpack.c.l.s8.bf16 %v6562
        %v6775 = vunpack.c.h.s8.bf16 %v6562
        %v6776 = vunpack.c.l.s8.bf16 %v6563
        %v6777 = vunpack.c.h.s8.bf16 %v6563
        %v6778 = vunpack.c.l.s8.bf16 %v6564
        %v6779 = vunpack.c.h.s8.bf16 %v6564
        %v6780 = vunpack.c.l.s8.bf16 %v6565
        %v6781 = vunpack.c.h.s8.bf16 %v6565
        %v6782 = vunpack.c.l.s8.bf16 %v6566
        %v6783 = vunpack.c.h.s8.bf16 %v6566
        %v6784 = vunpack.c.l.s8.bf16 %v6567
        %v6785 = vunpack.c.h.s8.bf16 %v6567
        %v6786 = vunpack.c.l.s8.bf16 %v6568
        %v6787 = vunpack.c.h.s8.bf16 %v6568
        %v6788 = vunpack.c.l.s8.bf16 %v6569
        %v6789 = vunpack.c.h.s8.bf16 %v6569
        %v6790 = vunpack.c.l.s8.bf16 %v6570
        %v6791 = vunpack.c.h.s8.bf16 %v6570
        %v6792 = vunpack.c.l.s8.bf16 %v6571
        %v6793 = vunpack.c.h.s8.bf16 %v6571
        %v6794 = vunpack.c.l.s8.bf16 %v6572
        %v6795 = vunpack.c.h.s8.bf16 %v6572
        %v6796 = vunpack.c.l.s8.bf16 %v6573
        %v6797 = vunpack.c.h.s8.bf16 %v6573
        %v6798 = vunpack.c.l.s8.bf16 %v6574
        %v6799 = vunpack.c.h.s8.bf16 %v6574
        %v6800 = vunpack.c.l.s8.bf16 %v6575
        %v6801 = vunpack.c.h.s8.bf16 %v6575
        %v6802 = vunpack.c.l.s8.bf16 %v6576
        %v6803 = vunpack.c.h.s8.bf16 %v6576
        %v6804 = vunpack.c.l.s8.bf16 %v6577
        %v6805 = vunpack.c.h.s8.bf16 %v6577
        %v6806 = vunpack.c.l.s8.bf16 %v6578
        %v6807 = vunpack.c.h.s8.bf16 %v6578
        %v6808 = vunpack.c.l.s8.bf16 %v6579
        %v6809 = vunpack.c.h.s8.bf16 %v6579
        %v6810 = vunpack.c.l.s8.bf16 %v6580
        %v6811 = vunpack.c.h.s8.bf16 %v6580
        %v6812 = vunpack.c.l.s8.bf16 %v6581
        %v6813 = vunpack.c.h.s8.bf16 %v6581
        %v6814 = vunpack.c.l.s8.bf16 %v6582
        %v6815 = vunpack.c.h.s8.bf16 %v6582
        %v6816 = vunpack.c.l.s8.bf16 %v6583
        %v6817 = vunpack.c.h.s8.bf16 %v6583
        %v6818 = vunpack.c.l.s8.bf16 %v6584
        %v6819 = vunpack.c.h.s8.bf16 %v6584
        %v6820 = vunpack.c.l.s8.bf16 %v6585
        %v6821 = vunpack.c.h.s8.bf16 %v6585
        %v6822 = vunpack.c.l.s8.bf16 %v6586
        %v6823 = vunpack.c.h.s8.bf16 %v6586
        %v6824 = vunpack.c.l.s8.bf16 %v6587
        %v6825 = vunpack.c.h.s8.bf16 %v6587
        %v6826 = vunpack.c.l.s8.bf16 %v6588
        %v6827 = vunpack.c.h.s8.bf16 %v6588
        %v6828 = vunpack.c.l.s8.bf16 %v6589
        %v6829 = vunpack.c.h.s8.bf16 %v6589
        %v6830 = vunpack.c.l.s8.bf16 %v6590
        %v6831 = vunpack.c.h.s8.bf16 %v6590
        %v6832 = vunpack.c.l.s8.bf16 %v6591
        %v6833 = vunpack.c.h.s8.bf16 %v6591
        %v6834 = vunpack.c.l.s8.bf16 %v6592
        %v6835 = vunpack.c.h.s8.bf16 %v6592
        %v6836 = vunpack.c.l.s8.bf16 %v6593
        %v6837 = vunpack.c.h.s8.bf16 %v6593
        %v6838 = vunpack.c.l.s8.bf16 %v6594
        %v6839 = vunpack.c.h.s8.bf16 %v6594
        %v6840 = vunpack.c.l.s8.bf16 %v6595
        %v6841 = vunpack.c.h.s8.bf16 %v6595
        %v6842 = vunpack.c.l.s8.bf16 %v6596
        %v6843 = vunpack.c.h.s8.bf16 %v6596
        %v6844 = vunpack.c.l.s8.bf16 %v6597
        %v6845 = vunpack.c.h.s8.bf16 %v6597
        %v6846 = vunpack.c.l.s8.bf16 %v6598
        %v6847 = vunpack.c.h.s8.bf16 %v6598
        %v6848 = vunpack.c.l.s8.bf16 %v6599
        %v6849 = vunpack.c.h.s8.bf16 %v6599
        %v6850 = vunpack.c.l.s8.bf16 %v6600
        %v6851 = vunpack.c.h.s8.bf16 %v6600
        %v6852 = vunpack.c.l.s8.bf16 %v6601
        %v6853 = vunpack.c.h.s8.bf16 %v6601
        %v6854 = vunpack.c.l.s8.bf16 %v6602
        %v6855 = vunpack.c.h.s8.bf16 %v6602
        %v6856 = vunpack.c.l.s8.bf16 %v6603
        %v6857 = vunpack.c.h.s8.bf16 %v6603
        %v6858 = vunpack.c.l.s8.bf16 %v6604
        %v6859 = vunpack.c.h.s8.bf16 %v6604
        %v6860 = vunpack.c.l.s8.bf16 %v6605
        %v6861 = vunpack.c.h.s8.bf16 %v6605
        %v6862 = vunpack.c.l.s8.bf16 %v6606
        %v6863 = vunpack.c.h.s8.bf16 %v6606
        %v6864 = vunpack.c.l.s8.bf16 %v6607
        %v6865 = vunpack.c.h.s8.bf16 %v6607
        %v6866 = vunpack.c.l.s8.bf16 %v6608
        %v6867 = vunpack.c.h.s8.bf16 %v6608
        %v6868 = vunpack.c.l.s8.bf16 %v6609
        %v6869 = vunpack.c.h.s8.bf16 %v6609
        %v6870 = vunpack.c.l.s8.bf16 %v6610
        %v6871 = vunpack.c.h.s8.bf16 %v6610
        %v6872 = vunpack.c.l.s8.bf16 %v6611
        %v6873 = vunpack.c.h.s8.bf16 %v6611
        %v6874 = vunpack.c.l.s8.bf16 %v6612
        %v6875 = vunpack.c.h.s8.bf16 %v6612
        %v6876 = vunpack.c.l.s8.bf16 %v6613
        %v6877 = vunpack.c.h.s8.bf16 %v6613
        %v6878 = vunpack.c.l.s8.bf16 %v6614
        %v6879 = vunpack.c.h.s8.bf16 %v6614
        %v6880 = vunpack.c.l.s8.bf16 %v6615
        %v6881 = vunpack.c.h.s8.bf16 %v6615
        %v6882 = vunpack.c.l.s8.bf16 %v6616
        %v6883 = vunpack.c.h.s8.bf16 %v6616
        %v6884 = vunpack.c.l.s8.bf16 %v6617
        %v6885 = vunpack.c.h.s8.bf16 %v6617
        %v6886 = vunpack.c.l.s8.bf16 %v6618
        %v6887 = vunpack.c.h.s8.bf16 %v6618
        %v6888 = vunpack.c.l.s8.bf16 %v6619
        %v6889 = vunpack.c.h.s8.bf16 %v6619
        %v6890 = vunpack.c.l.s8.bf16 %v6620
        %v6891 = vunpack.c.h.s8.bf16 %v6620
        %v6892 = vunpack.c.l.s8.bf16 %v6621
        %v6893 = vunpack.c.h.s8.bf16 %v6621
        %v6894 = vunpack.c.l.s8.bf16 %v6622
        %v6895 = vunpack.c.h.s8.bf16 %v6622
        %v6896 = vunpack.c.l.s8.bf16 %v6623
        %v6897 = vunpack.c.h.s8.bf16 %v6623
        %v6898 = vunpack.c.l.s8.bf16 %v6624
        %v6899 = vunpack.c.h.s8.bf16 %v6624
        %v6900 = vunpack.c.l.s8.bf16 %v6625
        %v6901 = vunpack.c.h.s8.bf16 %v6625
        %v6902 = vunpack.c.l.s8.bf16 %v6626
        %v6903 = vunpack.c.h.s8.bf16 %v6626
        %v6904 = vunpack.c.l.s8.bf16 %v6627
        %v6905 = vunpack.c.h.s8.bf16 %v6627
        %v6906 = vunpack.c.l.s8.bf16 %v6628
        %v6907 = vunpack.c.h.s8.bf16 %v6628
        %v6908 = vunpack.c.l.s8.bf16 %v6629
        %v6909 = vunpack.c.h.s8.bf16 %v6629
        %v6910 = vunpack.c.l.s8.bf16 %v6630
        %v6911 = vunpack.c.h.s8.bf16 %v6630
        %v6912 = vunpack.c.l.s8.bf16 %v6631
        %v6913 = vunpack.c.h.s8.bf16 %v6631
        %v6914 = vunpack.c.l.s8.bf16 %v6632
        %v6915 = vunpack.c.h.s8.bf16 %v6632
        %v6916 = vunpack.c.l.s8.bf16 %v6633
        %v6917 = vunpack.c.h.s8.bf16 %v6633
        %v6918 = vunpack.c.l.s8.bf16 %v6634
        %v6919 = vunpack.c.h.s8.bf16 %v6634
        %v6920 = vunpack.c.l.s8.bf16 %v6635
        %v6921 = vunpack.c.h.s8.bf16 %v6635
        %v6922 = vunpack.c.l.s8.bf16 %v6636
        %v6923 = vunpack.c.h.s8.bf16 %v6636
        %v6924 = vunpack.c.l.s8.bf16 %v6637
        %v6925 = vunpack.c.h.s8.bf16 %v6637
        %v6926 = vunpack.c.l.s8.bf16 %v6638
        %v6927 = vunpack.c.h.s8.bf16 %v6638
        %v6928 = vunpack.c.l.s8.bf16 %v6639
        %v6929 = vunpack.c.h.s8.bf16 %v6639
        %v6930 = vunpack.c.l.s8.bf16 %v6640
        %v6931 = vunpack.c.h.s8.bf16 %v6640
        %v6932 = vunpack.c.l.s8.bf16 %v6641
        %v6933 = vunpack.c.h.s8.bf16 %v6641
        %v6934 = vunpack.c.l.s8.bf16 %v6642
        %v6935 = vunpack.c.h.s8.bf16 %v6642
        %v6936 = vunpack.c.l.s8.bf16 %v6643
        %v6937 = vunpack.c.h.s8.bf16 %v6643
        %v6938 = vunpack.c.l.s8.bf16 %v6644
        %v6939 = vunpack.c.h.s8.bf16 %v6644
        %v6940 = vunpack.c.l.s8.bf16 %v6645
        %v6941 = vunpack.c.h.s8.bf16 %v6645
        %v6942 = vunpack.c.l.s8.bf16 %v6646
        %v6943 = vunpack.c.h.s8.bf16 %v6646
        %v6944 = vunpack.c.l.s8.bf16 %v6647
        %v6945 = vunpack.c.h.s8.bf16 %v6647
        %v6946 = vunpack.c.l.s8.bf16 %v6648
        %v6947 = vunpack.c.h.s8.bf16 %v6648
        %v6948 = vunpack.c.l.s8.bf16 %v6649
        %v6949 = vunpack.c.h.s8.bf16 %v6649
        %v6950 = vunpack.c.l.s8.bf16 %v6650
        %v6951 = vunpack.c.h.s8.bf16 %v6650
        %v6952 = vunpack.c.l.s8.bf16 %v6651
        %v6953 = vunpack.c.h.s8.bf16 %v6651
        %v6954 = vunpack.c.l.s8.bf16 %v6652
        %v6955 = vunpack.c.h.s8.bf16 %v6652
        %v6956 = vunpack.c.l.s8.bf16 %v6653
        %v6957 = vunpack.c.h.s8.bf16 %v6653
        %v6958 = vunpack.c.l.s8.bf16 %v6654
        %v6959 = vunpack.c.h.s8.bf16 %v6654
        %v6960 = vunpack.c.l.s8.bf16 %v6655
        %v6961 = vunpack.c.h.s8.bf16 %v6655
        %v6962 = vunpack.c.l.s8.bf16 %v6656
        %v6963 = vunpack.c.h.s8.bf16 %v6656
        %v6964 = vunpack.c.l.s8.bf16 %v6657
        %v6965 = vunpack.c.h.s8.bf16 %v6657
        %v6966 = vunpack.c.l.s8.bf16 %v6658
        %v6967 = vunpack.c.h.s8.bf16 %v6658
        %v6968 = vunpack.c.l.s8.bf16 %v6659
        %v6969 = vunpack.c.h.s8.bf16 %v6659
        %v6970 = vunpack.c.l.s8.bf16 %v6660
        %v6971 = vunpack.c.h.s8.bf16 %v6660
        %v6972 = vunpack.c.l.s8.bf16 %v6661
        %v6973 = vunpack.c.h.s8.bf16 %v6661
        %v6974 = vunpack.c.l.s8.bf16 %v6662
        %v6975 = vunpack.c.h.s8.bf16 %v6662
        %v6976 = vunpack.c.l.s8.bf16 %v6663
        %v6977 = vunpack.c.h.s8.bf16 %v6663
        %v6978 = vunpack.c.l.s8.bf16 %v6664
        %v6979 = vunpack.c.h.s8.bf16 %v6664
        %v6980 = vunpack.c.l.s8.bf16 %v6665
        %v6981 = vunpack.c.h.s8.bf16 %v6665
        %v6982 = vunpack.c.l.s8.bf16 %v6666
        %v6983 = vunpack.c.h.s8.bf16 %v6666
        %v6984 = vunpack.c.l.s8.bf16 %v6667
        %v6985 = vunpack.c.h.s8.bf16 %v6667
        %v6986 = vunpack.c.l.s8.bf16 %v6668
        %v6987 = vunpack.c.h.s8.bf16 %v6668
        %v6988 = vunpack.c.l.s8.bf16 %v6669
        %v6989 = vunpack.c.h.s8.bf16 %v6669
        %v6990 = vunpack.c.l.s8.bf16 %v6670
        %v6991 = vunpack.c.h.s8.bf16 %v6670
        %v6992 = vunpack.c.l.s8.bf16 %v6671
        %v6993 = vunpack.c.h.s8.bf16 %v6671
        %v6994 = vunpack.c.l.s8.bf16 %v6672
        %v6995 = vunpack.c.h.s8.bf16 %v6672
        %v6996 = vunpack.c.l.s8.bf16 %v6673
        %v6997 = vunpack.c.h.s8.bf16 %v6673
        %v6998 = vunpack.c.l.s8.bf16 %v6674
        %v6999 = vunpack.c.h.s8.bf16 %v6674
        %v7000 = vunpack.c.l.s8.bf16 %v6675
        %v7001 = vunpack.c.h.s8.bf16 %v6675
        %v7002 = vunpack.c.l.s8.bf16 %v6676
        %v7003 = vunpack.c.h.s8.bf16 %v6676
        %v7004 = vunpack.c.l.s8.bf16 %v6677
        %v7005 = vunpack.c.h.s8.bf16 %v6677
        %v7006 = vunpack.c.l.s8.bf16 %v6678
        %v7007 = vunpack.c.h.s8.bf16 %v6678
        %v7008 = vunpack.c.l.s8.bf16 %v6679
        %v7009 = vunpack.c.h.s8.bf16 %v6679
        %v7010 = vunpack.c.l.s8.bf16 %v6680
        %v7011 = vunpack.c.h.s8.bf16 %v6680
        %v7012 = vunpack.c.l.s8.bf16 %v6681
        %v7013 = vunpack.c.h.s8.bf16 %v6681
        %v7014 = vunpack.c.l.s8.bf16 %v6682
        %v7015 = vunpack.c.h.s8.bf16 %v6682
        %v7016 = vunpack.c.l.s8.bf16 %v6683
        %v7017 = vunpack.c.h.s8.bf16 %v6683
        %v7018 = vunpack.c.l.s8.bf16 %v6684
        %v7019 = vunpack.c.h.s8.bf16 %v6684
        %v7020 = vunpack.c.l.s8.bf16 %v6685
        %v7021 = vunpack.c.h.s8.bf16 %v6685
        %v7022 = vunpack.c.l.s8.bf16 %v6686
        %v7023 = vunpack.c.h.s8.bf16 %v6686
        %v7024 = vunpack.c.l.s8.bf16 %v6687
        %v7025 = vunpack.c.h.s8.bf16 %v6687
        %v7026 = vunpack.c.l.s8.bf16 %v6688
        %v7027 = vunpack.c.h.s8.bf16 %v6688
        %v7028 = vunpack.c.l.s8.bf16 %v6689
        %v7029 = vunpack.c.h.s8.bf16 %v6689
        %v7030 = vunpack.c.l.s8.bf16 %v6690
        %v7031 = vunpack.c.h.s8.bf16 %v6690
        %v7032 = vunpack.c.l.s8.bf16 %v6691
        %v7033 = vunpack.c.h.s8.bf16 %v6691
        %v7034 = vunpack.c.l.s8.bf16 %v6692
        %v7035 = vunpack.c.h.s8.bf16 %v6692
        %v7036 = vunpack.c.l.s8.bf16 %v6693
        %v7037 = vunpack.c.h.s8.bf16 %v6693
        %v7038 = vunpack.c.l.s8.bf16 %v6694
        %v7039 = vunpack.c.h.s8.bf16 %v6694
        %v7040 = vunpack.c.l.s8.bf16 %v6695
        %v7041 = vunpack.c.h.s8.bf16 %v6695
        %v7042 = vunpack.c.l.s8.bf16 %v6696
        %v7043 = vunpack.c.h.s8.bf16 %v6696
        %v7044 = vunpack.c.l.s8.bf16 %v6697
        %v7045 = vunpack.c.h.s8.bf16 %v6697
        %v7046 = vunpack.c.l.s8.bf16 %v6698
        %v7047 = vunpack.c.h.s8.bf16 %v6698
        %v7048 = vunpack.c.l.s8.bf16 %v6699
        %v7049 = vunpack.c.h.s8.bf16 %v6699
        %v7050 = vunpack.c.l.s8.bf16 %v6700
        %v7051 = vunpack.c.h.s8.bf16 %v6700
        %v7052 = vunpack.c.l.s8.bf16 %v6701
        %v7053 = vunpack.c.h.s8.bf16 %v6701
        %v7054 = vunpack.c.l.s8.bf16 %v6702
        %v7055 = vunpack.c.h.s8.bf16 %v6702
        %v7056 = vunpack.c.l.s8.bf16 %v6703
        %v7057 = vunpack.c.h.s8.bf16 %v6703
        %v7058 = vunpack.c.l.s8.bf16 %v6704
        %v7059 = vunpack.c.h.s8.bf16 %v6704
        %v7060 = vunpack.c.l.s8.bf16 %v6705
        %v7061 = vunpack.c.h.s8.bf16 %v6705
        %v7062 = vunpack.c.l.s8.bf16 %v6706
        %v7063 = vunpack.c.h.s8.bf16 %v6706
        %v7064 = vunpack.c.l.s8.bf16 %v6707
        %v7065 = vunpack.c.h.s8.bf16 %v6707
        %v7066 = vunpack.c.l.s8.bf16 %v6708
        %v7067 = vunpack.c.h.s8.bf16 %v6708
        %v7068 = vunpack.c.l.s8.bf16 %v6709
        %v7069 = vunpack.c.h.s8.bf16 %v6709
        %v7070 = vunpack.c.l.s8.bf16 %v6710
        %v7071 = vunpack.c.h.s8.bf16 %v6710
        %v7072 = vunpack.c.l.s8.bf16 %v6711
        %v7073 = vunpack.c.h.s8.bf16 %v6711
        %v7074 = vunpack.c.l.s8.bf16 %v6712
        %v7075 = vunpack.c.h.s8.bf16 %v6712
        %v7076 = vunpack.c.l.s8.bf16 %v6713
        %v7077 = vunpack.c.h.s8.bf16 %v6713
        %v7078 = vunpack.c.l.s8.bf16 %v6714
        %v7079 = vunpack.c.h.s8.bf16 %v6714
        %v7080 = vunpack.c.l.s8.bf16 %v6715
        %v7081 = vunpack.c.h.s8.bf16 %v6715
        %v7082 = vunpack.c.l.s8.bf16 %v6716
        %v7083 = vunpack.c.h.s8.bf16 %v6716
        %v7084 = vunpack.c.l.s8.bf16 %v6717
        %v7085 = vunpack.c.h.s8.bf16 %v6717
        %v7086 = vunpack.c.l.s8.bf16 %v6718
        %v7087 = vunpack.c.h.s8.bf16 %v6718
        %v7088 = vunpack.c.l.s8.bf16 %v6719
        %v7089 = vunpack.c.h.s8.bf16 %v6719
        %v7090 = vunpack.c.l.s8.bf16 %v6720
        %v7091 = vunpack.c.h.s8.bf16 %v6720
        %v7092 = vunpack.c.l.s8.bf16 %v6721
        %v7093 = vunpack.c.h.s8.bf16 %v6721
        %v7094 = vunpack.c.l.s8.bf16 %v6722
        %v7095 = vunpack.c.h.s8.bf16 %v6722
        %v7096 = vunpack.c.l.s8.bf16 %v6723
        %v7097 = vunpack.c.h.s8.bf16 %v6723
        %v7098 = vunpack.c.l.s8.bf16 %v6724
        %v7099 = vunpack.c.h.s8.bf16 %v6724
        %v7100 = vunpack.c.l.s8.bf16 %v6725
        %v7101 = vunpack.c.h.s8.bf16 %v6725
        %v7102 = vunpack.c.l.s8.bf16 %v6726
        %v7103 = vunpack.c.h.s8.bf16 %v6726
        %v7104 = vunpack.c.l.s8.bf16 %v6727
        %v7105 = vunpack.c.h.s8.bf16 %v6727
        %v7106 = vunpack.c.l.s8.bf16 %v6728
        %v7107 = vunpack.c.h.s8.bf16 %v6728
        %v7108 = vunpack.c.l.s8.bf16 %v6729
        %v7109 = vunpack.c.h.s8.bf16 %v6729
        %v7110 = vunpack.c.l.s8.bf16 %v6730
        %v7111 = vunpack.c.h.s8.bf16 %v6730
        %v7112 = vunpack.c.l.s8.bf16 %v6731
        %v7113 = vunpack.c.h.s8.bf16 %v6731
        %v7114 = vunpack.c.l.s8.bf16 %v6732
        %v7115 = vunpack.c.h.s8.bf16 %v6732
        %v7116 = vunpack.c.l.s8.bf16 %v6733
        %v7117 = vunpack.c.h.s8.bf16 %v6733
        %v7118 = vunpack.c.l.s8.bf16 %v6734
        %v7119 = vunpack.c.h.s8.bf16 %v6734
        %v7120 = vunpack.c.l.s8.bf16 %v6735
        %v7121 = vunpack.c.h.s8.bf16 %v6735
        %v7122 = vunpack.c.l.s8.bf16 %v6736
        %v7123 = vunpack.c.h.s8.bf16 %v6736
        %v7124 = vunpack.c.l.s8.bf16 %v6737
        %v7125 = vunpack.c.h.s8.bf16 %v6737
        %v7126 = vunpack.c.l.s8.bf16 %v6738
        %v7127 = vunpack.c.h.s8.bf16 %v6738
        %v7128 = vunpack.c.l.s8.bf16 %v6739
        %v7129 = vunpack.c.h.s8.bf16 %v6739
        %v7130 = vunpack.c.l.s8.bf16 %v6740
        %v7131 = vunpack.c.h.s8.bf16 %v6740
        %v7132 = vunpack.c.l.s8.bf16 %v6741
        %v7133 = vunpack.c.h.s8.bf16 %v6741
        %v7526 = vunpack.c.l.b16 %v6742
        %v7527 = vunpack.c.h.b16 %v6742
        %v7528 = vunpack.c.l.b16 %v6743
        %v7529 = vunpack.c.h.b16 %v6743
        %v7530 = vunpack.c.l.b16 %v6744
        %v7531 = vunpack.c.h.b16 %v6744
        %v7532 = vunpack.c.l.b16 %v6745
        %v7533 = vunpack.c.h.b16 %v6745
        %v7534 = vunpack.c.l.b16 %v6746
        %v7535 = vunpack.c.h.b16 %v6746
        %v7536 = vunpack.c.l.b16 %v6747
        %v7537 = vunpack.c.h.b16 %v6747
        %v7538 = vunpack.c.l.b16 %v6748
        %v7539 = vunpack.c.h.b16 %v6748
        %v7540 = vunpack.c.l.b16 %v6749
        %v7541 = vunpack.c.h.b16 %v6749
        %v7542 = vunpack.c.l.b16 %v6750
        %v7543 = vunpack.c.h.b16 %v6750
        %v7544 = vunpack.c.l.b16 %v6751
        %v7545 = vunpack.c.h.b16 %v6751
        %v7546 = vunpack.c.l.b16 %v6752
        %v7547 = vunpack.c.h.b16 %v6752
        %v7548 = vunpack.c.l.b16 %v6753
        %v7549 = vunpack.c.h.b16 %v6753
        %v7550 = vunpack.c.l.b16 %v6754
        %v7551 = vunpack.c.h.b16 %v6754
        %v7552 = vunpack.c.l.b16 %v6755
        %v7553 = vunpack.c.l.b16 %v6756
        %v7554 = vunpack.c.h.b16 %v6756
        %v7555 = vunpack.c.l.b16 %v6757
        %v7556 = vunpack.c.h.b16 %v6757
        %v7557 = vunpack.c.l.b16 %v6758
        %v7558 = vunpack.c.h.b16 %v6758
        %v7559 = vunpack.c.l.b16 %v6759
        %v7560 = vunpack.c.h.b16 %v6759
        %v7561 = vunpack.c.l.b16 %v6760
        %v7562 = vunpack.c.h.b16 %v6760
        %v7563 = vunpack.c.l.b16 %v6761
        %v7564 = vunpack.c.h.b16 %v6761
        %v7565 = vunpack.c.l.b16 %v6762
        %v7566 = vunpack.c.h.b16 %v6762
        %v7567 = vunpack.c.l.b16 %v6763
        %v7568 = vunpack.c.h.b16 %v6763
        %v7569 = vunpack.c.l.b16 %v6764
        %v7570 = vunpack.c.h.b16 %v6764
        %v7571 = vunpack.c.l.b16 %v6765
        %v7572 = vunpack.c.h.b16 %v6765
        %v7573 = vunpack.c.l.b16 %v6766
        %v7574 = vunpack.c.h.b16 %v6766
        %v7575 = vunpack.c.l.b16 %v6767
        %v7576 = vunpack.c.h.b16 %v6767
        %v7577 = vunpack.c.l.b16 %v6768
        %v7578 = vunpack.c.h.b16 %v6768
        %v7579 = vunpack.c.l.b16 %v6769
        %v7580 = vunpack.c.l.b16 %v6770
        %v7581 = vunpack.c.h.b16 %v6770
        %v7582 = vunpack.c.l.b16 %v6771
        %v7583 = vunpack.c.h.b16 %v6771
        %v7584 = vunpack.c.l.b16 %v6772
        %v7585 = vunpack.c.h.b16 %v6772
        %v7586 = vunpack.c.l.b16 %v6773
        %v7587 = vunpack.c.h.b16 %v6773
        %v7588 = vunpack.c.l.b16 %v6774
        %v7589 = vunpack.c.h.b16 %v6774
        %v7590 = vunpack.c.l.b16 %v6775
        %v7591 = vunpack.c.h.b16 %v6775
        %v7592 = vunpack.c.l.b16 %v6776
        %v7593 = vunpack.c.h.b16 %v6776
        %v7594 = vunpack.c.l.b16 %v6777
        %v7595 = vunpack.c.h.b16 %v6777
        %v7596 = vunpack.c.l.b16 %v6778
        %v7597 = vunpack.c.h.b16 %v6778
        %v7598 = vunpack.c.l.b16 %v6779
        %v7599 = vunpack.c.h.b16 %v6779
        %v7600 = vunpack.c.l.b16 %v6780
        %v7601 = vunpack.c.h.b16 %v6780
        %v7602 = vunpack.c.l.b16 %v6781
        %v7603 = vunpack.c.h.b16 %v6781
        %v7604 = vunpack.c.l.b16 %v6782
        %v7605 = vunpack.c.h.b16 %v6782
        %v7606 = vunpack.c.l.b16 %v6783
        %v7607 = vunpack.c.l.b16 %v6784
        %v7608 = vunpack.c.h.b16 %v6784
        %v7609 = vunpack.c.l.b16 %v6785
        %v7610 = vunpack.c.h.b16 %v6785
        %v7611 = vunpack.c.l.b16 %v6786
        %v7612 = vunpack.c.h.b16 %v6786
        %v7613 = vunpack.c.l.b16 %v6787
        %v7614 = vunpack.c.h.b16 %v6787
        %v7615 = vunpack.c.l.b16 %v6788
        %v7616 = vunpack.c.h.b16 %v6788
        %v7617 = vunpack.c.l.b16 %v6789
        %v7618 = vunpack.c.h.b16 %v6789
        %v7619 = vunpack.c.l.b16 %v6790
        %v7620 = vunpack.c.h.b16 %v6790
        %v7621 = vunpack.c.l.b16 %v6791
        %v7622 = vunpack.c.h.b16 %v6791
        %v7623 = vunpack.c.l.b16 %v6792
        %v7624 = vunpack.c.h.b16 %v6792
        %v7625 = vunpack.c.l.b16 %v6793
        %v7626 = vunpack.c.h.b16 %v6793
        %v7627 = vunpack.c.l.b16 %v6794
        %v7628 = vunpack.c.h.b16 %v6794
        %v7629 = vunpack.c.l.b16 %v6795
        %v7630 = vunpack.c.h.b16 %v6795
        %v7631 = vunpack.c.l.b16 %v6796
        %v7632 = vunpack.c.h.b16 %v6796
        %v7633 = vunpack.c.l.b16 %v6797
        %v7634 = vunpack.c.l.b16 %v6798
        %v7635 = vunpack.c.h.b16 %v6798
        %v7636 = vunpack.c.l.b16 %v6799
        %v7637 = vunpack.c.h.b16 %v6799
        %v7638 = vunpack.c.l.b16 %v6800
        %v7639 = vunpack.c.h.b16 %v6800
        %v7640 = vunpack.c.l.b16 %v6801
        %v7641 = vunpack.c.h.b16 %v6801
        %v7642 = vunpack.c.l.b16 %v6802
        %v7643 = vunpack.c.h.b16 %v6802
        %v7644 = vunpack.c.l.b16 %v6803
        %v7645 = vunpack.c.h.b16 %v6803
        %v7646 = vunpack.c.l.b16 %v6804
        %v7647 = vunpack.c.h.b16 %v6804
        %v7648 = vunpack.c.l.b16 %v6805
        %v7649 = vunpack.c.h.b16 %v6805
        %v7650 = vunpack.c.l.b16 %v6806
        %v7651 = vunpack.c.h.b16 %v6806
        %v7652 = vunpack.c.l.b16 %v6807
        %v7653 = vunpack.c.h.b16 %v6807
        %v7654 = vunpack.c.l.b16 %v6808
        %v7655 = vunpack.c.h.b16 %v6808
        %v7656 = vunpack.c.l.b16 %v6809
        %v7657 = vunpack.c.h.b16 %v6809
        %v7658 = vunpack.c.l.b16 %v6810
        %v7659 = vunpack.c.h.b16 %v6810
        %v7660 = vunpack.c.l.b16 %v6811
        %v7661 = vunpack.c.l.b16 %v6812
        %v7662 = vunpack.c.h.b16 %v6812
        %v7663 = vunpack.c.l.b16 %v6813
        %v7664 = vunpack.c.h.b16 %v6813
        %v7665 = vunpack.c.l.b16 %v6814
        %v7666 = vunpack.c.h.b16 %v6814
        %v7667 = vunpack.c.l.b16 %v6815
        %v7668 = vunpack.c.h.b16 %v6815
        %v7669 = vunpack.c.l.b16 %v6816
        %v7670 = vunpack.c.h.b16 %v6816
        %v7671 = vunpack.c.l.b16 %v6817
        %v7672 = vunpack.c.h.b16 %v6817
        %v7673 = vunpack.c.l.b16 %v6818
        %v7674 = vunpack.c.h.b16 %v6818
        %v7675 = vunpack.c.l.b16 %v6819
        %v7676 = vunpack.c.h.b16 %v6819
        %v7677 = vunpack.c.l.b16 %v6820
        %v7678 = vunpack.c.h.b16 %v6820
        %v7679 = vunpack.c.l.b16 %v6821
        %v7680 = vunpack.c.h.b16 %v6821
        %v7681 = vunpack.c.l.b16 %v6822
        %v7682 = vunpack.c.h.b16 %v6822
        %v7683 = vunpack.c.l.b16 %v6823
        %v7684 = vunpack.c.h.b16 %v6823
        %v7685 = vunpack.c.l.b16 %v6824
        %v7686 = vunpack.c.h.b16 %v6824
        %v7687 = vunpack.c.l.b16 %v6825
        %v7688 = vunpack.c.l.b16 %v6826
        %v7689 = vunpack.c.h.b16 %v6826
        %v7690 = vunpack.c.l.b16 %v6827
        %v7691 = vunpack.c.h.b16 %v6827
        %v7692 = vunpack.c.l.b16 %v6828
        %v7693 = vunpack.c.h.b16 %v6828
        %v7694 = vunpack.c.l.b16 %v6829
        %v7695 = vunpack.c.h.b16 %v6829
        %v7696 = vunpack.c.l.b16 %v6830
        %v7697 = vunpack.c.h.b16 %v6830
        %v7698 = vunpack.c.l.b16 %v6831
        %v7699 = vunpack.c.h.b16 %v6831
        %v7700 = vunpack.c.l.b16 %v6832
        %v7701 = vunpack.c.h.b16 %v6832
        %v7702 = vunpack.c.l.b16 %v6833
        %v7703 = vunpack.c.h.b16 %v6833
        %v7704 = vunpack.c.l.b16 %v6834
        %v7705 = vunpack.c.h.b16 %v6834
        %v7706 = vunpack.c.l.b16 %v6835
        %v7707 = vunpack.c.h.b16 %v6835
        %v7708 = vunpack.c.l.b16 %v6836
        %v7709 = vunpack.c.h.b16 %v6836
        %v7710 = vunpack.c.l.b16 %v6837
        %v7711 = vunpack.c.h.b16 %v6837
        %v7712 = vunpack.c.l.b16 %v6838
        %v7713 = vunpack.c.h.b16 %v6838
        %v7714 = vunpack.c.l.b16 %v6839
        %v7715 = vunpack.c.l.b16 %v6840
        %v7716 = vunpack.c.h.b16 %v6840
        %v7717 = vunpack.c.l.b16 %v6841
        %v7718 = vunpack.c.h.b16 %v6841
        %v7719 = vunpack.c.l.b16 %v6842
        %v7720 = vunpack.c.h.b16 %v6842
        %v7721 = vunpack.c.l.b16 %v6843
        %v7722 = vunpack.c.h.b16 %v6843
        %v7723 = vunpack.c.l.b16 %v6844
        %v7724 = vunpack.c.h.b16 %v6844
        %v7725 = vunpack.c.l.b16 %v6845
        %v7726 = vunpack.c.h.b16 %v6845
        %v7727 = vunpack.c.l.b16 %v6846
        %v7728 = vunpack.c.h.b16 %v6846
        %v7729 = vunpack.c.l.b16 %v6847
        %v7730 = vunpack.c.h.b16 %v6847
        %v7731 = vunpack.c.l.b16 %v6848
        %v7732 = vunpack.c.h.b16 %v6848
        %v7733 = vunpack.c.l.b16 %v6849
        %v7734 = vunpack.c.h.b16 %v6849
        %v7735 = vunpack.c.l.b16 %v6850
        %v7736 = vunpack.c.h.b16 %v6850
        %v7737 = vunpack.c.l.b16 %v6851
        %v7738 = vunpack.c.h.b16 %v6851
        %v7739 = vunpack.c.l.b16 %v6852
        %v7740 = vunpack.c.h.b16 %v6852
        %v7741 = vunpack.c.l.b16 %v6853
        %v7742 = vunpack.c.l.b16 %v6854
        %v7743 = vunpack.c.h.b16 %v6854
        %v7744 = vunpack.c.l.b16 %v6855
        %v7745 = vunpack.c.h.b16 %v6855
        %v7746 = vunpack.c.l.b16 %v6856
        %v7747 = vunpack.c.h.b16 %v6856
        %v7748 = vunpack.c.l.b16 %v6857
        %v7749 = vunpack.c.h.b16 %v6857
        %v7750 = vunpack.c.l.b16 %v6858
        %v7751 = vunpack.c.h.b16 %v6858
        %v7752 = vunpack.c.l.b16 %v6859
        %v7753 = vunpack.c.h.b16 %v6859
        %v7754 = vunpack.c.l.b16 %v6860
        %v7755 = vunpack.c.h.b16 %v6860
        %v7756 = vunpack.c.l.b16 %v6861
        %v7757 = vunpack.c.h.b16 %v6861
        %v7758 = vunpack.c.l.b16 %v6862
        %v7759 = vunpack.c.h.b16 %v6862
        %v7760 = vunpack.c.l.b16 %v6863
        %v7761 = vunpack.c.h.b16 %v6863
        %v7762 = vunpack.c.l.b16 %v6864
        %v7763 = vunpack.c.h.b16 %v6864
        %v7764 = vunpack.c.l.b16 %v6865
        %v7765 = vunpack.c.h.b16 %v6865
        %v7766 = vunpack.c.l.b16 %v6866
        %v7767 = vunpack.c.h.b16 %v6866
        %v7768 = vunpack.c.l.b16 %v6867
        %v7769 = vunpack.c.l.b16 %v6868
        %v7770 = vunpack.c.h.b16 %v6868
        %v7771 = vunpack.c.l.b16 %v6869
        %v7772 = vunpack.c.h.b16 %v6869
        %v7773 = vunpack.c.l.b16 %v6870
        %v7774 = vunpack.c.h.b16 %v6870
        %v7775 = vunpack.c.l.b16 %v6871
        %v7776 = vunpack.c.h.b16 %v6871
        %v7777 = vunpack.c.l.b16 %v6872
        %v7778 = vunpack.c.h.b16 %v6872
        %v7779 = vunpack.c.l.b16 %v6873
        %v7780 = vunpack.c.h.b16 %v6873
        %v7781 = vunpack.c.l.b16 %v6874
        %v7782 = vunpack.c.h.b16 %v6874
        %v7783 = vunpack.c.l.b16 %v6875
        %v7784 = vunpack.c.h.b16 %v6875
        %v7785 = vunpack.c.l.b16 %v6876
        %v7786 = vunpack.c.h.b16 %v6876
        %v7787 = vunpack.c.l.b16 %v6877
        %v7788 = vunpack.c.h.b16 %v6877
        %v7789 = vunpack.c.l.b16 %v6878
        %v7790 = vunpack.c.h.b16 %v6878
        %v7791 = vunpack.c.l.b16 %v6879
        %v7792 = vunpack.c.h.b16 %v6879
        %v7793 = vunpack.c.l.b16 %v6880
        %v7794 = vunpack.c.h.b16 %v6880
        %v7795 = vunpack.c.l.b16 %v6881
        %v7796 = vunpack.c.l.b16 %v6882
        %v7797 = vunpack.c.h.b16 %v6882
        %v7798 = vunpack.c.l.b16 %v6883
        %v7799 = vunpack.c.h.b16 %v6883
        %v7800 = vunpack.c.l.b16 %v6884
        %v7801 = vunpack.c.h.b16 %v6884
        %v7802 = vunpack.c.l.b16 %v6885
        %v7803 = vunpack.c.h.b16 %v6885
        %v7804 = vunpack.c.l.b16 %v6886
        %v7805 = vunpack.c.h.b16 %v6886
        %v7806 = vunpack.c.l.b16 %v6887
        %v7807 = vunpack.c.h.b16 %v6887
        %v7808 = vunpack.c.l.b16 %v6888
        %v7809 = vunpack.c.h.b16 %v6888
        %v7810 = vunpack.c.l.b16 %v6889
        %v7811 = vunpack.c.h.b16 %v6889
        %v7812 = vunpack.c.l.b16 %v6890
        %v7813 = vunpack.c.h.b16 %v6890
        %v7814 = vunpack.c.l.b16 %v6891
        %v7815 = vunpack.c.h.b16 %v6891
        %v7816 = vunpack.c.l.b16 %v6892
        %v7817 = vunpack.c.h.b16 %v6892
        %v7818 = vunpack.c.l.b16 %v6893
        %v7819 = vunpack.c.h.b16 %v6893
        %v7820 = vunpack.c.l.b16 %v6894
        %v7821 = vunpack.c.h.b16 %v6894
        %v7822 = vunpack.c.l.b16 %v6895
        %v7823 = vunpack.c.l.b16 %v6896
        %v7824 = vunpack.c.h.b16 %v6896
        %v7825 = vunpack.c.l.b16 %v6897
        %v7826 = vunpack.c.h.b16 %v6897
        %v7827 = vunpack.c.l.b16 %v6898
        %v7828 = vunpack.c.h.b16 %v6898
        %v7829 = vunpack.c.l.b16 %v6899
        %v7830 = vunpack.c.h.b16 %v6899
        %v7831 = vunpack.c.l.b16 %v6900
        %v7832 = vunpack.c.h.b16 %v6900
        %v7833 = vunpack.c.l.b16 %v6901
        %v7834 = vunpack.c.h.b16 %v6901
        %v7835 = vunpack.c.l.b16 %v6902
        %v7836 = vunpack.c.h.b16 %v6902
        %v7837 = vunpack.c.l.b16 %v6903
        %v7838 = vunpack.c.h.b16 %v6903
        %v7839 = vunpack.c.l.b16 %v6904
        %v7840 = vunpack.c.h.b16 %v6904
        %v7841 = vunpack.c.l.b16 %v6905
        %v7842 = vunpack.c.h.b16 %v6905
        %v7843 = vunpack.c.l.b16 %v6906
        %v7844 = vunpack.c.h.b16 %v6906
        %v7845 = vunpack.c.l.b16 %v6907
        %v7846 = vunpack.c.h.b16 %v6907
        %v7847 = vunpack.c.l.b16 %v6908
        %v7848 = vunpack.c.h.b16 %v6908
        %v7849 = vunpack.c.l.b16 %v6909
        %v7850 = vunpack.c.l.b16 %v6910
        %v7851 = vunpack.c.h.b16 %v6910
        %v7852 = vunpack.c.l.b16 %v6911
        %v7853 = vunpack.c.h.b16 %v6911
        %v7854 = vunpack.c.l.b16 %v6912
        %v7855 = vunpack.c.h.b16 %v6912
        %v7856 = vunpack.c.l.b16 %v6913
        %v7857 = vunpack.c.h.b16 %v6913
        %v7858 = vunpack.c.l.b16 %v6914
        %v7859 = vunpack.c.h.b16 %v6914
        %v7860 = vunpack.c.l.b16 %v6915
        %v7861 = vunpack.c.h.b16 %v6915
        %v7862 = vunpack.c.l.b16 %v6916
        %v7863 = vunpack.c.h.b16 %v6916
        %v7864 = vunpack.c.l.b16 %v6917
        %v7865 = vunpack.c.h.b16 %v6917
        %v7866 = vunpack.c.l.b16 %v6918
        %v7867 = vunpack.c.h.b16 %v6918
        %v7868 = vunpack.c.l.b16 %v6919
        %v7869 = vunpack.c.h.b16 %v6919
        %v7870 = vunpack.c.l.b16 %v6920
        %v7871 = vunpack.c.h.b16 %v6920
        %v7872 = vunpack.c.l.b16 %v6921
        %v7873 = vunpack.c.h.b16 %v6921
        %v7874 = vunpack.c.l.b16 %v6922
        %v7875 = vunpack.c.h.b16 %v6922
        %v7876 = vunpack.c.l.b16 %v6923
        %v7877 = vunpack.c.l.b16 %v6924
        %v7878 = vunpack.c.h.b16 %v6924
        %v7879 = vunpack.c.l.b16 %v6925
        %v7880 = vunpack.c.h.b16 %v6925
        %v7881 = vunpack.c.l.b16 %v6926
        %v7882 = vunpack.c.h.b16 %v6926
        %v7883 = vunpack.c.l.b16 %v6927
        %v7884 = vunpack.c.h.b16 %v6927
        %v7885 = vunpack.c.l.b16 %v6928
        %v7886 = vunpack.c.h.b16 %v6928
        %v7887 = vunpack.c.l.b16 %v6929
        %v7888 = vunpack.c.h.b16 %v6929
        %v7889 = vunpack.c.l.b16 %v6930
        %v7890 = vunpack.c.h.b16 %v6930
        %v7891 = vunpack.c.l.b16 %v6931
        %v7892 = vunpack.c.h.b16 %v6931
        %v7893 = vunpack.c.l.b16 %v6932
        %v7894 = vunpack.c.h.b16 %v6932
        %v7895 = vunpack.c.l.b16 %v6933
        %v7896 = vunpack.c.h.b16 %v6933
        %v7897 = vunpack.c.l.b16 %v6934
        %v7898 = vunpack.c.h.b16 %v6934
        %v7899 = vunpack.c.l.b16 %v6935
        %v7900 = vunpack.c.h.b16 %v6935
        %v7901 = vunpack.c.l.b16 %v6936
        %v7902 = vunpack.c.h.b16 %v6936
        %v7903 = vunpack.c.l.b16 %v6937
        %v7904 = vunpack.c.l.b16 %v6938
        %v7905 = vunpack.c.h.b16 %v6938
        %v7906 = vunpack.c.l.b16 %v6939
        %v7907 = vunpack.c.h.b16 %v6939
        %v7908 = vunpack.c.l.b16 %v6940
        %v7909 = vunpack.c.h.b16 %v6940
        %v7910 = vunpack.c.l.b16 %v6941
        %v7911 = vunpack.c.h.b16 %v6941
        %v7912 = vunpack.c.l.b16 %v6942
        %v7913 = vunpack.c.h.b16 %v6942
        %v7914 = vunpack.c.l.b16 %v6943
        %v7915 = vunpack.c.h.b16 %v6943
        %v7916 = vunpack.c.l.b16 %v6944
        %v7917 = vunpack.c.h.b16 %v6944
        %v7918 = vunpack.c.l.b16 %v6945
        %v7919 = vunpack.c.h.b16 %v6945
        %v7920 = vunpack.c.l.b16 %v6946
        %v7921 = vunpack.c.h.b16 %v6946
        %v7922 = vunpack.c.l.b16 %v6947
        %v7923 = vunpack.c.h.b16 %v6947
        %v7924 = vunpack.c.l.b16 %v6948
        %v7925 = vunpack.c.h.b16 %v6948
        %v7926 = vunpack.c.l.b16 %v6949
        %v7927 = vunpack.c.h.b16 %v6949
        %v7928 = vunpack.c.l.b16 %v6950
        %v7929 = vunpack.c.h.b16 %v6950
        %v7930 = vunpack.c.l.b16 %v6951
        %v7931 = vunpack.c.l.b16 %v6952
        %v7932 = vunpack.c.h.b16 %v6952
        %v7933 = vunpack.c.l.b16 %v6953
        %v7934 = vunpack.c.h.b16 %v6953
        %v7935 = vunpack.c.l.b16 %v6954
        %v7936 = vunpack.c.h.b16 %v6954
        %v7937 = vunpack.c.l.b16 %v6955
        %v7938 = vunpack.c.h.b16 %v6955
        %v7939 = vunpack.c.l.b16 %v6956
        %v7940 = vunpack.c.h.b16 %v6956
        %v7941 = vunpack.c.l.b16 %v6957
        %v7942 = vunpack.c.h.b16 %v6957
        %v7943 = vunpack.c.l.b16 %v6958
        %v7944 = vunpack.c.h.b16 %v6958
        %v7945 = vunpack.c.l.b16 %v6959
        %v7946 = vunpack.c.h.b16 %v6959
        %v7947 = vunpack.c.l.b16 %v6960
        %v7948 = vunpack.c.h.b16 %v6960
        %v7949 = vunpack.c.l.b16 %v6961
        %v7950 = vunpack.c.h.b16 %v6961
        %v7951 = vunpack.c.l.b16 %v6962
        %v7952 = vunpack.c.h.b16 %v6962
        %v7953 = vunpack.c.l.b16 %v6963
        %v7954 = vunpack.c.h.b16 %v6963
        %v7955 = vunpack.c.l.b16 %v6964
        %v7956 = vunpack.c.h.b16 %v6964
        %v7957 = vunpack.c.l.b16 %v6965
        %v7958 = vunpack.c.l.b16 %v6966
        %v7959 = vunpack.c.h.b16 %v6966
        %v7960 = vunpack.c.l.b16 %v6967
        %v7961 = vunpack.c.h.b16 %v6967
        %v7962 = vunpack.c.l.b16 %v6968
        %v7963 = vunpack.c.h.b16 %v6968
        %v7964 = vunpack.c.l.b16 %v6969
        %v7965 = vunpack.c.h.b16 %v6969
        %v7966 = vunpack.c.l.b16 %v6970
        %v7967 = vunpack.c.h.b16 %v6970
        %v7968 = vunpack.c.l.b16 %v6971
        %v7969 = vunpack.c.h.b16 %v6971
        %v7970 = vunpack.c.l.b16 %v6972
        %v7971 = vunpack.c.h.b16 %v6972
        %v7972 = vunpack.c.l.b16 %v6973
        %v7973 = vunpack.c.h.b16 %v6973
        %v7974 = vunpack.c.l.b16 %v6974
        %v7975 = vunpack.c.h.b16 %v6974
        %v7976 = vunpack.c.l.b16 %v6975
        %v7977 = vunpack.c.h.b16 %v6975
        %v7978 = vunpack.c.l.b16 %v6976
        %v7979 = vunpack.c.h.b16 %v6976
        %v7980 = vunpack.c.l.b16 %v6977
        %v7981 = vunpack.c.h.b16 %v6977
        %v7982 = vunpack.c.l.b16 %v6978
        %v7983 = vunpack.c.h.b16 %v6978
        %v7984 = vunpack.c.l.b16 %v6979
        %v7985 = vunpack.c.l.b16 %v6980
        %v7986 = vunpack.c.h.b16 %v6980
        %v7987 = vunpack.c.l.b16 %v6981
        %v7988 = vunpack.c.h.b16 %v6981
        %v7989 = vunpack.c.l.b16 %v6982
        %v7990 = vunpack.c.h.b16 %v6982
        %v7991 = vunpack.c.l.b16 %v6983
        %v7992 = vunpack.c.h.b16 %v6983
        %v7993 = vunpack.c.l.b16 %v6984
        %v7994 = vunpack.c.h.b16 %v6984
        %v7995 = vunpack.c.l.b16 %v6985
        %v7996 = vunpack.c.h.b16 %v6985
        %v7997 = vunpack.c.l.b16 %v6986
        %v7998 = vunpack.c.h.b16 %v6986
        %v7999 = vunpack.c.l.b16 %v6987
        %v8000 = vunpack.c.h.b16 %v6987
        %v8001 = vunpack.c.l.b16 %v6988
        %v8002 = vunpack.c.h.b16 %v6988
        %v8003 = vunpack.c.l.b16 %v6989
        %v8004 = vunpack.c.h.b16 %v6989
        %v8005 = vunpack.c.l.b16 %v6990
        %v8006 = vunpack.c.h.b16 %v6990
        %v8007 = vunpack.c.l.b16 %v6991
        %v8008 = vunpack.c.h.b16 %v6991
        %v8009 = vunpack.c.l.b16 %v6992
        %v8010 = vunpack.c.h.b16 %v6992
        %v8011 = vunpack.c.l.b16 %v6993
        %v8012 = vunpack.c.l.b16 %v6994
        %v8013 = vunpack.c.h.b16 %v6994
        %v8014 = vunpack.c.l.b16 %v6995
        %v8015 = vunpack.c.h.b16 %v6995
        %v8016 = vunpack.c.l.b16 %v6996
        %v8017 = vunpack.c.h.b16 %v6996
        %v8018 = vunpack.c.l.b16 %v6997
        %v8019 = vunpack.c.h.b16 %v6997
        %v8020 = vunpack.c.l.b16 %v6998
        %v8021 = vunpack.c.h.b16 %v6998
        %v8022 = vunpack.c.l.b16 %v6999
        %v8023 = vunpack.c.h.b16 %v6999
        %v8024 = vunpack.c.l.b16 %v7000
        %v8025 = vunpack.c.h.b16 %v7000
        %v8026 = vunpack.c.l.b16 %v7001
        %v8027 = vunpack.c.h.b16 %v7001
        %v8028 = vunpack.c.l.b16 %v7002
        %v8029 = vunpack.c.h.b16 %v7002
        %v8030 = vunpack.c.l.b16 %v7003
        %v8031 = vunpack.c.h.b16 %v7003
        %v8032 = vunpack.c.l.b16 %v7004
        %v8033 = vunpack.c.h.b16 %v7004
        %v8034 = vunpack.c.l.b16 %v7005
        %v8035 = vunpack.c.h.b16 %v7005
        %v8036 = vunpack.c.l.b16 %v7006
        %v8037 = vunpack.c.h.b16 %v7006
        %v8038 = vunpack.c.l.b16 %v7007
        %v8039 = vunpack.c.l.b16 %v7008
        %v8040 = vunpack.c.h.b16 %v7008
        %v8041 = vunpack.c.l.b16 %v7009
        %v8042 = vunpack.c.h.b16 %v7009
        %v8043 = vunpack.c.l.b16 %v7010
        %v8044 = vunpack.c.h.b16 %v7010
        %v8045 = vunpack.c.l.b16 %v7011
        %v8046 = vunpack.c.h.b16 %v7011
        %v8047 = vunpack.c.l.b16 %v7012
        %v8048 = vunpack.c.h.b16 %v7012
        %v8049 = vunpack.c.l.b16 %v7013
        %v8050 = vunpack.c.h.b16 %v7013
        %v8051 = vunpack.c.l.b16 %v7014
        %v8052 = vunpack.c.h.b16 %v7014
        %v8053 = vunpack.c.l.b16 %v7015
        %v8054 = vunpack.c.h.b16 %v7015
        %v8055 = vunpack.c.l.b16 %v7016
        %v8056 = vunpack.c.h.b16 %v7016
        %v8057 = vunpack.c.l.b16 %v7017
        %v8058 = vunpack.c.h.b16 %v7017
        %v8059 = vunpack.c.l.b16 %v7018
        %v8060 = vunpack.c.h.b16 %v7018
        %v8061 = vunpack.c.l.b16 %v7019
        %v8062 = vunpack.c.h.b16 %v7019
        %v8063 = vunpack.c.l.b16 %v7020
        %v8064 = vunpack.c.h.b16 %v7020
        %v8065 = vunpack.c.l.b16 %v7021
        %v8066 = vunpack.c.l.b16 %v7022
        %v8067 = vunpack.c.h.b16 %v7022
        %v8068 = vunpack.c.l.b16 %v7023
        %v8069 = vunpack.c.h.b16 %v7023
        %v8070 = vunpack.c.l.b16 %v7024
        %v8071 = vunpack.c.h.b16 %v7024
        %v8072 = vunpack.c.l.b16 %v7025
        %v8073 = vunpack.c.h.b16 %v7025
        %v8074 = vunpack.c.l.b16 %v7026
        %v8075 = vunpack.c.h.b16 %v7026
        %v8076 = vunpack.c.l.b16 %v7027
        %v8077 = vunpack.c.h.b16 %v7027
        %v8078 = vunpack.c.l.b16 %v7028
        %v8079 = vunpack.c.h.b16 %v7028
        %v8080 = vunpack.c.l.b16 %v7029
        %v8081 = vunpack.c.h.b16 %v7029
        %v8082 = vunpack.c.l.b16 %v7030
        %v8083 = vunpack.c.h.b16 %v7030
        %v8084 = vunpack.c.l.b16 %v7031
        %v8085 = vunpack.c.h.b16 %v7031
        %v8086 = vunpack.c.l.b16 %v7032
        %v8087 = vunpack.c.h.b16 %v7032
        %v8088 = vunpack.c.l.b16 %v7033
        %v8089 = vunpack.c.h.b16 %v7033
        %v8090 = vunpack.c.l.b16 %v7034
        %v8091 = vunpack.c.h.b16 %v7034
        %v8092 = vunpack.c.l.b16 %v7035
        %v8093 = vunpack.c.l.b16 %v7036
        %v8094 = vunpack.c.h.b16 %v7036
        %v8095 = vunpack.c.l.b16 %v7037
        %v8096 = vunpack.c.h.b16 %v7037
        %v8097 = vunpack.c.l.b16 %v7038
        %v8098 = vunpack.c.h.b16 %v7038
        %v8099 = vunpack.c.l.b16 %v7039
        %v8100 = vunpack.c.h.b16 %v7039
        %v8101 = vunpack.c.l.b16 %v7040
        %v8102 = vunpack.c.h.b16 %v7040
        %v8103 = vunpack.c.l.b16 %v7041
        %v8104 = vunpack.c.h.b16 %v7041
        %v8105 = vunpack.c.l.b16 %v7042
        %v8106 = vunpack.c.h.b16 %v7042
        %v8107 = vunpack.c.l.b16 %v7043
        %v8108 = vunpack.c.h.b16 %v7043
        %v8109 = vunpack.c.l.b16 %v7044
        %v8110 = vunpack.c.h.b16 %v7044
        %v8111 = vunpack.c.l.b16 %v7045
        %v8112 = vunpack.c.h.b16 %v7045
        %v8113 = vunpack.c.l.b16 %v7046
        %v8114 = vunpack.c.h.b16 %v7046
        %v8115 = vunpack.c.l.b16 %v7047
        %v8116 = vunpack.c.h.b16 %v7047
        %v8117 = vunpack.c.l.b16 %v7048
        %v8118 = vunpack.c.h.b16 %v7048
        %v8119 = vunpack.c.l.b16 %v7049
        %v8120 = vunpack.c.l.b16 %v7050
        %v8121 = vunpack.c.h.b16 %v7050
        %v8122 = vunpack.c.l.b16 %v7051
        %v8123 = vunpack.c.h.b16 %v7051
        %v8124 = vunpack.c.l.b16 %v7052
        %v8125 = vunpack.c.h.b16 %v7052
        %v8126 = vunpack.c.l.b16 %v7053
        %v8127 = vunpack.c.h.b16 %v7053
        %v8128 = vunpack.c.l.b16 %v7054
        %v8129 = vunpack.c.h.b16 %v7054
        %v8130 = vunpack.c.l.b16 %v7055
        %v8131 = vunpack.c.h.b16 %v7055
        %v8132 = vunpack.c.l.b16 %v7056
        %v8133 = vunpack.c.h.b16 %v7056
        %v8134 = vunpack.c.l.b16 %v7057
        %v8135 = vunpack.c.h.b16 %v7057
        %v8136 = vunpack.c.l.b16 %v7058
        %v8137 = vunpack.c.h.b16 %v7058
        %v8138 = vunpack.c.l.b16 %v7059
        %v8139 = vunpack.c.h.b16 %v7059
        %v8140 = vunpack.c.l.b16 %v7060
        %v8141 = vunpack.c.h.b16 %v7060
        %v8142 = vunpack.c.l.b16 %v7061
        %v8143 = vunpack.c.h.b16 %v7061
        %v8144 = vunpack.c.l.b16 %v7062
        %v8145 = vunpack.c.h.b16 %v7062
        %v8146 = vunpack.c.l.b16 %v7063
        %v8147 = vunpack.c.l.b16 %v7064
        %v8148 = vunpack.c.h.b16 %v7064
        %v8149 = vunpack.c.l.b16 %v7065
        %v8150 = vunpack.c.h.b16 %v7065
        %v8151 = vunpack.c.l.b16 %v7066
        %v8152 = vunpack.c.h.b16 %v7066
        %v8153 = vunpack.c.l.b16 %v7067
        %v8154 = vunpack.c.h.b16 %v7067
        %v8155 = vunpack.c.l.b16 %v7068
        %v8156 = vunpack.c.h.b16 %v7068
        %v8157 = vunpack.c.l.b16 %v7069
        %v8158 = vunpack.c.h.b16 %v7069
        %v8159 = vunpack.c.l.b16 %v7070
        %v8160 = vunpack.c.h.b16 %v7070
        %v8161 = vunpack.c.l.b16 %v7071
        %v8162 = vunpack.c.h.b16 %v7071
        %v8163 = vunpack.c.l.b16 %v7072
        %v8164 = vunpack.c.h.b16 %v7072
        %v8165 = vunpack.c.l.b16 %v7073
        %v8166 = vunpack.c.h.b16 %v7073
        %v8167 = vunpack.c.l.b16 %v7074
        %v8168 = vunpack.c.h.b16 %v7074
        %v8169 = vunpack.c.l.b16 %v7075
        %v8170 = vunpack.c.h.b16 %v7075
        %v8171 = vunpack.c.l.b16 %v7076
        %v8172 = vunpack.c.h.b16 %v7076
        %v8173 = vunpack.c.l.b16 %v7077
        %v8174 = vunpack.c.l.b16 %v7078
        %v8175 = vunpack.c.h.b16 %v7078
        %v8176 = vunpack.c.l.b16 %v7079
        %v8177 = vunpack.c.h.b16 %v7079
        %v8178 = vunpack.c.l.b16 %v7080
        %v8179 = vunpack.c.h.b16 %v7080
        %v8180 = vunpack.c.l.b16 %v7081
        %v8181 = vunpack.c.h.b16 %v7081
        %v8182 = vunpack.c.l.b16 %v7082
        %v8183 = vunpack.c.h.b16 %v7082
        %v8184 = vunpack.c.l.b16 %v7083
        %v8185 = vunpack.c.h.b16 %v7083
        %v8186 = vunpack.c.l.b16 %v7084
        %v8187 = vunpack.c.h.b16 %v7084
        %v8188 = vunpack.c.l.b16 %v7085
        %v8189 = vunpack.c.h.b16 %v7085
        %v8190 = vunpack.c.l.b16 %v7086
        %v8191 = vunpack.c.h.b16 %v7086
        %v8192 = vunpack.c.l.b16 %v7087
        %v8193 = vunpack.c.h.b16 %v7087
        %v8194 = vunpack.c.l.b16 %v7088
        %v8195 = vunpack.c.h.b16 %v7088
        %v8196 = vunpack.c.l.b16 %v7089
        %v8197 = vunpack.c.h.b16 %v7089
        %v8198 = vunpack.c.l.b16 %v7090
        %v8199 = vunpack.c.h.b16 %v7090
        %v8200 = vunpack.c.l.b16 %v7091
        %v8201 = vunpack.c.l.b16 %v7092
        %v8202 = vunpack.c.h.b16 %v7092
        %v8203 = vunpack.c.l.b16 %v7093
        %v8204 = vunpack.c.h.b16 %v7093
        %v8205 = vunpack.c.l.b16 %v7094
        %v8206 = vunpack.c.h.b16 %v7094
        %v8207 = vunpack.c.l.b16 %v7095
        %v8208 = vunpack.c.h.b16 %v7095
        %v8209 = vunpack.c.l.b16 %v7096
        %v8210 = vunpack.c.h.b16 %v7096
        %v8211 = vunpack.c.l.b16 %v7097
        %v8212 = vunpack.c.h.b16 %v7097
        %v8213 = vunpack.c.l.b16 %v7098
        %v8214 = vunpack.c.h.b16 %v7098
        %v8215 = vunpack.c.l.b16 %v7099
        %v8216 = vunpack.c.h.b16 %v7099
        %v8217 = vunpack.c.l.b16 %v7100
        %v8218 = vunpack.c.h.b16 %v7100
        %v8219 = vunpack.c.l.b16 %v7101
        %v8220 = vunpack.c.h.b16 %v7101
        %v8221 = vunpack.c.l.b16 %v7102
        %v8222 = vunpack.c.h.b16 %v7102
        %v8223 = vunpack.c.l.b16 %v7103
        %v8224 = vunpack.c.h.b16 %v7103
        %v8225 = vunpack.c.l.b16 %v7104
        %v8226 = vunpack.c.h.b16 %v7104
        %v8227 = vunpack.c.l.b16 %v7105
        %v8228 = vunpack.c.l.b16 %v7106
        %v8229 = vunpack.c.h.b16 %v7106
        %v8230 = vunpack.c.l.b16 %v7107
        %v8231 = vunpack.c.h.b16 %v7107
        %v8232 = vunpack.c.l.b16 %v7108
        %v8233 = vunpack.c.h.b16 %v7108
        %v8234 = vunpack.c.l.b16 %v7109
        %v8235 = vunpack.c.h.b16 %v7109
        %v8236 = vunpack.c.l.b16 %v7110
        %v8237 = vunpack.c.h.b16 %v7110
        %v8238 = vunpack.c.l.b16 %v7111
        %v8239 = vunpack.c.h.b16 %v7111
        %v8240 = vunpack.c.l.b16 %v7112
        %v8241 = vunpack.c.h.b16 %v7112
        %v8242 = vunpack.c.l.b16 %v7113
        %v8243 = vunpack.c.h.b16 %v7113
        %v8244 = vunpack.c.l.b16 %v7114
        %v8245 = vunpack.c.h.b16 %v7114
        %v8246 = vunpack.c.l.b16 %v7115
        %v8247 = vunpack.c.h.b16 %v7115
        %v8248 = vunpack.c.l.b16 %v7116
        %v8249 = vunpack.c.h.b16 %v7116
        %v8250 = vunpack.c.l.b16 %v7117
        %v8251 = vunpack.c.h.b16 %v7117
        %v8252 = vunpack.c.l.b16 %v7118
        %v8253 = vunpack.c.h.b16 %v7118
        %v8254 = vunpack.c.l.b16 %v7119
        %v8255 = vunpack.c.l.b16 %v7120
        %v8256 = vunpack.c.h.b16 %v7120
        %v8257 = vunpack.c.l.b16 %v7121
        %v8258 = vunpack.c.h.b16 %v7121
        %v8259 = vunpack.c.l.b16 %v7122
        %v8260 = vunpack.c.h.b16 %v7122
        %v8261 = vunpack.c.l.b16 %v7123
        %v8262 = vunpack.c.h.b16 %v7123
        %v8263 = vunpack.c.l.b16 %v7124
        %v8264 = vunpack.c.h.b16 %v7124
        %v8265 = vunpack.c.l.b16 %v7125
        %v8266 = vunpack.c.h.b16 %v7125
        %v8267 = vunpack.c.l.b16 %v7126
        %v8268 = vunpack.c.h.b16 %v7126
        %v8269 = vunpack.c.l.b16 %v7127
        %v8270 = vunpack.c.h.b16 %v7127
        %v8271 = vunpack.c.l.b16 %v7128
        %v8272 = vunpack.c.h.b16 %v7128
        %v8273 = vunpack.c.l.b16 %v7129
        %v8274 = vunpack.c.h.b16 %v7129
        %v8275 = vunpack.c.l.b16 %v7130
        %v8276 = vunpack.c.h.b16 %v7130
        %v8277 = vunpack.c.l.b16 %v7131
        %v8278 = vunpack.c.h.b16 %v7131
        %v8279 = vunpack.c.l.b16 %v7132
        %v8280 = vunpack.c.h.b16 %v7132
        %v8281 = vunpack.c.l.b16 %v7133
        %v8282 = vpack.c.b16 %v7553, %v7526
        %v8283 = vpack.c.b16 %v7554, %v7527
        %v8284 = vpack.c.b16 %v7555, %v7528
        %v8285 = vpack.c.b16 %v7556, %v7529
        %v8286 = vpack.c.b16 %v7557, %v7530
        %v8287 = vpack.c.b16 %v7558, %v7531
        %v8288 = vpack.c.b16 %v7559, %v7532
        %v8289 = vpack.c.b16 %v7560, %v7533
        %v8290 = vpack.c.b16 %v7561, %v7534
        %v8291 = vpack.c.b16 %v7562, %v7535
        %v8292 = vpack.c.b16 %v7563, %v7536
        %v8293 = vpack.c.b16 %v7564, %v7537
        %v8294 = vpack.c.b16 %v7565, %v7538
        %v8295 = vpack.c.b16 %v7566, %v7539
        %v8296 = vpack.c.b16 %v7567, %v7540
        %v8297 = vpack.c.b16 %v7568, %v7541
        %v8298 = vpack.c.b16 %v7569, %v7542
        %v8299 = vpack.c.b16 %v7570, %v7543
        %v8300 = vpack.c.b16 %v7571, %v7544
        %v8301 = vpack.c.b16 %v7572, %v7545
        %v8302 = vpack.c.b16 %v7573, %v7546
        %v8303 = vpack.c.b16 %v7574, %v7547
        %v8304 = vpack.c.b16 %v7575, %v7548
        %v8305 = vpack.c.b16 %v7576, %v7549
        %v8306 = vpack.c.b16 %v7577, %v7550
        %v8307 = vpack.c.b16 %v7578, %v7551
        %v8308 = vpack.c.b16 %v7579, %v7552
        %v8309 = vpack.c.b16 %v7607, %v7580
        %v8310 = vpack.c.b16 %v7608, %v7581
        %v8311 = vpack.c.b16 %v7609, %v7582
        %v8312 = vpack.c.b16 %v7610, %v7583
        %v8313 = vpack.c.b16 %v7611, %v7584
        %v8314 = vpack.c.b16 %v7612, %v7585
        %v8315 = vpack.c.b16 %v7613, %v7586
        %v8316 = vpack.c.b16 %v7614, %v7587
        %v8317 = vpack.c.b16 %v7615, %v7588
        %v8318 = vpack.c.b16 %v7616, %v7589
        %v8319 = vpack.c.b16 %v7617, %v7590
        %v8320 = vpack.c.b16 %v7618, %v7591
        %v8321 = vpack.c.b16 %v7619, %v7592
        %v8322 = vpack.c.b16 %v7620, %v7593
        %v8323 = vpack.c.b16 %v7621, %v7594
        %v8324 = vpack.c.b16 %v7622, %v7595
        %v8325 = vpack.c.b16 %v7623, %v7596
        %v8326 = vpack.c.b16 %v7624, %v7597
        %v8327 = vpack.c.b16 %v7625, %v7598
        %v8328 = vpack.c.b16 %v7626, %v7599
        %v8329 = vpack.c.b16 %v7627, %v7600
        %v8330 = vpack.c.b16 %v7628, %v7601
        %v8331 = vpack.c.b16 %v7629, %v7602
        %v8332 = vpack.c.b16 %v7630, %v7603
        %v8333 = vpack.c.b16 %v7631, %v7604
        %v8334 = vpack.c.b16 %v7632, %v7605
        %v8335 = vpack.c.b16 %v7633, %v7606
        %v8336 = vpack.c.b16 %v7661, %v7634
        %v8337 = vpack.c.b16 %v7662, %v7635
        %v8338 = vpack.c.b16 %v7663, %v7636
        %v8339 = vpack.c.b16 %v7664, %v7637
        %v8340 = vpack.c.b16 %v7665, %v7638
        %v8341 = vpack.c.b16 %v7666, %v7639
        %v8342 = vpack.c.b16 %v7667, %v7640
        %v8343 = vpack.c.b16 %v7668, %v7641
        %v8344 = vpack.c.b16 %v7669, %v7642
        %v8345 = vpack.c.b16 %v7670, %v7643
        %v8346 = vpack.c.b16 %v7671, %v7644
        %v8347 = vpack.c.b16 %v7672, %v7645
        %v8348 = vpack.c.b16 %v7673, %v7646
        %v8349 = vpack.c.b16 %v7674, %v7647
        %v8350 = vpack.c.b16 %v7675, %v7648
        %v8351 = vpack.c.b16 %v7676, %v7649
        %v8352 = vpack.c.b16 %v7677, %v7650
        %v8353 = vpack.c.b16 %v7678, %v7651
        %v8354 = vpack.c.b16 %v7679, %v7652
        %v8355 = vpack.c.b16 %v7680, %v7653
        %v8356 = vpack.c.b16 %v7681, %v7654
        %v8357 = vpack.c.b16 %v7682, %v7655
        %v8358 = vpack.c.b16 %v7683, %v7656
        %v8359 = vpack.c.b16 %v7684, %v7657
        %v8360 = vpack.c.b16 %v7685, %v7658
        %v8361 = vpack.c.b16 %v7686, %v7659
        %v8362 = vpack.c.b16 %v7687, %v7660
        %v8363 = vpack.c.b16 %v7715, %v7688
        %v8364 = vpack.c.b16 %v7716, %v7689
        %v8365 = vpack.c.b16 %v7717, %v7690
        %v8366 = vpack.c.b16 %v7718, %v7691
        %v8367 = vpack.c.b16 %v7719, %v7692
        %v8368 = vpack.c.b16 %v7720, %v7693
        %v8369 = vpack.c.b16 %v7721, %v7694
        %v8370 = vpack.c.b16 %v7722, %v7695
        %v8371 = vpack.c.b16 %v7723, %v7696
        %v8372 = vpack.c.b16 %v7724, %v7697
        %v8373 = vpack.c.b16 %v7725, %v7698
        %v8374 = vpack.c.b16 %v7726, %v7699
        %v8375 = vpack.c.b16 %v7727, %v7700
        %v8376 = vpack.c.b16 %v7728, %v7701
        %v8377 = vpack.c.b16 %v7729, %v7702
        %v8378 = vpack.c.b16 %v7730, %v7703
        %v8379 = vpack.c.b16 %v7731, %v7704
        %v8380 = vpack.c.b16 %v7732, %v7705
        %v8381 = vpack.c.b16 %v7733, %v7706
        %v8382 = vpack.c.b16 %v7734, %v7707
        %v8383 = vpack.c.b16 %v7735, %v7708
        %v8384 = vpack.c.b16 %v7736, %v7709
        %v8385 = vpack.c.b16 %v7737, %v7710
        %v8386 = vpack.c.b16 %v7738, %v7711
        %v8387 = vpack.c.b16 %v7739, %v7712
        %v8388 = vpack.c.b16 %v7740, %v7713
        %v8389 = vpack.c.b16 %v7741, %v7714
        %v8390 = vpack.c.b16 %v7769, %v7742
        %v8391 = vpack.c.b16 %v7770, %v7743
        %v8392 = vpack.c.b16 %v7771, %v7744
        %v8393 = vpack.c.b16 %v7772, %v7745
        %v8394 = vpack.c.b16 %v7773, %v7746
        %v8395 = vpack.c.b16 %v7774, %v7747
        %v8396 = vpack.c.b16 %v7775, %v7748
        %v8397 = vpack.c.b16 %v7776, %v7749
        %v8398 = vpack.c.b16 %v7777, %v7750
        %v8399 = vpack.c.b16 %v7778, %v7751
        %v8400 = vpack.c.b16 %v7779, %v7752
        %v8401 = vpack.c.b16 %v7780, %v7753
        %v8402 = vpack.c.b16 %v7781, %v7754
        %v8403 = vpack.c.b16 %v7782, %v7755
        %v8404 = vpack.c.b16 %v7783, %v7756
        %v8405 = vpack.c.b16 %v7784, %v7757
        %v8406 = vpack.c.b16 %v7785, %v7758
        %v8407 = vpack.c.b16 %v7786, %v7759
        %v8408 = vpack.c.b16 %v7787, %v7760
        %v8409 = vpack.c.b16 %v7788, %v7761
        %v8410 = vpack.c.b16 %v7789, %v7762
        %v8411 = vpack.c.b16 %v7790, %v7763
        %v8412 = vpack.c.b16 %v7791, %v7764
        %v8413 = vpack.c.b16 %v7792, %v7765
        %v8414 = vpack.c.b16 %v7793, %v7766
        %v8415 = vpack.c.b16 %v7794, %v7767
        %v8416 = vpack.c.b16 %v7795, %v7768
        %v8417 = vpack.c.b16 %v7823, %v7796
        %v8418 = vpack.c.b16 %v7824, %v7797
        %v8419 = vpack.c.b16 %v7825, %v7798
        %v8420 = vpack.c.b16 %v7826, %v7799
        %v8421 = vpack.c.b16 %v7827, %v7800
        %v8422 = vpack.c.b16 %v7828, %v7801
        %v8423 = vpack.c.b16 %v7829, %v7802
        %v8424 = vpack.c.b16 %v7830, %v7803
        %v8425 = vpack.c.b16 %v7831, %v7804
        %v8426 = vpack.c.b16 %v7832, %v7805
        %v8427 = vpack.c.b16 %v7833, %v7806
        %v8428 = vpack.c.b16 %v7834, %v7807
        %v8429 = vpack.c.b16 %v7835, %v7808
        %v8430 = vpack.c.b16 %v7836, %v7809
        %v8431 = vpack.c.b16 %v7837, %v7810
        %v8432 = vpack.c.b16 %v7838, %v7811
        %v8433 = vpack.c.b16 %v7839, %v7812
        %v8434 = vpack.c.b16 %v7840, %v7813
        %v8435 = vpack.c.b16 %v7841, %v7814
        %v8436 = vpack.c.b16 %v7842, %v7815
        %v8437 = vpack.c.b16 %v7843, %v7816
        %v8438 = vpack.c.b16 %v7844, %v7817
        %v8439 = vpack.c.b16 %v7845, %v7818
        %v8440 = vpack.c.b16 %v7846, %v7819
        %v8441 = vpack.c.b16 %v7847, %v7820
        %v8442 = vpack.c.b16 %v7848, %v7821
        %v8443 = vpack.c.b16 %v7849, %v7822
        %v8444 = vpack.c.b16 %v7877, %v7850
        %v8445 = vpack.c.b16 %v7878, %v7851
        %v8446 = vpack.c.b16 %v7879, %v7852
        %v8447 = vpack.c.b16 %v7880, %v7853
        %v8448 = vpack.c.b16 %v7881, %v7854
        %v8449 = vpack.c.b16 %v7882, %v7855
        %v8450 = vpack.c.b16 %v7883, %v7856
        %v8451 = vpack.c.b16 %v7884, %v7857
        %v8452 = vpack.c.b16 %v7885, %v7858
        %v8453 = vpack.c.b16 %v7886, %v7859
        %v8454 = vpack.c.b16 %v7887, %v7860
        %v8455 = vpack.c.b16 %v7888, %v7861
        %v8456 = vpack.c.b16 %v7889, %v7862
        %v8457 = vpack.c.b16 %v7890, %v7863
        %v8458 = vpack.c.b16 %v7891, %v7864
        %v8459 = vpack.c.b16 %v7892, %v7865
        %v8460 = vpack.c.b16 %v7893, %v7866
        %v8461 = vpack.c.b16 %v7894, %v7867
        %v8462 = vpack.c.b16 %v7895, %v7868
        %v8463 = vpack.c.b16 %v7896, %v7869
        %v8464 = vpack.c.b16 %v7897, %v7870
        %v8465 = vpack.c.b16 %v7898, %v7871
        %v8466 = vpack.c.b16 %v7899, %v7872
        %v8467 = vpack.c.b16 %v7900, %v7873
        %v8468 = vpack.c.b16 %v7901, %v7874
        %v8469 = vpack.c.b16 %v7902, %v7875
        %v8470 = vpack.c.b16 %v7903, %v7876
        %v8471 = vpack.c.b16 %v7931, %v7904
        %v8472 = vpack.c.b16 %v7932, %v7905
        %v8473 = vpack.c.b16 %v7933, %v7906
        %v8474 = vpack.c.b16 %v7934, %v7907
        %v8475 = vpack.c.b16 %v7935, %v7908
        %v8476 = vpack.c.b16 %v7936, %v7909
        %v8477 = vpack.c.b16 %v7937, %v7910
        %v8478 = vpack.c.b16 %v7938, %v7911
        %v8479 = vpack.c.b16 %v7939, %v7912
        %v8480 = vpack.c.b16 %v7940, %v7913
        %v8481 = vpack.c.b16 %v7941, %v7914
        %v8482 = vpack.c.b16 %v7942, %v7915
        %v8483 = vpack.c.b16 %v7943, %v7916
        %v8484 = vpack.c.b16 %v7944, %v7917
        %v8485 = vpack.c.b16 %v7945, %v7918
        %v8486 = vpack.c.b16 %v7946, %v7919
        %v8487 = vpack.c.b16 %v7947, %v7920
        %v8488 = vpack.c.b16 %v7948, %v7921
        %v8489 = vpack.c.b16 %v7949, %v7922
        %v8490 = vpack.c.b16 %v7950, %v7923
        %v8491 = vpack.c.b16 %v7951, %v7924
        %v8492 = vpack.c.b16 %v7952, %v7925
        %v8493 = vpack.c.b16 %v7953, %v7926
        %v8494 = vpack.c.b16 %v7954, %v7927
        %v8495 = vpack.c.b16 %v7955, %v7928
        %v8496 = vpack.c.b16 %v7956, %v7929
        %v8497 = vpack.c.b16 %v7957, %v7930
        %v8498 = vpack.c.b16 %v7985, %v7958
        %v8499 = vpack.c.b16 %v7986, %v7959
        %v8500 = vpack.c.b16 %v7987, %v7960
        %v8501 = vpack.c.b16 %v7988, %v7961
        %v8502 = vpack.c.b16 %v7989, %v7962
        %v8503 = vpack.c.b16 %v7990, %v7963
        %v8504 = vpack.c.b16 %v7991, %v7964
        %v8505 = vpack.c.b16 %v7992, %v7965
        %v8506 = vpack.c.b16 %v7993, %v7966
        %v8507 = vpack.c.b16 %v7994, %v7967
        %v8508 = vpack.c.b16 %v7995, %v7968
        %v8509 = vpack.c.b16 %v7996, %v7969
        %v8510 = vpack.c.b16 %v7997, %v7970
        %v8511 = vpack.c.b16 %v7998, %v7971
        %v8512 = vpack.c.b16 %v7999, %v7972
        %v8513 = vpack.c.b16 %v8000, %v7973
        %v8514 = vpack.c.b16 %v8001, %v7974
        %v8515 = vpack.c.b16 %v8002, %v7975
        %v8516 = vpack.c.b16 %v8003, %v7976
        %v8517 = vpack.c.b16 %v8004, %v7977
        %v8518 = vpack.c.b16 %v8005, %v7978
        %v8519 = vpack.c.b16 %v8006, %v7979
        %v8520 = vpack.c.b16 %v8007, %v7980
        %v8521 = vpack.c.b16 %v8008, %v7981
        %v8522 = vpack.c.b16 %v8009, %v7982
        %v8523 = vpack.c.b16 %v8010, %v7983
        %v8524 = vpack.c.b16 %v8011, %v7984
        %v8525 = vpack.c.b16 %v8039, %v8012
        %v8526 = vpack.c.b16 %v8040, %v8013
        %v8527 = vpack.c.b16 %v8041, %v8014
        %v8528 = vpack.c.b16 %v8042, %v8015
        %v8529 = vpack.c.b16 %v8043, %v8016
        %v8530 = vpack.c.b16 %v8044, %v8017
        %v8531 = vpack.c.b16 %v8045, %v8018
        %v8532 = vpack.c.b16 %v8046, %v8019
        %v8533 = vpack.c.b16 %v8047, %v8020
        %v8534 = vpack.c.b16 %v8048, %v8021
        %v8535 = vpack.c.b16 %v8049, %v8022
        %v8536 = vpack.c.b16 %v8050, %v8023
        %v8537 = vpack.c.b16 %v8051, %v8024
        %v8538 = vpack.c.b16 %v8052, %v8025
        %v8539 = vpack.c.b16 %v8053, %v8026
        %v8540 = vpack.c.b16 %v8054, %v8027
        %v8541 = vpack.c.b16 %v8055, %v8028
        %v8542 = vpack.c.b16 %v8056, %v8029
        %v8543 = vpack.c.b16 %v8057, %v8030
        %v8544 = vpack.c.b16 %v8058, %v8031
        %v8545 = vpack.c.b16 %v8059, %v8032
        %v8546 = vpack.c.b16 %v8060, %v8033
        %v8547 = vpack.c.b16 %v8061, %v8034
        %v8548 = vpack.c.b16 %v8062, %v8035
        %v8549 = vpack.c.b16 %v8063, %v8036
        %v8550 = vpack.c.b16 %v8064, %v8037
        %v8551 = vpack.c.b16 %v8065, %v8038
        %v8552 = vpack.c.b16 %v8093, %v8066
        %v8553 = vpack.c.b16 %v8094, %v8067
        %v8554 = vpack.c.b16 %v8095, %v8068
        %v8555 = vpack.c.b16 %v8096, %v8069
        %v8556 = vpack.c.b16 %v8097, %v8070
        %v8557 = vpack.c.b16 %v8098, %v8071
        %v8558 = vpack.c.b16 %v8099, %v8072
        %v8559 = vpack.c.b16 %v8100, %v8073
        %v8560 = vpack.c.b16 %v8101, %v8074
        %v8561 = vpack.c.b16 %v8102, %v8075
        %v8562 = vpack.c.b16 %v8103, %v8076
        %v8563 = vpack.c.b16 %v8104, %v8077
        %v8564 = vpack.c.b16 %v8105, %v8078
        %v8565 = vpack.c.b16 %v8106, %v8079
        %v8566 = vpack.c.b16 %v8107, %v8080
        %v8567 = vpack.c.b16 %v8108, %v8081
        %v8568 = vpack.c.b16 %v8109, %v8082
        %v8569 = vpack.c.b16 %v8110, %v8083
        %v8570 = vpack.c.b16 %v8111, %v8084
        %v8571 = vpack.c.b16 %v8112, %v8085
        %v8572 = vpack.c.b16 %v8113, %v8086
        %v8573 = vpack.c.b16 %v8114, %v8087
        %v8574 = vpack.c.b16 %v8115, %v8088
        %v8575 = vpack.c.b16 %v8116, %v8089
        %v8576 = vpack.c.b16 %v8117, %v8090
        %v8577 = vpack.c.b16 %v8118, %v8091
        %v8578 = vpack.c.b16 %v8119, %v8092
        %v8579 = vpack.c.b16 %v8147, %v8120
        %v8580 = vpack.c.b16 %v8148, %v8121
        %v8581 = vpack.c.b16 %v8149, %v8122
        %v8582 = vpack.c.b16 %v8150, %v8123
        %v8583 = vpack.c.b16 %v8151, %v8124
        %v8584 = vpack.c.b16 %v8152, %v8125
        %v8585 = vpack.c.b16 %v8153, %v8126
        %v8586 = vpack.c.b16 %v8154, %v8127
        %v8587 = vpack.c.b16 %v8155, %v8128
        %v8588 = vpack.c.b16 %v8156, %v8129
        %v8589 = vpack.c.b16 %v8157, %v8130
        %v8590 = vpack.c.b16 %v8158, %v8131
        %v8591 = vpack.c.b16 %v8159, %v8132
        %v8592 = vpack.c.b16 %v8160, %v8133
        %v8593 = vpack.c.b16 %v8161, %v8134
        %v8594 = vpack.c.b16 %v8162, %v8135
        %v8595 = vpack.c.b16 %v8163, %v8136
        %v8596 = vpack.c.b16 %v8164, %v8137
        %v8597 = vpack.c.b16 %v8165, %v8138
        %v8598 = vpack.c.b16 %v8166, %v8139
        %v8599 = vpack.c.b16 %v8167, %v8140
        %v8600 = vpack.c.b16 %v8168, %v8141
        %v8601 = vpack.c.b16 %v8169, %v8142
        %v8602 = vpack.c.b16 %v8170, %v8143
        %v8603 = vpack.c.b16 %v8171, %v8144
        %v8604 = vpack.c.b16 %v8172, %v8145
        %v8605 = vpack.c.b16 %v8173, %v8146
        %v8606 = vpack.c.b16 %v8201, %v8174
        %v8607 = vpack.c.b16 %v8202, %v8175
        %v8608 = vpack.c.b16 %v8203, %v8176
        %v8609 = vpack.c.b16 %v8204, %v8177
        %v8610 = vpack.c.b16 %v8205, %v8178
        %v8611 = vpack.c.b16 %v8206, %v8179
        %v8612 = vpack.c.b16 %v8207, %v8180
        %v8613 = vpack.c.b16 %v8208, %v8181
        %v8614 = vpack.c.b16 %v8209, %v8182
        %v8615 = vpack.c.b16 %v8210, %v8183
        %v8616 = vpack.c.b16 %v8211, %v8184
        %v8617 = vpack.c.b16 %v8212, %v8185
        %v8618 = vpack.c.b16 %v8213, %v8186
        %v8619 = vpack.c.b16 %v8214, %v8187
        %v8620 = vpack.c.b16 %v8215, %v8188
        %v8621 = vpack.c.b16 %v8216, %v8189
        %v8622 = vpack.c.b16 %v8217, %v8190
        %v8623 = vpack.c.b16 %v8218, %v8191
        %v8624 = vpack.c.b16 %v8219, %v8192
        %v8625 = vpack.c.b16 %v8220, %v8193
        %v8626 = vpack.c.b16 %v8221, %v8194
        %v8627 = vpack.c.b16 %v8222, %v8195
        %v8628 = vpack.c.b16 %v8223, %v8196
        %v8629 = vpack.c.b16 %v8224, %v8197
        %v8630 = vpack.c.b16 %v8225, %v8198
        %v8631 = vpack.c.b16 %v8226, %v8199
        %v8632 = vpack.c.b16 %v8227, %v8200
        %v8633 = vpack.c.b16 %v8255, %v8228
        %v8634 = vpack.c.b16 %v8256, %v8229
        %v8635 = vpack.c.b16 %v8257, %v8230
        %v8636 = vpack.c.b16 %v8258, %v8231
        %v8637 = vpack.c.b16 %v8259, %v8232
        %v8638 = vpack.c.b16 %v8260, %v8233
        %v8639 = vpack.c.b16 %v8261, %v8234
        %v8640 = vpack.c.b16 %v8262, %v8235
        %v8641 = vpack.c.b16 %v8263, %v8236
        %v8642 = vpack.c.b16 %v8264, %v8237
        %v8643 = vpack.c.b16 %v8265, %v8238
        %v8644 = vpack.c.b16 %v8266, %v8239
        %v8645 = vpack.c.b16 %v8267, %v8240
        %v8646 = vpack.c.b16 %v8268, %v8241
        %v8647 = vpack.c.b16 %v8269, %v8242
        %v8648 = vpack.c.b16 %v8270, %v8243
        %v8649 = vpack.c.b16 %v8271, %v8244
        %v8650 = vpack.c.b16 %v8272, %v8245
        %v8651 = vpack.c.b16 %v8273, %v8246
        %v8652 = vpack.c.b16 %v8274, %v8247
        %v8653 = vpack.c.b16 %v8275, %v8248
        %v8654 = vpack.c.b16 %v8276, %v8249
        %v8655 = vpack.c.b16 %v8277, %v8250
        %v8656 = vpack.c.b16 %v8278, %v8251
        %v8657 = vpack.c.b16 %v8279, %v8252
        %v8658 = vpack.c.b16 %v8280, %v8253
        %v8659 = vpack.c.b16 %v8281, %v8254
        %v9012 = vsel %vm2763, %v297, 0
        %v9015 = vsel %vm2767, %v8633, 0
        %v9018 = vsel %vm2767, %v8634, 0
        %v9021 = vsel %vm2767, %v8635, 0
        %v9024 = vsel %vm2767, %v8636, 0
        %v9027 = vsel %vm2767, %v8637, 0
        %v9030 = vsel %vm2767, %v8638, 0
        %v9033 = vsel %vm2767, %v8639, 0
        %v9036 = vsel %vm2767, %v8640, 0
        %v9039 = vsel %vm2767, %v8641, 0
        %v9042 = vsel %vm2767, %v8642, 0
        %v9045 = vsel %vm2767, %v8643, 0
        %v9048 = vsel %vm2767, %v8644, 0
        %v9051 = vsel %vm2767, %v8645, 0
        %v9054 = vsel %vm2767, %v8646, 0
        %v9057 = vsel %vm2767, %v8647, 0
        %v9060 = vsel %vm2767, %v8648, 0
        %v9063 = vsel %vm2767, %v8649, 0
        %v9066 = vsel %vm2767, %v8650, 0
        %v9069 = vsel %vm2767, %v8651, 0
        %v9072 = vsel %vm2767, %v8652, 0
        %v9075 = vsel %vm2767, %v8653, 0
        %v9078 = vsel %vm2767, %v8654, 0
        %v9081 = vsel %vm2767, %v8655, 0
        %v9084 = vsel %vm2767, %v8656, 0
        %v9087 = vsel %vm2767, %v8657, 0
        %v9090 = vsel %vm2767, %v8658, 0
        %v9093 = vsel %vm2767, %v8659, 0
        %9095 = vmatprep.subr.bf16.mxu0 %v8283
        %9096 = vmatpush1.bf16.msra.mxu0 %v8282
        %9097 = vmatprep.subr.bf16.mxu0 %v8310
        %9098 = vmatpush1.bf16.msra.mxu0 %v8309
        %9099 = vmatprep.subr.bf16.mxu0 %v8337
        %9100 = vmatpush1.bf16.msra.mxu0 %v8336
        %9101 = vmatprep.subr.bf16.mxu0 %v8364
        %9102 = vmatpush1.bf16.msra.mxu0 %v8363
        %9103 = vmatprep.subr.bf16.mxu0 %v8391
        %9104 = vmatpush1.bf16.msra.mxu0 %v8390
        %9105 = vmatprep.subr.bf16.mxu0 %v8418
        %9106 = vmatpush1.bf16.msra.mxu0 %v8417
        %9107 = vmatprep.subr.bf16.mxu0 %v8445
        %9108 = vmatpush1.bf16.msra.mxu0 %v8444
        %9109 = vmatprep.subr.bf16.mxu0 %v8472
        %9110 = vmatpush1.bf16.msra.mxu0 %v8471
        %9111 = vmatprep.subr.bf16.mxu0 %v8499
        %9112 = vmatpush1.bf16.msra.mxu0 %v8498
        %9113 = vmatprep.subr.bf16.mxu0 %v8526
        %9114 = vmatpush1.bf16.msra.mxu0 %v8525
        %9115 = vmatprep.subr.bf16.mxu0 %v8553
        %9116 = vmatpush1.bf16.msra.mxu0 %v8552
        %9117 = vmatprep.subr.bf16.mxu0 %v8580
        %9118 = vmatpush1.bf16.msra.mxu0 %v8579
        %9119 = vmatprep.subr.bf16.mxu0 %v8607
        %9120 = vmatpush1.bf16.msra.mxu0 %v8606
        %9121 = vmatprep.subr.bf16.mxu0 %v9018
        %9122 = vmatpush1.bf16.msra.mxu0 %v9015
        %9123 = vmatprep.subr.bf16.mxu0 0
        %9124 = vmatpush1.bf16.msra.mxu0 0
        %9125 = vmatprep.subr.bf16.mxu0 0
        %9126 = vmatpush1.bf16.msra.mxu0 0
        %9127 = vmatprep.mubr.bf16.mxu0 %v9012
        %9128 = vmatmul.mubr.bf16.gmra.mrb[0].mxu0 %v296
        %v9129 = vpop.f32.mrb[0].mxu0
        %v9130 = vadd.f32 0.0, %v9129
        %v9131 = vpop.f32.mrb[0].mxu0
        %v9132 = vadd.f32 0.0, %v9131
        %v9133 = vpop.f32.mrb[0].mxu0
        %v9134 = vpop.f32.mrb[0].mxu0
        %9135 = vdwg.mxu0
        %9136 = vmatprep.subr.bf16.mxu0 %v8285
        %9137 = vmatpush1.bf16.msra.mxu0 %v8284
        %9138 = vmatprep.subr.bf16.mxu0 %v8312
        %9139 = vmatpush1.bf16.msra.mxu0 %v8311
        %9140 = vmatprep.subr.bf16.mxu0 %v8339
        %9141 = vmatpush1.bf16.msra.mxu0 %v8338
        %9142 = vmatprep.subr.bf16.mxu0 %v8366
        %9143 = vmatpush1.bf16.msra.mxu0 %v8365
        %9144 = vmatprep.subr.bf16.mxu0 %v8393
        %9145 = vmatpush1.bf16.msra.mxu0 %v8392
        %9146 = vmatprep.subr.bf16.mxu0 %v8420
        %9147 = vmatpush1.bf16.msra.mxu0 %v8419
        %9148 = vmatprep.subr.bf16.mxu0 %v8447
        %9149 = vmatpush1.bf16.msra.mxu0 %v8446
        %9150 = vmatprep.subr.bf16.mxu0 %v8474
        %9151 = vmatpush1.bf16.msra.mxu0 %v8473
        %9152 = vmatprep.subr.bf16.mxu0 %v8501
        %9153 = vmatpush1.bf16.msra.mxu0 %v8500
        %9154 = vmatprep.subr.bf16.mxu0 %v8528
        %9155 = vmatpush1.bf16.msra.mxu0 %v8527
        %9156 = vmatprep.subr.bf16.mxu0 %v8555
        %9157 = vmatpush1.bf16.msra.mxu0 %v8554
        %9158 = vmatprep.subr.bf16.mxu0 %v8582
        %9159 = vmatpush1.bf16.msra.mxu0 %v8581
        %9160 = vmatprep.subr.bf16.mxu0 %v8609
        %9161 = vmatpush1.bf16.msra.mxu0 %v8608
        %9162 = vmatprep.subr.bf16.mxu0 %v9024
        %9163 = vmatpush1.bf16.msra.mxu0 %v9021
        %9164 = vmatprep.subr.bf16.mxu0 0
        %9165 = vmatpush1.bf16.msra.mxu0 0
        %9166 = vmatprep.subr.bf16.mxu0 0
        %9167 = vmatpush1.bf16.msra.mxu0 0
        %9168 = vmatprep.mubr.bf16.mxu0 %v9012
        %9169 = vmatmul.mubr.bf16.gmra.mrb[0].mxu0 %v296
        %v9170 = vpop.f32.mrb[0].mxu0
        %v9171 = vadd.f32 0.0, %v9170
        %v9172 = vpop.f32.mrb[0].mxu0
        %v9173 = vadd.f32 0.0, %v9172
        %v9174 = vpop.f32.mrb[0].mxu0
        %v9175 = vpop.f32.mrb[0].mxu0
        %9176 = vdwg.mxu0
        %9177 = vmatprep.subr.bf16.mxu0 %v8287
        %9178 = vmatpush1.bf16.msra.mxu0 %v8286
        %9179 = vmatprep.subr.bf16.mxu0 %v8314
        %9180 = vmatpush1.bf16.msra.mxu0 %v8313
        %9181 = vmatprep.subr.bf16.mxu0 %v8341
        %9182 = vmatpush1.bf16.msra.mxu0 %v8340
        %9183 = vmatprep.subr.bf16.mxu0 %v8368
        %9184 = vmatpush1.bf16.msra.mxu0 %v8367
        %9185 = vmatprep.subr.bf16.mxu0 %v8395
        %9186 = vmatpush1.bf16.msra.mxu0 %v8394
        %9187 = vmatprep.subr.bf16.mxu0 %v8422
        %9188 = vmatpush1.bf16.msra.mxu0 %v8421
        %9189 = vmatprep.subr.bf16.mxu0 %v8449
        %9190 = vmatpush1.bf16.msra.mxu0 %v8448
        %9191 = vmatprep.subr.bf16.mxu0 %v8476
        %9192 = vmatpush1.bf16.msra.mxu0 %v8475
        %9193 = vmatprep.subr.bf16.mxu0 %v8503
        %9194 = vmatpush1.bf16.msra.mxu0 %v8502
        %9195 = vmatprep.subr.bf16.mxu0 %v8530
        %9196 = vmatpush1.bf16.msra.mxu0 %v8529
        %9197 = vmatprep.subr.bf16.mxu0 %v8557
        %9198 = vmatpush1.bf16.msra.mxu0 %v8556
        %9199 = vmatprep.subr.bf16.mxu0 %v8584
        %9200 = vmatpush1.bf16.msra.mxu0 %v8583
        %9201 = vmatprep.subr.bf16.mxu0 %v8611
        %9202 = vmatpush1.bf16.msra.mxu0 %v8610
        %9203 = vmatprep.subr.bf16.mxu0 %v9030
        %9204 = vmatpush1.bf16.msra.mxu0 %v9027
        %9205 = vmatprep.subr.bf16.mxu0 0
        %9206 = vmatpush1.bf16.msra.mxu0 0
        %9207 = vmatprep.subr.bf16.mxu0 0
        %9208 = vmatpush1.bf16.msra.mxu0 0
        %9209 = vmatprep.mubr.bf16.mxu0 %v9012
        %9210 = vmatmul.mubr.bf16.gmra.mrb[0].mxu0 %v296
        %v9211 = vpop.f32.mrb[0].mxu0
        %v9212 = vadd.f32 0.0, %v9211
        %v9213 = vpop.f32.mrb[0].mxu0
        %v9214 = vadd.f32 0.0, %v9213
        %v9215 = vpop.f32.mrb[0].mxu0
        %v9216 = vpop.f32.mrb[0].mxu0
        %9217 = vdwg.mxu0
        %9218 = vmatprep.subr.bf16.mxu0 %v8289
        %9219 = vmatpush1.bf16.msra.mxu0 %v8288
        %9220 = vmatprep.subr.bf16.mxu0 %v8316
        %9221 = vmatpush1.bf16.msra.mxu0 %v8315
        %9222 = vmatprep.subr.bf16.mxu0 %v8343
        %9223 = vmatpush1.bf16.msra.mxu0 %v8342
        %9224 = vmatprep.subr.bf16.mxu0 %v8370
        %9225 = vmatpush1.bf16.msra.mxu0 %v8369
        %9226 = vmatprep.subr.bf16.mxu0 %v8397
        %9227 = vmatpush1.bf16.msra.mxu0 %v8396
        %9228 = vmatprep.subr.bf16.mxu0 %v8424
        %9229 = vmatpush1.bf16.msra.mxu0 %v8423
        %9230 = vmatprep.subr.bf16.mxu0 %v8451
        %9231 = vmatpush1.bf16.msra.mxu0 %v8450
        %9232 = vmatprep.subr.bf16.mxu0 %v8478
        %9233 = vmatpush1.bf16.msra.mxu0 %v8477
        %9234 = vmatprep.subr.bf16.mxu0 %v8505
        %9235 = vmatpush1.bf16.msra.mxu0 %v8504
        %9236 = vmatprep.subr.bf16.mxu0 %v8532
        %9237 = vmatpush1.bf16.msra.mxu0 %v8531
        %9238 = vmatprep.subr.bf16.mxu0 %v8559
        %9239 = vmatpush1.bf16.msra.mxu0 %v8558
        %9240 = vmatprep.subr.bf16.mxu0 %v8586
        %9241 = vmatpush1.bf16.msra.mxu0 %v8585
        %9242 = vmatprep.subr.bf16.mxu0 %v8613
        %9243 = vmatpush1.bf16.msra.mxu0 %v8612
        %9244 = vmatprep.subr.bf16.mxu0 %v9036
        %9245 = vmatpush1.bf16.msra.mxu0 %v9033
        %9246 = vmatprep.subr.bf16.mxu0 0
        %9247 = vmatpush1.bf16.msra.mxu0 0
        %9248 = vmatprep.subr.bf16.mxu0 0
        %9249 = vmatpush1.bf16.msra.mxu0 0
        %9250 = vmatprep.mubr.bf16.mxu0 %v9012
        %9251 = vmatmul.mubr.bf16.gmra.mrb[0].mxu0 %v296
        %v9252 = vpop.f32.mrb[0].mxu0
        %v9253 = vadd.f32 0.0, %v9252
        %v9254 = vpop.f32.mrb[0].mxu0
        %v9255 = vadd.f32 0.0, %v9254
        %v9256 = vpop.f32.mrb[0].mxu0
        %v9257 = vpop.f32.mrb[0].mxu0
        %9258 = vdwg.mxu0
        %9259 = vmatprep.subr.bf16.mxu0 %v8291
        %9260 = vmatpush1.bf16.msra.mxu0 %v8290
        %9261 = vmatprep.subr.bf16.mxu0 %v8318
        %9262 = vmatpush1.bf16.msra.mxu0 %v8317
        %9263 = vmatprep.subr.bf16.mxu0 %v8345
        %9264 = vmatpush1.bf16.msra.mxu0 %v8344
        %9265 = vmatprep.subr.bf16.mxu0 %v8372
        %9266 = vmatpush1.bf16.msra.mxu0 %v8371
        %9267 = vmatprep.subr.bf16.mxu0 %v8399
        %9268 = vmatpush1.bf16.msra.mxu0 %v8398
        %9269 = vmatprep.subr.bf16.mxu0 %v8426
        %9270 = vmatpush1.bf16.msra.mxu0 %v8425
        %9271 = vmatprep.subr.bf16.mxu0 %v8453
        %9272 = vmatpush1.bf16.msra.mxu0 %v8452
        %9273 = vmatprep.subr.bf16.mxu0 %v8480
        %9274 = vmatpush1.bf16.msra.mxu0 %v8479
        %9275 = vmatprep.subr.bf16.mxu0 %v8507
        %9276 = vmatpush1.bf16.msra.mxu0 %v8506
        %9277 = vmatprep.subr.bf16.mxu0 %v8534
        %9278 = vmatpush1.bf16.msra.mxu0 %v8533
        %9279 = vmatprep.subr.bf16.mxu0 %v8561
        %9280 = vmatpush1.bf16.msra.mxu0 %v8560
        %9281 = vmatprep.subr.bf16.mxu0 %v8588
        %9282 = vmatpush1.bf16.msra.mxu0 %v8587
        %9283 = vmatprep.subr.bf16.mxu0 %v8615
        %9284 = vmatpush1.bf16.msra.mxu0 %v8614
        %9285 = vmatprep.subr.bf16.mxu0 %v9042
        %9286 = vmatpush1.bf16.msra.mxu0 %v9039
        %9287 = vmatprep.subr.bf16.mxu0 0
        %9288 = vmatpush1.bf16.msra.mxu0 0
        %9289 = vmatprep.subr.bf16.mxu0 0
        %9290 = vmatpush1.bf16.msra.mxu0 0
        %9291 = vmatprep.mubr.bf16.mxu0 %v9012
        %9292 = vmatmul.mubr.bf16.gmra.mrb[0].mxu0 %v296
        %v9293 = vpop.f32.mrb[0].mxu0
        %v9294 = vadd.f32 0.0, %v9293
        %v9295 = vpop.f32.mrb[0].mxu0
        %v9296 = vadd.f32 0.0, %v9295
        %v9297 = vpop.f32.mrb[0].mxu0
        %v9298 = vpop.f32.mrb[0].mxu0
        %9299 = vdwg.mxu0
        %9300 = vmatprep.subr.bf16.mxu0 %v8293
        %9301 = vmatpush1.bf16.msra.mxu0 %v8292
        %9302 = vmatprep.subr.bf16.mxu0 %v8320
        %9303 = vmatpush1.bf16.msra.mxu0 %v8319
        %9304 = vmatprep.subr.bf16.mxu0 %v8347
        %9305 = vmatpush1.bf16.msra.mxu0 %v8346
        %9306 = vmatprep.subr.bf16.mxu0 %v8374
        %9307 = vmatpush1.bf16.msra.mxu0 %v8373
        %9308 = vmatprep.subr.bf16.mxu0 %v8401
        %9309 = vmatpush1.bf16.msra.mxu0 %v8400
        %9310 = vmatprep.subr.bf16.mxu0 %v8428
        %9311 = vmatpush1.bf16.msra.mxu0 %v8427
        %9312 = vmatprep.subr.bf16.mxu0 %v8455
        %9313 = vmatpush1.bf16.msra.mxu0 %v8454
        %9314 = vmatprep.subr.bf16.mxu0 %v8482
        %9315 = vmatpush1.bf16.msra.mxu0 %v8481
        %9316 = vmatprep.subr.bf16.mxu0 %v8509
        %9317 = vmatpush1.bf16.msra.mxu0 %v8508
        %9318 = vmatprep.subr.bf16.mxu0 %v8536
        %9319 = vmatpush1.bf16.msra.mxu0 %v8535
        %9320 = vmatprep.subr.bf16.mxu0 %v8563
        %9321 = vmatpush1.bf16.msra.mxu0 %v8562
        %9322 = vmatprep.subr.bf16.mxu0 %v8590
        %9323 = vmatpush1.bf16.msra.mxu0 %v8589
        %9324 = vmatprep.subr.bf16.mxu0 %v8617
        %9325 = vmatpush1.bf16.msra.mxu0 %v8616
        %9326 = vmatprep.subr.bf16.mxu0 %v9048
        %9327 = vmatpush1.bf16.msra.mxu0 %v9045
        %9328 = vmatprep.subr.bf16.mxu0 0
        %9329 = vmatpush1.bf16.msra.mxu0 0
        %9330 = vmatprep.subr.bf16.mxu0 0
        %9331 = vmatpush1.bf16.msra.mxu0 0
        %9332 = vmatprep.mubr.bf16.mxu0 %v9012
        %9333 = vmatmul.mubr.bf16.gmra.mrb[0].mxu0 %v296
        %v9334 = vpop.f32.mrb[0].mxu0
        %v9335 = vadd.f32 0.0, %v9334
        %v9336 = vpop.f32.mrb[0].mxu0
        %v9337 = vadd.f32 0.0, %v9336
        %v9338 = vpop.f32.mrb[0].mxu0
        %v9339 = vpop.f32.mrb[0].mxu0
        %9340 = vdwg.mxu0
        %9341 = vmatprep.subr.bf16.mxu0 %v8295
        %9342 = vmatpush1.bf16.msra.mxu0 %v8294
        %9343 = vmatprep.subr.bf16.mxu0 %v8322
        %9344 = vmatpush1.bf16.msra.mxu0 %v8321
        %9345 = vmatprep.subr.bf16.mxu0 %v8349
        %9346 = vmatpush1.bf16.msra.mxu0 %v8348
        %9347 = vmatprep.subr.bf16.mxu0 %v8376
        %9348 = vmatpush1.bf16.msra.mxu0 %v8375
        %9349 = vmatprep.subr.bf16.mxu0 %v8403
        %9350 = vmatpush1.bf16.msra.mxu0 %v8402
        %9351 = vmatprep.subr.bf16.mxu0 %v8430
        %9352 = vmatpush1.bf16.msra.mxu0 %v8429
        %9353 = vmatprep.subr.bf16.mxu0 %v8457
        %9354 = vmatpush1.bf16.msra.mxu0 %v8456
        %9355 = vmatprep.subr.bf16.mxu0 %v8484
        %9356 = vmatpush1.bf16.msra.mxu0 %v8483
        %9357 = vmatprep.subr.bf16.mxu0 %v8511
        %9358 = vmatpush1.bf16.msra.mxu0 %v8510
        %9359 = vmatprep.subr.bf16.mxu0 %v8538
        %9360 = vmatpush1.bf16.msra.mxu0 %v8537
        %9361 = vmatprep.subr.bf16.mxu0 %v8565
        %9362 = vmatpush1.bf16.msra.mxu0 %v8564
        %9363 = vmatprep.subr.bf16.mxu0 %v8592
        %9364 = vmatpush1.bf16.msra.mxu0 %v8591
        %9365 = vmatprep.subr.bf16.mxu0 %v8619
        %9366 = vmatpush1.bf16.msra.mxu0 %v8618
        %9367 = vmatprep.subr.bf16.mxu0 %v9054
        %9368 = vmatpush1.bf16.msra.mxu0 %v9051
        %9369 = vmatprep.subr.bf16.mxu0 0
        %9370 = vmatpush1.bf16.msra.mxu0 0
        %9371 = vmatprep.subr.bf16.mxu0 0
        %9372 = vmatpush1.bf16.msra.mxu0 0
        %9373 = vmatprep.mubr.bf16.mxu0 %v9012
        %9374 = vmatmul.mubr.bf16.gmra.mrb[0].mxu0 %v296
        %v9375 = vpop.f32.mrb[0].mxu0
        %v9376 = vadd.f32 0.0, %v9375
        %v9377 = vpop.f32.mrb[0].mxu0
        %v9378 = vadd.f32 0.0, %v9377
        %v9379 = vpop.f32.mrb[0].mxu0
        %v9380 = vpop.f32.mrb[0].mxu0
        %9381 = vdwg.mxu0
        %9382 = vmatprep.subr.bf16.mxu0 %v8297
        %9383 = vmatpush1.bf16.msra.mxu0 %v8296
        %9384 = vmatprep.subr.bf16.mxu0 %v8324
        %9385 = vmatpush1.bf16.msra.mxu0 %v8323
        %9386 = vmatprep.subr.bf16.mxu0 %v8351
        %9387 = vmatpush1.bf16.msra.mxu0 %v8350
        %9388 = vmatprep.subr.bf16.mxu0 %v8378
        %9389 = vmatpush1.bf16.msra.mxu0 %v8377
        %9390 = vmatprep.subr.bf16.mxu0 %v8405
        %9391 = vmatpush1.bf16.msra.mxu0 %v8404
        %9392 = vmatprep.subr.bf16.mxu0 %v8432
        %9393 = vmatpush1.bf16.msra.mxu0 %v8431
        %9394 = vmatprep.subr.bf16.mxu0 %v8459
        %9395 = vmatpush1.bf16.msra.mxu0 %v8458
        %9396 = vmatprep.subr.bf16.mxu0 %v8486
        %9397 = vmatpush1.bf16.msra.mxu0 %v8485
        %9398 = vmatprep.subr.bf16.mxu0 %v8513
        %9399 = vmatpush1.bf16.msra.mxu0 %v8512
        %9400 = vmatprep.subr.bf16.mxu0 %v8540
        %9401 = vmatpush1.bf16.msra.mxu0 %v8539
        %9402 = vmatprep.subr.bf16.mxu0 %v8567
        %9403 = vmatpush1.bf16.msra.mxu0 %v8566
        %9404 = vmatprep.subr.bf16.mxu0 %v8594
        %9405 = vmatpush1.bf16.msra.mxu0 %v8593
        %9406 = vmatprep.subr.bf16.mxu0 %v8621
        %9407 = vmatpush1.bf16.msra.mxu0 %v8620
        %9408 = vmatprep.subr.bf16.mxu0 %v9060
        %9409 = vmatpush1.bf16.msra.mxu0 %v9057
        %9410 = vmatprep.subr.bf16.mxu0 0
        %9411 = vmatpush1.bf16.msra.mxu0 0
        %9412 = vmatprep.subr.bf16.mxu0 0
        %9413 = vmatpush1.bf16.msra.mxu0 0
        %9414 = vmatprep.mubr.bf16.mxu0 %v9012
        %9415 = vmatmul.mubr.bf16.gmra.mrb[0].mxu0 %v296
        %v9416 = vpop.f32.mrb[0].mxu0
        %v9417 = vadd.f32 0.0, %v9416
        %v9418 = vpop.f32.mrb[0].mxu0
        %v9419 = vadd.f32 0.0, %v9418
        %v9420 = vpop.f32.mrb[0].mxu0
        %v9421 = vpop.f32.mrb[0].mxu0
        %9422 = vdwg.mxu0
        %9423 = vmatprep.subr.bf16.mxu0 %v8299
        %9424 = vmatpush1.bf16.msra.mxu0 %v8298
        %9425 = vmatprep.subr.bf16.mxu0 %v8326
        %9426 = vmatpush1.bf16.msra.mxu0 %v8325
        %9427 = vmatprep.subr.bf16.mxu0 %v8353
        %9428 = vmatpush1.bf16.msra.mxu0 %v8352
        %9429 = vmatprep.subr.bf16.mxu0 %v8380
        %9430 = vmatpush1.bf16.msra.mxu0 %v8379
        %9431 = vmatprep.subr.bf16.mxu0 %v8407
        %9432 = vmatpush1.bf16.msra.mxu0 %v8406
        %9433 = vmatprep.subr.bf16.mxu0 %v8434
        %9434 = vmatpush1.bf16.msra.mxu0 %v8433
        %9435 = vmatprep.subr.bf16.mxu0 %v8461
        %9436 = vmatpush1.bf16.msra.mxu0 %v8460
        %9437 = vmatprep.subr.bf16.mxu0 %v8488
        %9438 = vmatpush1.bf16.msra.mxu0 %v8487
        %9439 = vmatprep.subr.bf16.mxu0 %v8515
        %9440 = vmatpush1.bf16.msra.mxu0 %v8514
        %9441 = vmatprep.subr.bf16.mxu0 %v8542
        %9442 = vmatpush1.bf16.msra.mxu0 %v8541
        %9443 = vmatprep.subr.bf16.mxu0 %v8569
        %9444 = vmatpush1.bf16.msra.mxu0 %v8568
        %9445 = vmatprep.subr.bf16.mxu0 %v8596
        %9446 = vmatpush1.bf16.msra.mxu0 %v8595
        %9447 = vmatprep.subr.bf16.mxu0 %v8623
        %9448 = vmatpush1.bf16.msra.mxu0 %v8622
        %9449 = vmatprep.subr.bf16.mxu0 %v9066
        %9450 = vmatpush1.bf16.msra.mxu0 %v9063
        %9451 = vmatprep.subr.bf16.mxu0 0
        %9452 = vmatpush1.bf16.msra.mxu0 0
        %9453 = vmatprep.subr.bf16.mxu0 0
        %9454 = vmatpush1.bf16.msra.mxu0 0
        %9455 = vmatprep.mubr.bf16.mxu0 %v9012
        %9456 = vmatmul.mubr.bf16.gmra.mrb[0].mxu0 %v296
        %v9457 = vpop.f32.mrb[0].mxu0
        %v9458 = vadd.f32 0.0, %v9457
        %v9459 = vpop.f32.mrb[0].mxu0
        %v9460 = vadd.f32 0.0, %v9459
        %v9461 = vpop.f32.mrb[0].mxu0
        %v9462 = vpop.f32.mrb[0].mxu0
        %9463 = vdwg.mxu0
        %9464 = vmatprep.subr.bf16.mxu0 %v8301
        %9465 = vmatpush1.bf16.msra.mxu0 %v8300
        %9466 = vmatprep.subr.bf16.mxu0 %v8328
        %9467 = vmatpush1.bf16.msra.mxu0 %v8327
        %9468 = vmatprep.subr.bf16.mxu0 %v8355
        %9469 = vmatpush1.bf16.msra.mxu0 %v8354
        %9470 = vmatprep.subr.bf16.mxu0 %v8382
        %9471 = vmatpush1.bf16.msra.mxu0 %v8381
        %9472 = vmatprep.subr.bf16.mxu0 %v8409
        %9473 = vmatpush1.bf16.msra.mxu0 %v8408
        %9474 = vmatprep.subr.bf16.mxu0 %v8436
        %9475 = vmatpush1.bf16.msra.mxu0 %v8435
        %9476 = vmatprep.subr.bf16.mxu0 %v8463
        %9477 = vmatpush1.bf16.msra.mxu0 %v8462
        %9478 = vmatprep.subr.bf16.mxu0 %v8490
        %9479 = vmatpush1.bf16.msra.mxu0 %v8489
        %9480 = vmatprep.subr.bf16.mxu0 %v8517
        %9481 = vmatpush1.bf16.msra.mxu0 %v8516
        %9482 = vmatprep.subr.bf16.mxu0 %v8544
        %9483 = vmatpush1.bf16.msra.mxu0 %v8543
        %9484 = vmatprep.subr.bf16.mxu0 %v8571
        %9485 = vmatpush1.bf16.msra.mxu0 %v8570
        %9486 = vmatprep.subr.bf16.mxu0 %v8598
        %9487 = vmatpush1.bf16.msra.mxu0 %v8597
        %9488 = vmatprep.subr.bf16.mxu0 %v8625
        %9489 = vmatpush1.bf16.msra.mxu0 %v8624
        %9490 = vmatprep.subr.bf16.mxu0 %v9072
        %9491 = vmatpush1.bf16.msra.mxu0 %v9069
        %9492 = vmatprep.subr.bf16.mxu0 0
        %9493 = vmatpush1.bf16.msra.mxu0 0
        %9494 = vmatprep.subr.bf16.mxu0 0
        %9495 = vmatpush1.bf16.msra.mxu0 0
        %9496 = vmatprep.mubr.bf16.mxu0 %v9012
        %9497 = vmatmul.mubr.bf16.gmra.mrb[0].mxu0 %v296
        %v9498 = vpop.f32.mrb[0].mxu0
        %v9499 = vadd.f32 0.0, %v9498
        %v9500 = vpop.f32.mrb[0].mxu0
        %v9501 = vadd.f32 0.0, %v9500
        %v9502 = vpop.f32.mrb[0].mxu0
        %v9503 = vpop.f32.mrb[0].mxu0
        %9504 = vdwg.mxu0
        %9505 = vmatprep.subr.bf16.mxu0 %v8303
        %9506 = vmatpush1.bf16.msra.mxu0 %v8302
        %9507 = vmatprep.subr.bf16.mxu0 %v8330
        %9508 = vmatpush1.bf16.msra.mxu0 %v8329
        %9509 = vmatprep.subr.bf16.mxu0 %v8357
        %9510 = vmatpush1.bf16.msra.mxu0 %v8356
        %9511 = vmatprep.subr.bf16.mxu0 %v8384
        %9512 = vmatpush1.bf16.msra.mxu0 %v8383
        %9513 = vmatprep.subr.bf16.mxu0 %v8411
        %9514 = vmatpush1.bf16.msra.mxu0 %v8410
        %9515 = vmatprep.subr.bf16.mxu0 %v8438
        %9516 = vmatpush1.bf16.msra.mxu0 %v8437
        %9517 = vmatprep.subr.bf16.mxu0 %v8465
        %9518 = vmatpush1.bf16.msra.mxu0 %v8464
        %9519 = vmatprep.subr.bf16.mxu0 %v8492
        %9520 = vmatpush1.bf16.msra.mxu0 %v8491
        %9521 = vmatprep.subr.bf16.mxu0 %v8519
        %9522 = vmatpush1.bf16.msra.mxu0 %v8518
        %9523 = vmatprep.subr.bf16.mxu0 %v8546
        %9524 = vmatpush1.bf16.msra.mxu0 %v8545
        %9525 = vmatprep.subr.bf16.mxu0 %v8573
        %9526 = vmatpush1.bf16.msra.mxu0 %v8572
        %9527 = vmatprep.subr.bf16.mxu0 %v8600
        %9528 = vmatpush1.bf16.msra.mxu0 %v8599
        %9529 = vmatprep.subr.bf16.mxu0 %v8627
        %9530 = vmatpush1.bf16.msra.mxu0 %v8626
        %9531 = vmatprep.subr.bf16.mxu0 %v9078
        %9532 = vmatpush1.bf16.msra.mxu0 %v9075
        %9533 = vmatprep.subr.bf16.mxu0 0
        %9534 = vmatpush1.bf16.msra.mxu0 0
        %9535 = vmatprep.subr.bf16.mxu0 0
        %9536 = vmatpush1.bf16.msra.mxu0 0
        %9537 = vmatprep.mubr.bf16.mxu0 %v9012
        %9538 = vmatmul.mubr.bf16.gmra.mrb[0].mxu0 %v296
        %v9539 = vpop.f32.mrb[0].mxu0
        %v9540 = vadd.f32 0.0, %v9539
        %v9541 = vpop.f32.mrb[0].mxu0
        %v9542 = vadd.f32 0.0, %v9541
        %v9543 = vpop.f32.mrb[0].mxu0
        %v9544 = vpop.f32.mrb[0].mxu0
        %9545 = vdwg.mxu0
        %9546 = vmatprep.subr.bf16.mxu0 %v8305
        %9547 = vmatpush1.bf16.msra.mxu0 %v8304
        %9548 = vmatprep.subr.bf16.mxu0 %v8332
        %9549 = vmatpush1.bf16.msra.mxu0 %v8331
        %9550 = vmatprep.subr.bf16.mxu0 %v8359
        %9551 = vmatpush1.bf16.msra.mxu0 %v8358
        %9552 = vmatprep.subr.bf16.mxu0 %v8386
        %9553 = vmatpush1.bf16.msra.mxu0 %v8385
        %9554 = vmatprep.subr.bf16.mxu0 %v8413
        %9555 = vmatpush1.bf16.msra.mxu0 %v8412
        %9556 = vmatprep.subr.bf16.mxu0 %v8440
        %9557 = vmatpush1.bf16.msra.mxu0 %v8439
        %9558 = vmatprep.subr.bf16.mxu0 %v8467
        %9559 = vmatpush1.bf16.msra.mxu0 %v8466
        %9560 = vmatprep.subr.bf16.mxu0 %v8494
        %9561 = vmatpush1.bf16.msra.mxu0 %v8493
        %9562 = vmatprep.subr.bf16.mxu0 %v8521
        %9563 = vmatpush1.bf16.msra.mxu0 %v8520
        %9564 = vmatprep.subr.bf16.mxu0 %v8548
        %9565 = vmatpush1.bf16.msra.mxu0 %v8547
        %9566 = vmatprep.subr.bf16.mxu0 %v8575
        %9567 = vmatpush1.bf16.msra.mxu0 %v8574
        %9568 = vmatprep.subr.bf16.mxu0 %v8602
        %9569 = vmatpush1.bf16.msra.mxu0 %v8601
        %9570 = vmatprep.subr.bf16.mxu0 %v8629
        %9571 = vmatpush1.bf16.msra.mxu0 %v8628
        %9572 = vmatprep.subr.bf16.mxu0 %v9084
        %9573 = vmatpush1.bf16.msra.mxu0 %v9081
        %9574 = vmatprep.subr.bf16.mxu0 0
        %9575 = vmatpush1.bf16.msra.mxu0 0
        %9576 = vmatprep.subr.bf16.mxu0 0
        %9577 = vmatpush1.bf16.msra.mxu0 0
        %9578 = vmatprep.mubr.bf16.mxu0 %v9012
        %9579 = vmatmul.mubr.bf16.gmra.mrb[0].mxu0 %v296
        %v9580 = vpop.f32.mrb[0].mxu0
        %v9581 = vadd.f32 0.0, %v9580
        %v9582 = vpop.f32.mrb[0].mxu0
        %v9583 = vadd.f32 0.0, %v9582
        %v9584 = vpop.f32.mrb[0].mxu0
        %v9585 = vpop.f32.mrb[0].mxu0
        %9586 = vdwg.mxu0
        %9587 = vmatprep.subr.bf16.mxu0 %v8307
        %9588 = vmatpush1.bf16.msra.mxu0 %v8306
        %9589 = vmatprep.subr.bf16.mxu0 %v8334
        %9590 = vmatpush1.bf16.msra.mxu0 %v8333
        %9591 = vmatprep.subr.bf16.mxu0 %v8361
        %9592 = vmatpush1.bf16.msra.mxu0 %v8360
        %9593 = vmatprep.subr.bf16.mxu0 %v8388
        %9594 = vmatpush1.bf16.msra.mxu0 %v8387
        %9595 = vmatprep.subr.bf16.mxu0 %v8415
        %9596 = vmatpush1.bf16.msra.mxu0 %v8414
        %9597 = vmatprep.subr.bf16.mxu0 %v8442
        %9598 = vmatpush1.bf16.msra.mxu0 %v8441
        %9599 = vmatprep.subr.bf16.mxu0 %v8469
        %9600 = vmatpush1.bf16.msra.mxu0 %v8468
        %9601 = vmatprep.subr.bf16.mxu0 %v8496
        %9602 = vmatpush1.bf16.msra.mxu0 %v8495
        %9603 = vmatprep.subr.bf16.mxu0 %v8523
        %9604 = vmatpush1.bf16.msra.mxu0 %v8522
        %9605 = vmatprep.subr.bf16.mxu0 %v8550
        %9606 = vmatpush1.bf16.msra.mxu0 %v8549
        %9607 = vmatprep.subr.bf16.mxu0 %v8577
        %9608 = vmatpush1.bf16.msra.mxu0 %v8576
        %9609 = vmatprep.subr.bf16.mxu0 %v8604
        %9610 = vmatpush1.bf16.msra.mxu0 %v8603
        %9611 = vmatprep.subr.bf16.mxu0 %v8631
        %9612 = vmatpush1.bf16.msra.mxu0 %v8630
        %9613 = vmatprep.subr.bf16.mxu0 %v9090
        %9614 = vmatpush1.bf16.msra.mxu0 %v9087
        %9615 = vmatprep.subr.bf16.mxu0 0
        %9616 = vmatpush1.bf16.msra.mxu0 0
        %9617 = vmatprep.subr.bf16.mxu0 0
        %9618 = vmatpush1.bf16.msra.mxu0 0
        %9619 = vmatprep.mubr.bf16.mxu0 %v9012
        %9620 = vmatmul.mubr.bf16.gmra.mrb[0].mxu0 %v296
        %v9621 = vpop.f32.mrb[0].mxu0
        %v9622 = vadd.f32 0.0, %v9621
        %v9623 = vpop.f32.mrb[0].mxu0
        %v9624 = vadd.f32 0.0, %v9623
        %v9625 = vpop.f32.mrb[0].mxu0
        %v9626 = vpop.f32.mrb[0].mxu0
        %9627 = vdwg.mxu0
        %9628 = vmatprep.subr.bf16.mxu0 0
        %9629 = vmatpush1.bf16.msra.mxu0 %v8308
        %9630 = vmatprep.subr.bf16.mxu0 0
        %9631 = vmatpush1.bf16.msra.mxu0 %v8335
        %9632 = vmatprep.subr.bf16.mxu0 0
        %9633 = vmatpush1.bf16.msra.mxu0 %v8362
        %9634 = vmatprep.subr.bf16.mxu0 0
        %9635 = vmatpush1.bf16.msra.mxu0 %v8389
        %9636 = vmatprep.subr.bf16.mxu0 0
        %9637 = vmatpush1.bf16.msra.mxu0 %v8416
        %9638 = vmatprep.subr.bf16.mxu0 0
        %9639 = vmatpush1.bf16.msra.mxu0 %v8443
        %9640 = vmatprep.subr.bf16.mxu0 0
        %9641 = vmatpush1.bf16.msra.mxu0 %v8470
        %9642 = vmatprep.subr.bf16.mxu0 0
        %9643 = vmatpush1.bf16.msra.mxu0 %v8497
        %9644 = vmatprep.subr.bf16.mxu0 0
        %9645 = vmatpush1.bf16.msra.mxu0 %v8524
        %9646 = vmatprep.subr.bf16.mxu0 0
        %9647 = vmatpush1.bf16.msra.mxu0 %v8551
        %9648 = vmatprep.subr.bf16.mxu0 0
        %9649 = vmatpush1.bf16.msra.mxu0 %v8578
        %9650 = vmatprep.subr.bf16.mxu0 0
        %9651 = vmatpush1.bf16.msra.mxu0 %v8605
        %9652 = vmatprep.subr.bf16.mxu0 0
        %9653 = vmatpush1.bf16.msra.mxu0 %v8632
        %9654 = vmatprep.subr.bf16.mxu0 0
        %9655 = vmatpush1.bf16.msra.mxu0 %v9093
        %9656 = vmatprep.subr.bf16.mxu0 0
        %9657 = vmatpush1.bf16.msra.mxu0 0
        %9658 = vmatprep.subr.bf16.mxu0 0
        %9659 = vmatpush1.bf16.msra.mxu0 0
        %9660 = vmatprep.mubr.bf16.mxu0 %v9012
        %9661 = vmatmul.mubr.bf16.gmra.mrb[0].mxu0 %v296
        %v9662 = vpop.f32.mrb[0].mxu0
        %v9663 = vadd.f32 0.0, %v9662
        %v9664 = vpop.f32.mrb[0].mxu0
        %v9665 = vpop.f32.mrb[0].mxu0
        %v9666 = vpop.f32.mrb[0].mxu0
        %9667 = vdwg.mxu0
        %v9668 = vld [vmem:[%s3] sm:$0xff]
        %v9669 = vld [vmem:[%s3 + $0x8] sm:$0xff]
        %v9670 = vld [vmem:[%s3 + $0x10] sm:$0xff]
        %v9671 = vld [vmem:[%s223] sm:$0xff]
        %v9672 = vld [vmem:[%s223 + $0x8] sm:$0xff]
        %v9673 = vld [vmem:[%s223 + $0x10] sm:$0xff]
        %v9674 = vld [vmem:[%s223 + $0x18] sm:$0xff]
        %v9675 = vld [vmem:[%s223 + $0x20] sm:$0xff]
        %v9676 = vld [vmem:[%s223 + $0x28] sm:$0xff]
        %v9677 = vld [vmem:[%s223 + $0x30] sm:$0xff]
        %v9678 = vld [vmem:[%s223 + $0x38] sm:$0xff]
        %v9679 = vld [vmem:[%s223 + $0x40] sm:$0xff]
        %v9680 = vld [vmem:[%s223 + $0x48] sm:$0xff]
        %v9681 = vld [vmem:[%s223 + $0x50] sm:$0xff]
        %v9682 = vld [vmem:[%s223 + $0x58] sm:$0xff]
        %v9683 = vld [vmem:[%s223 + $0x60] sm:$0xff]
        %v9684 = vld [vmem:[%s223 + $0x68] sm:$0xf]
        %v9685 = vld [vmem:[%s223 + $0x6c] sm:$0xff]
        %v9686 = vld [vmem:[%s223 + $0x74] sm:$0xff]
        %v9687 = vld [vmem:[%s223 + $0x7c] sm:$0xff]
        %v9688 = vld [vmem:[%s223 + $0x84] sm:$0xff]
        %v9689 = vld [vmem:[%s223 + $0x8c] sm:$0xff]
        %v9690 = vld [vmem:[%s223 + $0x94] sm:$0xff]
        %v9691 = vld [vmem:[%s223 + $0x9c] sm:$0xff]
        %v9692 = vld [vmem:[%s223 + $0xa4] sm:$0xff]
        %v9693 = vld [vmem:[%s223 + $0xac] sm:$0xff]
        %v9694 = vld [vmem:[%s223 + $0xb4] sm:$0xff]
        %v9695 = vld [vmem:[%s223 + $0xbc] sm:$0xff]
        %v9696 = vld [vmem:[%s223 + $0xc4] sm:$0xff]
        %v9697 = vld [vmem:[%s223 + $0xcc] sm:$0xff]
        %v9698 = vld [vmem:[%s223 + $0xd4] sm:$0xf]
        %v9699 = vld [vmem:[%s223 + $0xd8] sm:$0xff]
        %v9700 = vld [vmem:[%s223 + $0xe0] sm:$0xff]
        %v9701 = vld [vmem:[%s223 + $0xe8] sm:$0xff]
        %v9702 = vld [vmem:[%s223 + $0xf0] sm:$0xff]
        %v9703 = vld [vmem:[%s223 + $0xf8] sm:$0xff]
        %v9704 = vld [vmem:[%s223 + $0x100] sm:$0xff]
        %v9705 = vld [vmem:[%s223 + $0x108] sm:$0xff]
        %v9706 = vld [vmem:[%s223 + $0x110] sm:$0xff]
        %v9707 = vld [vmem:[%s223 + $0x118] sm:$0xff]
        %v9708 = vld [vmem:[%s223 + $0x120] sm:$0xff]
        %v9709 = vld [vmem:[%s223 + $0x128] sm:$0xff]
        %v9710 = vld [vmem:[%s223 + $0x130] sm:$0xff]
        %v9711 = vld [vmem:[%s223 + $0x138] sm:$0xff]
        %v9712 = vld [vmem:[%s223 + $0x140] sm:$0xf]
        %v9713 = vunpack.c.l.bf16 %v9671
        %v9714 = vunpack.c.h.bf16 %v9671
        %v9715 = vunpack.c.l.bf16 %v9672
        %v9716 = vunpack.c.h.bf16 %v9672
        %v9717 = vunpack.c.l.bf16 %v9673
        %v9718 = vunpack.c.h.bf16 %v9673
        %v9719 = vunpack.c.l.bf16 %v9674
        %v9720 = vunpack.c.h.bf16 %v9674
        %v9721 = vunpack.c.l.bf16 %v9675
        %v9722 = vunpack.c.h.bf16 %v9675
        %v9723 = vunpack.c.l.bf16 %v9676
        %v9724 = vunpack.c.h.bf16 %v9676
        %v9725 = vunpack.c.l.bf16 %v9677
        %v9726 = vunpack.c.h.bf16 %v9677
        %v9727 = vunpack.c.l.bf16 %v9678
        %v9728 = vunpack.c.h.bf16 %v9678
        %v9729 = vunpack.c.l.bf16 %v9679
        %v9730 = vunpack.c.h.bf16 %v9679
        %v9731 = vunpack.c.l.bf16 %v9680
        %v9732 = vunpack.c.h.bf16 %v9680
        %v9733 = vunpack.c.l.bf16 %v9681
        %v9734 = vunpack.c.h.bf16 %v9681
        %v9735 = vunpack.c.l.bf16 %v9682
        %v9736 = vunpack.c.h.bf16 %v9682
        %v9737 = vunpack.c.l.bf16 %v9683
        %v9738 = vunpack.c.h.bf16 %v9683
        %v9739 = vunpack.c.l.bf16 %v9684
        %v9740 = vunpack.c.l.bf16 %v9685
        %v9741 = vunpack.c.h.bf16 %v9685
        %v9742 = vunpack.c.l.bf16 %v9686
        %v9743 = vunpack.c.h.bf16 %v9686
        %v9744 = vunpack.c.l.bf16 %v9687
        %v9745 = vunpack.c.h.bf16 %v9687
        %v9746 = vunpack.c.l.bf16 %v9688
        %v9747 = vunpack.c.h.bf16 %v9688
        %v9748 = vunpack.c.l.bf16 %v9689
        %v9749 = vunpack.c.h.bf16 %v9689
        %v9750 = vunpack.c.l.bf16 %v9690
        %v9751 = vunpack.c.h.bf16 %v9690
        %v9752 = vunpack.c.l.bf16 %v9691
        %v9753 = vunpack.c.h.bf16 %v9691
        %v9754 = vunpack.c.l.bf16 %v9692
        %v9755 = vunpack.c.h.bf16 %v9692
        %v9756 = vunpack.c.l.bf16 %v9693
        %v9757 = vunpack.c.h.bf16 %v9693
        %v9758 = vunpack.c.l.bf16 %v9694
        %v9759 = vunpack.c.h.bf16 %v9694
        %v9760 = vunpack.c.l.bf16 %v9695
        %v9761 = vunpack.c.h.bf16 %v9695
        %v9762 = vunpack.c.l.bf16 %v9696
        %v9763 = vunpack.c.h.bf16 %v9696
        %v9764 = vunpack.c.l.bf16 %v9697
        %v9765 = vunpack.c.h.bf16 %v9697
        %v9766 = vunpack.c.l.bf16 %v9698
        %v9767 = vunpack.c.l.bf16 %v9699
        %v9768 = vunpack.c.h.bf16 %v9699
        %v9769 = vunpack.c.l.bf16 %v9700
        %v9770 = vunpack.c.h.bf16 %v9700
        %v9771 = vunpack.c.l.bf16 %v9701
        %v9772 = vunpack.c.h.bf16 %v9701
        %v9773 = vunpack.c.l.bf16 %v9702
        %v9774 = vunpack.c.h.bf16 %v9702
        %v9775 = vunpack.c.l.bf16 %v9703
        %v9776 = vunpack.c.h.bf16 %v9703
        %v9777 = vunpack.c.l.bf16 %v9704
        %v9778 = vunpack.c.h.bf16 %v9704
        %v9779 = vunpack.c.l.bf16 %v9705
        %v9780 = vunpack.c.h.bf16 %v9705
        %v9781 = vunpack.c.l.bf16 %v9706
        %v9782 = vunpack.c.h.bf16 %v9706
        %v9783 = vunpack.c.l.bf16 %v9707
        %v9784 = vunpack.c.h.bf16 %v9707
        %v9785 = vunpack.c.l.bf16 %v9708
        %v9786 = vunpack.c.h.bf16 %v9708
        %v9787 = vunpack.c.l.bf16 %v9709
        %v9788 = vunpack.c.h.bf16 %v9709
        %v9789 = vunpack.c.l.bf16 %v9710
        %v9790 = vunpack.c.h.bf16 %v9710
        %v9791 = vunpack.c.l.bf16 %v9711
        %v9792 = vunpack.c.h.bf16 %v9711
        %v9793 = vunpack.c.l.bf16 %v9712
        %vm9794 = vcmask 195584
        %v9796 = vsel %vm9794, %v9668, 0
        %v9799 = vsel %vm9794, %v9669, 0
        %v9802 = vsel %vm9794, %v9670, 0
        %9804 = vmatprep.subr.mxu0 %v9714
        %9805 = vmatpush1.msra.mxu0 %v9713
        %9806 = vmatprep.subr.mxu0 %v9741
        %9807 = vmatpush1.msra.mxu0 %v9740
        %9808 = vmatprep.subr.mxu0 %v9768
        %9809 = vmatpush1.msra.mxu0 %v9767
        %9810 = vmatprep.subr.mxu0 0.0
        %9811 = vmatpush1.msra.mxu0 0.0
        %9812 = vmatprep.subr.mxu0 0.0
        %9813 = vmatpush1.msra.mxu0 0.0
        %9814 = vmatprep.subr.mxu0 0.0
        %9815 = vmatpush1.msra.mxu0 0.0
        %9816 = vmatprep.subr.mxu0 0.0
        %9817 = vmatpush1.msra.mxu0 0.0
        %9818 = vmatprep.subr.mxu0 0.0
        %9819 = vmatpush1.msra.mxu0 0.0
        %9820 = vmatprep.subr.mxu0 0.0
        %9821 = vmatpush1.msra.mxu0 0.0
        %9822 = vmatprep.subr.mxu0 0.0
        %9823 = vmatpush1.msra.mxu0 0.0
        %9824 = vmatprep.subr.mxu0 0.0
        %9825 = vmatpush1.msra.mxu0 0.0
        %9826 = vmatprep.subr.mxu0 0.0
        %9827 = vmatpush1.msra.mxu0 0.0
        %9828 = vmatprep.subr.mxu0 0.0
        %9829 = vmatpush1.msra.mxu0 0.0
        %9830 = vmatprep.subr.mxu0 0.0
        %9831 = vmatpush1.msra.mxu0 0.0
        %9832 = vmatprep.subr.mxu0 0.0
        %9833 = vmatpush1.msra.mxu0 0.0
        %9834 = vmatprep.subr.mxu0 0.0
        %9835 = vmatpush1.msra.mxu0 0.0
        %9836 = vmatprep.subr.mxu0 0.0
        %9837 = vmatpush1.msra.mxu0 0.0
        %9838 = vmatprep.subr.mxu0 0.0
        %9839 = vmatpush1.msra.mxu0 0.0
        %9840 = vmatprep.subr.mxu0 0.0
        %9841 = vmatpush1.msra.mxu0 0.0
        %9842 = vmatprep.subr.mxu0 0.0
        %9843 = vmatpush1.msra.mxu0 0.0
        %9844 = vmatprep.subr.mxu0 0.0
        %9845 = vmatpush1.msra.mxu0 0.0
        %9846 = vmatprep.subr.mxu0 0.0
        %9847 = vmatpush1.msra.mxu0 0.0
        %9848 = vmatprep.subr.mxu0 0.0
        %9849 = vmatpush1.msra.mxu0 0.0
        %9850 = vmatprep.subr.mxu0 0.0
        %9851 = vmatpush1.msra.mxu0 0.0
        %9852 = vmatprep.subr.mxu0 0.0
        %9853 = vmatpush1.msra.mxu0 0.0
        %9854 = vmatprep.subr.mxu0 0.0
        %9855 = vmatpush1.msra.mxu0 0.0
        %9856 = vmatprep.subr.mxu0 0.0
        %9857 = vmatpush1.msra.mxu0 0.0
        %9858 = vmatprep.subr.mxu0 0.0
        %9859 = vmatpush1.msra.mxu0 0.0
        %9860 = vmatprep.subr.mxu0 0.0
        %9861 = vmatpush1.msra.mxu0 0.0
        %9862 = vmatprep.subr.mxu0 0.0
        %9863 = vmatpush1.msra.mxu0 0.0
        %9864 = vmatprep.subr.mxu0 0.0
        %9865 = vmatpush1.msra.mxu0 0.0
        %9866 = vmatprep.subr.mxu0 0.0
        %9867 = vmatpush1.msra.mxu0 0.0
        %9868 = vmatprep.mubr.f32.mxu0 0.0
        %9869 = vmatmul.mubr.f32.gmra.mrb[0].mxu0 %v9796
        %v9870 = vpop.f32.mrb[0].mxu0
        %v9871 = vadd.f32 0.0, %v9870
        %v9872 = vpop.f32.mrb[0].mxu0
        %v9873 = vadd.f32 0.0, %v9872
        %9874 = vmatprep.mubr.f32.mxu0 0.0
        %9875 = vmatmul.mubr.f32.gmra.mrb[0].mxu0 %v9799
        %v9876 = vpop.f32.mrb[0].mxu0
        %v9877 = vadd.f32 0.0, %v9876
        %v9878 = vpop.f32.mrb[0].mxu0
        %v9879 = vadd.f32 0.0, %v9878
        %9880 = vmatprep.mubr.f32.mxu0 0.0
        %9881 = vmatmul.mubr.f32.gmra.mrb[0].mxu0 %v9802
        %v9882 = vpop.f32.mrb[0].mxu0
        %v9883 = vadd.f32 0.0, %v9882
        %v9884 = vpop.f32.mrb[0].mxu0
        %v9885 = vadd.f32 0.0, %v9884
        %9886 = vdwg.mxu0
        %9887 = vmatprep.subr.mxu0 %v9716
        %9888 = vmatpush1.msra.mxu0 %v9715
        %9889 = vmatprep.subr.mxu0 %v9743
        %9890 = vmatpush1.msra.mxu0 %v9742
        %9891 = vmatprep.subr.mxu0 %v9770
        %9892 = vmatpush1.msra.mxu0 %v9769
        %9893 = vmatprep.subr.mxu0 0.0
        %9894 = vmatpush1.msra.mxu0 0.0
        %9895 = vmatprep.subr.mxu0 0.0
        %9896 = vmatpush1.msra.mxu0 0.0
        %9897 = vmatprep.subr.mxu0 0.0
        %9898 = vmatpush1.msra.mxu0 0.0
        %9899 = vmatprep.subr.mxu0 0.0
        %9900 = vmatpush1.msra.mxu0 0.0
        %9901 = vmatprep.subr.mxu0 0.0
        %9902 = vmatpush1.msra.mxu0 0.0
        %9903 = vmatprep.subr.mxu0 0.0
        %9904 = vmatpush1.msra.mxu0 0.0
        %9905 = vmatprep.subr.mxu0 0.0
        %9906 = vmatpush1.msra.mxu0 0.0
        %9907 = vmatprep.subr.mxu0 0.0
        %9908 = vmatpush1.msra.mxu0 0.0
        %9909 = vmatprep.subr.mxu0 0.0
        %9910 = vmatpush1.msra.mxu0 0.0
        %9911 = vmatprep.subr.mxu0 0.0
        %9912 = vmatpush1.msra.mxu0 0.0
        %9913 = vmatprep.subr.mxu0 0.0
        %9914 = vmatpush1.msra.mxu0 0.0
        %9915 = vmatprep.subr.mxu0 0.0
        %9916 = vmatpush1.msra.mxu0 0.0
        %9917 = vmatprep.subr.mxu0 0.0
        %9918 = vmatpush1.msra.mxu0 0.0
        %9919 = vmatprep.subr.mxu0 0.0
        %9920 = vmatpush1.msra.mxu0 0.0
        %9921 = vmatprep.subr.mxu0 0.0
        %9922 = vmatpush1.msra.mxu0 0.0
        %9923 = vmatprep.subr.mxu0 0.0
        %9924 = vmatpush1.msra.mxu0 0.0
        %9925 = vmatprep.subr.mxu0 0.0
        %9926 = vmatpush1.msra.mxu0 0.0
        %9927 = vmatprep.subr.mxu0 0.0
        %9928 = vmatpush1.msra.mxu0 0.0
        %9929 = vmatprep.subr.mxu0 0.0
        %9930 = vmatpush1.msra.mxu0 0.0
        %9931 = vmatprep.subr.mxu0 0.0
        %9932 = vmatpush1.msra.mxu0 0.0
        %9933 = vmatprep.subr.mxu0 0.0
        %9934 = vmatpush1.msra.mxu0 0.0
        %9935 = vmatprep.subr.mxu0 0.0
        %9936 = vmatpush1.msra.mxu0 0.0
        %9937 = vmatprep.subr.mxu0 0.0
        %9938 = vmatpush1.msra.mxu0 0.0
        %9939 = vmatprep.subr.mxu0 0.0
        %9940 = vmatpush1.msra.mxu0 0.0
        %9941 = vmatprep.subr.mxu0 0.0
        %9942 = vmatpush1.msra.mxu0 0.0
        %9943 = vmatprep.subr.mxu0 0.0
        %9944 = vmatpush1.msra.mxu0 0.0
        %9945 = vmatprep.subr.mxu0 0.0
        %9946 = vmatpush1.msra.mxu0 0.0
        %9947 = vmatprep.subr.mxu0 0.0
        %9948 = vmatpush1.msra.mxu0 0.0
        %9949 = vmatprep.subr.mxu0 0.0
        %9950 = vmatpush1.msra.mxu0 0.0
        %9951 = vmatprep.mubr.f32.mxu0 0.0
        %9952 = vmatmul.mubr.f32.gmra.mrb[0].mxu0 %v9796
        %v9953 = vpop.f32.mrb[0].mxu0
        %v9954 = vadd.f32 0.0, %v9953
        %v9955 = vpop.f32.mrb[0].mxu0
        %v9956 = vadd.f32 0.0, %v9955
        %9957 = vmatprep.mubr.f32.mxu0 0.0
        %9958 = vmatmul.mubr.f32.gmra.mrb[0].mxu0 %v9799
        %v9959 = vpop.f32.mrb[0].mxu0
        %v9960 = vadd.f32 0.0, %v9959
        %v9961 = vpop.f32.mrb[0].mxu0
        %v9962 = vadd.f32 0.0, %v9961
        %9963 = vmatprep.mubr.f32.mxu0 0.0
        %9964 = vmatmul.mubr.f32.gmra.mrb[0].mxu0 %v9802
        %v9965 = vpop.f32.mrb[0].mxu0
        %v9966 = vadd.f32 0.0, %v9965
        %v9967 = vpop.f32.mrb[0].mxu0
        %v9968 = vadd.f32 0.0, %v9967
        %9969 = vdwg.mxu0
        %9970 = vmatprep.subr.mxu0 %v9718
        %9971 = vmatpush1.msra.mxu0 %v9717
        %9972 = vmatprep.subr.mxu0 %v9745
        %9973 = vmatpush1.msra.mxu0 %v9744
        %9974 = vmatprep.subr.mxu0 %v9772
        %9975 = vmatpush1.msra.mxu0 %v9771
        %9976 = vmatprep.subr.mxu0 0.0
        %9977 = vmatpush1.msra.mxu0 0.0
        %9978 = vmatprep.subr.mxu0 0.0
        %9979 = vmatpush1.msra.mxu0 0.0
        %9980 = vmatprep.subr.mxu0 0.0
        %9981 = vmatpush1.msra.mxu0 0.0
        %9982 = vmatprep.subr.mxu0 0.0
        %9983 = vmatpush1.msra.mxu0 0.0
        %9984 = vmatprep.subr.mxu0 0.0
        %9985 = vmatpush1.msra.mxu0 0.0
        %9986 = vmatprep.subr.mxu0 0.0
        %9987 = vmatpush1.msra.mxu0 0.0
        %9988 = vmatprep.subr.mxu0 0.0
        %9989 = vmatpush1.msra.mxu0 0.0
        %9990 = vmatprep.subr.mxu0 0.0
        %9991 = vmatpush1.msra.mxu0 0.0
        %9992 = vmatprep.subr.mxu0 0.0
        %9993 = vmatpush1.msra.mxu0 0.0
        %9994 = vmatprep.subr.mxu0 0.0
        %9995 = vmatpush1.msra.mxu0 0.0
        %9996 = vmatprep.subr.mxu0 0.0
        %9997 = vmatpush1.msra.mxu0 0.0
        %9998 = vmatprep.subr.mxu0 0.0
        %9999 = vmatpush1.msra.mxu0 0.0
        %10000 = vmatprep.subr.mxu0 0.0
        %10001 = vmatpush1.msra.mxu0 0.0
        %10002 = vmatprep.subr.mxu0 0.0
        %10003 = vmatpush1.msra.mxu0 0.0
        %10004 = vmatprep.subr.mxu0 0.0
        %10005 = vmatpush1.msra.mxu0 0.0
        %10006 = vmatprep.subr.mxu0 0.0
        %10007 = vmatpush1.msra.mxu0 0.0
        %10008 = vmatprep.subr.mxu0 0.0
        %10009 = vmatpush1.msra.mxu0 0.0
        %10010 = vmatprep.subr.mxu0 0.0
        %10011 = vmatpush1.msra.mxu0 0.0
        %10012 = vmatprep.subr.mxu0 0.0
        %10013 = vmatpush1.msra.mxu0 0.0
        %10014 = vmatprep.subr.mxu0 0.0
        %10015 = vmatpush1.msra.mxu0 0.0
        %10016 = vmatprep.subr.mxu0 0.0
        %10017 = vmatpush1.msra.mxu0 0.0
        %10018 = vmatprep.subr.mxu0 0.0
        %10019 = vmatpush1.msra.mxu0 0.0
        %10020 = vmatprep.subr.mxu0 0.0
        %10021 = vmatpush1.msra.mxu0 0.0
        %10022 = vmatprep.subr.mxu0 0.0
        %10023 = vmatpush1.msra.mxu0 0.0
        %10024 = vmatprep.subr.mxu0 0.0
        %10025 = vmatpush1.msra.mxu0 0.0
        %10026 = vmatprep.subr.mxu0 0.0
        %10027 = vmatpush1.msra.mxu0 0.0
        %10028 = vmatprep.subr.mxu0 0.0
        %10029 = vmatpush1.msra.mxu0 0.0
        %10030 = vmatprep.subr.mxu0 0.0
        %10031 = vmatpush1.msra.mxu0 0.0
        %10032 = vmatprep.subr.mxu0 0.0
        %10033 = vmatpush1.msra.mxu0 0.0
        %10034 = vmatprep.mubr.f32.mxu0 0.0
        %10035 = vmatmul.mubr.f32.gmra.mrb[0].mxu0 %v9796
        %v10036 = vpop.f32.mrb[0].mxu0
        %v10037 = vadd.f32 0.0, %v10036
        %v10038 = vpop.f32.mrb[0].mxu0
        %v10039 = vadd.f32 0.0, %v10038
        %10040 = vmatprep.mubr.f32.mxu0 0.0
        %10041 = vmatmul.mubr.f32.gmra.mrb[0].mxu0 %v9799
        %v10042 = vpop.f32.mrb[0].mxu0
        %v10043 = vadd.f32 0.0, %v10042
        %v10044 = vpop.f32.mrb[0].mxu0
        %v10045 = vadd.f32 0.0, %v10044
        %10046 = vmatprep.mubr.f32.mxu0 0.0
        %10047 = vmatmul.mubr.f32.gmra.mrb[0].mxu0 %v9802
        %v10048 = vpop.f32.mrb[0].mxu0
        %v10049 = vadd.f32 0.0, %v10048
        %v10050 = vpop.f32.mrb[0].mxu0
        %v10051 = vadd.f32 0.0, %v10050
        %10052 = vdwg.mxu0
        %10053 = vmatprep.subr.mxu0 %v9720
        %10054 = vmatpush1.msra.mxu0 %v9719
        %10055 = vmatprep.subr.mxu0 %v9747
        %10056 = vmatpush1.msra.mxu0 %v9746
        %10057 = vmatprep.subr.mxu0 %v9774
        %10058 = vmatpush1.msra.mxu0 %v9773
        %10059 = vmatprep.subr.mxu0 0.0
        %10060 = vmatpush1.msra.mxu0 0.0
        %10061 = vmatprep.subr.mxu0 0.0
        %10062 = vmatpush1.msra.mxu0 0.0
        %10063 = vmatprep.subr.mxu0 0.0
        %10064 = vmatpush1.msra.mxu0 0.0
        %10065 = vmatprep.subr.mxu0 0.0
        %10066 = vmatpush1.msra.mxu0 0.0
        %10067 = vmatprep.subr.mxu0 0.0
        %10068 = vmatpush1.msra.mxu0 0.0
        %10069 = vmatprep.subr.mxu0 0.0
        %10070 = vmatpush1.msra.mxu0 0.0
        %10071 = vmatprep.subr.mxu0 0.0
        %10072 = vmatpush1.msra.mxu0 0.0
        %10073 = vmatprep.subr.mxu0 0.0
        %10074 = vmatpush1.msra.mxu0 0.0
        %10075 = vmatprep.subr.mxu0 0.0
        %10076 = vmatpush1.msra.mxu0 0.0
        %10077 = vmatprep.subr.mxu0 0.0
        %10078 = vmatpush1.msra.mxu0 0.0
        %10079 = vmatprep.subr.mxu0 0.0
        %10080 = vmatpush1.msra.mxu0 0.0
        %10081 = vmatprep.subr.mxu0 0.0
        %10082 = vmatpush1.msra.mxu0 0.0
        %10083 = vmatprep.subr.mxu0 0.0
        %10084 = vmatpush1.msra.mxu0 0.0
        %10085 = vmatprep.subr.mxu0 0.0
        %10086 = vmatpush1.msra.mxu0 0.0
        %10087 = vmatprep.subr.mxu0 0.0
        %10088 = vmatpush1.msra.mxu0 0.0
        %10089 = vmatprep.subr.mxu0 0.0
        %10090 = vmatpush1.msra.mxu0 0.0
        %10091 = vmatprep.subr.mxu0 0.0
        %10092 = vmatpush1.msra.mxu0 0.0
        %10093 = vmatprep.subr.mxu0 0.0
        %10094 = vmatpush1.msra.mxu0 0.0
        %10095 = vmatprep.subr.mxu0 0.0
        %10096 = vmatpush1.msra.mxu0 0.0
        %10097 = vmatprep.subr.mxu0 0.0
        %10098 = vmatpush1.msra.mxu0 0.0
        %10099 = vmatprep.subr.mxu0 0.0
        %10100 = vmatpush1.msra.mxu0 0.0
        %10101 = vmatprep.subr.mxu0 0.0
        %10102 = vmatpush1.msra.mxu0 0.0
        %10103 = vmatprep.subr.mxu0 0.0
        %10104 = vmatpush1.msra.mxu0 0.0
        %10105 = vmatprep.subr.mxu0 0.0
        %10106 = vmatpush1.msra.mxu0 0.0
        %10107 = vmatprep.subr.mxu0 0.0
        %10108 = vmatpush1.msra.mxu0 0.0
        %10109 = vmatprep.subr.mxu0 0.0
        %10110 = vmatpush1.msra.mxu0 0.0
        %10111 = vmatprep.subr.mxu0 0.0
        %10112 = vmatpush1.msra.mxu0 0.0
        %10113 = vmatprep.subr.mxu0 0.0
        %10114 = vmatpush1.msra.mxu0 0.0
        %10115 = vmatprep.subr.mxu0 0.0
        %10116 = vmatpush1.msra.mxu0 0.0
        %10117 = vmatprep.mubr.f32.mxu0 0.0
        %10118 = vmatmul.mubr.f32.gmra.mrb[0].mxu0 %v9796
        %v10119 = vpop.f32.mrb[0].mxu0
        %v10120 = vadd.f32 0.0, %v10119
        %v10121 = vpop.f32.mrb[0].mxu0
        %v10122 = vadd.f32 0.0, %v10121
        %10123 = vmatprep.mubr.f32.mxu0 0.0
        %10124 = vmatmul.mubr.f32.gmra.mrb[0].mxu0 %v9799
        %v10125 = vpop.f32.mrb[0].mxu0
        %v10126 = vadd.f32 0.0, %v10125
        %v10127 = vpop.f32.mrb[0].mxu0
        %v10128 = vadd.f32 0.0, %v10127
        %10129 = vmatprep.mubr.f32.mxu0 0.0
        %10130 = vmatmul.mubr.f32.gmra.mrb[0].mxu0 %v9802
        %v10131 = vpop.f32.mrb[0].mxu0
        %v10132 = vadd.f32 0.0, %v10131
        %v10133 = vpop.f32.mrb[0].mxu0
        %v10134 = vadd.f32 0.0, %v10133
        %10135 = vdwg.mxu0
        %10136 = vmatprep.subr.mxu0 %v9722
        %10137 = vmatpush1.msra.mxu0 %v9721
        %10138 = vmatprep.subr.mxu0 %v9749
        %10139 = vmatpush1.msra.mxu0 %v9748
        %10140 = vmatprep.subr.mxu0 %v9776
        %10141 = vmatpush1.msra.mxu0 %v9775
        %10142 = vmatprep.subr.mxu0 0.0
        %10143 = vmatpush1.msra.mxu0 0.0
        %10144 = vmatprep.subr.mxu0 0.0
        %10145 = vmatpush1.msra.mxu0 0.0
        %10146 = vmatprep.subr.mxu0 0.0
        %10147 = vmatpush1.msra.mxu0 0.0
        %10148 = vmatprep.subr.mxu0 0.0
        %10149 = vmatpush1.msra.mxu0 0.0
        %10150 = vmatprep.subr.mxu0 0.0
        %10151 = vmatpush1.msra.mxu0 0.0
        %10152 = vmatprep.subr.mxu0 0.0
        %10153 = vmatpush1.msra.mxu0 0.0
        %10154 = vmatprep.subr.mxu0 0.0
        %10155 = vmatpush1.msra.mxu0 0.0
        %10156 = vmatprep.subr.mxu0 0.0
        %10157 = vmatpush1.msra.mxu0 0.0
        %10158 = vmatprep.subr.mxu0 0.0
        %10159 = vmatpush1.msra.mxu0 0.0
        %10160 = vmatprep.subr.mxu0 0.0
        %10161 = vmatpush1.msra.mxu0 0.0
        %10162 = vmatprep.subr.mxu0 0.0
        %10163 = vmatpush1.msra.mxu0 0.0
        %10164 = vmatprep.subr.mxu0 0.0
        %10165 = vmatpush1.msra.mxu0 0.0
        %10166 = vmatprep.subr.mxu0 0.0
        %10167 = vmatpush1.msra.mxu0 0.0
        %10168 = vmatprep.subr.mxu0 0.0
        %10169 = vmatpush1.msra.mxu0 0.0
        %10170 = vmatprep.subr.mxu0 0.0
        %10171 = vmatpush1.msra.mxu0 0.0
        %10172 = vmatprep.subr.mxu0 0.0
        %10173 = vmatpush1.msra.mxu0 0.0
        %10174 = vmatprep.subr.mxu0 0.0
        %10175 = vmatpush1.msra.mxu0 0.0
        %10176 = vmatprep.subr.mxu0 0.0
        %10177 = vmatpush1.msra.mxu0 0.0
        %10178 = vmatprep.subr.mxu0 0.0
        %10179 = vmatpush1.msra.mxu0 0.0
        %10180 = vmatprep.subr.mxu0 0.0
        %10181 = vmatpush1.msra.mxu0 0.0
        %10182 = vmatprep.subr.mxu0 0.0
        %10183 = vmatpush1.msra.mxu0 0.0
        %10184 = vmatprep.subr.mxu0 0.0
        %10185 = vmatpush1.msra.mxu0 0.0
        %10186 = vmatprep.subr.mxu0 0.0
        %10187 = vmatpush1.msra.mxu0 0.0
        %10188 = vmatprep.subr.mxu0 0.0
        %10189 = vmatpush1.msra.mxu0 0.0
        %10190 = vmatprep.subr.mxu0 0.0
        %10191 = vmatpush1.msra.mxu0 0.0
        %10192 = vmatprep.subr.mxu0 0.0
        %10193 = vmatpush1.msra.mxu0 0.0
        %10194 = vmatprep.subr.mxu0 0.0
        %10195 = vmatpush1.msra.mxu0 0.0
        %10196 = vmatprep.subr.mxu0 0.0
        %10197 = vmatpush1.msra.mxu0 0.0
        %10198 = vmatprep.subr.mxu0 0.0
        %10199 = vmatpush1.msra.mxu0 0.0
        %10200 = vmatprep.mubr.f32.mxu0 0.0
        %10201 = vmatmul.mubr.f32.gmra.mrb[0].mxu0 %v9796
        %v10202 = vpop.f32.mrb[0].mxu0
        %v10203 = vadd.f32 0.0, %v10202
        %v10204 = vpop.f32.mrb[0].mxu0
        %v10205 = vadd.f32 0.0, %v10204
        %10206 = vmatprep.mubr.f32.mxu0 0.0
        %10207 = vmatmul.mubr.f32.gmra.mrb[0].mxu0 %v9799
        %v10208 = vpop.f32.mrb[0].mxu0
        %v10209 = vadd.f32 0.0, %v10208
        %v10210 = vpop.f32.mrb[0].mxu0
        %v10211 = vadd.f32 0.0, %v10210
        %10212 = vmatprep.mubr.f32.mxu0 0.0
        %10213 = vmatmul.mubr.f32.gmra.mrb[0].mxu0 %v9802
        %v10214 = vpop.f32.mrb[0].mxu0
        %v10215 = vadd.f32 0.0, %v10214
        %v10216 = vpop.f32.mrb[0].mxu0
        %v10217 = vadd.f32 0.0, %v10216
        %10218 = vdwg.mxu0
        %10219 = vmatprep.subr.mxu0 %v9724
        %10220 = vmatpush1.msra.mxu0 %v9723
        %10221 = vmatprep.subr.mxu0 %v9751
        %10222 = vmatpush1.msra.mxu0 %v9750
        %10223 = vmatprep.subr.mxu0 %v9778
        %10224 = vmatpush1.msra.mxu0 %v9777
        %10225 = vmatprep.subr.mxu0 0.0
        %10226 = vmatpush1.msra.mxu0 0.0
        %10227 = vmatprep.subr.mxu0 0.0
        %10228 = vmatpush1.msra.mxu0 0.0
        %10229 = vmatprep.subr.mxu0 0.0
        %10230 = vmatpush1.msra.mxu0 0.0
        %10231 = vmatprep.subr.mxu0 0.0
        %10232 = vmatpush1.msra.mxu0 0.0
        %10233 = vmatprep.subr.mxu0 0.0
        %10234 = vmatpush1.msra.mxu0 0.0
        %10235 = vmatprep.subr.mxu0 0.0
        %10236 = vmatpush1.msra.mxu0 0.0
        %10237 = vmatprep.subr.mxu0 0.0
        %10238 = vmatpush1.msra.mxu0 0.0
        %10239 = vmatprep.subr.mxu0 0.0
        %10240 = vmatpush1.msra.mxu0 0.0
        %10241 = vmatprep.subr.mxu0 0.0
        %10242 = vmatpush1.msra.mxu0 0.0
        %10243 = vmatprep.subr.mxu0 0.0
        %10244 = vmatpush1.msra.mxu0 0.0
        %10245 = vmatprep.subr.mxu0 0.0
        %10246 = vmatpush1.msra.mxu0 0.0
        %10247 = vmatprep.subr.mxu0 0.0
        %10248 = vmatpush1.msra.mxu0 0.0
        %10249 = vmatprep.subr.mxu0 0.0
        %10250 = vmatpush1.msra.mxu0 0.0
        %10251 = vmatprep.subr.mxu0 0.0
        %10252 = vmatpush1.msra.mxu0 0.0
        %10253 = vmatprep.subr.mxu0 0.0
        %10254 = vmatpush1.msra.mxu0 0.0
        %10255 = vmatprep.subr.mxu0 0.0
        %10256 = vmatpush1.msra.mxu0 0.0
        %10257 = vmatprep.subr.mxu0 0.0
        %10258 = vmatpush1.msra.mxu0 0.0
        %10259 = vmatprep.subr.mxu0 0.0
        %10260 = vmatpush1.msra.mxu0 0.0
        %10261 = vmatprep.subr.mxu0 0.0
        %10262 = vmatpush1.msra.mxu0 0.0
        %10263 = vmatprep.subr.mxu0 0.0
        %10264 = vmatpush1.msra.mxu0 0.0
        %10265 = vmatprep.subr.mxu0 0.0
        %10266 = vmatpush1.msra.mxu0 0.0
        %10267 = vmatprep.subr.mxu0 0.0
        %10268 = vmatpush1.msra.mxu0 0.0
        %10269 = vmatprep.subr.mxu0 0.0
        %10270 = vmatpush1.msra.mxu0 0.0
        %10271 = vmatprep.subr.mxu0 0.0
        %10272 = vmatpush1.msra.mxu0 0.0
        %10273 = vmatprep.subr.mxu0 0.0
        %10274 = vmatpush1.msra.mxu0 0.0
        %10275 = vmatprep.subr.mxu0 0.0
        %10276 = vmatpush1.msra.mxu0 0.0
        %10277 = vmatprep.subr.mxu0 0.0
        %10278 = vmatpush1.msra.mxu0 0.0
        %10279 = vmatprep.subr.mxu0 0.0
        %10280 = vmatpush1.msra.mxu0 0.0
        %10281 = vmatprep.subr.mxu0 0.0
        %10282 = vmatpush1.msra.mxu0 0.0
        %10283 = vmatprep.mubr.f32.mxu0 0.0
        %10284 = vmatmul.mubr.f32.gmra.mrb[0].mxu0 %v9796
        %v10285 = vpop.f32.mrb[0].mxu0
        %v10286 = vadd.f32 0.0, %v10285
        %v10287 = vpop.f32.mrb[0].mxu0
        %v10288 = vadd.f32 0.0, %v10287
        %10289 = vmatprep.mubr.f32.mxu0 0.0
        %10290 = vmatmul.mubr.f32.gmra.mrb[0].mxu0 %v9799
        %v10291 = vpop.f32.mrb[0].mxu0
        %v10292 = vadd.f32 0.0, %v10291
        %v10293 = vpop.f32.mrb[0].mxu0
        %v10294 = vadd.f32 0.0, %v10293
        %10295 = vmatprep.mubr.f32.mxu0 0.0
        %10296 = vmatmul.mubr.f32.gmra.mrb[0].mxu0 %v9802
        %v10297 = vpop.f32.mrb[0].mxu0
        %v10298 = vadd.f32 0.0, %v10297
        %v10299 = vpop.f32.mrb[0].mxu0
        %v10300 = vadd.f32 0.0, %v10299
        %10301 = vdwg.mxu0
        %10302 = vmatprep.subr.mxu0 %v9726
        %10303 = vmatpush1.msra.mxu0 %v9725
        %10304 = vmatprep.subr.mxu0 %v9753
        %10305 = vmatpush1.msra.mxu0 %v9752
        %10306 = vmatprep.subr.mxu0 %v9780
        %10307 = vmatpush1.msra.mxu0 %v9779
        %10308 = vmatprep.subr.mxu0 0.0
        %10309 = vmatpush1.msra.mxu0 0.0
        %10310 = vmatprep.subr.mxu0 0.0
        %10311 = vmatpush1.msra.mxu0 0.0
        %10312 = vmatprep.subr.mxu0 0.0
        %10313 = vmatpush1.msra.mxu0 0.0
        %10314 = vmatprep.subr.mxu0 0.0
        %10315 = vmatpush1.msra.mxu0 0.0
        %10316 = vmatprep.subr.mxu0 0.0
        %10317 = vmatpush1.msra.mxu0 0.0
        %10318 = vmatprep.subr.mxu0 0.0
        %10319 = vmatpush1.msra.mxu0 0.0
        %10320 = vmatprep.subr.mxu0 0.0
        %10321 = vmatpush1.msra.mxu0 0.0
        %10322 = vmatprep.subr.mxu0 0.0
        %10323 = vmatpush1.msra.mxu0 0.0
        %10324 = vmatprep.subr.mxu0 0.0
        %10325 = vmatpush1.msra.mxu0 0.0
        %10326 = vmatprep.subr.mxu0 0.0
        %10327 = vmatpush1.msra.mxu0 0.0
        %10328 = vmatprep.subr.mxu0 0.0
        %10329 = vmatpush1.msra.mxu0 0.0
        %10330 = vmatprep.subr.mxu0 0.0
        %10331 = vmatpush1.msra.mxu0 0.0
        %10332 = vmatprep.subr.mxu0 0.0
        %10333 = vmatpush1.msra.mxu0 0.0
        %10334 = vmatprep.subr.mxu0 0.0
        %10335 = vmatpush1.msra.mxu0 0.0
        %10336 = vmatprep.subr.mxu0 0.0
        %10337 = vmatpush1.msra.mxu0 0.0
        %10338 = vmatprep.subr.mxu0 0.0
        %10339 = vmatpush1.msra.mxu0 0.0
        %10340 = vmatprep.subr.mxu0 0.0
        %10341 = vmatpush1.msra.mxu0 0.0
        %10342 = vmatprep.subr.mxu0 0.0
        %10343 = vmatpush1.msra.mxu0 0.0
        %10344 = vmatprep.subr.mxu0 0.0
        %10345 = vmatpush1.msra.mxu0 0.0
        %10346 = vmatprep.subr.mxu0 0.0
        %10347 = vmatpush1.msra.mxu0 0.0
        %10348 = vmatprep.subr.mxu0 0.0
        %10349 = vmatpush1.msra.mxu0 0.0
        %10350 = vmatprep.subr.mxu0 0.0
        %10351 = vmatpush1.msra.mxu0 0.0
        %10352 = vmatprep.subr.mxu0 0.0
        %10353 = vmatpush1.msra.mxu0 0.0
        %10354 = vmatprep.subr.mxu0 0.0
        %10355 = vmatpush1.msra.mxu0 0.0
        %10356 = vmatprep.subr.mxu0 0.0
        %10357 = vmatpush1.msra.mxu0 0.0
        %10358 = vmatprep.subr.mxu0 0.0
        %10359 = vmatpush1.msra.mxu0 0.0
        %10360 = vmatprep.subr.mxu0 0.0
        %10361 = vmatpush1.msra.mxu0 0.0
        %10362 = vmatprep.subr.mxu0 0.0
        %10363 = vmatpush1.msra.mxu0 0.0
        %10364 = vmatprep.subr.mxu0 0.0
        %10365 = vmatpush1.msra.mxu0 0.0
        %10366 = vmatprep.mubr.f32.mxu0 0.0
        %10367 = vmatmul.mubr.f32.gmra.mrb[0].mxu0 %v9796
        %v10368 = vpop.f32.mrb[0].mxu0
        %v10369 = vadd.f32 0.0, %v10368
        %v10370 = vpop.f32.mrb[0].mxu0
        %v10371 = vadd.f32 0.0, %v10370
        %10372 = vmatprep.mubr.f32.mxu0 0.0
        %10373 = vmatmul.mubr.f32.gmra.mrb[0].mxu0 %v9799
        %v10374 = vpop.f32.mrb[0].mxu0
        %v10375 = vadd.f32 0.0, %v10374
        %v10376 = vpop.f32.mrb[0].mxu0
        %v10377 = vadd.f32 0.0, %v10376
        %10378 = vmatprep.mubr.f32.mxu0 0.0
        %10379 = vmatmul.mubr.f32.gmra.mrb[0].mxu0 %v9802
        %v10380 = vpop.f32.mrb[0].mxu0
        %v10381 = vadd.f32 0.0, %v10380
        %v10382 = vpop.f32.mrb[0].mxu0
        %v10383 = vadd.f32 0.0, %v10382
        %10384 = vdwg.mxu0
        %10385 = vmatprep.subr.mxu0 %v9728
        %10386 = vmatpush1.msra.mxu0 %v9727
        %10387 = vmatprep.subr.mxu0 %v9755
        %10388 = vmatpush1.msra.mxu0 %v9754
        %10389 = vmatprep.subr.mxu0 %v9782
        %10390 = vmatpush1.msra.mxu0 %v9781
        %10391 = vmatprep.subr.mxu0 0.0
        %10392 = vmatpush1.msra.mxu0 0.0
        %10393 = vmatprep.subr.mxu0 0.0
        %10394 = vmatpush1.msra.mxu0 0.0
        %10395 = vmatprep.subr.mxu0 0.0
        %10396 = vmatpush1.msra.mxu0 0.0
        %10397 = vmatprep.subr.mxu0 0.0
        %10398 = vmatpush1.msra.mxu0 0.0
        %10399 = vmatprep.subr.mxu0 0.0
        %10400 = vmatpush1.msra.mxu0 0.0
        %10401 = vmatprep.subr.mxu0 0.0
        %10402 = vmatpush1.msra.mxu0 0.0
        %10403 = vmatprep.subr.mxu0 0.0
        %10404 = vmatpush1.msra.mxu0 0.0
        %10405 = vmatprep.subr.mxu0 0.0
        %10406 = vmatpush1.msra.mxu0 0.0
        %10407 = vmatprep.subr.mxu0 0.0
        %10408 = vmatpush1.msra.mxu0 0.0
        %10409 = vmatprep.subr.mxu0 0.0
        %10410 = vmatpush1.msra.mxu0 0.0
        %10411 = vmatprep.subr.mxu0 0.0
        %10412 = vmatpush1.msra.mxu0 0.0
        %10413 = vmatprep.subr.mxu0 0.0
        %10414 = vmatpush1.msra.mxu0 0.0
        %10415 = vmatprep.subr.mxu0 0.0
        %10416 = vmatpush1.msra.mxu0 0.0
        %10417 = vmatprep.subr.mxu0 0.0
        %10418 = vmatpush1.msra.mxu0 0.0
        %10419 = vmatprep.subr.mxu0 0.0
        %10420 = vmatpush1.msra.mxu0 0.0
        %10421 = vmatprep.subr.mxu0 0.0
        %10422 = vmatpush1.msra.mxu0 0.0
        %10423 = vmatprep.subr.mxu0 0.0
        %10424 = vmatpush1.msra.mxu0 0.0
        %10425 = vmatprep.subr.mxu0 0.0
        %10426 = vmatpush1.msra.mxu0 0.0
        %10427 = vmatprep.subr.mxu0 0.0
        %10428 = vmatpush1.msra.mxu0 0.0
        %10429 = vmatprep.subr.mxu0 0.0
        %10430 = vmatpush1.msra.mxu0 0.0
        %10431 = vmatprep.subr.mxu0 0.0
        %10432 = vmatpush1.msra.mxu0 0.0
        %10433 = vmatprep.subr.mxu0 0.0
        %10434 = vmatpush1.msra.mxu0 0.0
        %10435 = vmatprep.subr.mxu0 0.0
        %10436 = vmatpush1.msra.mxu0 0.0
        %10437 = vmatprep.subr.mxu0 0.0
        %10438 = vmatpush1.msra.mxu0 0.0
        %10439 = vmatprep.subr.mxu0 0.0
        %10440 = vmatpush1.msra.mxu0 0.0
        %10441 = vmatprep.subr.mxu0 0.0
        %10442 = vmatpush1.msra.mxu0 0.0
        %10443 = vmatprep.subr.mxu0 0.0
        %10444 = vmatpush1.msra.mxu0 0.0
        %10445 = vmatprep.subr.mxu0 0.0
        %10446 = vmatpush1.msra.mxu0 0.0
        %10447 = vmatprep.subr.mxu0 0.0
        %10448 = vmatpush1.msra.mxu0 0.0
        %10449 = vmatprep.mubr.f32.mxu0 0.0
        %10450 = vmatmul.mubr.f32.gmra.mrb[0].mxu0 %v9796
        %v10451 = vpop.f32.mrb[0].mxu0
        %v10452 = vadd.f32 0.0, %v10451
        %v10453 = vpop.f32.mrb[0].mxu0
        %v10454 = vadd.f32 0.0, %v10453
        %10455 = vmatprep.mubr.f32.mxu0 0.0
        %10456 = vmatmul.mubr.f32.gmra.mrb[0].mxu0 %v9799
        %v10457 = vpop.f32.mrb[0].mxu0
        %v10458 = vadd.f32 0.0, %v10457
        %v10459 = vpop.f32.mrb[0].mxu0
        %v10460 = vadd.f32 0.0, %v10459
        %10461 = vmatprep.mubr.f32.mxu0 0.0
        %10462 = vmatmul.mubr.f32.gmra.mrb[0].mxu0 %v9802
        %v10463 = vpop.f32.mrb[0].mxu0
        %v10464 = vadd.f32 0.0, %v10463
        %v10465 = vpop.f32.mrb[0].mxu0
        %v10466 = vadd.f32 0.0, %v10465
        %10467 = vdwg.mxu0
        %10468 = vmatprep.subr.mxu0 %v9730
        %10469 = vmatpush1.msra.mxu0 %v9729
        %10470 = vmatprep.subr.mxu0 %v9757
        %10471 = vmatpush1.msra.mxu0 %v9756
        %10472 = vmatprep.subr.mxu0 %v9784
        %10473 = vmatpush1.msra.mxu0 %v9783
        %10474 = vmatprep.subr.mxu0 0.0
        %10475 = vmatpush1.msra.mxu0 0.0
        %10476 = vmatprep.subr.mxu0 0.0
        %10477 = vmatpush1.msra.mxu0 0.0
        %10478 = vmatprep.subr.mxu0 0.0
        %10479 = vmatpush1.msra.mxu0 0.0
        %10480 = vmatprep.subr.mxu0 0.0
        %10481 = vmatpush1.msra.mxu0 0.0
        %10482 = vmatprep.subr.mxu0 0.0
        %10483 = vmatpush1.msra.mxu0 0.0
        %10484 = vmatprep.subr.mxu0 0.0
        %10485 = vmatpush1.msra.mxu0 0.0
        %10486 = vmatprep.subr.mxu0 0.0
        %10487 = vmatpush1.msra.mxu0 0.0
        %10488 = vmatprep.subr.mxu0 0.0
        %10489 = vmatpush1.msra.mxu0 0.0
        %10490 = vmatprep.subr.mxu0 0.0
        %10491 = vmatpush1.msra.mxu0 0.0
        %10492 = vmatprep.subr.mxu0 0.0
        %10493 = vmatpush1.msra.mxu0 0.0
        %10494 = vmatprep.subr.mxu0 0.0
        %10495 = vmatpush1.msra.mxu0 0.0
        %10496 = vmatprep.subr.mxu0 0.0
        %10497 = vmatpush1.msra.mxu0 0.0
        %10498 = vmatprep.subr.mxu0 0.0
        %10499 = vmatpush1.msra.mxu0 0.0
        %10500 = vmatprep.subr.mxu0 0.0
        %10501 = vmatpush1.msra.mxu0 0.0
        %10502 = vmatprep.subr.mxu0 0.0
        %10503 = vmatpush1.msra.mxu0 0.0
        %10504 = vmatprep.subr.mxu0 0.0
        %10505 = vmatpush1.msra.mxu0 0.0
        %10506 = vmatprep.subr.mxu0 0.0
        %10507 = vmatpush1.msra.mxu0 0.0
        %10508 = vmatprep.subr.mxu0 0.0
        %10509 = vmatpush1.msra.mxu0 0.0
        %10510 = vmatprep.subr.mxu0 0.0
        %10511 = vmatpush1.msra.mxu0 0.0
        %10512 = vmatprep.subr.mxu0 0.0
        %10513 = vmatpush1.msra.mxu0 0.0
        %10514 = vmatprep.subr.mxu0 0.0
        %10515 = vmatpush1.msra.mxu0 0.0
        %10516 = vmatprep.subr.mxu0 0.0
        %10517 = vmatpush1.msra.mxu0 0.0
        %10518 = vmatprep.subr.mxu0 0.0
        %10519 = vmatpush1.msra.mxu0 0.0
        %10520 = vmatprep.subr.mxu0 0.0
        %10521 = vmatpush1.msra.mxu0 0.0
        %10522 = vmatprep.subr.mxu0 0.0
        %10523 = vmatpush1.msra.mxu0 0.0
        %10524 = vmatprep.subr.mxu0 0.0
        %10525 = vmatpush1.msra.mxu0 0.0
        %10526 = vmatprep.subr.mxu0 0.0
        %10527 = vmatpush1.msra.mxu0 0.0
        %10528 = vmatprep.subr.mxu0 0.0
        %10529 = vmatpush1.msra.mxu0 0.0
        %10530 = vmatprep.subr.mxu0 0.0
        %10531 = vmatpush1.msra.mxu0 0.0
        %10532 = vmatprep.mubr.f32.mxu0 0.0
        %10533 = vmatmul.mubr.f32.gmra.mrb[0].mxu0 %v9796
        %v10534 = vpop.f32.mrb[0].mxu0
        %v10535 = vadd.f32 0.0, %v10534
        %v10536 = vpop.f32.mrb[0].mxu0
        %v10537 = vadd.f32 0.0, %v10536
        %10538 = vmatprep.mubr.f32.mxu0 0.0
        %10539 = vmatmul.mubr.f32.gmra.mrb[0].mxu0 %v9799
        %v10540 = vpop.f32.mrb[0].mxu0
        %v10541 = vadd.f32 0.0, %v10540
        %v10542 = vpop.f32.mrb[0].mxu0
        %v10543 = vadd.f32 0.0, %v10542
        %10544 = vmatprep.mubr.f32.mxu0 0.0
        %10545 = vmatmul.mubr.f32.gmra.mrb[0].mxu0 %v9802
        %v10546 = vpop.f32.mrb[0].mxu0
        %v10547 = vadd.f32 0.0, %v10546
        %v10548 = vpop.f32.mrb[0].mxu0
        %v10549 = vadd.f32 0.0, %v10548
        %10550 = vdwg.mxu0
        %10551 = vmatprep.subr.mxu0 %v9732
        %10552 = vmatpush1.msra.mxu0 %v9731
        %10553 = vmatprep.subr.mxu0 %v9759
        %10554 = vmatpush1.msra.mxu0 %v9758
        %10555 = vmatprep.subr.mxu0 %v9786
        %10556 = vmatpush1.msra.mxu0 %v9785
        %10557 = vmatprep.subr.mxu0 0.0
        %10558 = vmatpush1.msra.mxu0 0.0
        %10559 = vmatprep.subr.mxu0 0.0
        %10560 = vmatpush1.msra.mxu0 0.0
        %10561 = vmatprep.subr.mxu0 0.0
        %10562 = vmatpush1.msra.mxu0 0.0
        %10563 = vmatprep.subr.mxu0 0.0
        %10564 = vmatpush1.msra.mxu0 0.0
        %10565 = vmatprep.subr.mxu0 0.0
        %10566 = vmatpush1.msra.mxu0 0.0
        %10567 = vmatprep.subr.mxu0 0.0
        %10568 = vmatpush1.msra.mxu0 0.0
        %10569 = vmatprep.subr.mxu0 0.0
        %10570 = vmatpush1.msra.mxu0 0.0
        %10571 = vmatprep.subr.mxu0 0.0
        %10572 = vmatpush1.msra.mxu0 0.0
        %10573 = vmatprep.subr.mxu0 0.0
        %10574 = vmatpush1.msra.mxu0 0.0
        %10575 = vmatprep.subr.mxu0 0.0
        %10576 = vmatpush1.msra.mxu0 0.0
        %10577 = vmatprep.subr.mxu0 0.0
        %10578 = vmatpush1.msra.mxu0 0.0
        %10579 = vmatprep.subr.mxu0 0.0
        %10580 = vmatpush1.msra.mxu0 0.0
        %10581 = vmatprep.subr.mxu0 0.0
        %10582 = vmatpush1.msra.mxu0 0.0
        %10583 = vmatprep.subr.mxu0 0.0
        %10584 = vmatpush1.msra.mxu0 0.0
        %10585 = vmatprep.subr.mxu0 0.0
        %10586 = vmatpush1.msra.mxu0 0.0
        %10587 = vmatprep.subr.mxu0 0.0
        %10588 = vmatpush1.msra.mxu0 0.0
        %10589 = vmatprep.subr.mxu0 0.0
        %10590 = vmatpush1.msra.mxu0 0.0
        %10591 = vmatprep.subr.mxu0 0.0
        %10592 = vmatpush1.msra.mxu0 0.0
        %10593 = vmatprep.subr.mxu0 0.0
        %10594 = vmatpush1.msra.mxu0 0.0
        %10595 = vmatprep.subr.mxu0 0.0
        %10596 = vmatpush1.msra.mxu0 0.0
        %10597 = vmatprep.subr.mxu0 0.0
        %10598 = vmatpush1.msra.mxu0 0.0
        %10599 = vmatprep.subr.mxu0 0.0
        %10600 = vmatpush1.msra.mxu0 0.0
        %10601 = vmatprep.subr.mxu0 0.0
        %10602 = vmatpush1.msra.mxu0 0.0
        %10603 = vmatprep.subr.mxu0 0.0
        %10604 = vmatpush1.msra.mxu0 0.0
        %10605 = vmatprep.subr.mxu0 0.0
        %10606 = vmatpush1.msra.mxu0 0.0
        %10607 = vmatprep.subr.mxu0 0.0
        %10608 = vmatpush1.msra.mxu0 0.0
        %10609 = vmatprep.subr.mxu0 0.0
        %10610 = vmatpush1.msra.mxu0 0.0
        %10611 = vmatprep.subr.mxu0 0.0
        %10612 = vmatpush1.msra.mxu0 0.0
        %10613 = vmatprep.subr.mxu0 0.0
        %10614 = vmatpush1.msra.mxu0 0.0
        %10615 = vmatprep.mubr.f32.mxu0 0.0
        %10616 = vmatmul.mubr.f32.gmra.mrb[0].mxu0 %v9796
        %v10617 = vpop.f32.mrb[0].mxu0
        %v10618 = vadd.f32 0.0, %v10617
        %v10619 = vpop.f32.mrb[0].mxu0
        %v10620 = vadd.f32 0.0, %v10619
        %10621 = vmatprep.mubr.f32.mxu0 0.0
        %10622 = vmatmul.mubr.f32.gmra.mrb[0].mxu0 %v9799
        %v10623 = vpop.f32.mrb[0].mxu0
        %v10624 = vadd.f32 0.0, %v10623
        %v10625 = vpop.f32.mrb[0].mxu0
        %v10626 = vadd.f32 0.0, %v10625
        %10627 = vmatprep.mubr.f32.mxu0 0.0
        %10628 = vmatmul.mubr.f32.gmra.mrb[0].mxu0 %v9802
        %v10629 = vpop.f32.mrb[0].mxu0
        %v10630 = vadd.f32 0.0, %v10629
        %v10631 = vpop.f32.mrb[0].mxu0
        %v10632 = vadd.f32 0.0, %v10631
        %10633 = vdwg.mxu0
        %10634 = vmatprep.subr.mxu0 %v9734
        %10635 = vmatpush1.msra.mxu0 %v9733
        %10636 = vmatprep.subr.mxu0 %v9761
        %10637 = vmatpush1.msra.mxu0 %v9760
        %10638 = vmatprep.subr.mxu0 %v9788
        %10639 = vmatpush1.msra.mxu0 %v9787
        %10640 = vmatprep.subr.mxu0 0.0
        %10641 = vmatpush1.msra.mxu0 0.0
        %10642 = vmatprep.subr.mxu0 0.0
        %10643 = vmatpush1.msra.mxu0 0.0
        %10644 = vmatprep.subr.mxu0 0.0
        %10645 = vmatpush1.msra.mxu0 0.0
        %10646 = vmatprep.subr.mxu0 0.0
        %10647 = vmatpush1.msra.mxu0 0.0
        %10648 = vmatprep.subr.mxu0 0.0
        %10649 = vmatpush1.msra.mxu0 0.0
        %10650 = vmatprep.subr.mxu0 0.0
        %10651 = vmatpush1.msra.mxu0 0.0
        %10652 = vmatprep.subr.mxu0 0.0
        %10653 = vmatpush1.msra.mxu0 0.0
        %10654 = vmatprep.subr.mxu0 0.0
        %10655 = vmatpush1.msra.mxu0 0.0
        %10656 = vmatprep.subr.mxu0 0.0
        %10657 = vmatpush1.msra.mxu0 0.0
        %10658 = vmatprep.subr.mxu0 0.0
        %10659 = vmatpush1.msra.mxu0 0.0
        %10660 = vmatprep.subr.mxu0 0.0
        %10661 = vmatpush1.msra.mxu0 0.0
        %10662 = vmatprep.subr.mxu0 0.0
        %10663 = vmatpush1.msra.mxu0 0.0
        %10664 = vmatprep.subr.mxu0 0.0
        %10665 = vmatpush1.msra.mxu0 0.0
        %10666 = vmatprep.subr.mxu0 0.0
        %10667 = vmatpush1.msra.mxu0 0.0
        %10668 = vmatprep.subr.mxu0 0.0
        %10669 = vmatpush1.msra.mxu0 0.0
        %10670 = vmatprep.subr.mxu0 0.0
        %10671 = vmatpush1.msra.mxu0 0.0
        %10672 = vmatprep.subr.mxu0 0.0
        %10673 = vmatpush1.msra.mxu0 0.0
        %10674 = vmatprep.subr.mxu0 0.0
        %10675 = vmatpush1.msra.mxu0 0.0
        %10676 = vmatprep.subr.mxu0 0.0
        %10677 = vmatpush1.msra.mxu0 0.0
        %10678 = vmatprep.subr.mxu0 0.0
        %10679 = vmatpush1.msra.mxu0 0.0
        %10680 = vmatprep.subr.mxu0 0.0
        %10681 = vmatpush1.msra.mxu0 0.0
        %10682 = vmatprep.subr.mxu0 0.0
        %10683 = vmatpush1.msra.mxu0 0.0
        %10684 = vmatprep.subr.mxu0 0.0
        %10685 = vmatpush1.msra.mxu0 0.0
        %10686 = vmatprep.subr.mxu0 0.0
        %10687 = vmatpush1.msra.mxu0 0.0
        %10688 = vmatprep.subr.mxu0 0.0
        %10689 = vmatpush1.msra.mxu0 0.0
        %10690 = vmatprep.subr.mxu0 0.0
        %10691 = vmatpush1.msra.mxu0 0.0
        %10692 = vmatprep.subr.mxu0 0.0
        %10693 = vmatpush1.msra.mxu0 0.0
        %10694 = vmatprep.subr.mxu0 0.0
        %10695 = vmatpush1.msra.mxu0 0.0
        %10696 = vmatprep.subr.mxu0 0.0
        %10697 = vmatpush1.msra.mxu0 0.0
        %10698 = vmatprep.mubr.f32.mxu0 0.0
        %10699 = vmatmul.mubr.f32.gmra.mrb[0].mxu0 %v9796
        %v10700 = vpop.f32.mrb[0].mxu0
        %v10701 = vadd.f32 0.0, %v10700
        %v10702 = vpop.f32.mrb[0].mxu0
        %v10703 = vadd.f32 0.0, %v10702
        %10704 = vmatprep.mubr.f32.mxu0 0.0
        %10705 = vmatmul.mubr.f32.gmra.mrb[0].mxu0 %v9799
        %v10706 = vpop.f32.mrb[0].mxu0
        %v10707 = vadd.f32 0.0, %v10706
        %v10708 = vpop.f32.mrb[0].mxu0
        %v10709 = vadd.f32 0.0, %v10708
        %10710 = vmatprep.mubr.f32.mxu0 0.0
        %10711 = vmatmul.mubr.f32.gmra.mrb[0].mxu0 %v9802
        %v10712 = vpop.f32.mrb[0].mxu0
        %v10713 = vadd.f32 0.0, %v10712
        %v10714 = vpop.f32.mrb[0].mxu0
        %v10715 = vadd.f32 0.0, %v10714
        %10716 = vdwg.mxu0
        %10717 = vmatprep.subr.mxu0 %v9736
        %10718 = vmatpush1.msra.mxu0 %v9735
        %10719 = vmatprep.subr.mxu0 %v9763
        %10720 = vmatpush1.msra.mxu0 %v9762
        %10721 = vmatprep.subr.mxu0 %v9790
        %10722 = vmatpush1.msra.mxu0 %v9789
        %10723 = vmatprep.subr.mxu0 0.0
        %10724 = vmatpush1.msra.mxu0 0.0
        %10725 = vmatprep.subr.mxu0 0.0
        %10726 = vmatpush1.msra.mxu0 0.0
        %10727 = vmatprep.subr.mxu0 0.0
        %10728 = vmatpush1.msra.mxu0 0.0
        %10729 = vmatprep.subr.mxu0 0.0
        %10730 = vmatpush1.msra.mxu0 0.0
        %10731 = vmatprep.subr.mxu0 0.0
        %10732 = vmatpush1.msra.mxu0 0.0
        %10733 = vmatprep.subr.mxu0 0.0
        %10734 = vmatpush1.msra.mxu0 0.0
        %10735 = vmatprep.subr.mxu0 0.0
        %10736 = vmatpush1.msra.mxu0 0.0
        %10737 = vmatprep.subr.mxu0 0.0
        %10738 = vmatpush1.msra.mxu0 0.0
        %10739 = vmatprep.subr.mxu0 0.0
        %10740 = vmatpush1.msra.mxu0 0.0
        %10741 = vmatprep.subr.mxu0 0.0
        %10742 = vmatpush1.msra.mxu0 0.0
        %10743 = vmatprep.subr.mxu0 0.0
        %10744 = vmatpush1.msra.mxu0 0.0
        %10745 = vmatprep.subr.mxu0 0.0
        %10746 = vmatpush1.msra.mxu0 0.0
        %10747 = vmatprep.subr.mxu0 0.0
        %10748 = vmatpush1.msra.mxu0 0.0
        %10749 = vmatprep.subr.mxu0 0.0
        %10750 = vmatpush1.msra.mxu0 0.0
        %10751 = vmatprep.subr.mxu0 0.0
        %10752 = vmatpush1.msra.mxu0 0.0
        %10753 = vmatprep.subr.mxu0 0.0
        %10754 = vmatpush1.msra.mxu0 0.0
        %10755 = vmatprep.subr.mxu0 0.0
        %10756 = vmatpush1.msra.mxu0 0.0
        %10757 = vmatprep.subr.mxu0 0.0
        %10758 = vmatpush1.msra.mxu0 0.0
        %10759 = vmatprep.subr.mxu0 0.0
        %10760 = vmatpush1.msra.mxu0 0.0
        %10761 = vmatprep.subr.mxu0 0.0
        %10762 = vmatpush1.msra.mxu0 0.0
        %10763 = vmatprep.subr.mxu0 0.0
        %10764 = vmatpush1.msra.mxu0 0.0
        %10765 = vmatprep.subr.mxu0 0.0
        %10766 = vmatpush1.msra.mxu0 0.0
        %10767 = vmatprep.subr.mxu0 0.0
        %10768 = vmatpush1.msra.mxu0 0.0
        %10769 = vmatprep.subr.mxu0 0.0
        %10770 = vmatpush1.msra.mxu0 0.0
        %10771 = vmatprep.subr.mxu0 0.0
        %10772 = vmatpush1.msra.mxu0 0.0
        %10773 = vmatprep.subr.mxu0 0.0
        %10774 = vmatpush1.msra.mxu0 0.0
        %10775 = vmatprep.subr.mxu0 0.0
        %10776 = vmatpush1.msra.mxu0 0.0
        %10777 = vmatprep.subr.mxu0 0.0
        %10778 = vmatpush1.msra.mxu0 0.0
        %10779 = vmatprep.subr.mxu0 0.0
        %10780 = vmatpush1.msra.mxu0 0.0
        %10781 = vmatprep.mubr.f32.mxu0 0.0
        %10782 = vmatmul.mubr.f32.gmra.mrb[0].mxu0 %v9796
        %v10783 = vpop.f32.mrb[0].mxu0
        %v10784 = vadd.f32 0.0, %v10783
        %v10785 = vpop.f32.mrb[0].mxu0
        %v10786 = vadd.f32 0.0, %v10785
        %10787 = vmatprep.mubr.f32.mxu0 0.0
        %10788 = vmatmul.mubr.f32.gmra.mrb[0].mxu0 %v9799
        %v10789 = vpop.f32.mrb[0].mxu0
        %v10790 = vadd.f32 0.0, %v10789
        %v10791 = vpop.f32.mrb[0].mxu0
        %v10792 = vadd.f32 0.0, %v10791
        %10793 = vmatprep.mubr.f32.mxu0 0.0
        %10794 = vmatmul.mubr.f32.gmra.mrb[0].mxu0 %v9802
        %v10795 = vpop.f32.mrb[0].mxu0
        %v10796 = vadd.f32 0.0, %v10795
        %v10797 = vpop.f32.mrb[0].mxu0
        %v10798 = vadd.f32 0.0, %v10797
        %10799 = vdwg.mxu0
        %10800 = vmatprep.subr.mxu0 %v9738
        %10801 = vmatpush1.msra.mxu0 %v9737
        %10802 = vmatprep.subr.mxu0 %v9765
        %10803 = vmatpush1.msra.mxu0 %v9764
        %10804 = vmatprep.subr.mxu0 %v9792
        %10805 = vmatpush1.msra.mxu0 %v9791
        %10806 = vmatprep.subr.mxu0 0.0
        %10807 = vmatpush1.msra.mxu0 0.0
        %10808 = vmatprep.subr.mxu0 0.0
        %10809 = vmatpush1.msra.mxu0 0.0
        %10810 = vmatprep.subr.mxu0 0.0
        %10811 = vmatpush1.msra.mxu0 0.0
        %10812 = vmatprep.subr.mxu0 0.0
        %10813 = vmatpush1.msra.mxu0 0.0
        %10814 = vmatprep.subr.mxu0 0.0
        %10815 = vmatpush1.msra.mxu0 0.0
        %10816 = vmatprep.subr.mxu0 0.0
        %10817 = vmatpush1.msra.mxu0 0.0
        %10818 = vmatprep.subr.mxu0 0.0
        %10819 = vmatpush1.msra.mxu0 0.0
        %10820 = vmatprep.subr.mxu0 0.0
        %10821 = vmatpush1.msra.mxu0 0.0
        %10822 = vmatprep.subr.mxu0 0.0
        %10823 = vmatpush1.msra.mxu0 0.0
        %10824 = vmatprep.subr.mxu0 0.0
        %10825 = vmatpush1.msra.mxu0 0.0
        %10826 = vmatprep.subr.mxu0 0.0
        %10827 = vmatpush1.msra.mxu0 0.0
        %10828 = vmatprep.subr.mxu0 0.0
        %10829 = vmatpush1.msra.mxu0 0.0
        %10830 = vmatprep.subr.mxu0 0.0
        %10831 = vmatpush1.msra.mxu0 0.0
        %10832 = vmatprep.subr.mxu0 0.0
        %10833 = vmatpush1.msra.mxu0 0.0
        %10834 = vmatprep.subr.mxu0 0.0
        %10835 = vmatpush1.msra.mxu0 0.0
        %10836 = vmatprep.subr.mxu0 0.0
        %10837 = vmatpush1.msra.mxu0 0.0
        %10838 = vmatprep.subr.mxu0 0.0
        %10839 = vmatpush1.msra.mxu0 0.0
        %10840 = vmatprep.subr.mxu0 0.0
        %10841 = vmatpush1.msra.mxu0 0.0
        %10842 = vmatprep.subr.mxu0 0.0
        %10843 = vmatpush1.msra.mxu0 0.0
        %10844 = vmatprep.subr.mxu0 0.0
        %10845 = vmatpush1.msra.mxu0 0.0
        %10846 = vmatprep.subr.mxu0 0.0
        %10847 = vmatpush1.msra.mxu0 0.0
        %10848 = vmatprep.subr.mxu0 0.0
        %10849 = vmatpush1.msra.mxu0 0.0
        %10850 = vmatprep.subr.mxu0 0.0
        %10851 = vmatpush1.msra.mxu0 0.0
        %10852 = vmatprep.subr.mxu0 0.0
        %10853 = vmatpush1.msra.mxu0 0.0
        %10854 = vmatprep.subr.mxu0 0.0
        %10855 = vmatpush1.msra.mxu0 0.0
        %10856 = vmatprep.subr.mxu0 0.0
        %10857 = vmatpush1.msra.mxu0 0.0
        %10858 = vmatprep.subr.mxu0 0.0
        %10859 = vmatpush1.msra.mxu0 0.0
        %10860 = vmatprep.subr.mxu0 0.0
        %10861 = vmatpush1.msra.mxu0 0.0
        %10862 = vmatprep.subr.mxu0 0.0
        %10863 = vmatpush1.msra.mxu0 0.0
        %10864 = vmatprep.mubr.f32.mxu0 0.0
        %10865 = vmatmul.mubr.f32.gmra.mrb[0].mxu0 %v9796
        %v10866 = vpop.f32.mrb[0].mxu0
        %v10867 = vadd.f32 0.0, %v10866
        %v10868 = vpop.f32.mrb[0].mxu0
        %v10869 = vadd.f32 0.0, %v10868
        %10870 = vmatprep.mubr.f32.mxu0 0.0
        %10871 = vmatmul.mubr.f32.gmra.mrb[0].mxu0 %v9799
        %v10872 = vpop.f32.mrb[0].mxu0
        %v10873 = vadd.f32 0.0, %v10872
        %v10874 = vpop.f32.mrb[0].mxu0
        %v10875 = vadd.f32 0.0, %v10874
        %10876 = vmatprep.mubr.f32.mxu0 0.0
        %10877 = vmatmul.mubr.f32.gmra.mrb[0].mxu0 %v9802
        %v10878 = vpop.f32.mrb[0].mxu0
        %v10879 = vadd.f32 0.0, %v10878
        %v10880 = vpop.f32.mrb[0].mxu0
        %v10881 = vadd.f32 0.0, %v10880
        %10882 = vdwg.mxu0
        %10883 = vmatprep.subr.mxu0 0.0
        %10884 = vmatpush1.msra.mxu0 %v9739
        %10885 = vmatprep.subr.mxu0 0.0
        %10886 = vmatpush1.msra.mxu0 %v9766
        %10887 = vmatprep.subr.mxu0 0.0
        %10888 = vmatpush1.msra.mxu0 %v9793
        %10889 = vmatprep.subr.mxu0 0.0
        %10890 = vmatpush1.msra.mxu0 0.0
        %10891 = vmatprep.subr.mxu0 0.0
        %10892 = vmatpush1.msra.mxu0 0.0
        %10893 = vmatprep.subr.mxu0 0.0
        %10894 = vmatpush1.msra.mxu0 0.0
        %10895 = vmatprep.subr.mxu0 0.0
        %10896 = vmatpush1.msra.mxu0 0.0
        %10897 = vmatprep.subr.mxu0 0.0
        %10898 = vmatpush1.msra.mxu0 0.0
        %10899 = vmatprep.subr.mxu0 0.0
        %10900 = vmatpush1.msra.mxu0 0.0
        %10901 = vmatprep.subr.mxu0 0.0
        %10902 = vmatpush1.msra.mxu0 0.0
        %10903 = vmatprep.subr.mxu0 0.0
        %10904 = vmatpush1.msra.mxu0 0.0
        %10905 = vmatprep.subr.mxu0 0.0
        %10906 = vmatpush1.msra.mxu0 0.0
        %10907 = vmatprep.subr.mxu0 0.0
        %10908 = vmatpush1.msra.mxu0 0.0
        %10909 = vmatprep.subr.mxu0 0.0
        %10910 = vmatpush1.msra.mxu0 0.0
        %10911 = vmatprep.subr.mxu0 0.0
        %10912 = vmatpush1.msra.mxu0 0.0
        %10913 = vmatprep.subr.mxu0 0.0
        %10914 = vmatpush1.msra.mxu0 0.0
        %10915 = vmatprep.subr.mxu0 0.0
        %10916 = vmatpush1.msra.mxu0 0.0
        %10917 = vmatprep.subr.mxu0 0.0
        %10918 = vmatpush1.msra.mxu0 0.0
        %10919 = vmatprep.subr.mxu0 0.0
        %10920 = vmatpush1.msra.mxu0 0.0
        %10921 = vmatprep.subr.mxu0 0.0
        %10922 = vmatpush1.msra.mxu0 0.0
        %10923 = vmatprep.subr.mxu0 0.0
        %10924 = vmatpush1.msra.mxu0 0.0
        %10925 = vmatprep.subr.mxu0 0.0
        %10926 = vmatpush1.msra.mxu0 0.0
        %10927 = vmatprep.subr.mxu0 0.0
        %10928 = vmatpush1.msra.mxu0 0.0
        %10929 = vmatprep.subr.mxu0 0.0
        %10930 = vmatpush1.msra.mxu0 0.0
        %10931 = vmatprep.subr.mxu0 0.0
        %10932 = vmatpush1.msra.mxu0 0.0
        %10933 = vmatprep.subr.mxu0 0.0
        %10934 = vmatpush1.msra.mxu0 0.0
        %10935 = vmatprep.subr.mxu0 0.0
        %10936 = vmatpush1.msra.mxu0 0.0
        %10937 = vmatprep.subr.mxu0 0.0
        %10938 = vmatpush1.msra.mxu0 0.0
        %10939 = vmatprep.subr.mxu0 0.0
        %10940 = vmatpush1.msra.mxu0 0.0
        %10941 = vmatprep.subr.mxu0 0.0
        %10942 = vmatpush1.msra.mxu0 0.0
        %10943 = vmatprep.subr.mxu0 0.0
        %10944 = vmatpush1.msra.mxu0 0.0
        %10945 = vmatprep.subr.mxu0 0.0
        %10946 = vmatpush1.msra.mxu0 0.0
        %10947 = vmatprep.mubr.f32.mxu0 0.0
        %10948 = vmatmul.mubr.f32.gmra.mrb[0].mxu0 %v9796
        %v10949 = vpop.f32.mrb[0].mxu0
        %v10950 = vadd.f32 0.0, %v10949
        %v10951 = vpop.f32.mrb[0].mxu0
        %10952 = vmatprep.mubr.f32.mxu0 0.0
        %10953 = vmatmul.mubr.f32.gmra.mrb[0].mxu0 %v9799
        %v10954 = vpop.f32.mrb[0].mxu0
        %v10955 = vadd.f32 0.0, %v10954
        %v10956 = vpop.f32.mrb[0].mxu0
        %10957 = vmatprep.mubr.f32.mxu0 0.0
        %10958 = vmatmul.mubr.f32.gmra.mrb[0].mxu0 %v9802
        %v10959 = vpop.f32.mrb[0].mxu0
        %v10960 = vadd.f32 0.0, %v10959
        %v10961 = vpop.f32.mrb[0].mxu0
        %10962 = vdwg.mxu0
        %v10963 = vmul.f32 %v9871, %v2884
        %v10964 = vmul.f32 %v9873, %v2886
        %v10965 = vmul.f32 %v9954, %v2925
        %v10966 = vmul.f32 %v9956, %v2927
        %v10967 = vmul.f32 %v10037, %v2966
        %v10968 = vmul.f32 %v10039, %v2968
        %v10969 = vmul.f32 %v10120, %v3007
        %v10970 = vmul.f32 %v10122, %v3009
        %v10971 = vmul.f32 %v10203, %v3048
        %v10972 = vmul.f32 %v10205, %v3050
        %v10973 = vmul.f32 %v10286, %v3089
        %v10974 = vmul.f32 %v10288, %v3091
        %v10975 = vmul.f32 %v10369, %v3130
        %v10976 = vmul.f32 %v10371, %v3132
        %v10977 = vmul.f32 %v10452, %v3171
        %v10978 = vmul.f32 %v10454, %v3173
        %v10979 = vmul.f32 %v10535, %v3212
        %v10980 = vmul.f32 %v10537, %v3214
        %v10981 = vmul.f32 %v10618, %v3253
        %v10982 = vmul.f32 %v10620, %v3255
        %v10983 = vmul.f32 %v10701, %v3294
        %v10984 = vmul.f32 %v10703, %v3296
        %v10985 = vmul.f32 %v10784, %v3335
        %v10986 = vmul.f32 %v10786, %v3337
        %v10987 = vmul.f32 %v10867, %v3376
        %v10988 = vmul.f32 %v10869, %v3378
        %v10989 = vmul.f32 %v10950, %v3417
        %v11017 = vrot.slane %v6007, 6
        %v11018 = vrot.slane %v6009, 6
        %v11019 = vrot.slane %v6048, 6
        %v11020 = vrot.slane %v6050, 6
        %v11021 = vrot.slane %v6089, 6
        %v11022 = vrot.slane %v6091, 6
        %v11023 = vrot.slane %v6130, 6
        %v11024 = vrot.slane %v6132, 6
        %v11025 = vrot.slane %v6171, 6
        %v11026 = vrot.slane %v6173, 6
        %v11027 = vrot.slane %v6212, 6
        %v11028 = vrot.slane %v6214, 6
        %v11029 = vrot.slane %v6253, 6
        %v11030 = vrot.slane %v6255, 6
        %v11031 = vrot.slane %v6294, 6
        %v11032 = vrot.slane %v6296, 6
        %v11033 = vrot.slane %v6335, 6
        %v11034 = vrot.slane %v6337, 6
        %v11035 = vrot.slane %v6376, 6
        %v11036 = vrot.slane %v6378, 6
        %v11037 = vrot.slane %v6417, 6
        %v11038 = vrot.slane %v6419, 6
        %v11039 = vrot.slane %v6458, 6
        %v11040 = vrot.slane %v6460, 6
        %v11041 = vrot.slane %v6499, 6
        %v11042 = vrot.slane %v6501, 6
        %v11043 = vrot.slane %v6540, 6
        %v11071 = vmul.f32 %v9871, %v11017
        %v11072 = vmul.f32 %v9873, %v11018
        %v11073 = vmul.f32 %v9954, %v11019
        %v11074 = vmul.f32 %v9956, %v11020
        %v11075 = vmul.f32 %v10037, %v11021
        %v11076 = vmul.f32 %v10039, %v11022
        %v11077 = vmul.f32 %v10120, %v11023
        %v11078 = vmul.f32 %v10122, %v11024
        %v11079 = vmul.f32 %v10203, %v11025
        %v11080 = vmul.f32 %v10205, %v11026
        %v11081 = vmul.f32 %v10286, %v11027
        %v11082 = vmul.f32 %v10288, %v11028
        %v11083 = vmul.f32 %v10369, %v11029
        %v11084 = vmul.f32 %v10371, %v11030
        %v11085 = vmul.f32 %v10452, %v11031
        %v11086 = vmul.f32 %v10454, %v11032
        %v11087 = vmul.f32 %v10535, %v11033
        %v11088 = vmul.f32 %v10537, %v11034
        %v11089 = vmul.f32 %v10618, %v11035
        %v11090 = vmul.f32 %v10620, %v11036
        %v11091 = vmul.f32 %v10701, %v11037
        %v11092 = vmul.f32 %v10703, %v11038
        %v11093 = vmul.f32 %v10784, %v11039
        %v11094 = vmul.f32 %v10786, %v11040
        %v11095 = vmul.f32 %v10867, %v11041
        %v11096 = vmul.f32 %v10869, %v11042
        %v11097 = vmul.f32 %v10950, %v11043
        %v11125 = vrot.slane %v11071, 2
        %v11126 = vrot.slane %v11072, 2
        %v11127 = vrot.slane %v11073, 2
        %v11128 = vrot.slane %v11074, 2
        %v11129 = vrot.slane %v11075, 2
        %v11130 = vrot.slane %v11076, 2
        %v11131 = vrot.slane %v11077, 2
        %v11132 = vrot.slane %v11078, 2
        %v11133 = vrot.slane %v11079, 2
        %v11134 = vrot.slane %v11080, 2
        %v11135 = vrot.slane %v11081, 2
        %v11136 = vrot.slane %v11082, 2
        %v11137 = vrot.slane %v11083, 2
        %v11138 = vrot.slane %v11084, 2
        %v11139 = vrot.slane %v11085, 2
        %v11140 = vrot.slane %v11086, 2
        %v11141 = vrot.slane %v11087, 2
        %v11142 = vrot.slane %v11088, 2
        %v11143 = vrot.slane %v11089, 2
        %v11144 = vrot.slane %v11090, 2
        %v11145 = vrot.slane %v11091, 2
        %v11146 = vrot.slane %v11092, 2
        %v11147 = vrot.slane %v11093, 2
        %v11148 = vrot.slane %v11094, 2
        %v11149 = vrot.slane %v11095, 2
        %v11150 = vrot.slane %v11096, 2
        %v11151 = vrot.slane %v11097, 2
        %v11179 = vadd.f32 %v10963, %v11125
        %v11180 = vadd.f32 %v10964, %v11126
        %v11181 = vadd.f32 %v10965, %v11127
        %v11182 = vadd.f32 %v10966, %v11128
        %v11183 = vadd.f32 %v10967, %v11129
        %v11184 = vadd.f32 %v10968, %v11130
        %v11185 = vadd.f32 %v10969, %v11131
        %v11186 = vadd.f32 %v10970, %v11132
        %v11187 = vadd.f32 %v10971, %v11133
        %v11188 = vadd.f32 %v10972, %v11134
        %v11189 = vadd.f32 %v10973, %v11135
        %v11190 = vadd.f32 %v10974, %v11136
        %v11191 = vadd.f32 %v10975, %v11137
        %v11192 = vadd.f32 %v10976, %v11138
        %v11193 = vadd.f32 %v10977, %v11139
        %v11194 = vadd.f32 %v10978, %v11140
        %v11195 = vadd.f32 %v10979, %v11141
        %v11196 = vadd.f32 %v10980, %v11142
        %v11197 = vadd.f32 %v10981, %v11143
        %v11198 = vadd.f32 %v10982, %v11144
        %v11199 = vadd.f32 %v10983, %v11145
        %v11200 = vadd.f32 %v10984, %v11146
        %v11201 = vadd.f32 %v10985, %v11147
        %v11202 = vadd.f32 %v10986, %v11148
        %v11203 = vadd.f32 %v10987, %v11149
        %v11204 = vadd.f32 %v10988, %v11150
        %v11205 = vadd.f32 %v10989, %v11151
        %v11233 = vrot.slane %v9130, 4
        %v11234 = vrot.slane %v9132, 4
        %v11235 = vrot.slane %v9171, 4
        %v11236 = vrot.slane %v9173, 4
        %v11237 = vrot.slane %v9212, 4
        %v11238 = vrot.slane %v9214, 4
        %v11239 = vrot.slane %v9253, 4
        %v11240 = vrot.slane %v9255, 4
        %v11241 = vrot.slane %v9294, 4
        %v11242 = vrot.slane %v9296, 4
        %v11243 = vrot.slane %v9335, 4
        %v11244 = vrot.slane %v9337, 4
        %v11245 = vrot.slane %v9376, 4
        %v11246 = vrot.slane %v9378, 4
        %v11247 = vrot.slane %v9417, 4
        %v11248 = vrot.slane %v9419, 4
        %v11249 = vrot.slane %v9458, 4
        %v11250 = vrot.slane %v9460, 4
        %v11251 = vrot.slane %v9499, 4
        %v11252 = vrot.slane %v9501, 4
        %v11253 = vrot.slane %v9540, 4
        %v11254 = vrot.slane %v9542, 4
        %v11255 = vrot.slane %v9581, 4
        %v11256 = vrot.slane %v9583, 4
        %v11257 = vrot.slane %v9622, 4
        %v11258 = vrot.slane %v9624, 4
        %v11259 = vrot.slane %v9663, 4
        %v11287 = vmul.f32 %v9871, %v11233
        %v11288 = vmul.f32 %v9873, %v11234
        %v11289 = vmul.f32 %v9954, %v11235
        %v11290 = vmul.f32 %v9956, %v11236
        %v11291 = vmul.f32 %v10037, %v11237
        %v11292 = vmul.f32 %v10039, %v11238
        %v11293 = vmul.f32 %v10120, %v11239
        %v11294 = vmul.f32 %v10122, %v11240
        %v11295 = vmul.f32 %v10203, %v11241
        %v11296 = vmul.f32 %v10205, %v11242
        %v11297 = vmul.f32 %v10286, %v11243
        %v11298 = vmul.f32 %v10288, %v11244
        %v11299 = vmul.f32 %v10369, %v11245
        %v11300 = vmul.f32 %v10371, %v11246
        %v11301 = vmul.f32 %v10452, %v11247
        %v11302 = vmul.f32 %v10454, %v11248
        %v11303 = vmul.f32 %v10535, %v11249
        %v11304 = vmul.f32 %v10537, %v11250
        %v11305 = vmul.f32 %v10618, %v11251
        %v11306 = vmul.f32 %v10620, %v11252
        %v11307 = vmul.f32 %v10701, %v11253
        %v11308 = vmul.f32 %v10703, %v11254
        %v11309 = vmul.f32 %v10784, %v11255
        %v11310 = vmul.f32 %v10786, %v11256
        %v11311 = vmul.f32 %v10867, %v11257
        %v11312 = vmul.f32 %v10869, %v11258
        %v11313 = vmul.f32 %v10950, %v11259
        %v11341 = vrot.slane %v11287, 4
        %v11342 = vrot.slane %v11288, 4
        %v11343 = vrot.slane %v11289, 4
        %v11344 = vrot.slane %v11290, 4
        %v11345 = vrot.slane %v11291, 4
        %v11346 = vrot.slane %v11292, 4
        %v11347 = vrot.slane %v11293, 4
        %v11348 = vrot.slane %v11294, 4
        %v11349 = vrot.slane %v11295, 4
        %v11350 = vrot.slane %v11296, 4
        %v11351 = vrot.slane %v11297, 4
        %v11352 = vrot.slane %v11298, 4
        %v11353 = vrot.slane %v11299, 4
        %v11354 = vrot.slane %v11300, 4
        %v11355 = vrot.slane %v11301, 4
        %v11356 = vrot.slane %v11302, 4
        %v11357 = vrot.slane %v11303, 4
        %v11358 = vrot.slane %v11304, 4
        %v11359 = vrot.slane %v11305, 4
        %v11360 = vrot.slane %v11306, 4
        %v11361 = vrot.slane %v11307, 4
        %v11362 = vrot.slane %v11308, 4
        %v11363 = vrot.slane %v11309, 4
        %v11364 = vrot.slane %v11310, 4
        %v11365 = vrot.slane %v11311, 4
        %v11366 = vrot.slane %v11312, 4
        %v11367 = vrot.slane %v11313, 4
        %v11395 = vadd.f32 %v11179, %v11341
        %v11396 = vadd.f32 %v11180, %v11342
        %v11397 = vadd.f32 %v11181, %v11343
        %v11398 = vadd.f32 %v11182, %v11344
        %v11399 = vadd.f32 %v11183, %v11345
        %v11400 = vadd.f32 %v11184, %v11346
        %v11401 = vadd.f32 %v11185, %v11347
        %v11402 = vadd.f32 %v11186, %v11348
        %v11403 = vadd.f32 %v11187, %v11349
        %v11404 = vadd.f32 %v11188, %v11350
        %v11405 = vadd.f32 %v11189, %v11351
        %v11406 = vadd.f32 %v11190, %v11352
        %v11407 = vadd.f32 %v11191, %v11353
        %v11408 = vadd.f32 %v11192, %v11354
        %v11409 = vadd.f32 %v11193, %v11355
        %v11410 = vadd.f32 %v11194, %v11356
        %v11411 = vadd.f32 %v11195, %v11357
        %v11412 = vadd.f32 %v11196, %v11358
        %v11413 = vadd.f32 %v11197, %v11359
        %v11414 = vadd.f32 %v11198, %v11360
        %v11415 = vadd.f32 %v11199, %v11361
        %v11416 = vadd.f32 %v11200, %v11362
        %v11417 = vadd.f32 %v11201, %v11363
        %v11418 = vadd.f32 %v11202, %v11364
        %v11419 = vadd.f32 %v11203, %v11365
        %v11420 = vadd.f32 %v11204, %v11366
        %v11421 = vadd.f32 %v11205, %v11367
        %v11449 = vrot.slane %v9871, 6
        %v11450 = vrot.slane %v9873, 6
        %v11451 = vrot.slane %v9954, 6
        %v11452 = vrot.slane %v9956, 6
        %v11453 = vrot.slane %v10037, 6
        %v11454 = vrot.slane %v10039, 6
        %v11455 = vrot.slane %v10120, 6
        %v11456 = vrot.slane %v10122, 6
        %v11457 = vrot.slane %v10203, 6
        %v11458 = vrot.slane %v10205, 6
        %v11459 = vrot.slane %v10286, 6
        %v11460 = vrot.slane %v10288, 6
        %v11461 = vrot.slane %v10369, 6
        %v11462 = vrot.slane %v10371, 6
        %v11463 = vrot.slane %v10452, 6
        %v11464 = vrot.slane %v10454, 6
        %v11465 = vrot.slane %v10535, 6
        %v11466 = vrot.slane %v10537, 6
        %v11467 = vrot.slane %v10618, 6
        %v11468 = vrot.slane %v10620, 6
        %v11469 = vrot.slane %v10701, 6
        %v11470 = vrot.slane %v10703, 6
        %v11471 = vrot.slane %v10784, 6
        %v11472 = vrot.slane %v10786, 6
        %v11473 = vrot.slane %v10867, 6
        %v11474 = vrot.slane %v10869, 6
        %v11475 = vrot.slane %v10950, 6
        %v11503 = vadd.f32 %v11395, %v11449
        %v11504 = vadd.f32 %v11396, %v11450
        %v11505 = vadd.f32 %v11397, %v11451
        %v11506 = vadd.f32 %v11398, %v11452
        %v11507 = vadd.f32 %v11399, %v11453
        %v11508 = vadd.f32 %v11400, %v11454
        %v11509 = vadd.f32 %v11401, %v11455
        %v11510 = vadd.f32 %v11402, %v11456
        %v11511 = vadd.f32 %v11403, %v11457
        %v11512 = vadd.f32 %v11404, %v11458
        %v11513 = vadd.f32 %v11405, %v11459
        %v11514 = vadd.f32 %v11406, %v11460
        %v11515 = vadd.f32 %v11407, %v11461
        %v11516 = vadd.f32 %v11408, %v11462
        %v11517 = vadd.f32 %v11409, %v11463
        %v11518 = vadd.f32 %v11410, %v11464
        %v11519 = vadd.f32 %v11411, %v11465
        %v11520 = vadd.f32 %v11412, %v11466
        %v11521 = vadd.f32 %v11413, %v11467
        %v11522 = vadd.f32 %v11414, %v11468
        %v11523 = vadd.f32 %v11415, %v11469
        %v11524 = vadd.f32 %v11416, %v11470
        %v11525 = vadd.f32 %v11417, %v11471
        %v11526 = vadd.f32 %v11418, %v11472
        %v11527 = vadd.f32 %v11419, %v11473
        %v11528 = vadd.f32 %v11420, %v11474
        %v11529 = vadd.f32 %v11421, %v11475
        %v11557 = vcombine.low %v11503, %v11504
        %v11558 = vcombine.low %v11505, %v11506
        %v11560 = vunpack.c.l.s4 1983009808
        %v11561 = vunpack.c.0.s8 %v11560
        %v11562 = vlaneseq
        %v11563 = vshrl.u32 %v11562, 7
        %v11564 = vsub.s32 %v11561, %v11563
        %v11565 = vrot.slane %v11557, %v11564
        %v11567 = vunpack.c.l.s4 1983009808
        %v11568 = vunpack.c.0.s8 %v11567
        %v11569 = vlaneseq
        %v11570 = vshrl.u32 %v11569, 7
        %v11571 = vsub.s32 %v11568, %v11570
        %v11572 = vrot.slane %v11558, %v11571
        %v11573 = vcombine.low %v11565, %v11572
        %v11574 = vcombine.low %v11507, %v11508
        %v11575 = vcombine.low %v11509, %v11510
        %v11577 = vunpack.c.l.s4 1983009808
        %v11578 = vunpack.c.0.s8 %v11577
        %v11579 = vlaneseq
        %v11580 = vshrl.u32 %v11579, 7
        %v11581 = vsub.s32 %v11578, %v11580
        %v11582 = vrot.slane %v11574, %v11581
        %v11584 = vunpack.c.l.s4 1983009808
        %v11585 = vunpack.c.0.s8 %v11584
        %v11586 = vlaneseq
        %v11587 = vshrl.u32 %v11586, 7
        %v11588 = vsub.s32 %v11585, %v11587
        %v11589 = vrot.slane %v11575, %v11588
        %v11590 = vcombine.low %v11582, %v11589
        %v11591 = vcombine.low %v11511, %v11512
        %v11592 = vcombine.low %v11513, %v11514
        %v11594 = vunpack.c.l.s4 1983009808
        %v11595 = vunpack.c.0.s8 %v11594
        %v11596 = vlaneseq
        %v11597 = vshrl.u32 %v11596, 7
        %v11598 = vsub.s32 %v11595, %v11597
        %v11599 = vrot.slane %v11591, %v11598
        %v11601 = vunpack.c.l.s4 1983009808
        %v11602 = vunpack.c.0.s8 %v11601
        %v11603 = vlaneseq
        %v11604 = vshrl.u32 %v11603, 7
        %v11605 = vsub.s32 %v11602, %v11604
        %v11606 = vrot.slane %v11592, %v11605
        %v11607 = vcombine.low %v11599, %v11606
        %v11608 = vcombine.low %v11515, %v11516
        %v11609 = vcombine.low %v11517, %v11518
        %v11611 = vunpack.c.l.s4 1983009808
        %v11612 = vunpack.c.0.s8 %v11611
        %v11613 = vlaneseq
        %v11614 = vshrl.u32 %v11613, 7
        %v11615 = vsub.s32 %v11612, %v11614
        %v11616 = vrot.slane %v11608, %v11615
        %v11618 = vunpack.c.l.s4 1983009808
        %v11619 = vunpack.c.0.s8 %v11618
        %v11620 = vlaneseq
        %v11621 = vshrl.u32 %v11620, 7
        %v11622 = vsub.s32 %v11619, %v11621
        %v11623 = vrot.slane %v11609, %v11622
        %v11624 = vcombine.low %v11616, %v11623
        %v11625 = vcombine.low %v11519, %v11520
        %v11626 = vcombine.low %v11521, %v11522
        %v11628 = vunpack.c.l.s4 1983009808
        %v11629 = vunpack.c.0.s8 %v11628
        %v11630 = vlaneseq
        %v11631 = vshrl.u32 %v11630, 7
        %v11632 = vsub.s32 %v11629, %v11631
        %v11633 = vrot.slane %v11625, %v11632
        %v11635 = vunpack.c.l.s4 1983009808
        %v11636 = vunpack.c.0.s8 %v11635
        %v11637 = vlaneseq
        %v11638 = vshrl.u32 %v11637, 7
        %v11639 = vsub.s32 %v11636, %v11638
        %v11640 = vrot.slane %v11626, %v11639
        %v11641 = vcombine.low %v11633, %v11640
        %v11642 = vcombine.low %v11523, %v11524
        %v11643 = vcombine.low %v11525, %v11526
        %v11645 = vunpack.c.l.s4 1983009808
        %v11646 = vunpack.c.0.s8 %v11645
        %v11647 = vlaneseq
        %v11648 = vshrl.u32 %v11647, 7
        %v11649 = vsub.s32 %v11646, %v11648
        %v11650 = vrot.slane %v11642, %v11649
        %v11652 = vunpack.c.l.s4 1983009808
        %v11653 = vunpack.c.0.s8 %v11652
        %v11654 = vlaneseq
        %v11655 = vshrl.u32 %v11654, 7
        %v11656 = vsub.s32 %v11653, %v11655
        %v11657 = vrot.slane %v11643, %v11656
        %v11658 = vcombine.low %v11650, %v11657
        %v11659 = vcombine.low %v11527, %v11528
        %v11661 = vunpack.c.l.s4 1983009808
        %v11662 = vunpack.c.0.s8 %v11661
        %v11663 = vlaneseq
        %v11664 = vshrl.u32 %v11663, 7
        %v11665 = vsub.s32 %v11662, %v11664
        %v11666 = vrot.slane %v11659, %v11665
        %v11668 = vunpack.c.l.s4 1983009808
        %v11669 = vunpack.c.0.s8 %v11668
        %v11670 = vlaneseq
        %v11671 = vshrl.u32 %v11670, 7
        %v11672 = vsub.s32 %v11669, %v11671
        %v11673 = vrot.slane %v11529, %v11672
        %v11674 = vcombine.low %v11666, %v11673
        %11682 = vst [vmem:[%s251] sm:$0xff] %v11573
        %11683 = vst [vmem:[%s251 + $0x8] sm:$0xff] %v11590
        %11684 = vst [vmem:[%s251 + $0x10] sm:$0xff] %v11607
        %11685 = vst [vmem:[%s251 + $0x18] sm:$0xff] %v11624
        %11686 = vst [vmem:[%s251 + $0x20] sm:$0xff] %v11641
        %11687 = vst [vmem:[%s251 + $0x28] sm:$0xff] %v11658
        %11688 = vst [vmem:[%s251 + $0x30] sm:$0x3f] %v11674
        %v11689 = vmul.f32 %v9877, %v2884
        %v11690 = vmul.f32 %v9879, %v2886
        %v11691 = vmul.f32 %v9960, %v2925
        %v11692 = vmul.f32 %v9962, %v2927
        %v11693 = vmul.f32 %v10043, %v2966
        %v11694 = vmul.f32 %v10045, %v2968
        %v11695 = vmul.f32 %v10126, %v3007
        %v11696 = vmul.f32 %v10128, %v3009
        %v11697 = vmul.f32 %v10209, %v3048
        %v11698 = vmul.f32 %v10211, %v3050
        %v11699 = vmul.f32 %v10292, %v3089
        %v11700 = vmul.f32 %v10294, %v3091
        %v11701 = vmul.f32 %v10375, %v3130
        %v11702 = vmul.f32 %v10377, %v3132
        %v11703 = vmul.f32 %v10458, %v3171
        %v11704 = vmul.f32 %v10460, %v3173
        %v11705 = vmul.f32 %v10541, %v3212
        %v11706 = vmul.f32 %v10543, %v3214
        %v11707 = vmul.f32 %v10624, %v3253
        %v11708 = vmul.f32 %v10626, %v3255
        %v11709 = vmul.f32 %v10707, %v3294
        %v11710 = vmul.f32 %v10709, %v3296
        %v11711 = vmul.f32 %v10790, %v3335
        %v11712 = vmul.f32 %v10792, %v3337
        %v11713 = vmul.f32 %v10873, %v3376
        %v11714 = vmul.f32 %v10875, %v3378
        %v11715 = vmul.f32 %v10955, %v3417
        %v11716 = vmul.f32 %v9877, %v11017
        %v11717 = vmul.f32 %v9879, %v11018
        %v11718 = vmul.f32 %v9960, %v11019
        %v11719 = vmul.f32 %v9962, %v11020
        %v11720 = vmul.f32 %v10043, %v11021
        %v11721 = vmul.f32 %v10045, %v11022
        %v11722 = vmul.f32 %v10126, %v11023
        %v11723 = vmul.f32 %v10128, %v11024
        %v11724 = vmul.f32 %v10209, %v11025
        %v11725 = vmul.f32 %v10211, %v11026
        %v11726 = vmul.f32 %v10292, %v11027
        %v11727 = vmul.f32 %v10294, %v11028
        %v11728 = vmul.f32 %v10375, %v11029
        %v11729 = vmul.f32 %v10377, %v11030
        %v11730 = vmul.f32 %v10458, %v11031
        %v11731 = vmul.f32 %v10460, %v11032
        %v11732 = vmul.f32 %v10541, %v11033
        %v11733 = vmul.f32 %v10543, %v11034
        %v11734 = vmul.f32 %v10624, %v11035
        %v11735 = vmul.f32 %v10626, %v11036
        %v11736 = vmul.f32 %v10707, %v11037
        %v11737 = vmul.f32 %v10709, %v11038
        %v11738 = vmul.f32 %v10790, %v11039
        %v11739 = vmul.f32 %v10792, %v11040
        %v11740 = vmul.f32 %v10873, %v11041
        %v11741 = vmul.f32 %v10875, %v11042
        %v11742 = vmul.f32 %v10955, %v11043
        %v11770 = vrot.slane %v11716, 2
        %v11771 = vrot.slane %v11717, 2
        %v11772 = vrot.slane %v11718, 2
        %v11773 = vrot.slane %v11719, 2
        %v11774 = vrot.slane %v11720, 2
        %v11775 = vrot.slane %v11721, 2
        %v11776 = vrot.slane %v11722, 2
        %v11777 = vrot.slane %v11723, 2
        %v11778 = vrot.slane %v11724, 2
        %v11779 = vrot.slane %v11725, 2
        %v11780 = vrot.slane %v11726, 2
        %v11781 = vrot.slane %v11727, 2
        %v11782 = vrot.slane %v11728, 2
        %v11783 = vrot.slane %v11729, 2
        %v11784 = vrot.slane %v11730, 2
        %v11785 = vrot.slane %v11731, 2
        %v11786 = vrot.slane %v11732, 2
        %v11787 = vrot.slane %v11733, 2
        %v11788 = vrot.slane %v11734, 2
        %v11789 = vrot.slane %v11735, 2
        %v11790 = vrot.slane %v11736, 2
        %v11791 = vrot.slane %v11737, 2
        %v11792 = vrot.slane %v11738, 2
        %v11793 = vrot.slane %v11739, 2
        %v11794 = vrot.slane %v11740, 2
        %v11795 = vrot.slane %v11741, 2
        %v11796 = vrot.slane %v11742, 2
        %v11824 = vadd.f32 %v11689, %v11770
        %v11825 = vadd.f32 %v11690, %v11771
        %v11826 = vadd.f32 %v11691, %v11772
        %v11827 = vadd.f32 %v11692, %v11773
        %v11828 = vadd.f32 %v11693, %v11774
        %v11829 = vadd.f32 %v11694, %v11775
        %v11830 = vadd.f32 %v11695, %v11776
        %v11831 = vadd.f32 %v11696, %v11777
        %v11832 = vadd.f32 %v11697, %v11778
        %v11833 = vadd.f32 %v11698, %v11779
        %v11834 = vadd.f32 %v11699, %v11780
        %v11835 = vadd.f32 %v11700, %v11781
        %v11836 = vadd.f32 %v11701, %v11782
        %v11837 = vadd.f32 %v11702, %v11783
        %v11838 = vadd.f32 %v11703, %v11784
        %v11839 = vadd.f32 %v11704, %v11785
        %v11840 = vadd.f32 %v11705, %v11786
        %v11841 = vadd.f32 %v11706, %v11787
        %v11842 = vadd.f32 %v11707, %v11788
        %v11843 = vadd.f32 %v11708, %v11789
        %v11844 = vadd.f32 %v11709, %v11790
        %v11845 = vadd.f32 %v11710, %v11791
        %v11846 = vadd.f32 %v11711, %v11792
        %v11847 = vadd.f32 %v11712, %v11793
        %v11848 = vadd.f32 %v11713, %v11794
        %v11849 = vadd.f32 %v11714, %v11795
        %v11850 = vadd.f32 %v11715, %v11796
        %v11851 = vmul.f32 %v9877, %v11233
        %v11852 = vmul.f32 %v9879, %v11234
        %v11853 = vmul.f32 %v9960, %v11235
        %v11854 = vmul.f32 %v9962, %v11236
        %v11855 = vmul.f32 %v10043, %v11237
        %v11856 = vmul.f32 %v10045, %v11238
        %v11857 = vmul.f32 %v10126, %v11239
        %v11858 = vmul.f32 %v10128, %v11240
        %v11859 = vmul.f32 %v10209, %v11241
        %v11860 = vmul.f32 %v10211, %v11242
        %v11861 = vmul.f32 %v10292, %v11243
        %v11862 = vmul.f32 %v10294, %v11244
        %v11863 = vmul.f32 %v10375, %v11245
        %v11864 = vmul.f32 %v10377, %v11246
        %v11865 = vmul.f32 %v10458, %v11247
        %v11866 = vmul.f32 %v10460, %v11248
        %v11867 = vmul.f32 %v10541, %v11249
        %v11868 = vmul.f32 %v10543, %v11250
        %v11869 = vmul.f32 %v10624, %v11251
        %v11870 = vmul.f32 %v10626, %v11252
        %v11871 = vmul.f32 %v10707, %v11253
        %v11872 = vmul.f32 %v10709, %v11254
        %v11873 = vmul.f32 %v10790, %v11255
        %v11874 = vmul.f32 %v10792, %v11256
        %v11875 = vmul.f32 %v10873, %v11257
        %v11876 = vmul.f32 %v10875, %v11258
        %v11877 = vmul.f32 %v10955, %v11259
        %v11905 = vrot.slane %v11851, 4
        %v11906 = vrot.slane %v11852, 4
        %v11907 = vrot.slane %v11853, 4
        %v11908 = vrot.slane %v11854, 4
        %v11909 = vrot.slane %v11855, 4
        %v11910 = vrot.slane %v11856, 4
        %v11911 = vrot.slane %v11857, 4
        %v11912 = vrot.slane %v11858, 4
        %v11913 = vrot.slane %v11859, 4
        %v11914 = vrot.slane %v11860, 4
        %v11915 = vrot.slane %v11861, 4
        %v11916 = vrot.slane %v11862, 4
        %v11917 = vrot.slane %v11863, 4
        %v11918 = vrot.slane %v11864, 4
        %v11919 = vrot.slane %v11865, 4
        %v11920 = vrot.slane %v11866, 4
        %v11921 = vrot.slane %v11867, 4
        %v11922 = vrot.slane %v11868, 4
        %v11923 = vrot.slane %v11869, 4
        %v11924 = vrot.slane %v11870, 4
        %v11925 = vrot.slane %v11871, 4
        %v11926 = vrot.slane %v11872, 4
        %v11927 = vrot.slane %v11873, 4
        %v11928 = vrot.slane %v11874, 4
        %v11929 = vrot.slane %v11875, 4
        %v11930 = vrot.slane %v11876, 4
        %v11931 = vrot.slane %v11877, 4
        %v11959 = vadd.f32 %v11824, %v11905
        %v11960 = vadd.f32 %v11825, %v11906
        %v11961 = vadd.f32 %v11826, %v11907
        %v11962 = vadd.f32 %v11827, %v11908
        %v11963 = vadd.f32 %v11828, %v11909
        %v11964 = vadd.f32 %v11829, %v11910
        %v11965 = vadd.f32 %v11830, %v11911
        %v11966 = vadd.f32 %v11831, %v11912
        %v11967 = vadd.f32 %v11832, %v11913
        %v11968 = vadd.f32 %v11833, %v11914
        %v11969 = vadd.f32 %v11834, %v11915
        %v11970 = vadd.f32 %v11835, %v11916
        %v11971 = vadd.f32 %v11836, %v11917
        %v11972 = vadd.f32 %v11837, %v11918
        %v11973 = vadd.f32 %v11838, %v11919
        %v11974 = vadd.f32 %v11839, %v11920
        %v11975 = vadd.f32 %v11840, %v11921
        %v11976 = vadd.f32 %v11841, %v11922
        %v11977 = vadd.f32 %v11842, %v11923
        %v11978 = vadd.f32 %v11843, %v11924
        %v11979 = vadd.f32 %v11844, %v11925
        %v11980 = vadd.f32 %v11845, %v11926
        %v11981 = vadd.f32 %v11846, %v11927
        %v11982 = vadd.f32 %v11847, %v11928
        %v11983 = vadd.f32 %v11848, %v11929
        %v11984 = vadd.f32 %v11849, %v11930
        %v11985 = vadd.f32 %v11850, %v11931
        %v12013 = vrot.slane %v9877, 6
        %v12014 = vrot.slane %v9879, 6
        %v12015 = vrot.slane %v9960, 6
        %v12016 = vrot.slane %v9962, 6
        %v12017 = vrot.slane %v10043, 6
        %v12018 = vrot.slane %v10045, 6
        %v12019 = vrot.slane %v10126, 6
        %v12020 = vrot.slane %v10128, 6
        %v12021 = vrot.slane %v10209, 6
        %v12022 = vrot.slane %v10211, 6
        %v12023 = vrot.slane %v10292, 6
        %v12024 = vrot.slane %v10294, 6
        %v12025 = vrot.slane %v10375, 6
        %v12026 = vrot.slane %v10377, 6
        %v12027 = vrot.slane %v10458, 6
        %v12028 = vrot.slane %v10460, 6
        %v12029 = vrot.slane %v10541, 6
        %v12030 = vrot.slane %v10543, 6
        %v12031 = vrot.slane %v10624, 6
        %v12032 = vrot.slane %v10626, 6
        %v12033 = vrot.slane %v10707, 6
        %v12034 = vrot.slane %v10709, 6
        %v12035 = vrot.slane %v10790, 6
        %v12036 = vrot.slane %v10792, 6
        %v12037 = vrot.slane %v10873, 6
        %v12038 = vrot.slane %v10875, 6
        %v12039 = vrot.slane %v10955, 6
        %v12067 = vadd.f32 %v11959, %v12013
        %v12068 = vadd.f32 %v11960, %v12014
        %v12069 = vadd.f32 %v11961, %v12015
        %v12070 = vadd.f32 %v11962, %v12016
        %v12071 = vadd.f32 %v11963, %v12017
        %v12072 = vadd.f32 %v11964, %v12018
        %v12073 = vadd.f32 %v11965, %v12019
        %v12074 = vadd.f32 %v11966, %v12020
        %v12075 = vadd.f32 %v11967, %v12021
        %v12076 = vadd.f32 %v11968, %v12022
        %v12077 = vadd.f32 %v11969, %v12023
        %v12078 = vadd.f32 %v11970, %v12024
        %v12079 = vadd.f32 %v11971, %v12025
        %v12080 = vadd.f32 %v11972, %v12026
        %v12081 = vadd.f32 %v11973, %v12027
        %v12082 = vadd.f32 %v11974, %v12028
        %v12083 = vadd.f32 %v11975, %v12029
        %v12084 = vadd.f32 %v11976, %v12030
        %v12085 = vadd.f32 %v11977, %v12031
        %v12086 = vadd.f32 %v11978, %v12032
        %v12087 = vadd.f32 %v11979, %v12033
        %v12088 = vadd.f32 %v11980, %v12034
        %v12089 = vadd.f32 %v11981, %v12035
        %v12090 = vadd.f32 %v11982, %v12036
        %v12091 = vadd.f32 %v11983, %v12037
        %v12092 = vadd.f32 %v11984, %v12038
        %v12093 = vadd.f32 %v11985, %v12039
        %v12121 = vcombine.low %v12067, %v12068
        %v12122 = vcombine.low %v12069, %v12070
        %v12124 = vunpack.c.l.s4 1983009808
        %v12125 = vunpack.c.0.s8 %v12124
        %v12126 = vlaneseq
        %v12127 = vshrl.u32 %v12126, 7
        %v12128 = vsub.s32 %v12125, %v12127
        %v12129 = vrot.slane %v12121, %v12128
        %v12131 = vunpack.c.l.s4 1983009808
        %v12132 = vunpack.c.0.s8 %v12131
        %v12133 = vlaneseq
        %v12134 = vshrl.u32 %v12133, 7
        %v12135 = vsub.s32 %v12132, %v12134
        %v12136 = vrot.slane %v12122, %v12135
        %v12137 = vcombine.low %v12129, %v12136
        %v12138 = vcombine.low %v12071, %v12072
        %v12139 = vcombine.low %v12073, %v12074
        %v12141 = vunpack.c.l.s4 1983009808
        %v12142 = vunpack.c.0.s8 %v12141
        %v12143 = vlaneseq
        %v12144 = vshrl.u32 %v12143, 7
        %v12145 = vsub.s32 %v12142, %v12144
        %v12146 = vrot.slane %v12138, %v12145
        %v12148 = vunpack.c.l.s4 1983009808
        %v12149 = vunpack.c.0.s8 %v12148
        %v12150 = vlaneseq
        %v12151 = vshrl.u32 %v12150, 7
        %v12152 = vsub.s32 %v12149, %v12151
        %v12153 = vrot.slane %v12139, %v12152
        %v12154 = vcombine.low %v12146, %v12153
        %v12155 = vcombine.low %v12075, %v12076
        %v12156 = vcombine.low %v12077, %v12078
        %v12158 = vunpack.c.l.s4 1983009808
        %v12159 = vunpack.c.0.s8 %v12158
        %v12160 = vlaneseq
        %v12161 = vshrl.u32 %v12160, 7
        %v12162 = vsub.s32 %v12159, %v12161
        %v12163 = vrot.slane %v12155, %v12162
        %v12165 = vunpack.c.l.s4 1983009808
        %v12166 = vunpack.c.0.s8 %v12165
        %v12167 = vlaneseq
        %v12168 = vshrl.u32 %v12167, 7
        %v12169 = vsub.s32 %v12166, %v12168
        %v12170 = vrot.slane %v12156, %v12169
        %v12171 = vcombine.low %v12163, %v12170
        %v12172 = vcombine.low %v12079, %v12080
        %v12173 = vcombine.low %v12081, %v12082
        %v12175 = vunpack.c.l.s4 1983009808
        %v12176 = vunpack.c.0.s8 %v12175
        %v12177 = vlaneseq
        %v12178 = vshrl.u32 %v12177, 7
        %v12179 = vsub.s32 %v12176, %v12178
        %v12180 = vrot.slane %v12172, %v12179
        %v12182 = vunpack.c.l.s4 1983009808
        %v12183 = vunpack.c.0.s8 %v12182
        %v12184 = vlaneseq
        %v12185 = vshrl.u32 %v12184, 7
        %v12186 = vsub.s32 %v12183, %v12185
        %v12187 = vrot.slane %v12173, %v12186
        %v12188 = vcombine.low %v12180, %v12187
        %v12189 = vcombine.low %v12083, %v12084
        %v12190 = vcombine.low %v12085, %v12086
        %v12192 = vunpack.c.l.s4 1983009808
        %v12193 = vunpack.c.0.s8 %v12192
        %v12194 = vlaneseq
        %v12195 = vshrl.u32 %v12194, 7
        %v12196 = vsub.s32 %v12193, %v12195
        %v12197 = vrot.slane %v12189, %v12196
        %v12199 = vunpack.c.l.s4 1983009808
        %v12200 = vunpack.c.0.s8 %v12199
        %v12201 = vlaneseq
        %v12202 = vshrl.u32 %v12201, 7
        %v12203 = vsub.s32 %v12200, %v12202
        %v12204 = vrot.slane %v12190, %v12203
        %v12205 = vcombine.low %v12197, %v12204
        %v12206 = vcombine.low %v12087, %v12088
        %v12207 = vcombine.low %v12089, %v12090
        %v12209 = vunpack.c.l.s4 1983009808
        %v12210 = vunpack.c.0.s8 %v12209
        %v12211 = vlaneseq
        %v12212 = vshrl.u32 %v12211, 7
        %v12213 = vsub.s32 %v12210, %v12212
        %v12214 = vrot.slane %v12206, %v12213
        %v12216 = vunpack.c.l.s4 1983009808
        %v12217 = vunpack.c.0.s8 %v12216
        %v12218 = vlaneseq
        %v12219 = vshrl.u32 %v12218, 7
        %v12220 = vsub.s32 %v12217, %v12219
        %v12221 = vrot.slane %v12207, %v12220
        %v12222 = vcombine.low %v12214, %v12221
        %v12223 = vcombine.low %v12091, %v12092
        %v12225 = vunpack.c.l.s4 1983009808
        %v12226 = vunpack.c.0.s8 %v12225
        %v12227 = vlaneseq
        %v12228 = vshrl.u32 %v12227, 7
        %v12229 = vsub.s32 %v12226, %v12228
        %v12230 = vrot.slane %v12223, %v12229
        %v12232 = vunpack.c.l.s4 1983009808
        %v12233 = vunpack.c.0.s8 %v12232
        %v12234 = vlaneseq
        %v12235 = vshrl.u32 %v12234, 7
        %v12236 = vsub.s32 %v12233, %v12235
        %v12237 = vrot.slane %v12093, %v12236
        %v12238 = vcombine.low %v12230, %v12237
        %s12246 = scalar_lea.vmem %s251, 54 [#allocation6]
        %12247 = vst [vmem:[%s12246] sm:$0xff] %v12137
        %12248 = vst [vmem:[%s12246 + $0x8] sm:$0xff] %v12154
        %12249 = vst [vmem:[%s12246 + $0x10] sm:$0xff] %v12171
        %12250 = vst [vmem:[%s12246 + $0x18] sm:$0xff] %v12188
        %12251 = vst [vmem:[%s12246 + $0x20] sm:$0xff] %v12205
        %12252 = vst [vmem:[%s12246 + $0x28] sm:$0xff] %v12222
        %12253 = vst [vmem:[%s12246 + $0x30] sm:$0x3f] %v12238
        %v12254 = vmul.f32 %v9883, %v2884
        %v12255 = vmul.f32 %v9885, %v2886
        %v12256 = vmul.f32 %v9966, %v2925
        %v12257 = vmul.f32 %v9968, %v2927
        %v12258 = vmul.f32 %v10049, %v2966
        %v12259 = vmul.f32 %v10051, %v2968
        %v12260 = vmul.f32 %v10132, %v3007
        %v12261 = vmul.f32 %v10134, %v3009
        %v12262 = vmul.f32 %v10215, %v3048
        %v12263 = vmul.f32 %v10217, %v3050
        %v12264 = vmul.f32 %v10298, %v3089
        %v12265 = vmul.f32 %v10300, %v3091
        %v12266 = vmul.f32 %v10381, %v3130
        %v12267 = vmul.f32 %v10383, %v3132
        %v12268 = vmul.f32 %v10464, %v3171
        %v12269 = vmul.f32 %v10466, %v3173
        %v12270 = vmul.f32 %v10547, %v3212
        %v12271 = vmul.f32 %v10549, %v3214
        %v12272 = vmul.f32 %v10630, %v3253
        %v12273 = vmul.f32 %v10632, %v3255
        %v12274 = vmul.f32 %v10713, %v3294
        %v12275 = vmul.f32 %v10715, %v3296
        %v12276 = vmul.f32 %v10796, %v3335
        %v12277 = vmul.f32 %v10798, %v3337
        %v12278 = vmul.f32 %v10879, %v3376
        %v12279 = vmul.f32 %v10881, %v3378
        %v12280 = vmul.f32 %v10960, %v3417
        %v12281 = vmul.f32 %v9883, %v11017
        %v12282 = vmul.f32 %v9885, %v11018
        %v12283 = vmul.f32 %v9966, %v11019
        %v12284 = vmul.f32 %v9968, %v11020
        %v12285 = vmul.f32 %v10049, %v11021
        %v12286 = vmul.f32 %v10051, %v11022
        %v12287 = vmul.f32 %v10132, %v11023
        %v12288 = vmul.f32 %v10134, %v11024
        %v12289 = vmul.f32 %v10215, %v11025
        %v12290 = vmul.f32 %v10217, %v11026
        %v12291 = vmul.f32 %v10298, %v11027
        %v12292 = vmul.f32 %v10300, %v11028
        %v12293 = vmul.f32 %v10381, %v11029
        %v12294 = vmul.f32 %v10383, %v11030
        %v12295 = vmul.f32 %v10464, %v11031
        %v12296 = vmul.f32 %v10466, %v11032
        %v12297 = vmul.f32 %v10547, %v11033
        %v12298 = vmul.f32 %v10549, %v11034
        %v12299 = vmul.f32 %v10630, %v11035
        %v12300 = vmul.f32 %v10632, %v11036
        %v12301 = vmul.f32 %v10713, %v11037
        %v12302 = vmul.f32 %v10715, %v11038
        %v12303 = vmul.f32 %v10796, %v11039
        %v12304 = vmul.f32 %v10798, %v11040
        %v12305 = vmul.f32 %v10879, %v11041
        %v12306 = vmul.f32 %v10881, %v11042
        %v12307 = vmul.f32 %v10960, %v11043
        %v12335 = vrot.slane %v12281, 2
        %v12336 = vrot.slane %v12282, 2
        %v12337 = vrot.slane %v12283, 2
        %v12338 = vrot.slane %v12284, 2
        %v12339 = vrot.slane %v12285, 2
        %v12340 = vrot.slane %v12286, 2
        %v12341 = vrot.slane %v12287, 2
        %v12342 = vrot.slane %v12288, 2
        %v12343 = vrot.slane %v12289, 2
        %v12344 = vrot.slane %v12290, 2
        %v12345 = vrot.slane %v12291, 2
        %v12346 = vrot.slane %v12292, 2
        %v12347 = vrot.slane %v12293, 2
        %v12348 = vrot.slane %v12294, 2
        %v12349 = vrot.slane %v12295, 2
        %v12350 = vrot.slane %v12296, 2
        %v12351 = vrot.slane %v12297, 2
        %v12352 = vrot.slane %v12298, 2
        %v12353 = vrot.slane %v12299, 2
        %v12354 = vrot.slane %v12300, 2
        %v12355 = vrot.slane %v12301, 2
        %v12356 = vrot.slane %v12302, 2
        %v12357 = vrot.slane %v12303, 2
        %v12358 = vrot.slane %v12304, 2
        %v12359 = vrot.slane %v12305, 2
        %v12360 = vrot.slane %v12306, 2
        %v12361 = vrot.slane %v12307, 2
        %v12389 = vadd.f32 %v12254, %v12335
        %v12390 = vadd.f32 %v12255, %v12336
        %v12391 = vadd.f32 %v12256, %v12337
        %v12392 = vadd.f32 %v12257, %v12338
        %v12393 = vadd.f32 %v12258, %v12339
        %v12394 = vadd.f32 %v12259, %v12340
        %v12395 = vadd.f32 %v12260, %v12341
        %v12396 = vadd.f32 %v12261, %v12342
        %v12397 = vadd.f32 %v12262, %v12343
        %v12398 = vadd.f32 %v12263, %v12344
        %v12399 = vadd.f32 %v12264, %v12345
        %v12400 = vadd.f32 %v12265, %v12346
        %v12401 = vadd.f32 %v12266, %v12347
        %v12402 = vadd.f32 %v12267, %v12348
        %v12403 = vadd.f32 %v12268, %v12349
        %v12404 = vadd.f32 %v12269, %v12350
        %v12405 = vadd.f32 %v12270, %v12351
        %v12406 = vadd.f32 %v12271, %v12352
        %v12407 = vadd.f32 %v12272, %v12353
        %v12408 = vadd.f32 %v12273, %v12354
        %v12409 = vadd.f32 %v12274, %v12355
        %v12410 = vadd.f32 %v12275, %v12356
        %v12411 = vadd.f32 %v12276, %v12357
        %v12412 = vadd.f32 %v12277, %v12358
        %v12413 = vadd.f32 %v12278, %v12359
        %v12414 = vadd.f32 %v12279, %v12360
        %v12415 = vadd.f32 %v12280, %v12361
        %v12416 = vmul.f32 %v9883, %v11233
        %v12417 = vmul.f32 %v9885, %v11234
        %v12418 = vmul.f32 %v9966, %v11235
        %v12419 = vmul.f32 %v9968, %v11236
        %v12420 = vmul.f32 %v10049, %v11237
        %v12421 = vmul.f32 %v10051, %v11238
        %v12422 = vmul.f32 %v10132, %v11239
        %v12423 = vmul.f32 %v10134, %v11240
        %v12424 = vmul.f32 %v10215, %v11241
        %v12425 = vmul.f32 %v10217, %v11242
        %v12426 = vmul.f32 %v10298, %v11243
        %v12427 = vmul.f32 %v10300, %v11244
        %v12428 = vmul.f32 %v10381, %v11245
        %v12429 = vmul.f32 %v10383, %v11246
        %v12430 = vmul.f32 %v10464, %v11247
        %v12431 = vmul.f32 %v10466, %v11248
        %v12432 = vmul.f32 %v10547, %v11249
        %v12433 = vmul.f32 %v10549, %v11250
        %v12434 = vmul.f32 %v10630, %v11251
        %v12435 = vmul.f32 %v10632, %v11252
        %v12436 = vmul.f32 %v10713, %v11253
        %v12437 = vmul.f32 %v10715, %v11254
        %v12438 = vmul.f32 %v10796, %v11255
        %v12439 = vmul.f32 %v10798, %v11256
        %v12440 = vmul.f32 %v10879, %v11257
        %v12441 = vmul.f32 %v10881, %v11258
        %v12442 = vmul.f32 %v10960, %v11259
        %v12470 = vrot.slane %v12416, 4
        %v12471 = vrot.slane %v12417, 4
        %v12472 = vrot.slane %v12418, 4
        %v12473 = vrot.slane %v12419, 4
        %v12474 = vrot.slane %v12420, 4
        %v12475 = vrot.slane %v12421, 4
        %v12476 = vrot.slane %v12422, 4
        %v12477 = vrot.slane %v12423, 4
        %v12478 = vrot.slane %v12424, 4
        %v12479 = vrot.slane %v12425, 4
        %v12480 = vrot.slane %v12426, 4
        %v12481 = vrot.slane %v12427, 4
        %v12482 = vrot.slane %v12428, 4
        %v12483 = vrot.slane %v12429, 4
        %v12484 = vrot.slane %v12430, 4
        %v12485 = vrot.slane %v12431, 4
        %v12486 = vrot.slane %v12432, 4
        %v12487 = vrot.slane %v12433, 4
        %v12488 = vrot.slane %v12434, 4
        %v12489 = vrot.slane %v12435, 4
        %v12490 = vrot.slane %v12436, 4
        %v12491 = vrot.slane %v12437, 4
        %v12492 = vrot.slane %v12438, 4
        %v12493 = vrot.slane %v12439, 4
        %v12494 = vrot.slane %v12440, 4
        %v12495 = vrot.slane %v12441, 4
        %v12496 = vrot.slane %v12442, 4
        %v12524 = vadd.f32 %v12389, %v12470
        %v12525 = vadd.f32 %v12390, %v12471
        %v12526 = vadd.f32 %v12391, %v12472
        %v12527 = vadd.f32 %v12392, %v12473
        %v12528 = vadd.f32 %v12393, %v12474
        %v12529 = vadd.f32 %v12394, %v12475
        %v12530 = vadd.f32 %v12395, %v12476
        %v12531 = vadd.f32 %v12396, %v12477
        %v12532 = vadd.f32 %v12397, %v12478
        %v12533 = vadd.f32 %v12398, %v12479
        %v12534 = vadd.f32 %v12399, %v12480
        %v12535 = vadd.f32 %v12400, %v12481
        %v12536 = vadd.f32 %v12401, %v12482
        %v12537 = vadd.f32 %v12402, %v12483
        %v12538 = vadd.f32 %v12403, %v12484
        %v12539 = vadd.f32 %v12404, %v12485
        %v12540 = vadd.f32 %v12405, %v12486
        %v12541 = vadd.f32 %v12406, %v12487
        %v12542 = vadd.f32 %v12407, %v12488
        %v12543 = vadd.f32 %v12408, %v12489
        %v12544 = vadd.f32 %v12409, %v12490
        %v12545 = vadd.f32 %v12410, %v12491
        %v12546 = vadd.f32 %v12411, %v12492
        %v12547 = vadd.f32 %v12412, %v12493
        %v12548 = vadd.f32 %v12413, %v12494
        %v12549 = vadd.f32 %v12414, %v12495
        %v12550 = vadd.f32 %v12415, %v12496
        %v12578 = vrot.slane %v9883, 6
        %v12579 = vrot.slane %v9885, 6
        %v12580 = vrot.slane %v9966, 6
        %v12581 = vrot.slane %v9968, 6
        %v12582 = vrot.slane %v10049, 6
        %v12583 = vrot.slane %v10051, 6
        %v12584 = vrot.slane %v10132, 6
        %v12585 = vrot.slane %v10134, 6
        %v12586 = vrot.slane %v10215, 6
        %v12587 = vrot.slane %v10217, 6
        %v12588 = vrot.slane %v10298, 6
        %v12589 = vrot.slane %v10300, 6
        %v12590 = vrot.slane %v10381, 6
        %v12591 = vrot.slane %v10383, 6
        %v12592 = vrot.slane %v10464, 6
        %v12593 = vrot.slane %v10466, 6
        %v12594 = vrot.slane %v10547, 6
        %v12595 = vrot.slane %v10549, 6
        %v12596 = vrot.slane %v10630, 6
        %v12597 = vrot.slane %v10632, 6
        %v12598 = vrot.slane %v10713, 6
        %v12599 = vrot.slane %v10715, 6
        %v12600 = vrot.slane %v10796, 6
        %v12601 = vrot.slane %v10798, 6
        %v12602 = vrot.slane %v10879, 6
        %v12603 = vrot.slane %v10881, 6
        %v12604 = vrot.slane %v10960, 6
        %v12632 = vadd.f32 %v12524, %v12578
        %v12633 = vadd.f32 %v12525, %v12579
        %v12634 = vadd.f32 %v12526, %v12580
        %v12635 = vadd.f32 %v12527, %v12581
        %v12636 = vadd.f32 %v12528, %v12582
        %v12637 = vadd.f32 %v12529, %v12583
        %v12638 = vadd.f32 %v12530, %v12584
        %v12639 = vadd.f32 %v12531, %v12585
        %v12640 = vadd.f32 %v12532, %v12586
        %v12641 = vadd.f32 %v12533, %v12587
        %v12642 = vadd.f32 %v12534, %v12588
        %v12643 = vadd.f32 %v12535, %v12589
        %v12644 = vadd.f32 %v12536, %v12590
        %v12645 = vadd.f32 %v12537, %v12591
        %v12646 = vadd.f32 %v12538, %v12592
        %v12647 = vadd.f32 %v12539, %v12593
        %v12648 = vadd.f32 %v12540, %v12594
        %v12649 = vadd.f32 %v12541, %v12595
        %v12650 = vadd.f32 %v12542, %v12596
        %v12651 = vadd.f32 %v12543, %v12597
        %v12652 = vadd.f32 %v12544, %v12598
        %v12653 = vadd.f32 %v12545, %v12599
        %v12654 = vadd.f32 %v12546, %v12600
        %v12655 = vadd.f32 %v12547, %v12601
        %v12656 = vadd.f32 %v12548, %v12602
        %v12657 = vadd.f32 %v12549, %v12603
        %v12658 = vadd.f32 %v12550, %v12604
        %v12686 = vcombine.low %v12632, %v12633
        %v12687 = vcombine.low %v12634, %v12635
        %v12689 = vunpack.c.l.s4 1983009808
        %v12690 = vunpack.c.0.s8 %v12689
        %v12691 = vlaneseq
        %v12692 = vshrl.u32 %v12691, 7
        %v12693 = vsub.s32 %v12690, %v12692
        %v12694 = vrot.slane %v12686, %v12693
        %v12696 = vunpack.c.l.s4 1983009808
        %v12697 = vunpack.c.0.s8 %v12696
        %v12698 = vlaneseq
        %v12699 = vshrl.u32 %v12698, 7
        %v12700 = vsub.s32 %v12697, %v12699
        %v12701 = vrot.slane %v12687, %v12700
        %v12702 = vcombine.low %v12694, %v12701
        %v12703 = vcombine.low %v12636, %v12637
        %v12704 = vcombine.low %v12638, %v12639
        %v12706 = vunpack.c.l.s4 1983009808
        %v12707 = vunpack.c.0.s8 %v12706
        %v12708 = vlaneseq
        %v12709 = vshrl.u32 %v12708, 7
        %v12710 = vsub.s32 %v12707, %v12709
        %v12711 = vrot.slane %v12703, %v12710
        %v12713 = vunpack.c.l.s4 1983009808
        %v12714 = vunpack.c.0.s8 %v12713
        %v12715 = vlaneseq
        %v12716 = vshrl.u32 %v12715, 7
        %v12717 = vsub.s32 %v12714, %v12716
        %v12718 = vrot.slane %v12704, %v12717
        %v12719 = vcombine.low %v12711, %v12718
        %v12720 = vcombine.low %v12640, %v12641
        %v12721 = vcombine.low %v12642, %v12643
        %v12723 = vunpack.c.l.s4 1983009808
        %v12724 = vunpack.c.0.s8 %v12723
        %v12725 = vlaneseq
        %v12726 = vshrl.u32 %v12725, 7
        %v12727 = vsub.s32 %v12724, %v12726
        %v12728 = vrot.slane %v12720, %v12727
        %v12730 = vunpack.c.l.s4 1983009808
        %v12731 = vunpack.c.0.s8 %v12730
        %v12732 = vlaneseq
        %v12733 = vshrl.u32 %v12732, 7
        %v12734 = vsub.s32 %v12731, %v12733
        %v12735 = vrot.slane %v12721, %v12734
        %v12736 = vcombine.low %v12728, %v12735
        %v12737 = vcombine.low %v12644, %v12645
        %v12738 = vcombine.low %v12646, %v12647
        %v12740 = vunpack.c.l.s4 1983009808
        %v12741 = vunpack.c.0.s8 %v12740
        %v12742 = vlaneseq
        %v12743 = vshrl.u32 %v12742, 7
        %v12744 = vsub.s32 %v12741, %v12743
        %v12745 = vrot.slane %v12737, %v12744
        %v12747 = vunpack.c.l.s4 1983009808
        %v12748 = vunpack.c.0.s8 %v12747
        %v12749 = vlaneseq
        %v12750 = vshrl.u32 %v12749, 7
        %v12751 = vsub.s32 %v12748, %v12750
        %v12752 = vrot.slane %v12738, %v12751
        %v12753 = vcombine.low %v12745, %v12752
        %v12754 = vcombine.low %v12648, %v12649
        %v12755 = vcombine.low %v12650, %v12651
        %v12757 = vunpack.c.l.s4 1983009808
        %v12758 = vunpack.c.0.s8 %v12757
        %v12759 = vlaneseq
        %v12760 = vshrl.u32 %v12759, 7
        %v12761 = vsub.s32 %v12758, %v12760
        %v12762 = vrot.slane %v12754, %v12761
        %v12764 = vunpack.c.l.s4 1983009808
        %v12765 = vunpack.c.0.s8 %v12764
        %v12766 = vlaneseq
        %v12767 = vshrl.u32 %v12766, 7
        %v12768 = vsub.s32 %v12765, %v12767
        %v12769 = vrot.slane %v12755, %v12768
        %v12770 = vcombine.low %v12762, %v12769
        %v12771 = vcombine.low %v12652, %v12653
        %v12772 = vcombine.low %v12654, %v12655
        %v12774 = vunpack.c.l.s4 1983009808
        %v12775 = vunpack.c.0.s8 %v12774
        %v12776 = vlaneseq
        %v12777 = vshrl.u32 %v12776, 7
        %v12778 = vsub.s32 %v12775, %v12777
        %v12779 = vrot.slane %v12771, %v12778
        %v12781 = vunpack.c.l.s4 1983009808
        %v12782 = vunpack.c.0.s8 %v12781
        %v12783 = vlaneseq
        %v12784 = vshrl.u32 %v12783, 7
        %v12785 = vsub.s32 %v12782, %v12784
        %v12786 = vrot.slane %v12772, %v12785
        %v12787 = vcombine.low %v12779, %v12786
        %v12788 = vcombine.low %v12656, %v12657
        %v12790 = vunpack.c.l.s4 1983009808
        %v12791 = vunpack.c.0.s8 %v12790
        %v12792 = vlaneseq
        %v12793 = vshrl.u32 %v12792, 7
        %v12794 = vsub.s32 %v12791, %v12793
        %v12795 = vrot.slane %v12788, %v12794
        %v12797 = vunpack.c.l.s4 1983009808
        %v12798 = vunpack.c.0.s8 %v12797
        %v12799 = vlaneseq
        %v12800 = vshrl.u32 %v12799, 7
        %v12801 = vsub.s32 %v12798, %v12800
        %v12802 = vrot.slane %v12658, %v12801
        %v12803 = vcombine.low %v12795, %v12802
        %s12811 = scalar_lea.vmem %s251, 108 [#allocation6]
        %12812 = vst [vmem:[%s12811] sm:$0xff] %v12702
        %12813 = vst [vmem:[%s12811 + $0x8] sm:$0xff] %v12719
        %12814 = vst [vmem:[%s12811 + $0x10] sm:$0xff] %v12736
        %12815 = vst [vmem:[%s12811 + $0x18] sm:$0xff] %v12753
        %12816 = vst [vmem:[%s12811 + $0x20] sm:$0xff] %v12770
        %12817 = vst [vmem:[%s12811 + $0x28] sm:$0xff] %v12787
        %12818 = vst [vmem:[%s12811 + $0x30] sm:$0x3f] %v12803
        %s12819 = sand.u32 %s123, 1
        %s12820 = sand.u32 %s123, 1
        %s12821 = smul.addr %s12820, 162
        %s12822 = scalar_lea.vmem [#allocation6], %s12821
        // Predicated region
        $region45: #{forward.1} parent=35 // pred_check
          %p12823 = pneg %p133
        $region46: #{forward.1} parent=35 // pred_check_branch
          %12825 = sbr.rel (%p12823) target = $region48
        $region47: #{forward.1} parent=35 // pred_region
          %s12826 = smul.u32 27, %s21
          %s12827 = smul.addr %s12826, 2
          %s12828 = scalar_lea.vmem %s4, %s12827
          // Predicated region
          $region49: #{forward.1} parent=47 // pred_check
            _
          $region50: #{forward.1} parent=47 // pred_check_branch
            %12830 = sbr.rel (0) target = $region52
          $region51: #{forward.1} parent=47 // pred_region
            // Predicated region
            $region53: #{forward.1} parent=51 // pred_check
              _
            $region54: #{forward.1} parent=51 // pred_check_branch
              %12832 = sbr.rel (0) target = $region56
            $region55: #{forward.1} parent=51 // pred_region
              %s12833 = scalar_lea.vmem %s12822, 48 [#allocation6]
              %s12834 = scalar_lea.vmem %s12828, 48
              loop: start=0, step=1, limit=1
              $region57: #{forward.1} parent=55 // loop_pre_header
                _
              $region58: #{forward.1} parent=55 // loop_header
                %s12836 = sphi 0, %s12840
                %p12837 = scmp.ge.s32.totalorder %s12836, 1
                %s12841 = sphi %s12822, %s12822
                %s12842 = sphi %s12828, %s12828
              $region59: #{forward.1} parent=55 // loop_header_branch
                %12839 = sbr.rel (%p12837) target = $region63
              $region60: #{forward.1} parent=55 // loop_body
                %v12843 = vld [vmem:[%s12841] sm:$0xff]
                %12844 = vst [vmem:[%s12842] sm:$0xff] %v12843
                %v12845 = vld [vmem:[%s12841 + $0x8] sm:$0xff]
                %12846 = vst [vmem:[%s12842 + $0x8] sm:$0xff] %v12845
                %v12847 = vld [vmem:[%s12841 + $0x10] sm:$0xff]
                %12848 = vst [vmem:[%s12842 + $0x10] sm:$0xff] %v12847
                %v12849 = vld [vmem:[%s12841 + $0x18] sm:$0xff]
                %12850 = vst [vmem:[%s12842 + $0x18] sm:$0xff] %v12849
                %v12851 = vld [vmem:[%s12841 + $0x20] sm:$0xff]
                %12852 = vst [vmem:[%s12842 + $0x20] sm:$0xff] %v12851
                %v12853 = vld [vmem:[%s12841 + $0x28] sm:$0xff]
                %12854 = vst [vmem:[%s12842 + $0x28] sm:$0xff] %v12853
                %v12855 = vld [vmem:[%s12841 + $0x36] sm:$0xff]
                %12856 = vst [vmem:[%s12842 + $0x6c] sm:$0xff] %v12855
                %v12857 = vld [vmem:[%s12841 + $0x3e] sm:$0xff]
                %12858 = vst [vmem:[%s12842 + $0x74] sm:$0xff] %v12857
                %v12859 = vld [vmem:[%s12841 + $0x46] sm:$0xff]
                %12860 = vst [vmem:[%s12842 + $0x7c] sm:$0xff] %v12859
                %v12861 = vld [vmem:[%s12841 + $0x4e] sm:$0xff]
                %12862 = vst [vmem:[%s12842 + $0x84] sm:$0xff] %v12861
                %v12863 = vld [vmem:[%s12841 + $0x56] sm:$0xff]
                %12864 = vst [vmem:[%s12842 + $0x8c] sm:$0xff] %v12863
                %v12865 = vld [vmem:[%s12841 + $0x5e] sm:$0xff]
                %12866 = vst [vmem:[%s12842 + $0x94] sm:$0xff] %v12865
                %v12867 = vld [vmem:[%s12841 + $0x6c] sm:$0xff]
                %12868 = vst [vmem:[%s12842 + $0xd8] sm:$0xff] %v12867
                %v12869 = vld [vmem:[%s12841 + $0x74] sm:$0xff]
                %12870 = vst [vmem:[%s12842 + $0xe0] sm:$0xff] %v12869
                %v12871 = vld [vmem:[%s12841 + $0x7c] sm:$0xff]
                %12872 = vst [vmem:[%s12842 + $0xe8] sm:$0xff] %v12871
                %v12873 = vld [vmem:[%s12841 + $0x84] sm:$0xff]
                %12874 = vst [vmem:[%s12842 + $0xf0] sm:$0xff] %v12873
                %v12875 = vld [vmem:[%s12841 + $0x8c] sm:$0xff]
                %12876 = vst [vmem:[%s12842 + $0xf8] sm:$0xff] %v12875
                %v12877 = vld [vmem:[%s12841 + $0x94] sm:$0xff]
                %12878 = vst [vmem:[%s12842 + $0x100] sm:$0xff] %v12877
              $region61: #{forward.1} parent=55 // loop_footer
                %s12840 = sadd.s32 1, %s12836
              $region62: #{forward.1} parent=55 // loop_footer_branch
                %12835 = sbr.rel target = $region58
              $region63: #{forward.1} parent=55 // loop_exit
                _
              loop: start=0, step=1, limit=1
              $region64: #{forward.1} parent=55 // loop_pre_header
                _
              $region65: #{forward.1} parent=55 // loop_header
                %s12881 = sphi 0, %s12885
                %p12882 = scmp.ge.s32.totalorder %s12881, 1
                %s12886 = sphi %s12833, %s12833
                %s12887 = sphi %s12834, %s12834
              $region66: #{forward.1} parent=55 // loop_header_branch
                %12884 = sbr.rel (%p12882) target = $region70
              $region67: #{forward.1} parent=55 // loop_body
                %v12888 = vld [vmem:[%s12886] sm:$0x3f]
                %12889 = vst [vmem:[%s12887] sm:$0x3f] %v12888
                %v12890 = vld [vmem:[%s12886 + $0x36] sm:$0x3f]
                %12891 = vst [vmem:[%s12887 + $0x6c] sm:$0x3f] %v12890
                %v12892 = vld [vmem:[%s12886 + $0x6c] sm:$0x3f]
                %12893 = vst [vmem:[%s12887 + $0xd8] sm:$0x3f] %v12892
              $region68: #{forward.1} parent=55 // loop_footer
                %s12885 = sadd.s32 1, %s12881
              $region69: #{forward.1} parent=55 // loop_footer_branch
                %12880 = sbr.rel target = $region65
              $region70: #{forward.1} parent=55 // loop_exit
                _
            $region56: #{forward.1} parent=51 // pred_fallthru
              _
          $region52: #{forward.1} parent=47 // pred_fallthru
            _
          %12894 = vnop
        $region48: #{forward.1} parent=35 // pred_fallthru
          _
      $region36: #{forward.1} parent=5 // pred_fallthru
        _
      %p12895 = scmp.le.s32.totalorder 2, %s16
      // Predicated region
      $region71: #{forward.1} parent=5 // pred_check
        %p12896 = pneg %p12895
      $region72: #{forward.1} parent=5 // pred_check_branch
        %12898 = sbr.rel (%p12896) target = $region74
      $region73: #{forward.1} parent=5 // pred_region
        %s12899 = ssub.s32 %s16, 2
        // Predicated region
        $region75: #{forward.1} parent=73 // pred_check
          %p12900 = pneg %p139
        $region76: #{forward.1} parent=73 // pred_check_branch
          %12902 = sbr.rel (%p12900) target = $region78
        $region77: #{forward.1} parent=73 // pred_region
          %s12903 = sand.u32 %s124, 1
          %s12904 = sand.u32 %s124, 1
          %s12905 = smul.addr %s12904, 162
          %s12906 = scalar_lea.vmem [#allocation6], %s12905
        $region78: #{forward.1} parent=73 // pred_fallthru
          _
      $region74: #{forward.1} parent=5 // pred_fallthru
        _
    $region6: #{forward.1} parent=1 // loop_footer
      %s20 = sadd.s32 1, %s16
    $region7: #{forward.1} parent=1 // loop_footer_branch
      %15 = sbr.rel target = $region3
    $region8: #{forward.1} parent=1 // loop_exit
      _
    %12907 = vsyncpa [#allocation3], 1
    %s12908 = scalar_lea.sflag [#allocation3], 1
    %12909 = vsyncpa %s12908, 1
    %12910 = vsyncpa [#allocation5], 1
    %s12911 = scalar_lea.sflag [#allocation5], 1
    %12912 = vsyncpa %s12911, 1

</llo_original>
